<compile_context>
chip_gen: v5e
topology: v5e:2x2
jax: 0.10.0
libtpu: 0.0.40
codegen_flags: <defaults>
</compile_context>

<pallas_src>
import math

import jax
import jax.numpy as jnp
from jax.experimental import pallas as pl
from jax.experimental.pallas import tpu as pltpu


# MXU operand dtype (accumulation is always f32 via preferred_element_type).
# Set MXU_DTYPE = jnp.float32 for bit-exact f32 parity with the reference.
MXU_DTYPE = jnp.bfloat16
_MIB = 1024 * 1024

# PyTorch fused-gate order is (i, f, g, o); we place them in packed slots
# (i, f, o, g) so the three sigmoid gates are contiguous -> one sigmoid pass.
_GATE_SLOTS = (0, 1, 3, 2)   # pytorch gate p -> packed slot


def _round_up(x, m):
    return (x + m - 1) // m * m


_VMEM_CAP_CACHE = [None]


def _vmem_capacity_bytes():
    if _VMEM_CAP_CACHE[0] is None:
        cap = 64 * _MIB
        try:
            info_cap = int(pltpu.get_tpu_info().vmem_capacity_bytes)
            if info_cap > 0:
                cap = info_cap
        except Exception:
            pass
        _VMEM_CAP_CACHE[0] = cap
    return _VMEM_CAP_CACHE[0]


def _vmem_limit(need_bytes):
    # Generation-aware scoped-VMEM limit: use most of v5e/v6e's 128 MiB, stay
    # conservative (64 MiB physical) on v7x / unknown chips.
    cap = max(32 * _MIB, _vmem_capacity_bytes() - 16 * _MIB)
    return int(min(cap, need_bytes + 16 * _MIB))


# ------------------------- tiled matmul (+bias) kernel ------------------------
def _matmul_bias_kernel(x_ref, w_ref, b_ref, o_ref, acc_ref):
    """o = x @ w + b; K axis accumulated in an f32 VMEM scratch."""
    @pl.when(pl.program_id(2) == 0)
    def _():
        acc_ref[...] = jnp.zeros_like(acc_ref)

    acc_ref[...] += jnp.dot(x_ref[...], w_ref[...],
                            preferred_element_type=jnp.float32)

    @pl.when(pl.program_id(2) == pl.num_programs(2) - 1)
    def _():
        o_ref[...] = (acc_ref[...] + b_ref[...]).astype(o_ref.dtype)


def linear(x, w, b_row, *, out_dtype=jnp.float32, tm=256, tn=512, tk=512,
           mxu_dtype=MXU_DTYPE):
    """x: (N, K); w: (K0, V0) pre-packed (K0 >= K, already mxu dtype);
    b_row: (1, V0) f32.  Returns (N, V0) in `out_dtype`.

    Pads to tile multiples with zeros only when needed (exact math), casts MXU
    operands to `mxu_dtype`, accumulates in f32.
    """
    N, K = x.shape
    K0, V0 = w.shape
    assert K0 >= K

    tm = min(tm, _round_up(N, 8))
    tn = min(tn, _round_up(V0, 128))
    tk = min(tk, _round_up(K0, 128))
    Np, Kp, Vp = _round_up(N, tm), _round_up(K0, tk), _round_up(V0, tn)

    wsz = jnp.dtype(mxu_dtype).itemsize
    osz = jnp.dtype(out_dtype).itemsize

    xq = x.astype(mxu_dtype)
    if (Np, Kp) != (N, K):
        xq = jnp.zeros((Np, Kp), mxu_dtype).at[:N, :K].set(xq)
    wq = w.astype(mxu_dtype)
    if (Kp, Vp) != (K0, V0):
        wq = jnp.zeros((Kp, Vp), mxu_dtype).at[:K0, :V0].set(wq)
    bq = b_row.astype(jnp.float32)
    if Vp != V0:
        bq = jnp.zeros((1, Vp), jnp.float32).at[:, :V0].set(bq)

    need = (2 * (tm * tk + tk * tn) * wsz   # double-buffered x / w tiles
            + 2 * tn * 4                    # double-buffered bias tile
            + 2 * tm * tn * osz             # double-buffered output tile
            + tm * tn * 4)                  # f32 accumulator scratch

    out = pl.pallas_call(
        _matmul_bias_kernel,
        out_shape=jax.ShapeDtypeStruct((Np, Vp), out_dtype),
        grid_spec=pltpu.PrefetchScalarGridSpec(
            num_scalar_prefetch=0,
            grid=(Np // tm, Vp // tn, Kp // tk),
            in_specs=[
                pl.BlockSpec((tm, tk), lambda i, j, k: (i, k)),
                pl.BlockSpec((tk, tn), lambda i, j, k: (k, j)),
                pl.BlockSpec((1, tn), lambda i, j, k: (0, j)),
            ],
            out_specs=pl.BlockSpec((tm, tn), lambda i, j, k: (i, j)),
            scratch_shapes=[pltpu.VMEM((tm, tn), jnp.float32)],
        ),
        compiler_params=pltpu.CompilerParams(
            dimension_semantics=("parallel", "parallel", "arbitrary"),
            vmem_limit_bytes=_vmem_limit(need),
        ),
    )(xq, wq, bq)
    return out[:N, :V0]


# -------------------------- gate-aligned weight packing ------------------------
def _pack_gate_weight(w, H, Hp, in_pad):
    """PyTorch fused-gate weight (4H, in_dim) -> transposed (in_pad, 4*Hp), each
    gate block placed at a lane-aligned slot*Hp offset in (i,f,o,g) slot order.
    Zero padding keeps the math exact (padded hidden units stay 0 forever)."""
    in_dim = w.shape[1]
    w_t = jnp.transpose(w).astype(jnp.float32)              # (in_dim, 4H)
    out = jnp.zeros((in_pad, 4 * Hp), jnp.float32)
    for p, slot in enumerate(_GATE_SLOTS):
        out = out.at[:in_dim, slot * Hp:slot * Hp + H].set(w_t[:, p * H:(p + 1) * H])
    return out


def _pack_gate_bias(b, H, Hp):
    b = b.astype(jnp.float32)
    out = jnp.zeros((1, 4 * Hp), jnp.float32)
    for p, slot in enumerate(_GATE_SLOTS):
        out = out.at[0, slot * Hp:slot * Hp + H].set(b[p * H:(p + 1) * H])
    return out


# ------------------------------ one-time param prep ----------------------------
def pack_decoder_params(params, *, mxu_dtype=MXU_DTYPE):
    """Hoists all packing / padding / transposes / casts out of the forward."""
    emb = params["embedding"]
    V, E = emb.shape
    lstm = params["lstm"]
    L = len(lstm)
    H = lstm[0]["w_hh"].shape[1]
    # TODO(synk): for H < 128 the per-gate lane padding inflates recurrent
    #             matmul width by 128/H; an XLU-based gate split would avoid it.
    Hp = _round_up(H, 128)
    Ep = _round_up(E, 128)
    Vp = _round_up(V, 128)

    emb_p = jnp.zeros((V, Ep), mxu_dtype).at[:, :E].set(emb.astype(mxu_dtype))

    w_ih0 = _pack_gate_weight(lstm[0]["w_ih"], H, Hp, in_pad=Ep).astype(mxu_dtype)
    b0 = _pack_gate_bias(lstm[0]["b_ih"] + lstm[0]["b_hh"], H, Hp)
    whh0 = _pack_gate_weight(lstm[0]["w_hh"], H, Hp, in_pad=Hp).astype(mxu_dtype)

    wfused, biases = [], []
    for l in range(1, L):
        wi = _pack_gate_weight(lstm[l]["w_ih"], H, Hp, in_pad=Hp)
        wh = _pack_gate_weight(lstm[l]["w_hh"], H, Hp, in_pad=Hp)
        wfused.append(jnp.concatenate([wi, wh], axis=0).astype(mxu_dtype))
        biases.append(_pack_gate_bias(lstm[l]["b_ih"] + lstm[l]["b_hh"], H, Hp))

    fc_wt = jnp.zeros((Hp, Vp), mxu_dtype).at[:H, :V].set(
        jnp.transpose(params["fc_w"]).astype(mxu_dtype))
    fc_b = jnp.zeros((1, Vp), jnp.float32).at[:, :V].set(
        params["fc_b"].astype(jnp.float32))

    return {
        "emb": emb_p,                 # (V, Ep)  mxu dtype
        "w_ih0": w_ih0,               # (Ep, 4Hp) mxu dtype
        "b0": b0,                     # (1, 4Hp) f32
        "whh0": whh0,                 # (Hp, 4Hp) mxu dtype
        "wfused": tuple(wfused),      # L-1 x (2Hp, 4Hp) mxu dtype
        "bias": tuple(biases),        # L-1 x (1, 4Hp) f32
        "fc_wt": fc_wt,               # (Hp, Vp) mxu dtype
        "fc_b": fc_b,                 # (1, Vp) f32
    }


# --------------------------- fused multi-layer LSTM ----------------------------
def _make_fused_lstm_kernel(num_layers, Hp, tc):
    L = num_layers

    def kernel(*refs):
        # refs: g0 | W_hh0^T | Wfused[1..L-1] | bias[1..L-1] | y | h_scr, c_scr
        g0_ref = refs[0]
        whh0_ref = refs[1]
        wf_refs = refs[2:L + 1]
        b_refs = refs[L + 1:2 * L]
        y_ref = refs[2 * L]
        h_scr = refs[2 * L + 1]
        c_scr = refs[2 * L + 2]

        @pl.when(pl.program_id(0) == 0)
        def _():
            h_scr[...] = jnp.zeros_like(h_scr)
            c_scr[...] = jnp.zeros_like(c_scr)

        mdt = whh0_ref.dtype

        def cell(gates, c_prev):
            # packed slot order i, f, o, g -> one sigmoid pass + one tanh pass.
            sig = jax.nn.sigmoid(gates[:, :3 * Hp])
            i_g = sig[:, 0 * Hp:1 * Hp]
            f_g = sig[:, 1 * Hp:2 * Hp]
            o_g = sig[:, 2 * Hp:3 * Hp]
            g_g = jnp.tanh(gates[:, 3 * Hp:4 * Hp])
            c_new = f_g * c_prev + i_g * g_g
            h_new = o_g * jnp.tanh(c_new)
            return h_new, c_new

        # Fully unrolled loop over the tc steps of this time chunk (tc is a
        # small compile-time constant); amortizes per-grid-step overhead.
        for s in range(tc):
            # Layer 0: x_t @ W_ih^T + bias was precomputed (hoisted); only the
            # h @ W_hh^T term remains on the sequential critical path.
            gates = (g0_ref[s].astype(jnp.float32)
                     + jnp.dot(h_scr[0].astype(mdt), whh0_ref[...],
                               preferred_element_type=jnp.float32))
            h_new, c_new = cell(gates, c_scr[0])
            h_scr[0] = h_new
            c_scr[0] = c_new
            x_l = h_new

            # Layers 1..L-1: ONE fused matmul per layer:
            #   [x_l, h] @ [W_ih^T ; W_hh^T]  (+ fused bias)
            for l in range(1, L):
                xh = jnp.concatenate([x_l, h_scr[l]], axis=-1).astype(mdt)
                gates = (jnp.dot(xh, wf_refs[l - 1][...],
                                 preferred_element_type=jnp.float32)
                         + b_refs[l - 1][...])
                h_new, c_new = cell(gates, c_scr[l])
                h_scr[l] = h_new
                c_scr[l] = c_new
                x_l = h_new

            # Batch-major output layout (no XLA transpose before the FC).
            y_ref[:, s, :] = x_l.astype(y_ref.dtype)

    return kernel


def fused_lstm(g0, packed, L, Hp, Bp, tc):
    """g0: (T_pad, Bp, 4*Hp) precomputed layer-0 gates-in (bias folded), bf16.
    Returns top-layer hidden states, batch-major (Bp, T_pad, Hp) bfloat16."""
    T_pad = g0.shape[0]
    whh0 = packed["whh0"]
    wfused = list(packed["wfused"])
    biases = list(packed["bias"])
    wsz = jnp.dtype(whh0.dtype).itemsize
    g0sz = jnp.dtype(g0.dtype).itemsize

    in_specs = [pl.BlockSpec((tc, Bp, 4 * Hp), lambda t: (t, 0, 0)),
                pl.BlockSpec((Hp, 4 * Hp), lambda t: (0, 0))]
    in_specs += [pl.BlockSpec((2 * Hp, 4 * Hp), lambda t: (0, 0))
                 for _ in range(L - 1)]
    in_specs += [pl.BlockSpec((1, 4 * Hp), lambda t: (0, 0))
                 for _ in range(L - 1)]

    # Weight/bias inputs have constant block indices but may still be allocated
    # double-buffered by the pipeliner -> count them twice.
    need = (2 * (Hp * 4 * Hp + (L - 1) * 2 * Hp * 4 * Hp) * wsz   # gate weights
            + 2 * (L - 1) * 4 * Hp * 4                            # biases
            + 2 * tc * Bp * 4 * Hp * g0sz                         # g0 chunk
            + 2 * Bp * tc * Hp * 2                                # y chunk (bf16)
            + 2 * L * Bp * Hp * 4)                                # h / c scratch

    return pl.pallas_call(
        _make_fused_lstm_kernel(L, Hp, tc),
        out_shape=jax.ShapeDtypeStruct((Bp, T_pad, Hp), jnp.bfloat16),
        grid_spec=pltpu.PrefetchScalarGridSpec(
            num_scalar_prefetch=0,
            grid=(T_pad // tc,),
            in_specs=in_specs,
            out_specs=pl.BlockSpec((Bp, tc, Hp), lambda t: (0, t, 0)),
            scratch_shapes=[
                pltpu.VMEM((L, Bp, Hp), jnp.float32),   # h, all layers
                pltpu.VMEM((L, Bp, Hp), jnp.float32),   # c, all layers
            ],
        ),
        compiler_params=pltpu.CompilerParams(
            dimension_semantics=("arbitrary",),          # time recurrence
            vmem_limit_bytes=_vmem_limit(need),
        ),
    )(g0, whh0, *wfused, *biases)


# ------------------------------- DecoderRNN forward ----------------------------
def decoder_rnn_forward(packed, features, captions, *, time_chunk=8):
    """packed: output of pack_decoder_params; features: (B, n_embd) float32;
    captions: (B, S) int32.  Returns logits (B, S-1, vocab) == eval forward."""
    B, S = captions.shape
    T = S
    E = features.shape[1]
    Ep = packed["w_ih0"].shape[0]
    Hp = packed["whh0"].shape[0]
    Vp = packed["fc_wt"].shape[1]
    V = packed["emb"].shape[0]
    L = 1 + len(packed["wfused"])

    Bp = _round_up(B, 8)          # sublane-dense batch
    tc = time_chunk
    T_pad = _round_up(T, tc)      # trailing padded steps are computed & dropped

    # Embedding gathered directly into time-major (T, B, Ep); features at t=0.
    # (jnp.take clamps OOB indices on TPU whereas PyTorch would raise.)
    cap_t = jnp.transpose(captions[:, :-1])                              # (S-1, B)
    emb = jnp.take(packed["emb"], cap_t, axis=0)                         # (S-1, B, Ep)
    feat = jnp.zeros((1, B, Ep), emb.dtype).at[:, :, :E].set(
        features.astype(emb.dtype)[None, :, :])
    x = jnp.concatenate([feat, emb], axis=0)                             # (T, B, Ep)
    x = jnp.pad(x, ((0, T_pad - T), (0, Bp - B), (0, 0)))                # (T_pad, Bp, Ep)

    # Layer-0 input projection hoisted out of the recurrence: one tiled matmul
    # over all T_pad*Bp rows with the fused bias folded in; stored as bf16.
    g0 = linear(x.reshape(T_pad * Bp, Ep), packed["w_ih0"], packed["b0"],
                out_dtype=jnp.bfloat16).reshape(T_pad, Bp, 4 * Hp)

    # Fused multi-layer LSTM over time (single kernel, h/c live in VMEM),
    # output already batch-major bf16.
    y = fused_lstm(g0, packed, L, Hp, Bp, tc)                            # (Bp, T_pad, Hp)

    # Final projection only on t >= 1 (module returns logits[:, 1:, :]).  A
    # single row-block (tm covers all rows) streams the vocab weight from HBM
    # exactly once.
    rows = Bp * (T - 1)
    y_fc = y[:, 1:T, :].reshape(rows, Hp)
    logits = linear(y_fc, packed["fc_wt"], packed["fc_b"],
                    out_dtype=jnp.float32,
                    tm=min(4096, _round_up(rows, 8)), tn=512, tk=512)
    return logits.reshape(Bp, T - 1, Vp)[:B, :, :V]


# ------------------------------ pure-JAX reference -----------------------------
def decoder_rnn_reference(params, features, captions):
    """Eval-mode f32 reference (lax.scan LSTM) for numerics checking."""
    cap = captions[:, :-1]
    emb = jnp.take(params["embedding"], cap, axis=0)
    h = jnp.concatenate([features[:, None, :], emb], axis=1)             # (B, T, E)
    B = h.shape[0]
    for layer in params["lstm"]:
        w_ih, w_hh = layer["w_ih"], layer["w_hh"]
        b = layer["b_ih"] + layer["b_hh"]
        H = w_hh.shape[1]

        def step(carry, x_t, w_ih=w_ih, w_hh=w_hh, b=b, H=H):
            h_prev, c_prev = carry
            gates = x_t @ w_ih.T + h_prev @ w_hh.T + b
            i = jax.nn.sigmoid(gates[:, 0 * H:1 * H])
            f = jax.nn.sigmoid(gates[:, 1 * H:2 * H])
            g = jnp.tanh(gates[:, 2 * H:3 * H])
            o = jax.nn.sigmoid(gates[:, 3 * H:4 * H])
            c_new = f * c_prev + i * g
            h_new = o * jnp.tanh(c_new)
            return (h_new, c_new), h_new

        init = (jnp.zeros((B, H), jnp.float32), jnp.zeros((B, H), jnp.float32))
        _, ys = jax.lax.scan(step, init, jnp.transpose(h, (1, 0, 2)))
        h = jnp.transpose(ys, (1, 0, 2))
    logits = h @ params["fc_w"].T + params["fc_b"]
    return logits[:, 1:, :]


# ----------------------------------- param init --------------------------------
def init_params(key, n_embd, hidden_size, vocab_size, num_layers):
    keys = jax.random.split(key, 3 + 4 * num_layers)
    k_emb, k_fcw, k_fcb = keys[0], keys[1], keys[2]
    lstm_keys = keys[3:]
    bound = 1.0 / math.sqrt(hidden_size)

    params = {
        "embedding": jax.random.normal(k_emb, (vocab_size, n_embd), jnp.float32),
        "fc_w": jax.random.uniform(k_fcw, (vocab_size, hidden_size), jnp.float32,
                                   -bound, bound),
        "fc_b": jax.random.uniform(k_fcb, (vocab_size,), jnp.float32, -bound, bound),
        "lstm": [],
    }
    for l in range(num_layers):
        in_dim = n_embd if l == 0 else hidden_size
        kw1, kw2, kb1, kb2 = lstm_keys[4 * l:4 * l + 4]
        params["lstm"].append({
            "w_ih": jax.random.uniform(kw1, (4 * hidden_size, in_dim),
                                       jnp.float32, -bound, bound),
            "w_hh": jax.random.uniform(kw2, (4 * hidden_size, hidden_size),
                                       jnp.float32, -bound, bound),
            "b_ih": jax.random.uniform(kb1, (4 * hidden_size,),
                                       jnp.float32, -bound, bound),
            "b_hh": jax.random.uniform(kb2, (4 * hidden_size,),
                                       jnp.float32, -bound, bound),
        })
    return params


# -------------------------------------- main ------------------------------------
if __name__ == "__main__":
    n_embd, hidden_size, vocab_size, num_layers = 32, 32, 64, 2
    B, S = 2, 8    # captions length S -> LSTM sequence length T = S

    key = jax.random.PRNGKey(0)
    k_params, k_feat, k_cap = jax.random.split(key, 3)

    params = init_params(k_params, n_embd, hidden_size, vocab_size, num_layers)
    features = jax.random.normal(k_feat, (B, n_embd), jnp.float32)
    captions = jax.random.randint(k_cap, (B, S), 0, vocab_size, jnp.int32)

    # One-time parameter prep (packing / padding / casts hoisted off hot path).
    packed = pack_decoder_params(params)

    fwd = jax.jit(decoder_rnn_forward)
    out = jax.block_until_ready(fwd(packed, features, captions))

    assert out.shape == (B, S - 1, vocab_size), out.shape
    assert bool(jnp.all(jnp.isfinite(out)))

    # Numerics check vs pure-JAX f32 reference (bf16 MXU operands -> loose tol).
    ref = jax.block_until_ready(decoder_rnn_reference(params, features, captions))
    max_err = float(jnp.max(jnp.abs(out - ref)))
    assert max_err < 5e-2, f"max abs err {max_err}"

    print("KERNEL_OK")
</pallas_src>

<mosaic_0001>
module attributes {stable_mosaic.version = 11 : i64} {
  func.func @_matmul_bias_kernel(%arg0: i32, %arg1: i32, %arg2: i32, %arg3: memref<56x128xbf16, #tpu.memory_space<vmem>>, %arg4: memref<128x128xbf16, #tpu.memory_space<vmem>>, %arg5: memref<1x128xf32, #tpu.memory_space<vmem>>, %arg6: memref<56x128xf32, #tpu.memory_space<vmem>>, %arg7: memref<56x128xf32, #tpu.memory_space<vmem>>) attributes {dimension_semantics = [#tpu.dimension_semantics<parallel>, #tpu.dimension_semantics<parallel>, #tpu.dimension_semantics<arbitrary>], iteration_bounds = array<i64: 1, 1, 1>, scalar_prefetch = 0 : i64, scratch_operands = 1 : i64, tpu.core_type = #tpu.core_type<tc>, window_params = [{transform_indices = @transform_0, window_bounds = array<i64: 56, 128>}, {transform_indices = @transform_1, window_bounds = array<i64: 128, 128>}, {transform_indices = @transform_2, window_bounds = array<i64: 1, 128>}, {transform_indices = @transform_3, window_bounds = array<i64: 56, 128>}]} {
    %c0_i32 = arith.constant 0 : i32
    %0 = arith.cmpi eq, %arg2, %c0_i32 : i32
    %1 = arith.extui %0 : i1 to i32
    %c0_i32_0 = arith.constant 0 : i32
    %2 = arith.cmpi ne, %1, %c0_i32_0 : i32
    scf.if %2 {
      %cst_10 = arith.constant 0.000000e+00 : f32
      %12 = vector.broadcast %cst_10 : f32 to vector<56x128xf32>
      %c0_11 = arith.constant 0 : index
      %c0_12 = arith.constant 0 : index
      %13 = vector.load %arg7[%c0_11, %c0_12] : memref<56x128xf32, #tpu.memory_space<vmem>>, vector<56x128xf32>
      tpu.vector_store %arg7[%c0_11, %c0_12], %12 {strides = array<i32>} : memref<56x128xf32, #tpu.memory_space<vmem>>, vector<56x128xf32>,
    } else {
    }
    %c0 = arith.constant 0 : index
    %c0_1 = arith.constant 0 : index
    %3 = vector.load %arg7[%c0, %c0_1] : memref<56x128xf32, #tpu.memory_space<vmem>>, vector<56x128xf32>
    %c0_2 = arith.constant 0 : index
    %c0_3 = arith.constant 0 : index
    %4 = vector.load %arg3[%c0_2, %c0_3] : memref<56x128xbf16, #tpu.memory_space<vmem>>, vector<56x128xbf16>
    %c0_4 = arith.constant 0 : index
    %c0_5 = arith.constant 0 : index
    %5 = vector.load %arg4[%c0_4, %c0_5] : memref<128x128xbf16, #tpu.memory_space<vmem>>, vector<128x128xbf16>
    %cst = arith.constant dense<0.000000e+00> : vector<56x128xf32>
    %6 = tpu.matmul %4, %5, %cst {dimension_numbers = #tpu.dot_dimension_numbers<[1], [0], [0], [1], [0, 0, 1, 1], [], []>} : vector<56x128xbf16>, vector<128x128xbf16>, vector<56x128xf32> -> vector<56x128xf32>
    %7 = arith.addf %3, %6 : vector<56x128xf32>
    %c0_6 = arith.constant 0 : index
    %c0_7 = arith.constant 0 : index
    %8 = vector.load %arg7[%c0_6, %c0_7] : memref<56x128xf32, #tpu.memory_space<vmem>>, vector<56x128xf32>
    tpu.vector_store %arg7[%c0_6, %c0_7], %7 {strides = array<i32>} : memref<56x128xf32, #tpu.memory_space<vmem>>, vector<56x128xf32>,
    %c0_i32_8 = arith.constant 0 : i32
    %9 = arith.cmpi eq, %arg2, %c0_i32_8 : i32
    %10 = arith.extui %9 : i1 to i32
    %c0_i32_9 = arith.constant 0 : i32
    %11 = arith.cmpi ne, %10, %c0_i32_9 : i32
    scf.if %11 {
      %c0_10 = arith.constant 0 : index
      %c0_11 = arith.constant 0 : index
      %12 = vector.load %arg7[%c0_10, %c0_11] : memref<56x128xf32, #tpu.memory_space<vmem>>, vector<56x128xf32>
      %c0_12 = arith.constant 0 : index
      %c0_13 = arith.constant 0 : index
      %13 = vector.load %arg5[%c0_12, %c0_13] : memref<1x128xf32, #tpu.memory_space<vmem>>, vector<1x128xf32>
      %14 = vector.broadcast %13 : vector<1x128xf32> to vector<56x128xf32>
      %15 = arith.addf %12, %14 : vector<56x128xf32>
      %c0_14 = arith.constant 0 : index
      %c0_15 = arith.constant 0 : index
      %16 = vector.load %arg6[%c0_14, %c0_15] : memref<56x128xf32, #tpu.memory_space<vmem>>, vector<56x128xf32>
      tpu.vector_store %arg6[%c0_14, %c0_15], %15 {strides = array<i32>} : memref<56x128xf32, #tpu.memory_space<vmem>>, vector<56x128xf32>,
    } else {
    }
    return
  }
  func.func @transform_0(%arg0: i32, %arg1: i32, %arg2: i32) -> (i32, i32) {
    %c0_i32 = arith.constant 0 : i32
    return %arg0, %arg2 : i32, i32
  }
  func.func @transform_1(%arg0: i32, %arg1: i32, %arg2: i32) -> (i32, i32) {
    %c0_i32 = arith.constant 0 : i32
    return %arg2, %arg1 : i32, i32
  }
  func.func @transform_2(%arg0: i32, %arg1: i32, %arg2: i32) -> (i32, i32) {
    %c0_i32 = arith.constant 0 : i32
    %c0_i32_0 = arith.constant 0 : i32
    return %c0_i32, %arg1 : i32, i32
  }
  func.func @transform_3(%arg0: i32, %arg1: i32, %arg2: i32) -> (i32, i32) {
    %c0_i32 = arith.constant 0 : i32
    return %arg0, %arg1 : i32, i32
  }
}

module attributes {stable_mosaic.version = 11 : i64} {
  func.func @_matmul_bias_kernel(%arg0: i32, %arg1: i32, %arg2: i32, %arg3: memref<64x128xbf16, #tpu.memory_space<vmem>>, %arg4: memref<128x512xbf16, #tpu.memory_space<vmem>>, %arg5: memref<1x512xf32, #tpu.memory_space<vmem>>, %arg6: memref<64x512xbf16, #tpu.memory_space<vmem>>, %arg7: memref<64x512xf32, #tpu.memory_space<vmem>>) attributes {dimension_semantics = [#tpu.dimension_semantics<parallel>, #tpu.dimension_semantics<parallel>, #tpu.dimension_semantics<arbitrary>], iteration_bounds = array<i64: 1, 1, 1>, scalar_prefetch = 0 : i64, scratch_operands = 1 : i64, tpu.core_type = #tpu.core_type<tc>, window_params = [{transform_indices = @transform_0, window_bounds = array<i64: 64, 128>}, {transform_indices = @transform_1, window_bounds = array<i64: 128, 512>}, {transform_indices = @transform_2, window_bounds = array<i64: 1, 512>}, {transform_indices = @transform_3, window_bounds = array<i64: 64, 512>}]} {
    %c0_i32 = arith.constant 0 : i32
    %0 = arith.cmpi eq, %arg2, %c0_i32 : i32
    %1 = arith.extui %0 : i1 to i32
    %c0_i32_0 = arith.constant 0 : i32
    %2 = arith.cmpi ne, %1, %c0_i32_0 : i32
    scf.if %2 {
      %cst_10 = arith.constant 0.000000e+00 : f32
      %12 = vector.broadcast %cst_10 : f32 to vector<64x512xf32>
      %c0_11 = arith.constant 0 : index
      %c0_12 = arith.constant 0 : index
      %13 = vector.load %arg7[%c0_11, %c0_12] : memref<64x512xf32, #tpu.memory_space<vmem>>, vector<64x512xf32>
      tpu.vector_store %arg7[%c0_11, %c0_12], %12 {strides = array<i32>} : memref<64x512xf32, #tpu.memory_space<vmem>>, vector<64x512xf32>,
    } else {
    }
    %c0 = arith.constant 0 : index
    %c0_1 = arith.constant 0 : index
    %3 = vector.load %arg7[%c0, %c0_1] : memref<64x512xf32, #tpu.memory_space<vmem>>, vector<64x512xf32>
    %c0_2 = arith.constant 0 : index
    %c0_3 = arith.constant 0 : index
    %4 = vector.load %arg3[%c0_2, %c0_3] : memref<64x128xbf16, #tpu.memory_space<vmem>>, vector<64x128xbf16>
    %c0_4 = arith.constant 0 : index
    %c0_5 = arith.constant 0 : index
    %5 = vector.load %arg4[%c0_4, %c0_5] : memref<128x512xbf16, #tpu.memory_space<vmem>>, vector<128x512xbf16>
    %cst = arith.constant dense<0.000000e+00> : vector<64x512xf32>
    %6 = tpu.matmul %4, %5, %cst {dimension_numbers = #tpu.dot_dimension_numbers<[1], [0], [0], [1], [0, 0, 1, 1], [], []>} : vector<64x128xbf16>, vector<128x512xbf16>, vector<64x512xf32> -> vector<64x512xf32>
    %7 = arith.addf %3, %6 : vector<64x512xf32>
    %c0_6 = arith.constant 0 : index
    %c0_7 = arith.constant 0 : index
    %8 = vector.load %arg7[%c0_6, %c0_7] : memref<64x512xf32, #tpu.memory_space<vmem>>, vector<64x512xf32>
    tpu.vector_store %arg7[%c0_6, %c0_7], %7 {strides = array<i32>} : memref<64x512xf32, #tpu.memory_space<vmem>>, vector<64x512xf32>,
    %c0_i32_8 = arith.constant 0 : i32
    %9 = arith.cmpi eq, %arg2, %c0_i32_8 : i32
    %10 = arith.extui %9 : i1 to i32
    %c0_i32_9 = arith.constant 0 : i32
    %11 = arith.cmpi ne, %10, %c0_i32_9 : i32
    scf.if %11 {
      %c0_10 = arith.constant 0 : index
      %c0_11 = arith.constant 0 : index
      %12 = vector.load %arg7[%c0_10, %c0_11] : memref<64x512xf32, #tpu.memory_space<vmem>>, vector<64x512xf32>
      %c0_12 = arith.constant 0 : index
      %c0_13 = arith.constant 0 : index
      %13 = vector.load %arg5[%c0_12, %c0_13] : memref<1x512xf32, #tpu.memory_space<vmem>>, vector<1x512xf32>
      %14 = vector.broadcast %13 : vector<1x512xf32> to vector<64x512xf32>
      %15 = arith.addf %12, %14 : vector<64x512xf32>
      %16 = arith.truncf %15 : vector<64x512xf32> to vector<64x512xbf16>
      %c0_14 = arith.constant 0 : index
      %c0_15 = arith.constant 0 : index
      %17 = vector.load %arg6[%c0_14, %c0_15] : memref<64x512xbf16, #tpu.memory_space<vmem>>, vector<64x512xbf16>
      tpu.vector_store %arg6[%c0_14, %c0_15], %16 {strides = array<i32>} : memref<64x512xbf16, #tpu.memory_space<vmem>>, vector<64x512xbf16>,
    } else {
    }
    return
  }
  func.func @transform_0(%arg0: i32, %arg1: i32, %arg2: i32) -> (i32, i32) {
    %c0_i32 = arith.constant 0 : i32
    return %arg0, %arg2 : i32, i32
  }
  func.func @transform_1(%arg0: i32, %arg1: i32, %arg2: i32) -> (i32, i32) {
    %c0_i32 = arith.constant 0 : i32
    return %arg2, %arg1 : i32, i32
  }
  func.func @transform_2(%arg0: i32, %arg1: i32, %arg2: i32) -> (i32, i32) {
    %c0_i32 = arith.constant 0 : i32
    %c0_i32_0 = arith.constant 0 : i32
    return %c0_i32, %arg1 : i32, i32
  }
  func.func @transform_3(%arg0: i32, %arg1: i32, %arg2: i32) -> (i32, i32) {
    %c0_i32 = arith.constant 0 : i32
    return %arg0, %arg1 : i32, i32
  }
}

module attributes {stable_mosaic.version = 11 : i64} {
  func.func @kernel(%arg0: i32, %arg1: memref<8x8x512xbf16, #tpu.memory_space<vmem>>, %arg2: memref<128x512xbf16, #tpu.memory_space<vmem>>, %arg3: memref<256x512xbf16, #tpu.memory_space<vmem>>, %arg4: memref<1x512xf32, #tpu.memory_space<vmem>>, %arg5: memref<8x8x128xbf16, #tpu.memory_space<vmem>>, %arg6: memref<2x8x128xf32, #tpu.memory_space<vmem>>, %arg7: memref<2x8x128xf32, #tpu.memory_space<vmem>>) attributes {dimension_semantics = [#tpu.dimension_semantics<arbitrary>], iteration_bounds = array<i64: 1>, scalar_prefetch = 0 : i64, scratch_operands = 2 : i64, tpu.core_type = #tpu.core_type<tc>, window_params = [{transform_indices = @transform_0, window_bounds = array<i64: 8, 8, 512>}, {pipeline_mode = #tpu.pipeline_mode<synchronous>, transform_indices = @transform_1, window_bounds = array<i64: 128, 512>}, {pipeline_mode = #tpu.pipeline_mode<synchronous>, transform_indices = @transform_2, window_bounds = array<i64: 256, 512>}, {pipeline_mode = #tpu.pipeline_mode<synchronous>, transform_indices = @transform_3, window_bounds = array<i64: 1, 512>}, {transform_indices = @transform_4, window_bounds = array<i64: 8, 8, 128>}]} {
    %c0_i32 = arith.constant 0 : i32
    %0 = arith.cmpi eq, %arg0, %c0_i32 : i32
    %1 = arith.extui %0 : i1 to i32
    %c0_i32_0 = arith.constant 0 : i32
    %2 = arith.cmpi ne, %1, %c0_i32_0 : i32
    scf.if %2 {
      %cst_312 = arith.constant 0.000000e+00 : f32
      %563 = vector.broadcast %cst_312 : f32 to vector<2x8x128xf32>
      %c0_313 = arith.constant 0 : index
      %c0_314 = arith.constant 0 : index
      %c0_315 = arith.constant 0 : index
      %564 = vector.load %arg6[%c0_313, %c0_314, %c0_315] : memref<2x8x128xf32, #tpu.memory_space<vmem>>, vector<2x8x128xf32>
      tpu.vector_store %arg6[%c0_313, %c0_314, %c0_315], %563 {strides = array<i32>} : memref<2x8x128xf32, #tpu.memory_space<vmem>>, vector<2x8x128xf32>,
      %cst_316 = arith.constant 0.000000e+00 : f32
      %565 = vector.broadcast %cst_316 : f32 to vector<2x8x128xf32>
      %c0_317 = arith.constant 0 : index
      %c0_318 = arith.constant 0 : index
      %c0_319 = arith.constant 0 : index
      %566 = vector.load %arg7[%c0_317, %c0_318, %c0_319] : memref<2x8x128xf32, #tpu.memory_space<vmem>>, vector<2x8x128xf32>
      tpu.vector_store %arg7[%c0_317, %c0_318, %c0_319], %565 {strides = array<i32>} : memref<2x8x128xf32, #tpu.memory_space<vmem>>, vector<2x8x128xf32>,
    } else {
    }
    %c0 = arith.constant 0 : index
    %c0_1 = arith.constant 0 : index
    %c0_2 = arith.constant 0 : index
    %3 = vector.load %arg1[%c0, %c0_1, %c0_2] : memref<8x8x512xbf16, #tpu.memory_space<vmem>>, vector<1x8x512xbf16>
    %4 = vector.shape_cast %3 : vector<1x8x512xbf16> to vector<8x512xbf16>
    %5 = arith.extf %4 : vector<8x512xbf16> to vector<8x512xf32>
    %c0_3 = arith.constant 0 : index
    %c0_4 = arith.constant 0 : index
    %c0_5 = arith.constant 0 : index
    %6 = vector.load %arg6[%c0_3, %c0_4, %c0_5] : memref<2x8x128xf32, #tpu.memory_space<vmem>>, vector<1x8x128xf32>
    %7 = vector.shape_cast %6 : vector<1x8x128xf32> to vector<8x128xf32>
    %8 = arith.truncf %7 : vector<8x128xf32> to vector<8x128xbf16>
    %c0_6 = arith.constant 0 : index
    %c0_7 = arith.constant 0 : index
    %9 = vector.load %arg2[%c0_6, %c0_7] : memref<128x512xbf16, #tpu.memory_space<vmem>>, vector<128x512xbf16>
    %cst = arith.constant dense<0.000000e+00> : vector<8x512xf32>
    %10 = tpu.matmul %8, %9, %cst {dimension_numbers = #tpu.dot_dimension_numbers<[1], [0], [0], [1], [0, 0, 1, 1], [], []>} : vector<8x128xbf16>, vector<128x512xbf16>, vector<8x512xf32> -> vector<8x512xf32>
    %11 = arith.addf %5, %10 : vector<8x512xf32>
    %c0_8 = arith.constant 0 : index
    %c0_9 = arith.constant 0 : index
    %c0_10 = arith.constant 0 : index
    %12 = vector.load %arg7[%c0_8, %c0_9, %c0_10] : memref<2x8x128xf32, #tpu.memory_space<vmem>>, vector<1x8x128xf32>
    %13 = vector.shape_cast %12 : vector<1x8x128xf32> to vector<8x128xf32>
    %14 = vector.extract_strided_slice %11 {offsets = [0, 0], sizes = [8, 384], strides = [1, 1]} : vector<8x512xf32> to vector<8x384xf32>
    %15 = arith.negf %14 : vector<8x384xf32>
    %16 = math.exp %15 : vector<8x384xf32>
    %cst_11 = arith.constant 1.000000e+00 : f32
    %17 = vector.broadcast %cst_11 : f32 to vector<8x384xf32>
    %18 = arith.addf %17, %16 : vector<8x384xf32>
    %19 = arith.divf %17, %18 : vector<8x384xf32>
    %20 = vector.extract_strided_slice %19 {offsets = [0, 0], sizes = [8, 128], strides = [1, 1]} : vector<8x384xf32> to vector<8x128xf32>
    %21 = vector.extract_strided_slice %19 {offsets = [0, 128], sizes = [8, 128], strides = [1, 1]} : vector<8x384xf32> to vector<8x128xf32>
    %22 = vector.extract_strided_slice %19 {offsets = [0, 256], sizes = [8, 128], strides = [1, 1]} : vector<8x384xf32> to vector<8x128xf32>
    %23 = vector.extract_strided_slice %11 {offsets = [0, 384], sizes = [8, 128], strides = [1, 1]} : vector<8x512xf32> to vector<8x128xf32>
    %24 = math.tanh %23 : vector<8x128xf32>
    %25 = arith.mulf %21, %13 : vector<8x128xf32>
    %26 = arith.mulf %20, %24 : vector<8x128xf32>
    %27 = arith.addf %25, %26 : vector<8x128xf32>
    %28 = math.tanh %27 : vector<8x128xf32>
    %29 = arith.mulf %22, %28 : vector<8x128xf32>
    %c0_12 = arith.constant 0 : index
    %c0_13 = arith.constant 0 : index
    %c0_14 = arith.constant 0 : index
    %30 = vector.load %arg6[%c0_12, %c0_13, %c0_14] : memref<2x8x128xf32, #tpu.memory_space<vmem>>, vector<1x8x128xf32>
    %31 = vector.shape_cast %30 : vector<1x8x128xf32> to vector<8x128xf32>
    %32 = vector.shape_cast %29 : vector<8x128xf32> to vector<1x8x128xf32>
    tpu.vector_store %arg6[%c0_12, %c0_13, %c0_14], %32 {strides = array<i32>} : memref<2x8x128xf32, #tpu.memory_space<vmem>>, vector<1x8x128xf32>,
    %c0_15 = arith.constant 0 : index
    %c0_16 = arith.constant 0 : index
    %c0_17 = arith.constant 0 : index
    %33 = vector.load %arg7[%c0_15, %c0_16, %c0_17] : memref<2x8x128xf32, #tpu.memory_space<vmem>>, vector<1x8x128xf32>
    %34 = vector.shape_cast %33 : vector<1x8x128xf32> to vector<8x128xf32>
    %35 = vector.shape_cast %27 : vector<8x128xf32> to vector<1x8x128xf32>
    tpu.vector_store %arg7[%c0_15, %c0_16, %c0_17], %35 {strides = array<i32>} : memref<2x8x128xf32, #tpu.memory_space<vmem>>, vector<1x8x128xf32>,
    %c1 = arith.constant 1 : index
    %c0_18 = arith.constant 0 : index
    %c0_19 = arith.constant 0 : index
    %36 = vector.load %arg6[%c1, %c0_18, %c0_19] : memref<2x8x128xf32, #tpu.memory_space<vmem>>, vector<1x8x128xf32>
    %37 = vector.shape_cast %36 : vector<1x8x128xf32> to vector<8x128xf32>
    %38 = tpu.concatenate %29, %37 in 1 : vector<8x128xf32>, vector<8x128xf32> -> vector<8x256xf32>
    %39 = arith.truncf %38 : vector<8x256xf32> to vector<8x256xbf16>
    %c0_20 = arith.constant 0 : index
    %c0_21 = arith.constant 0 : index
    %40 = vector.load %arg3[%c0_20, %c0_21] : memref<256x512xbf16, #tpu.memory_space<vmem>>, vector<256x512xbf16>
    %cst_22 = arith.constant dense<0.000000e+00> : vector<8x512xf32>
    %41 = tpu.matmul %39, %40, %cst_22 {dimension_numbers = #tpu.dot_dimension_numbers<[1], [0], [0], [1], [0, 0, 1, 1], [], []>} : vector<8x256xbf16>, vector<256x512xbf16>, vector<8x512xf32> -> vector<8x512xf32>
    %c0_23 = arith.constant 0 : index
    %c0_24 = arith.constant 0 : index
    %42 = vector.load %arg4[%c0_23, %c0_24] : memref<1x512xf32, #tpu.memory_space<vmem>>, vector<1x512xf32>
    %43 = vector.broadcast %42 : vector<1x512xf32> to vector<8x512xf32>
    %44 = arith.addf %41, %43 : vector<8x512xf32>
    %c1_25 = arith.constant 1 : index
    %c0_26 = arith.constant 0 : index
    %c0_27 = arith.constant 0 : index
    %45 = vector.load %arg7[%c1_25, %c0_26, %c0_27] : memref<2x8x128xf32, #tpu.memory_space<vmem>>, vector<1x8x128xf32>
    %46 = vector.shape_cast %45 : vector<1x8x128xf32> to vector<8x128xf32>
    %47 = vector.extract_strided_slice %44 {offsets = [0, 0], sizes = [8, 384], strides = [1, 1]} : vector<8x512xf32> to vector<8x384xf32>
    %48 = arith.negf %47 : vector<8x384xf32>
    %49 = math.exp %48 : vector<8x384xf32>
    %cst_28 = arith.constant 1.000000e+00 : f32
    %50 = vector.broadcast %cst_28 : f32 to vector<8x384xf32>
    %51 = arith.addf %50, %49 : vector<8x384xf32>
    %52 = arith.divf %50, %51 : vector<8x384xf32>
    %53 = vector.extract_strided_slice %52 {offsets = [0, 0], sizes = [8, 128], strides = [1, 1]} : vector<8x384xf32> to vector<8x128xf32>
    %54 = vector.extract_strided_slice %52 {offsets = [0, 128], sizes = [8, 128], strides = [1, 1]} : vector<8x384xf32> to vector<8x128xf32>
    %55 = vector.extract_strided_slice %52 {offsets = [0, 256], sizes = [8, 128], strides = [1, 1]} : vector<8x384xf32> to vector<8x128xf32>
    %56 = vector.extract_strided_slice %44 {offsets = [0, 384], sizes = [8, 128], strides = [1, 1]} : vector<8x512xf32> to vector<8x128xf32>
    %57 = math.tanh %56 : vector<8x128xf32>
    %58 = arith.mulf %54, %46 : vector<8x128xf32>
    %59 = arith.mulf %53, %57 : vector<8x128xf32>
    %60 = arith.addf %58, %59 : vector<8x128xf32>
    %61 = math.tanh %60 : vector<8x128xf32>
    %62 = arith.mulf %55, %61 : vector<8x128xf32>
    %c1_29 = arith.constant 1 : index
    %c0_30 = arith.constant 0 : index
    %c0_31 = arith.constant 0 : index
    %63 = vector.load %arg6[%c1_29, %c0_30, %c0_31] : memref<2x8x128xf32, #tpu.memory_space<vmem>>, vector<1x8x128xf32>
    %64 = vector.shape_cast %63 : vector<1x8x128xf32> to vector<8x128xf32>
    %65 = vector.shape_cast %62 : vector<8x128xf32> to vector<1x8x128xf32>
    tpu.vector_store %arg6[%c1_29, %c0_30, %c0_31], %65 {strides = array<i32>} : memref<2x8x128xf32, #tpu.memory_space<vmem>>, vector<1x8x128xf32>,
    %c1_32 = arith.constant 1 : index
    %c0_33 = arith.constant 0 : index
    %c0_34 = arith.constant 0 : index
    %66 = vector.load %arg7[%c1_32, %c0_33, %c0_34] : memref<2x8x128xf32, #tpu.memory_space<vmem>>, vector<1x8x128xf32>
    %67 = vector.shape_cast %66 : vector<1x8x128xf32> to vector<8x128xf32>
    %68 = vector.shape_cast %60 : vector<8x128xf32> to vector<1x8x128xf32>
    tpu.vector_store %arg7[%c1_32, %c0_33, %c0_34], %68 {strides = array<i32>} : memref<2x8x128xf32, #tpu.memory_space<vmem>>, vector<1x8x128xf32>,
    %69 = arith.truncf %62 : vector<8x128xf32> to vector<8x128xbf16>
    %c0_35 = arith.constant 0 : index
    %c0_36 = arith.constant 0 : index
    %c0_37 = arith.constant 0 : index
    %70 = vector.load %arg5[%c0_35, %c0_36, %c0_37] : memref<8x8x128xbf16, #tpu.memory_space<vmem>>, vector<8x1x128xbf16>
    %71 = vector.shape_cast %70 : vector<8x1x128xbf16> to vector<8x128xbf16>
    %72 = vector.shape_cast %69 : vector<8x128xbf16> to vector<8x1x128xbf16>
    tpu.vector_store %arg5[%c0_35, %c0_36, %c0_37], %72 {strides = array<i32>} : memref<8x8x128xbf16, #tpu.memory_space<vmem>>, vector<8x1x128xbf16>,
    %c1_38 = arith.constant 1 : index
    %c0_39 = arith.constant 0 : index
    %c0_40 = arith.constant 0 : index
    %73 = vector.load %arg1[%c1_38, %c0_39, %c0_40] : memref<8x8x512xbf16, #tpu.memory_space<vmem>>, vector<1x8x512xbf16>
    %74 = vector.shape_cast %73 : vector<1x8x512xbf16> to vector<8x512xbf16>
    %75 = arith.extf %74 : vector<8x512xbf16> to vector<8x512xf32>
    %c0_41 = arith.constant 0 : index
    %c0_42 = arith.constant 0 : index
    %c0_43 = arith.constant 0 : index
    %76 = vector.load %arg6[%c0_41, %c0_42, %c0_43] : memref<2x8x128xf32, #tpu.memory_space<vmem>>, vector<1x8x128xf32>
    %77 = vector.shape_cast %76 : vector<1x8x128xf32> to vector<8x128xf32>
    %78 = arith.truncf %77 : vector<8x128xf32> to vector<8x128xbf16>
    %c0_44 = arith.constant 0 : index
    %c0_45 = arith.constant 0 : index
    %79 = vector.load %arg2[%c0_44, %c0_45] : memref<128x512xbf16, #tpu.memory_space<vmem>>, vector<128x512xbf16>
    %cst_46 = arith.constant dense<0.000000e+00> : vector<8x512xf32>
    %80 = tpu.matmul %78, %79, %cst_46 {dimension_numbers = #tpu.dot_dimension_numbers<[1], [0], [0], [1], [0, 0, 1, 1], [], []>} : vector<8x128xbf16>, vector<128x512xbf16>, vector<8x512xf32> -> vector<8x512xf32>
    %81 = arith.addf %75, %80 : vector<8x512xf32>
    %c0_47 = arith.constant 0 : index
    %c0_48 = arith.constant 0 : index
    %c0_49 = arith.constant 0 : index
    %82 = vector.load %arg7[%c0_47, %c0_48, %c0_49] : memref<2x8x128xf32, #tpu.memory_space<vmem>>, vector<1x8x128xf32>
    %83 = vector.shape_cast %82 : vector<1x8x128xf32> to vector<8x128xf32>
    %84 = vector.extract_strided_slice %81 {offsets = [0, 0], sizes = [8, 384], strides = [1, 1]} : vector<8x512xf32> to vector<8x384xf32>
    %85 = arith.negf %84 : vector<8x384xf32>
    %86 = math.exp %85 : vector<8x384xf32>
    %cst_50 = arith.constant 1.000000e+00 : f32
    %87 = vector.broadcast %cst_50 : f32 to vector<8x384xf32>
    %88 = arith.addf %87, %86 : vector<8x384xf32>
    %89 = arith.divf %87, %88 : vector<8x384xf32>
    %90 = vector.extract_strided_slice %89 {offsets = [0, 0], sizes = [8, 128], strides = [1, 1]} : vector<8x384xf32> to vector<8x128xf32>
    %91 = vector.extract_strided_slice %89 {offsets = [0, 128], sizes = [8, 128], strides = [1, 1]} : vector<8x384xf32> to vector<8x128xf32>
    %92 = vector.extract_strided_slice %89 {offsets = [0, 256], sizes = [8, 128], strides = [1, 1]} : vector<8x384xf32> to vector<8x128xf32>
    %93 = vector.extract_strided_slice %81 {offsets = [0, 384], sizes = [8, 128], strides = [1, 1]} : vector<8x512xf32> to vector<8x128xf32>
    %94 = math.tanh %93 : vector<8x128xf32>
    %95 = arith.mulf %91, %83 : vector<8x128xf32>
    %96 = arith.mulf %90, %94 : vector<8x128xf32>
    %97 = arith.addf %95, %96 : vector<8x128xf32>
    %98 = math.tanh %97 : vector<8x128xf32>
    %99 = arith.mulf %92, %98 : vector<8x128xf32>
    %c0_51 = arith.constant 0 : index
    %c0_52 = arith.constant 0 : index
    %c0_53 = arith.constant 0 : index
    %100 = vector.load %arg6[%c0_51, %c0_52, %c0_53] : memref<2x8x128xf32, #tpu.memory_space<vmem>>, vector<1x8x128xf32>
    %101 = vector.shape_cast %100 : vector<1x8x128xf32> to vector<8x128xf32>
    %102 = vector.shape_cast %99 : vector<8x128xf32> to vector<1x8x128xf32>
    tpu.vector_store %arg6[%c0_51, %c0_52, %c0_53], %102 {strides = array<i32>} : memref<2x8x128xf32, #tpu.memory_space<vmem>>, vector<1x8x128xf32>,
    %c0_54 = arith.constant 0 : index
    %c0_55 = arith.constant 0 : index
    %c0_56 = arith.constant 0 : index
    %103 = vector.load %arg7[%c0_54, %c0_55, %c0_56] : memref<2x8x128xf32, #tpu.memory_space<vmem>>, vector<1x8x128xf32>
    %104 = vector.shape_cast %103 : vector<1x8x128xf32> to vector<8x128xf32>
    %105 = vector.shape_cast %97 : vector<8x128xf32> to vector<1x8x128xf32>
    tpu.vector_store %arg7[%c0_54, %c0_55, %c0_56], %105 {strides = array<i32>} : memref<2x8x128xf32, #tpu.memory_space<vmem>>, vector<1x8x128xf32>,
    %c1_57 = arith.constant 1 : index
    %c0_58 = arith.constant 0 : index
    %c0_59 = arith.constant 0 : index
    %106 = vector.load %arg6[%c1_57, %c0_58, %c0_59] : memref<2x8x128xf32, #tpu.memory_space<vmem>>, vector<1x8x128xf32>
    %107 = vector.shape_cast %106 : vector<1x8x128xf32> to vector<8x128xf32>
    %108 = tpu.concatenate %99, %107 in 1 : vector<8x128xf32>, vector<8x128xf32> -> vector<8x256xf32>
    %109 = arith.truncf %108 : vector<8x256xf32> to vector<8x256xbf16>
    %c0_60 = arith.constant 0 : index
    %c0_61 = arith.constant 0 : index
    %110 = vector.load %arg3[%c0_60, %c0_61] : memref<256x512xbf16, #tpu.memory_space<vmem>>, vector<256x512xbf16>
    %cst_62 = arith.constant dense<0.000000e+00> : vector<8x512xf32>
    %111 = tpu.matmul %109, %110, %cst_62 {dimension_numbers = #tpu.dot_dimension_numbers<[1], [0], [0], [1], [0, 0, 1, 1], [], []>} : vector<8x256xbf16>, vector<256x512xbf16>, vector<8x512xf32> -> vector<8x512xf32>
    %c0_63 = arith.constant 0 : index
    %c0_64 = arith.constant 0 : index
    %112 = vector.load %arg4[%c0_63, %c0_64] : memref<1x512xf32, #tpu.memory_space<vmem>>, vector<1x512xf32>
    %113 = vector.broadcast %112 : vector<1x512xf32> to vector<8x512xf32>
    %114 = arith.addf %111, %113 : vector<8x512xf32>
    %c1_65 = arith.constant 1 : index
    %c0_66 = arith.constant 0 : index
    %c0_67 = arith.constant 0 : index
    %115 = vector.load %arg7[%c1_65, %c0_66, %c0_67] : memref<2x8x128xf32, #tpu.memory_space<vmem>>, vector<1x8x128xf32>
    %116 = vector.shape_cast %115 : vector<1x8x128xf32> to vector<8x128xf32>
    %117 = vector.extract_strided_slice %114 {offsets = [0, 0], sizes = [8, 384], strides = [1, 1]} : vector<8x512xf32> to vector<8x384xf32>
    %118 = arith.negf %117 : vector<8x384xf32>
    %119 = math.exp %118 : vector<8x384xf32>
    %cst_68 = arith.constant 1.000000e+00 : f32
    %120 = vector.broadcast %cst_68 : f32 to vector<8x384xf32>
    %121 = arith.addf %120, %119 : vector<8x384xf32>
    %122 = arith.divf %120, %121 : vector<8x384xf32>
    %123 = vector.extract_strided_slice %122 {offsets = [0, 0], sizes = [8, 128], strides = [1, 1]} : vector<8x384xf32> to vector<8x128xf32>
    %124 = vector.extract_strided_slice %122 {offsets = [0, 128], sizes = [8, 128], strides = [1, 1]} : vector<8x384xf32> to vector<8x128xf32>
    %125 = vector.extract_strided_slice %122 {offsets = [0, 256], sizes = [8, 128], strides = [1, 1]} : vector<8x384xf32> to vector<8x128xf32>
    %126 = vector.extract_strided_slice %114 {offsets = [0, 384], sizes = [8, 128], strides = [1, 1]} : vector<8x512xf32> to vector<8x128xf32>
    %127 = math.tanh %126 : vector<8x128xf32>
    %128 = arith.mulf %124, %116 : vector<8x128xf32>
    %129 = arith.mulf %123, %127 : vector<8x128xf32>
    %130 = arith.addf %128, %129 : vector<8x128xf32>
    %131 = math.tanh %130 : vector<8x128xf32>
    %132 = arith.mulf %125, %131 : vector<8x128xf32>
    %c1_69 = arith.constant 1 : index
    %c0_70 = arith.constant 0 : index
    %c0_71 = arith.constant 0 : index
    %133 = vector.load %arg6[%c1_69, %c0_70, %c0_71] : memref<2x8x128xf32, #tpu.memory_space<vmem>>, vector<1x8x128xf32>
    %134 = vector.shape_cast %133 : vector<1x8x128xf32> to vector<8x128xf32>
    %135 = vector.shape_cast %132 : vector<8x128xf32> to vector<1x8x128xf32>
    tpu.vector_store %arg6[%c1_69, %c0_70, %c0_71], %135 {strides = array<i32>} : memref<2x8x128xf32, #tpu.memory_space<vmem>>, vector<1x8x128xf32>,
    %c1_72 = arith.constant 1 : index
    %c0_73 = arith.constant 0 : index
    %c0_74 = arith.constant 0 : index
    %136 = vector.load %arg7[%c1_72, %c0_73, %c0_74] : memref<2x8x128xf32, #tpu.memory_space<vmem>>, vector<1x8x128xf32>
    %137 = vector.shape_cast %136 : vector<1x8x128xf32> to vector<8x128xf32>
    %138 = vector.shape_cast %130 : vector<8x128xf32> to vector<1x8x128xf32>
    tpu.vector_store %arg7[%c1_72, %c0_73, %c0_74], %138 {strides = array<i32>} : memref<2x8x128xf32, #tpu.memory_space<vmem>>, vector<1x8x128xf32>,
    %139 = arith.truncf %132 : vector<8x128xf32> to vector<8x128xbf16>
    %c0_75 = arith.constant 0 : index
    %c1_76 = arith.constant 1 : index
    %c0_77 = arith.constant 0 : index
    %140 = vector.load %arg5[%c0_75, %c1_76, %c0_77] : memref<8x8x128xbf16, #tpu.memory_space<vmem>>, vector<8x1x128xbf16>
    %141 = vector.shape_cast %140 : vector<8x1x128xbf16> to vector<8x128xbf16>
    %142 = vector.shape_cast %139 : vector<8x128xbf16> to vector<8x1x128xbf16>
    tpu.vector_store %arg5[%c0_75, %c1_76, %c0_77], %142 {strides = array<i32>} : memref<8x8x128xbf16, #tpu.memory_space<vmem>>, vector<8x1x128xbf16>,
    %c2 = arith.constant 2 : index
    %c0_78 = arith.constant 0 : index
    %c0_79 = arith.constant 0 : index
    %143 = vector.load %arg1[%c2, %c0_78, %c0_79] : memref<8x8x512xbf16, #tpu.memory_space<vmem>>, vector<1x8x512xbf16>
    %144 = vector.shape_cast %143 : vector<1x8x512xbf16> to vector<8x512xbf16>
    %145 = arith.extf %144 : vector<8x512xbf16> to vector<8x512xf32>
    %c0_80 = arith.constant 0 : index
    %c0_81 = arith.constant 0 : index
    %c0_82 = arith.constant 0 : index
    %146 = vector.load %arg6[%c0_80, %c0_81, %c0_82] : memref<2x8x128xf32, #tpu.memory_space<vmem>>, vector<1x8x128xf32>
    %147 = vector.shape_cast %146 : vector<1x8x128xf32> to vector<8x128xf32>
    %148 = arith.truncf %147 : vector<8x128xf32> to vector<8x128xbf16>
    %c0_83 = arith.constant 0 : index
    %c0_84 = arith.constant 0 : index
    %149 = vector.load %arg2[%c0_83, %c0_84] : memref<128x512xbf16, #tpu.memory_space<vmem>>, vector<128x512xbf16>
    %cst_85 = arith.constant dense<0.000000e+00> : vector<8x512xf32>
    %150 = tpu.matmul %148, %149, %cst_85 {dimension_numbers = #tpu.dot_dimension_numbers<[1], [0], [0], [1], [0, 0, 1, 1], [], []>} : vector<8x128xbf16>, vector<128x512xbf16>, vector<8x512xf32> -> vector<8x512xf32>
    %151 = arith.addf %145, %150 : vector<8x512xf32>
    %c0_86 = arith.constant 0 : index
    %c0_87 = arith.constant 0 : index
    %c0_88 = arith.constant 0 : index
    %152 = vector.load %arg7[%c0_86, %c0_87, %c0_88] : memref<2x8x128xf32, #tpu.memory_space<vmem>>, vector<1x8x128xf32>
    %153 = vector.shape_cast %152 : vector<1x8x128xf32> to vector<8x128xf32>
    %154 = vector.extract_strided_slice %151 {offsets = [0, 0], sizes = [8, 384], strides = [1, 1]} : vector<8x512xf32> to vector<8x384xf32>
    %155 = arith.negf %154 : vector<8x384xf32>
    %156 = math.exp %155 : vector<8x384xf32>
    %cst_89 = arith.constant 1.000000e+00 : f32
    %157 = vector.broadcast %cst_89 : f32 to vector<8x384xf32>
    %158 = arith.addf %157, %156 : vector<8x384xf32>
    %159 = arith.divf %157, %158 : vector<8x384xf32>
    %160 = vector.extract_strided_slice %159 {offsets = [0, 0], sizes = [8, 128], strides = [1, 1]} : vector<8x384xf32> to vector<8x128xf32>
    %161 = vector.extract_strided_slice %159 {offsets = [0, 128], sizes = [8, 128], strides = [1, 1]} : vector<8x384xf32> to vector<8x128xf32>
    %162 = vector.extract_strided_slice %159 {offsets = [0, 256], sizes = [8, 128], strides = [1, 1]} : vector<8x384xf32> to vector<8x128xf32>
    %163 = vector.extract_strided_slice %151 {offsets = [0, 384], sizes = [8, 128], strides = [1, 1]} : vector<8x512xf32> to vector<8x128xf32>
    %164 = math.tanh %163 : vector<8x128xf32>
    %165 = arith.mulf %161, %153 : vector<8x128xf32>
    %166 = arith.mulf %160, %164 : vector<8x128xf32>
    %167 = arith.addf %165, %166 : vector<8x128xf32>
    %168 = math.tanh %167 : vector<8x128xf32>
    %169 = arith.mulf %162, %168 : vector<8x128xf32>
    %c0_90 = arith.constant 0 : index
    %c0_91 = arith.constant 0 : index
    %c0_92 = arith.constant 0 : index
    %170 = vector.load %arg6[%c0_90, %c0_91, %c0_92] : memref<2x8x128xf32, #tpu.memory_space<vmem>>, vector<1x8x128xf32>
    %171 = vector.shape_cast %170 : vector<1x8x128xf32> to vector<8x128xf32>
    %172 = vector.shape_cast %169 : vector<8x128xf32> to vector<1x8x128xf32>
    tpu.vector_store %arg6[%c0_90, %c0_91, %c0_92], %172 {strides = array<i32>} : memref<2x8x128xf32, #tpu.memory_space<vmem>>, vector<1x8x128xf32>,
    %c0_93 = arith.constant 0 : index
    %c0_94 = arith.constant 0 : index
    %c0_95 = arith.constant 0 : index
    %173 = vector.load %arg7[%c0_93, %c0_94, %c0_95] : memref<2x8x128xf32, #tpu.memory_space<vmem>>, vector<1x8x128xf32>
    %174 = vector.shape_cast %173 : vector<1x8x128xf32> to vector<8x128xf32>
    %175 = vector.shape_cast %167 : vector<8x128xf32> to vector<1x8x128xf32>
    tpu.vector_store %arg7[%c0_93, %c0_94, %c0_95], %175 {strides = array<i32>} : memref<2x8x128xf32, #tpu.memory_space<vmem>>, vector<1x8x128xf32>,
    %c1_96 = arith.constant 1 : index
    %c0_97 = arith.constant 0 : index
    %c0_98 = arith.constant 0 : index
    %176 = vector.load %arg6[%c1_96, %c0_97, %c0_98] : memref<2x8x128xf32, #tpu.memory_space<vmem>>, vector<1x8x128xf32>
    %177 = vector.shape_cast %176 : vector<1x8x128xf32> to vector<8x128xf32>
    %178 = tpu.concatenate %169, %177 in 1 : vector<8x128xf32>, vector<8x128xf32> -> vector<8x256xf32>
    %179 = arith.truncf %178 : vector<8x256xf32> to vector<8x256xbf16>
    %c0_99 = arith.constant 0 : index
    %c0_100 = arith.constant 0 : index
    %180 = vector.load %arg3[%c0_99, %c0_100] : memref<256x512xbf16, #tpu.memory_space<vmem>>, vector<256x512xbf16>
    %cst_101 = arith.constant dense<0.000000e+00> : vector<8x512xf32>
    %181 = tpu.matmul %179, %180, %cst_101 {dimension_numbers = #tpu.dot_dimension_numbers<[1], [0], [0], [1], [0, 0, 1, 1], [], []>} : vector<8x256xbf16>, vector<256x512xbf16>, vector<8x512xf32> -> vector<8x512xf32>
    %c0_102 = arith.constant 0 : index
    %c0_103 = arith.constant 0 : index
    %182 = vector.load %arg4[%c0_102, %c0_103] : memref<1x512xf32, #tpu.memory_space<vmem>>, vector<1x512xf32>
    %183 = vector.broadcast %182 : vector<1x512xf32> to vector<8x512xf32>
    %184 = arith.addf %181, %183 : vector<8x512xf32>
    %c1_104 = arith.constant 1 : index
    %c0_105 = arith.constant 0 : index
    %c0_106 = arith.constant 0 : index
    %185 = vector.load %arg7[%c1_104, %c0_105, %c0_106] : memref<2x8x128xf32, #tpu.memory_space<vmem>>, vector<1x8x128xf32>
    %186 = vector.shape_cast %185 : vector<1x8x128xf32> to vector<8x128xf32>
    %187 = vector.extract_strided_slice %184 {offsets = [0, 0], sizes = [8, 384], strides = [1, 1]} : vector<8x512xf32> to vector<8x384xf32>
    %188 = arith.negf %187 : vector<8x384xf32>
    %189 = math.exp %188 : vector<8x384xf32>
    %cst_107 = arith.constant 1.000000e+00 : f32
    %190 = vector.broadcast %cst_107 : f32 to vector<8x384xf32>
    %191 = arith.addf %190, %189 : vector<8x384xf32>
    %192 = arith.divf %190, %191 : vector<8x384xf32>
    %193 = vector.extract_strided_slice %192 {offsets = [0, 0], sizes = [8, 128], strides = [1, 1]} : vector<8x384xf32> to vector<8x128xf32>
    %194 = vector.extract_strided_slice %192 {offsets = [0, 128], sizes = [8, 128], strides = [1, 1]} : vector<8x384xf32> to vector<8x128xf32>
    %195 = vector.extract_strided_slice %192 {offsets = [0, 256], sizes = [8, 128], strides = [1, 1]} : vector<8x384xf32> to vector<8x128xf32>
    %196 = vector.extract_strided_slice %184 {offsets = [0, 384], sizes = [8, 128], strides = [1, 1]} : vector<8x512xf32> to vector<8x128xf32>
    %197 = math.tanh %196 : vector<8x128xf32>
    %198 = arith.mulf %194, %186 : vector<8x128xf32>
    %199 = arith.mulf %193, %197 : vector<8x128xf32>
    %200 = arith.addf %198, %199 : vector<8x128xf32>
    %201 = math.tanh %200 : vector<8x128xf32>
    %202 = arith.mulf %195, %201 : vector<8x128xf32>
    %c1_108 = arith.constant 1 : index
    %c0_109 = arith.constant 0 : index
    %c0_110 = arith.constant 0 : index
    %203 = vector.load %arg6[%c1_108, %c0_109, %c0_110] : memref<2x8x128xf32, #tpu.memory_space<vmem>>, vector<1x8x128xf32>
    %204 = vector.shape_cast %203 : vector<1x8x128xf32> to vector<8x128xf32>
    %205 = vector.shape_cast %202 : vector<8x128xf32> to vector<1x8x128xf32>
    tpu.vector_store %arg6[%c1_108, %c0_109, %c0_110], %205 {strides = array<i32>} : memref<2x8x128xf32, #tpu.memory_space<vmem>>, vector<1x8x128xf32>,
    %c1_111 = arith.constant 1 : index
    %c0_112 = arith.constant 0 : index
    %c0_113 = arith.constant 0 : index
    %206 = vector.load %arg7[%c1_111, %c0_112, %c0_113] : memref<2x8x128xf32, #tpu.memory_space<vmem>>, vector<1x8x128xf32>
    %207 = vector.shape_cast %206 : vector<1x8x128xf32> to vector<8x128xf32>
    %208 = vector.shape_cast %200 : vector<8x128xf32> to vector<1x8x128xf32>
    tpu.vector_store %arg7[%c1_111, %c0_112, %c0_113], %208 {strides = array<i32>} : memref<2x8x128xf32, #tpu.memory_space<vmem>>, vector<1x8x128xf32>,
    %209 = arith.truncf %202 : vector<8x128xf32> to vector<8x128xbf16>
    %c0_114 = arith.constant 0 : index
    %c2_115 = arith.constant 2 : index
    %c0_116 = arith.constant 0 : index
    %210 = vector.load %arg5[%c0_114, %c2_115, %c0_116] : memref<8x8x128xbf16, #tpu.memory_space<vmem>>, vector<8x1x128xbf16>
    %211 = vector.shape_cast %210 : vector<8x1x128xbf16> to vector<8x128xbf16>
    %212 = vector.shape_cast %209 : vector<8x128xbf16> to vector<8x1x128xbf16>
    tpu.vector_store %arg5[%c0_114, %c2_115, %c0_116], %212 {strides = array<i32>} : memref<8x8x128xbf16, #tpu.memory_space<vmem>>, vector<8x1x128xbf16>,
    %c3 = arith.constant 3 : index
    %c0_117 = arith.constant 0 : index
    %c0_118 = arith.constant 0 : index
    %213 = vector.load %arg1[%c3, %c0_117, %c0_118] : memref<8x8x512xbf16, #tpu.memory_space<vmem>>, vector<1x8x512xbf16>
    %214 = vector.shape_cast %213 : vector<1x8x512xbf16> to vector<8x512xbf16>
    %215 = arith.extf %214 : vector<8x512xbf16> to vector<8x512xf32>
    %c0_119 = arith.constant 0 : index
    %c0_120 = arith.constant 0 : index
    %c0_121 = arith.constant 0 : index
    %216 = vector.load %arg6[%c0_119, %c0_120, %c0_121] : memref<2x8x128xf32, #tpu.memory_space<vmem>>, vector<1x8x128xf32>
    %217 = vector.shape_cast %216 : vector<1x8x128xf32> to vector<8x128xf32>
    %218 = arith.truncf %217 : vector<8x128xf32> to vector<8x128xbf16>
    %c0_122 = arith.constant 0 : index
    %c0_123 = arith.constant 0 : index
    %219 = vector.load %arg2[%c0_122, %c0_123] : memref<128x512xbf16, #tpu.memory_space<vmem>>, vector<128x512xbf16>
    %cst_124 = arith.constant dense<0.000000e+00> : vector<8x512xf32>
    %220 = tpu.matmul %218, %219, %cst_124 {dimension_numbers = #tpu.dot_dimension_numbers<[1], [0], [0], [1], [0, 0, 1, 1], [], []>} : vector<8x128xbf16>, vector<128x512xbf16>, vector<8x512xf32> -> vector<8x512xf32>
    %221 = arith.addf %215, %220 : vector<8x512xf32>
    %c0_125 = arith.constant 0 : index
    %c0_126 = arith.constant 0 : index
    %c0_127 = arith.constant 0 : index
    %222 = vector.load %arg7[%c0_125, %c0_126, %c0_127] : memref<2x8x128xf32, #tpu.memory_space<vmem>>, vector<1x8x128xf32>
    %223 = vector.shape_cast %222 : vector<1x8x128xf32> to vector<8x128xf32>
    %224 = vector.extract_strided_slice %221 {offsets = [0, 0], sizes = [8, 384], strides = [1, 1]} : vector<8x512xf32> to vector<8x384xf32>
    %225 = arith.negf %224 : vector<8x384xf32>
    %226 = math.exp %225 : vector<8x384xf32>
    %cst_128 = arith.constant 1.000000e+00 : f32
    %227 = vector.broadcast %cst_128 : f32 to vector<8x384xf32>
    %228 = arith.addf %227, %226 : vector<8x384xf32>
    %229 = arith.divf %227, %228 : vector<8x384xf32>
    %230 = vector.extract_strided_slice %229 {offsets = [0, 0], sizes = [8, 128], strides = [1, 1]} : vector<8x384xf32> to vector<8x128xf32>
    %231 = vector.extract_strided_slice %229 {offsets = [0, 128], sizes = [8, 128], strides = [1, 1]} : vector<8x384xf32> to vector<8x128xf32>
    %232 = vector.extract_strided_slice %229 {offsets = [0, 256], sizes = [8, 128], strides = [1, 1]} : vector<8x384xf32> to vector<8x128xf32>
    %233 = vector.extract_strided_slice %221 {offsets = [0, 384], sizes = [8, 128], strides = [1, 1]} : vector<8x512xf32> to vector<8x128xf32>
    %234 = math.tanh %233 : vector<8x128xf32>
    %235 = arith.mulf %231, %223 : vector<8x128xf32>
    %236 = arith.mulf %230, %234 : vector<8x128xf32>
    %237 = arith.addf %235, %236 : vector<8x128xf32>
    %238 = math.tanh %237 : vector<8x128xf32>
    %239 = arith.mulf %232, %238 : vector<8x128xf32>
    %c0_129 = arith.constant 0 : index
    %c0_130 = arith.constant 0 : index
    %c0_131 = arith.constant 0 : index
    %240 = vector.load %arg6[%c0_129, %c0_130, %c0_131] : memref<2x8x128xf32, #tpu.memory_space<vmem>>, vector<1x8x128xf32>
    %241 = vector.shape_cast %240 : vector<1x8x128xf32> to vector<8x128xf32>
    %242 = vector.shape_cast %239 : vector<8x128xf32> to vector<1x8x128xf32>
    tpu.vector_store %arg6[%c0_129, %c0_130, %c0_131], %242 {strides = array<i32>} : memref<2x8x128xf32, #tpu.memory_space<vmem>>, vector<1x8x128xf32>,
    %c0_132 = arith.constant 0 : index
    %c0_133 = arith.constant 0 : index
    %c0_134 = arith.constant 0 : index
    %243 = vector.load %arg7[%c0_132, %c0_133, %c0_134] : memref<2x8x128xf32, #tpu.memory_space<vmem>>, vector<1x8x128xf32>
    %244 = vector.shape_cast %243 : vector<1x8x128xf32> to vector<8x128xf32>
    %245 = vector.shape_cast %237 : vector<8x128xf32> to vector<1x8x128xf32>
    tpu.vector_store %arg7[%c0_132, %c0_133, %c0_134], %245 {strides = array<i32>} : memref<2x8x128xf32, #tpu.memory_space<vmem>>, vector<1x8x128xf32>,
    %c1_135 = arith.constant 1 : index
    %c0_136 = arith.constant 0 : index
    %c0_137 = arith.constant 0 : index
    %246 = vector.load %arg6[%c1_135, %c0_136, %c0_137] : memref<2x8x128xf32, #tpu.memory_space<vmem>>, vector<1x8x128xf32>
    %247 = vector.shape_cast %246 : vector<1x8x128xf32> to vector<8x128xf32>
    %248 = tpu.concatenate %239, %247 in 1 : vector<8x128xf32>, vector<8x128xf32> -> vector<8x256xf32>
    %249 = arith.truncf %248 : vector<8x256xf32> to vector<8x256xbf16>
    %c0_138 = arith.constant 0 : index
    %c0_139 = arith.constant 0 : index
    %250 = vector.load %arg3[%c0_138, %c0_139] : memref<256x512xbf16, #tpu.memory_space<vmem>>, vector<256x512xbf16>
    %cst_140 = arith.constant dense<0.000000e+00> : vector<8x512xf32>
    %251 = tpu.matmul %249, %250, %cst_140 {dimension_numbers = #tpu.dot_dimension_numbers<[1], [0], [0], [1], [0, 0, 1, 1], [], []>} : vector<8x256xbf16>, vector<256x512xbf16>, vector<8x512xf32> -> vector<8x512xf32>
    %c0_141 = arith.constant 0 : index
    %c0_142 = arith.constant 0 : index
    %252 = vector.load %arg4[%c0_141, %c0_142] : memref<1x512xf32, #tpu.memory_space<vmem>>, vector<1x512xf32>
    %253 = vector.broadcast %252 : vector<1x512xf32> to vector<8x512xf32>
    %254 = arith.addf %251, %253 : vector<8x512xf32>
    %c1_143 = arith.constant 1 : index
    %c0_144 = arith.constant 0 : index
    %c0_145 = arith.constant 0 : index
    %255 = vector.load %arg7[%c1_143, %c0_144, %c0_145] : memref<2x8x128xf32, #tpu.memory_space<vmem>>, vector<1x8x128xf32>
    %256 = vector.shape_cast %255 : vector<1x8x128xf32> to vector<8x128xf32>
    %257 = vector.extract_strided_slice %254 {offsets = [0, 0], sizes = [8, 384], strides = [1, 1]} : vector<8x512xf32> to vector<8x384xf32>
    %258 = arith.negf %257 : vector<8x384xf32>
    %259 = math.exp %258 : vector<8x384xf32>
    %cst_146 = arith.constant 1.000000e+00 : f32
    %260 = vector.broadcast %cst_146 : f32 to vector<8x384xf32>
    %261 = arith.addf %260, %259 : vector<8x384xf32>
    %262 = arith.divf %260, %261 : vector<8x384xf32>
    %263 = vector.extract_strided_slice %262 {offsets = [0, 0], sizes = [8, 128], strides = [1, 1]} : vector<8x384xf32> to vector<8x128xf32>
    %264 = vector.extract_strided_slice %262 {offsets = [0, 128], sizes = [8, 128], strides = [1, 1]} : vector<8x384xf32> to vector<8x128xf32>
    %265 = vector.extract_strided_slice %262 {offsets = [0, 256], sizes = [8, 128], strides = [1, 1]} : vector<8x384xf32> to vector<8x128xf32>
    %266 = vector.extract_strided_slice %254 {offsets = [0, 384], sizes = [8, 128], strides = [1, 1]} : vector<8x512xf32> to vector<8x128xf32>
    %267 = math.tanh %266 : vector<8x128xf32>
    %268 = arith.mulf %264, %256 : vector<8x128xf32>
    %269 = arith.mulf %263, %267 : vector<8x128xf32>
    %270 = arith.addf %268, %269 : vector<8x128xf32>
    %271 = math.tanh %270 : vector<8x128xf32>
    %272 = arith.mulf %265, %271 : vector<8x128xf32>
    %c1_147 = arith.constant 1 : index
    %c0_148 = arith.constant 0 : index
    %c0_149 = arith.constant 0 : index
    %273 = vector.load %arg6[%c1_147, %c0_148, %c0_149] : memref<2x8x128xf32, #tpu.memory_space<vmem>>, vector<1x8x128xf32>
    %274 = vector.shape_cast %273 : vector<1x8x128xf32> to vector<8x128xf32>
    %275 = vector.shape_cast %272 : vector<8x128xf32> to vector<1x8x128xf32>
    tpu.vector_store %arg6[%c1_147, %c0_148, %c0_149], %275 {strides = array<i32>} : memref<2x8x128xf32, #tpu.memory_space<vmem>>, vector<1x8x128xf32>,
    %c1_150 = arith.constant 1 : index
    %c0_151 = arith.constant 0 : index
    %c0_152 = arith.constant 0 : index
    %276 = vector.load %arg7[%c1_150, %c0_151, %c0_152] : memref<2x8x128xf32, #tpu.memory_space<vmem>>, vector<1x8x128xf32>
    %277 = vector.shape_cast %276 : vector<1x8x128xf32> to vector<8x128xf32>
    %278 = vector.shape_cast %270 : vector<8x128xf32> to vector<1x8x128xf32>
    tpu.vector_store %arg7[%c1_150, %c0_151, %c0_152], %278 {strides = array<i32>} : memref<2x8x128xf32, #tpu.memory_space<vmem>>, vector<1x8x128xf32>,
    %279 = arith.truncf %272 : vector<8x128xf32> to vector<8x128xbf16>
    %c0_153 = arith.constant 0 : index
    %c3_154 = arith.constant 3 : index
    %c0_155 = arith.constant 0 : index
    %280 = vector.load %arg5[%c0_153, %c3_154, %c0_155] : memref<8x8x128xbf16, #tpu.memory_space<vmem>>, vector<8x1x128xbf16>
    %281 = vector.shape_cast %280 : vector<8x1x128xbf16> to vector<8x128xbf16>
    %282 = vector.shape_cast %279 : vector<8x128xbf16> to vector<8x1x128xbf16>
    tpu.vector_store %arg5[%c0_153, %c3_154, %c0_155], %282 {strides = array<i32>} : memref<8x8x128xbf16, #tpu.memory_space<vmem>>, vector<8x1x128xbf16>,
    %c4 = arith.constant 4 : index
    %c0_156 = arith.constant 0 : index
    %c0_157 = arith.constant 0 : index
    %283 = vector.load %arg1[%c4, %c0_156, %c0_157] : memref<8x8x512xbf16, #tpu.memory_space<vmem>>, vector<1x8x512xbf16>
    %284 = vector.shape_cast %283 : vector<1x8x512xbf16> to vector<8x512xbf16>
    %285 = arith.extf %284 : vector<8x512xbf16> to vector<8x512xf32>
    %c0_158 = arith.constant 0 : index
    %c0_159 = arith.constant 0 : index
    %c0_160 = arith.constant 0 : index
    %286 = vector.load %arg6[%c0_158, %c0_159, %c0_160] : memref<2x8x128xf32, #tpu.memory_space<vmem>>, vector<1x8x128xf32>
    %287 = vector.shape_cast %286 : vector<1x8x128xf32> to vector<8x128xf32>
    %288 = arith.truncf %287 : vector<8x128xf32> to vector<8x128xbf16>
    %c0_161 = arith.constant 0 : index
    %c0_162 = arith.constant 0 : index
    %289 = vector.load %arg2[%c0_161, %c0_162] : memref<128x512xbf16, #tpu.memory_space<vmem>>, vector<128x512xbf16>
    %cst_163 = arith.constant dense<0.000000e+00> : vector<8x512xf32>
    %290 = tpu.matmul %288, %289, %cst_163 {dimension_numbers = #tpu.dot_dimension_numbers<[1], [0], [0], [1], [0, 0, 1, 1], [], []>} : vector<8x128xbf16>, vector<128x512xbf16>, vector<8x512xf32> -> vector<8x512xf32>
    %291 = arith.addf %285, %290 : vector<8x512xf32>
    %c0_164 = arith.constant 0 : index
    %c0_165 = arith.constant 0 : index
    %c0_166 = arith.constant 0 : index
    %292 = vector.load %arg7[%c0_164, %c0_165, %c0_166] : memref<2x8x128xf32, #tpu.memory_space<vmem>>, vector<1x8x128xf32>
    %293 = vector.shape_cast %292 : vector<1x8x128xf32> to vector<8x128xf32>
    %294 = vector.extract_strided_slice %291 {offsets = [0, 0], sizes = [8, 384], strides = [1, 1]} : vector<8x512xf32> to vector<8x384xf32>
    %295 = arith.negf %294 : vector<8x384xf32>
    %296 = math.exp %295 : vector<8x384xf32>
    %cst_167 = arith.constant 1.000000e+00 : f32
    %297 = vector.broadcast %cst_167 : f32 to vector<8x384xf32>
    %298 = arith.addf %297, %296 : vector<8x384xf32>
    %299 = arith.divf %297, %298 : vector<8x384xf32>
    %300 = vector.extract_strided_slice %299 {offsets = [0, 0], sizes = [8, 128], strides = [1, 1]} : vector<8x384xf32> to vector<8x128xf32>
    %301 = vector.extract_strided_slice %299 {offsets = [0, 128], sizes = [8, 128], strides = [1, 1]} : vector<8x384xf32> to vector<8x128xf32>
    %302 = vector.extract_strided_slice %299 {offsets = [0, 256], sizes = [8, 128], strides = [1, 1]} : vector<8x384xf32> to vector<8x128xf32>
    %303 = vector.extract_strided_slice %291 {offsets = [0, 384], sizes = [8, 128], strides = [1, 1]} : vector<8x512xf32> to vector<8x128xf32>
    %304 = math.tanh %303 : vector<8x128xf32>
    %305 = arith.mulf %301, %293 : vector<8x128xf32>
    %306 = arith.mulf %300, %304 : vector<8x128xf32>
    %307 = arith.addf %305, %306 : vector<8x128xf32>
    %308 = math.tanh %307 : vector<8x128xf32>
    %309 = arith.mulf %302, %308 : vector<8x128xf32>
    %c0_168 = arith.constant 0 : index
    %c0_169 = arith.constant 0 : index
    %c0_170 = arith.constant 0 : index
    %310 = vector.load %arg6[%c0_168, %c0_169, %c0_170] : memref<2x8x128xf32, #tpu.memory_space<vmem>>, vector<1x8x128xf32>
    %311 = vector.shape_cast %310 : vector<1x8x128xf32> to vector<8x128xf32>
    %312 = vector.shape_cast %309 : vector<8x128xf32> to vector<1x8x128xf32>
    tpu.vector_store %arg6[%c0_168, %c0_169, %c0_170], %312 {strides = array<i32>} : memref<2x8x128xf32, #tpu.memory_space<vmem>>, vector<1x8x128xf32>,
    %c0_171 = arith.constant 0 : index
    %c0_172 = arith.constant 0 : index
    %c0_173 = arith.constant 0 : index
    %313 = vector.load %arg7[%c0_171, %c0_172, %c0_173] : memref<2x8x128xf32, #tpu.memory_space<vmem>>, vector<1x8x128xf32>
    %314 = vector.shape_cast %313 : vector<1x8x128xf32> to vector<8x128xf32>
    %315 = vector.shape_cast %307 : vector<8x128xf32> to vector<1x8x128xf32>
    tpu.vector_store %arg7[%c0_171, %c0_172, %c0_173], %315 {strides = array<i32>} : memref<2x8x128xf32, #tpu.memory_space<vmem>>, vector<1x8x128xf32>,
    %c1_174 = arith.constant 1 : index
    %c0_175 = arith.constant 0 : index
    %c0_176 = arith.constant 0 : index
    %316 = vector.load %arg6[%c1_174, %c0_175, %c0_176] : memref<2x8x128xf32, #tpu.memory_space<vmem>>, vector<1x8x128xf32>
    %317 = vector.shape_cast %316 : vector<1x8x128xf32> to vector<8x128xf32>
    %318 = tpu.concatenate %309, %317 in 1 : vector<8x128xf32>, vector<8x128xf32> -> vector<8x256xf32>
    %319 = arith.truncf %318 : vector<8x256xf32> to vector<8x256xbf16>
    %c0_177 = arith.constant 0 : index
    %c0_178 = arith.constant 0 : index
    %320 = vector.load %arg3[%c0_177, %c0_178] : memref<256x512xbf16, #tpu.memory_space<vmem>>, vector<256x512xbf16>
    %cst_179 = arith.constant dense<0.000000e+00> : vector<8x512xf32>
    %321 = tpu.matmul %319, %320, %cst_179 {dimension_numbers = #tpu.dot_dimension_numbers<[1], [0], [0], [1], [0, 0, 1, 1], [], []>} : vector<8x256xbf16>, vector<256x512xbf16>, vector<8x512xf32> -> vector<8x512xf32>
    %c0_180 = arith.constant 0 : index
    %c0_181 = arith.constant 0 : index
    %322 = vector.load %arg4[%c0_180, %c0_181] : memref<1x512xf32, #tpu.memory_space<vmem>>, vector<1x512xf32>
    %323 = vector.broadcast %322 : vector<1x512xf32> to vector<8x512xf32>
    %324 = arith.addf %321, %323 : vector<8x512xf32>
    %c1_182 = arith.constant 1 : index
    %c0_183 = arith.constant 0 : index
    %c0_184 = arith.constant 0 : index
    %325 = vector.load %arg7[%c1_182, %c0_183, %c0_184] : memref<2x8x128xf32, #tpu.memory_space<vmem>>, vector<1x8x128xf32>
    %326 = vector.shape_cast %325 : vector<1x8x128xf32> to vector<8x128xf32>
    %327 = vector.extract_strided_slice %324 {offsets = [0, 0], sizes = [8, 384], strides = [1, 1]} : vector<8x512xf32> to vector<8x384xf32>
    %328 = arith.negf %327 : vector<8x384xf32>
    %329 = math.exp %328 : vector<8x384xf32>
    %cst_185 = arith.constant 1.000000e+00 : f32
    %330 = vector.broadcast %cst_185 : f32 to vector<8x384xf32>
    %331 = arith.addf %330, %329 : vector<8x384xf32>
    %332 = arith.divf %330, %331 : vector<8x384xf32>
    %333 = vector.extract_strided_slice %332 {offsets = [0, 0], sizes = [8, 128], strides = [1, 1]} : vector<8x384xf32> to vector<8x128xf32>
    %334 = vector.extract_strided_slice %332 {offsets = [0, 128], sizes = [8, 128], strides = [1, 1]} : vector<8x384xf32> to vector<8x128xf32>
    %335 = vector.extract_strided_slice %332 {offsets = [0, 256], sizes = [8, 128], strides = [1, 1]} : vector<8x384xf32> to vector<8x128xf32>
    %336 = vector.extract_strided_slice %324 {offsets = [0, 384], sizes = [8, 128], strides = [1, 1]} : vector<8x512xf32> to vector<8x128xf32>
    %337 = math.tanh %336 : vector<8x128xf32>
    %338 = arith.mulf %334, %326 : vector<8x128xf32>
    %339 = arith.mulf %333, %337 : vector<8x128xf32>
    %340 = arith.addf %338, %339 : vector<8x128xf32>
    %341 = math.tanh %340 : vector<8x128xf32>
    %342 = arith.mulf %335, %341 : vector<8x128xf32>
    %c1_186 = arith.constant 1 : index
    %c0_187 = arith.constant 0 : index
    %c0_188 = arith.constant 0 : index
    %343 = vector.load %arg6[%c1_186, %c0_187, %c0_188] : memref<2x8x128xf32, #tpu.memory_space<vmem>>, vector<1x8x128xf32>
    %344 = vector.shape_cast %343 : vector<1x8x128xf32> to vector<8x128xf32>
    %345 = vector.shape_cast %342 : vector<8x128xf32> to vector<1x8x128xf32>
    tpu.vector_store %arg6[%c1_186, %c0_187, %c0_188], %345 {strides = array<i32>} : memref<2x8x128xf32, #tpu.memory_space<vmem>>, vector<1x8x128xf32>,
    %c1_189 = arith.constant 1 : index
    %c0_190 = arith.constant 0 : index
    %c0_191 = arith.constant 0 : index
    %346 = vector.load %arg7[%c1_189, %c0_190, %c0_191] : memref<2x8x128xf32, #tpu.memory_space<vmem>>, vector<1x8x128xf32>
    %347 = vector.shape_cast %346 : vector<1x8x128xf32> to vector<8x128xf32>
    %348 = vector.shape_cast %340 : vector<8x128xf32> to vector<1x8x128xf32>
    tpu.vector_store %arg7[%c1_189, %c0_190, %c0_191], %348 {strides = array<i32>} : memref<2x8x128xf32, #tpu.memory_space<vmem>>, vector<1x8x128xf32>,
    %349 = arith.truncf %342 : vector<8x128xf32> to vector<8x128xbf16>
    %c0_192 = arith.constant 0 : index
    %c4_193 = arith.constant 4 : index
    %c0_194 = arith.constant 0 : index
    %350 = vector.load %arg5[%c0_192, %c4_193, %c0_194] : memref<8x8x128xbf16, #tpu.memory_space<vmem>>, vector<8x1x128xbf16>
    %351 = vector.shape_cast %350 : vector<8x1x128xbf16> to vector<8x128xbf16>
    %352 = vector.shape_cast %349 : vector<8x128xbf16> to vector<8x1x128xbf16>
    tpu.vector_store %arg5[%c0_192, %c4_193, %c0_194], %352 {strides = array<i32>} : memref<8x8x128xbf16, #tpu.memory_space<vmem>>, vector<8x1x128xbf16>,
    %c5 = arith.constant 5 : index
    %c0_195 = arith.constant 0 : index
    %c0_196 = arith.constant 0 : index
    %353 = vector.load %arg1[%c5, %c0_195, %c0_196] : memref<8x8x512xbf16, #tpu.memory_space<vmem>>, vector<1x8x512xbf16>
    %354 = vector.shape_cast %353 : vector<1x8x512xbf16> to vector<8x512xbf16>
    %355 = arith.extf %354 : vector<8x512xbf16> to vector<8x512xf32>
    %c0_197 = arith.constant 0 : index
    %c0_198 = arith.constant 0 : index
    %c0_199 = arith.constant 0 : index
    %356 = vector.load %arg6[%c0_197, %c0_198, %c0_199] : memref<2x8x128xf32, #tpu.memory_space<vmem>>, vector<1x8x128xf32>
    %357 = vector.shape_cast %356 : vector<1x8x128xf32> to vector<8x128xf32>
    %358 = arith.truncf %357 : vector<8x128xf32> to vector<8x128xbf16>
    %c0_200 = arith.constant 0 : index
    %c0_201 = arith.constant 0 : index
    %359 = vector.load %arg2[%c0_200, %c0_201] : memref<128x512xbf16, #tpu.memory_space<vmem>>, vector<128x512xbf16>
    %cst_202 = arith.constant dense<0.000000e+00> : vector<8x512xf32>
    %360 = tpu.matmul %358, %359, %cst_202 {dimension_numbers = #tpu.dot_dimension_numbers<[1], [0], [0], [1], [0, 0, 1, 1], [], []>} : vector<8x128xbf16>, vector<128x512xbf16>, vector<8x512xf32> -> vector<8x512xf32>
    %361 = arith.addf %355, %360 : vector<8x512xf32>
    %c0_203 = arith.constant 0 : index
    %c0_204 = arith.constant 0 : index
    %c0_205 = arith.constant 0 : index
    %362 = vector.load %arg7[%c0_203, %c0_204, %c0_205] : memref<2x8x128xf32, #tpu.memory_space<vmem>>, vector<1x8x128xf32>
    %363 = vector.shape_cast %362 : vector<1x8x128xf32> to vector<8x128xf32>
    %364 = vector.extract_strided_slice %361 {offsets = [0, 0], sizes = [8, 384], strides = [1, 1]} : vector<8x512xf32> to vector<8x384xf32>
    %365 = arith.negf %364 : vector<8x384xf32>
    %366 = math.exp %365 : vector<8x384xf32>
    %cst_206 = arith.constant 1.000000e+00 : f32
    %367 = vector.broadcast %cst_206 : f32 to vector<8x384xf32>
    %368 = arith.addf %367, %366 : vector<8x384xf32>
    %369 = arith.divf %367, %368 : vector<8x384xf32>
    %370 = vector.extract_strided_slice %369 {offsets = [0, 0], sizes = [8, 128], strides = [1, 1]} : vector<8x384xf32> to vector<8x128xf32>
    %371 = vector.extract_strided_slice %369 {offsets = [0, 128], sizes = [8, 128], strides = [1, 1]} : vector<8x384xf32> to vector<8x128xf32>
    %372 = vector.extract_strided_slice %369 {offsets = [0, 256], sizes = [8, 128], strides = [1, 1]} : vector<8x384xf32> to vector<8x128xf32>
    %373 = vector.extract_strided_slice %361 {offsets = [0, 384], sizes = [8, 128], strides = [1, 1]} : vector<8x512xf32> to vector<8x128xf32>
    %374 = math.tanh %373 : vector<8x128xf32>
    %375 = arith.mulf %371, %363 : vector<8x128xf32>
    %376 = arith.mulf %370, %374 : vector<8x128xf32>
    %377 = arith.addf %375, %376 : vector<8x128xf32>
    %378 = math.tanh %377 : vector<8x128xf32>
    %379 = arith.mulf %372, %378 : vector<8x128xf32>
    %c0_207 = arith.constant 0 : index
    %c0_208 = arith.constant 0 : index
    %c0_209 = arith.constant 0 : index
    %380 = vector.load %arg6[%c0_207, %c0_208, %c0_209] : memref<2x8x128xf32, #tpu.memory_space<vmem>>, vector<1x8x128xf32>
    %381 = vector.shape_cast %380 : vector<1x8x128xf32> to vector<8x128xf32>
    %382 = vector.shape_cast %379 : vector<8x128xf32> to vector<1x8x128xf32>
    tpu.vector_store %arg6[%c0_207, %c0_208, %c0_209], %382 {strides = array<i32>} : memref<2x8x128xf32, #tpu.memory_space<vmem>>, vector<1x8x128xf32>,
    %c0_210 = arith.constant 0 : index
    %c0_211 = arith.constant 0 : index
    %c0_212 = arith.constant 0 : index
    %383 = vector.load %arg7[%c0_210, %c0_211, %c0_212] : memref<2x8x128xf32, #tpu.memory_space<vmem>>, vector<1x8x128xf32>
    %384 = vector.shape_cast %383 : vector<1x8x128xf32> to vector<8x128xf32>
    %385 = vector.shape_cast %377 : vector<8x128xf32> to vector<1x8x128xf32>
    tpu.vector_store %arg7[%c0_210, %c0_211, %c0_212], %385 {strides = array<i32>} : memref<2x8x128xf32, #tpu.memory_space<vmem>>, vector<1x8x128xf32>,
    %c1_213 = arith.constant 1 : index
    %c0_214 = arith.constant 0 : index
    %c0_215 = arith.constant 0 : index
    %386 = vector.load %arg6[%c1_213, %c0_214, %c0_215] : memref<2x8x128xf32, #tpu.memory_space<vmem>>, vector<1x8x128xf32>
    %387 = vector.shape_cast %386 : vector<1x8x128xf32> to vector<8x128xf32>
    %388 = tpu.concatenate %379, %387 in 1 : vector<8x128xf32>, vector<8x128xf32> -> vector<8x256xf32>
    %389 = arith.truncf %388 : vector<8x256xf32> to vector<8x256xbf16>
    %c0_216 = arith.constant 0 : index
    %c0_217 = arith.constant 0 : index
    %390 = vector.load %arg3[%c0_216, %c0_217] : memref<256x512xbf16, #tpu.memory_space<vmem>>, vector<256x512xbf16>
    %cst_218 = arith.constant dense<0.000000e+00> : vector<8x512xf32>
    %391 = tpu.matmul %389, %390, %cst_218 {dimension_numbers = #tpu.dot_dimension_numbers<[1], [0], [0], [1], [0, 0, 1, 1], [], []>} : vector<8x256xbf16>, vector<256x512xbf16>, vector<8x512xf32> -> vector<8x512xf32>
    %c0_219 = arith.constant 0 : index
    %c0_220 = arith.constant 0 : index
    %392 = vector.load %arg4[%c0_219, %c0_220] : memref<1x512xf32, #tpu.memory_space<vmem>>, vector<1x512xf32>
    %393 = vector.broadcast %392 : vector<1x512xf32> to vector<8x512xf32>
    %394 = arith.addf %391, %393 : vector<8x512xf32>
    %c1_221 = arith.constant 1 : index
    %c0_222 = arith.constant 0 : index
    %c0_223 = arith.constant 0 : index
    %395 = vector.load %arg7[%c1_221, %c0_222, %c0_223] : memref<2x8x128xf32, #tpu.memory_space<vmem>>, vector<1x8x128xf32>
    %396 = vector.shape_cast %395 : vector<1x8x128xf32> to vector<8x128xf32>
    %397 = vector.extract_strided_slice %394 {offsets = [0, 0], sizes = [8, 384], strides = [1, 1]} : vector<8x512xf32> to vector<8x384xf32>
    %398 = arith.negf %397 : vector<8x384xf32>
    %399 = math.exp %398 : vector<8x384xf32>
    %cst_224 = arith.constant 1.000000e+00 : f32
    %400 = vector.broadcast %cst_224 : f32 to vector<8x384xf32>
    %401 = arith.addf %400, %399 : vector<8x384xf32>
    %402 = arith.divf %400, %401 : vector<8x384xf32>
    %403 = vector.extract_strided_slice %402 {offsets = [0, 0], sizes = [8, 128], strides = [1, 1]} : vector<8x384xf32> to vector<8x128xf32>
    %404 = vector.extract_strided_slice %402 {offsets = [0, 128], sizes = [8, 128], strides = [1, 1]} : vector<8x384xf32> to vector<8x128xf32>
    %405 = vector.extract_strided_slice %402 {offsets = [0, 256], sizes = [8, 128], strides = [1, 1]} : vector<8x384xf32> to vector<8x128xf32>
    %406 = vector.extract_strided_slice %394 {offsets = [0, 384], sizes = [8, 128], strides = [1, 1]} : vector<8x512xf32> to vector<8x128xf32>
    %407 = math.tanh %406 : vector<8x128xf32>
    %408 = arith.mulf %404, %396 : vector<8x128xf32>
    %409 = arith.mulf %403, %407 : vector<8x128xf32>
    %410 = arith.addf %408, %409 : vector<8x128xf32>
    %411 = math.tanh %410 : vector<8x128xf32>
    %412 = arith.mulf %405, %411 : vector<8x128xf32>
    %c1_225 = arith.constant 1 : index
    %c0_226 = arith.constant 0 : index
    %c0_227 = arith.constant 0 : index
    %413 = vector.load %arg6[%c1_225, %c0_226, %c0_227] : memref<2x8x128xf32, #tpu.memory_space<vmem>>, vector<1x8x128xf32>
    %414 = vector.shape_cast %413 : vector<1x8x128xf32> to vector<8x128xf32>
    %415 = vector.shape_cast %412 : vector<8x128xf32> to vector<1x8x128xf32>
    tpu.vector_store %arg6[%c1_225, %c0_226, %c0_227], %415 {strides = array<i32>} : memref<2x8x128xf32, #tpu.memory_space<vmem>>, vector<1x8x128xf32>,
    %c1_228 = arith.constant 1 : index
    %c0_229 = arith.constant 0 : index
    %c0_230 = arith.constant 0 : index
    %416 = vector.load %arg7[%c1_228, %c0_229, %c0_230] : memref<2x8x128xf32, #tpu.memory_space<vmem>>, vector<1x8x128xf32>
    %417 = vector.shape_cast %416 : vector<1x8x128xf32> to vector<8x128xf32>
    %418 = vector.shape_cast %410 : vector<8x128xf32> to vector<1x8x128xf32>
    tpu.vector_store %arg7[%c1_228, %c0_229, %c0_230], %418 {strides = array<i32>} : memref<2x8x128xf32, #tpu.memory_space<vmem>>, vector<1x8x128xf32>,
    %419 = arith.truncf %412 : vector<8x128xf32> to vector<8x128xbf16>
    %c0_231 = arith.constant 0 : index
    %c5_232 = arith.constant 5 : index
    %c0_233 = arith.constant 0 : index
    %420 = vector.load %arg5[%c0_231, %c5_232, %c0_233] : memref<8x8x128xbf16, #tpu.memory_space<vmem>>, vector<8x1x128xbf16>
    %421 = vector.shape_cast %420 : vector<8x1x128xbf16> to vector<8x128xbf16>
    %422 = vector.shape_cast %419 : vector<8x128xbf16> to vector<8x1x128xbf16>
    tpu.vector_store %arg5[%c0_231, %c5_232, %c0_233], %422 {strides = array<i32>} : memref<8x8x128xbf16, #tpu.memory_space<vmem>>, vector<8x1x128xbf16>,
    %c6 = arith.constant 6 : index
    %c0_234 = arith.constant 0 : index
    %c0_235 = arith.constant 0 : index
    %423 = vector.load %arg1[%c6, %c0_234, %c0_235] : memref<8x8x512xbf16, #tpu.memory_space<vmem>>, vector<1x8x512xbf16>
    %424 = vector.shape_cast %423 : vector<1x8x512xbf16> to vector<8x512xbf16>
    %425 = arith.extf %424 : vector<8x512xbf16> to vector<8x512xf32>
    %c0_236 = arith.constant 0 : index
    %c0_237 = arith.constant 0 : index
    %c0_238 = arith.constant 0 : index
    %426 = vector.load %arg6[%c0_236, %c0_237, %c0_238] : memref<2x8x128xf32, #tpu.memory_space<vmem>>, vector<1x8x128xf32>
    %427 = vector.shape_cast %426 : vector<1x8x128xf32> to vector<8x128xf32>
    %428 = arith.truncf %427 : vector<8x128xf32> to vector<8x128xbf16>
    %c0_239 = arith.constant 0 : index
    %c0_240 = arith.constant 0 : index
    %429 = vector.load %arg2[%c0_239, %c0_240] : memref<128x512xbf16, #tpu.memory_space<vmem>>, vector<128x512xbf16>
    %cst_241 = arith.constant dense<0.000000e+00> : vector<8x512xf32>
    %430 = tpu.matmul %428, %429, %cst_241 {dimension_numbers = #tpu.dot_dimension_numbers<[1], [0], [0], [1], [0, 0, 1, 1], [], []>} : vector<8x128xbf16>, vector<128x512xbf16>, vector<8x512xf32> -> vector<8x512xf32>
    %431 = arith.addf %425, %430 : vector<8x512xf32>
    %c0_242 = arith.constant 0 : index
    %c0_243 = arith.constant 0 : index
    %c0_244 = arith.constant 0 : index
    %432 = vector.load %arg7[%c0_242, %c0_243, %c0_244] : memref<2x8x128xf32, #tpu.memory_space<vmem>>, vector<1x8x128xf32>
    %433 = vector.shape_cast %432 : vector<1x8x128xf32> to vector<8x128xf32>
    %434 = vector.extract_strided_slice %431 {offsets = [0, 0], sizes = [8, 384], strides = [1, 1]} : vector<8x512xf32> to vector<8x384xf32>
    %435 = arith.negf %434 : vector<8x384xf32>
    %436 = math.exp %435 : vector<8x384xf32>
    %cst_245 = arith.constant 1.000000e+00 : f32
    %437 = vector.broadcast %cst_245 : f32 to vector<8x384xf32>
    %438 = arith.addf %437, %436 : vector<8x384xf32>
    %439 = arith.divf %437, %438 : vector<8x384xf32>
    %440 = vector.extract_strided_slice %439 {offsets = [0, 0], sizes = [8, 128], strides = [1, 1]} : vector<8x384xf32> to vector<8x128xf32>
    %441 = vector.extract_strided_slice %439 {offsets = [0, 128], sizes = [8, 128], strides = [1, 1]} : vector<8x384xf32> to vector<8x128xf32>
    %442 = vector.extract_strided_slice %439 {offsets = [0, 256], sizes = [8, 128], strides = [1, 1]} : vector<8x384xf32> to vector<8x128xf32>
    %443 = vector.extract_strided_slice %431 {offsets = [0, 384], sizes = [8, 128], strides = [1, 1]} : vector<8x512xf32> to vector<8x128xf32>
    %444 = math.tanh %443 : vector<8x128xf32>
    %445 = arith.mulf %441, %433 : vector<8x128xf32>
    %446 = arith.mulf %440, %444 : vector<8x128xf32>
    %447 = arith.addf %445, %446 : vector<8x128xf32>
    %448 = math.tanh %447 : vector<8x128xf32>
    %449 = arith.mulf %442, %448 : vector<8x128xf32>
    %c0_246 = arith.constant 0 : index
    %c0_247 = arith.constant 0 : index
    %c0_248 = arith.constant 0 : index
    %450 = vector.load %arg6[%c0_246, %c0_247, %c0_248] : memref<2x8x128xf32, #tpu.memory_space<vmem>>, vector<1x8x128xf32>
    %451 = vector.shape_cast %450 : vector<1x8x128xf32> to vector<8x128xf32>
    %452 = vector.shape_cast %449 : vector<8x128xf32> to vector<1x8x128xf32>
    tpu.vector_store %arg6[%c0_246, %c0_247, %c0_248], %452 {strides = array<i32>} : memref<2x8x128xf32, #tpu.memory_space<vmem>>, vector<1x8x128xf32>,
    %c0_249 = arith.constant 0 : index
    %c0_250 = arith.constant 0 : index
    %c0_251 = arith.constant 0 : index
    %453 = vector.load %arg7[%c0_249, %c0_250, %c0_251] : memref<2x8x128xf32, #tpu.memory_space<vmem>>, vector<1x8x128xf32>
    %454 = vector.shape_cast %453 : vector<1x8x128xf32> to vector<8x128xf32>
    %455 = vector.shape_cast %447 : vector<8x128xf32> to vector<1x8x128xf32>
    tpu.vector_store %arg7[%c0_249, %c0_250, %c0_251], %455 {strides = array<i32>} : memref<2x8x128xf32, #tpu.memory_space<vmem>>, vector<1x8x128xf32>,
    %c1_252 = arith.constant 1 : index
    %c0_253 = arith.constant 0 : index
    %c0_254 = arith.constant 0 : index
    %456 = vector.load %arg6[%c1_252, %c0_253, %c0_254] : memref<2x8x128xf32, #tpu.memory_space<vmem>>, vector<1x8x128xf32>
    %457 = vector.shape_cast %456 : vector<1x8x128xf32> to vector<8x128xf32>
    %458 = tpu.concatenate %449, %457 in 1 : vector<8x128xf32>, vector<8x128xf32> -> vector<8x256xf32>
    %459 = arith.truncf %458 : vector<8x256xf32> to vector<8x256xbf16>
    %c0_255 = arith.constant 0 : index
    %c0_256 = arith.constant 0 : index
    %460 = vector.load %arg3[%c0_255, %c0_256] : memref<256x512xbf16, #tpu.memory_space<vmem>>, vector<256x512xbf16>
    %cst_257 = arith.constant dense<0.000000e+00> : vector<8x512xf32>
    %461 = tpu.matmul %459, %460, %cst_257 {dimension_numbers = #tpu.dot_dimension_numbers<[1], [0], [0], [1], [0, 0, 1, 1], [], []>} : vector<8x256xbf16>, vector<256x512xbf16>, vector<8x512xf32> -> vector<8x512xf32>
    %c0_258 = arith.constant 0 : index
    %c0_259 = arith.constant 0 : index
    %462 = vector.load %arg4[%c0_258, %c0_259] : memref<1x512xf32, #tpu.memory_space<vmem>>, vector<1x512xf32>
    %463 = vector.broadcast %462 : vector<1x512xf32> to vector<8x512xf32>
    %464 = arith.addf %461, %463 : vector<8x512xf32>
    %c1_260 = arith.constant 1 : index
    %c0_261 = arith.constant 0 : index
    %c0_262 = arith.constant 0 : index
    %465 = vector.load %arg7[%c1_260, %c0_261, %c0_262] : memref<2x8x128xf32, #tpu.memory_space<vmem>>, vector<1x8x128xf32>
    %466 = vector.shape_cast %465 : vector<1x8x128xf32> to vector<8x128xf32>
    %467 = vector.extract_strided_slice %464 {offsets = [0, 0], sizes = [8, 384], strides = [1, 1]} : vector<8x512xf32> to vector<8x384xf32>
    %468 = arith.negf %467 : vector<8x384xf32>
    %469 = math.exp %468 : vector<8x384xf32>
    %cst_263 = arith.constant 1.000000e+00 : f32
    %470 = vector.broadcast %cst_263 : f32 to vector<8x384xf32>
    %471 = arith.addf %470, %469 : vector<8x384xf32>
    %472 = arith.divf %470, %471 : vector<8x384xf32>
    %473 = vector.extract_strided_slice %472 {offsets = [0, 0], sizes = [8, 128], strides = [1, 1]} : vector<8x384xf32> to vector<8x128xf32>
    %474 = vector.extract_strided_slice %472 {offsets = [0, 128], sizes = [8, 128], strides = [1, 1]} : vector<8x384xf32> to vector<8x128xf32>
    %475 = vector.extract_strided_slice %472 {offsets = [0, 256], sizes = [8, 128], strides = [1, 1]} : vector<8x384xf32> to vector<8x128xf32>
    %476 = vector.extract_strided_slice %464 {offsets = [0, 384], sizes = [8, 128], strides = [1, 1]} : vector<8x512xf32> to vector<8x128xf32>
    %477 = math.tanh %476 : vector<8x128xf32>
    %478 = arith.mulf %474, %466 : vector<8x128xf32>
    %479 = arith.mulf %473, %477 : vector<8x128xf32>
    %480 = arith.addf %478, %479 : vector<8x128xf32>
    %481 = math.tanh %480 : vector<8x128xf32>
    %482 = arith.mulf %475, %481 : vector<8x128xf32>
    %c1_264 = arith.constant 1 : index
    %c0_265 = arith.constant 0 : index
    %c0_266 = arith.constant 0 : index
    %483 = vector.load %arg6[%c1_264, %c0_265, %c0_266] : memref<2x8x128xf32, #tpu.memory_space<vmem>>, vector<1x8x128xf32>
    %484 = vector.shape_cast %483 : vector<1x8x128xf32> to vector<8x128xf32>
    %485 = vector.shape_cast %482 : vector<8x128xf32> to vector<1x8x128xf32>
    tpu.vector_store %arg6[%c1_264, %c0_265, %c0_266], %485 {strides = array<i32>} : memref<2x8x128xf32, #tpu.memory_space<vmem>>, vector<1x8x128xf32>,
    %c1_267 = arith.constant 1 : index
    %c0_268 = arith.constant 0 : index
    %c0_269 = arith.constant 0 : index
    %486 = vector.load %arg7[%c1_267, %c0_268, %c0_269] : memref<2x8x128xf32, #tpu.memory_space<vmem>>, vector<1x8x128xf32>
    %487 = vector.shape_cast %486 : vector<1x8x128xf32> to vector<8x128xf32>
    %488 = vector.shape_cast %480 : vector<8x128xf32> to vector<1x8x128xf32>
    tpu.vector_store %arg7[%c1_267, %c0_268, %c0_269], %488 {strides = array<i32>} : memref<2x8x128xf32, #tpu.memory_space<vmem>>, vector<1x8x128xf32>,
    %489 = arith.truncf %482 : vector<8x128xf32> to vector<8x128xbf16>
    %c0_270 = arith.constant 0 : index
    %c6_271 = arith.constant 6 : index
    %c0_272 = arith.constant 0 : index
    %490 = vector.load %arg5[%c0_270, %c6_271, %c0_272] : memref<8x8x128xbf16, #tpu.memory_space<vmem>>, vector<8x1x128xbf16>
    %491 = vector.shape_cast %490 : vector<8x1x128xbf16> to vector<8x128xbf16>
    %492 = vector.shape_cast %489 : vector<8x128xbf16> to vector<8x1x128xbf16>
    tpu.vector_store %arg5[%c0_270, %c6_271, %c0_272], %492 {strides = array<i32>} : memref<8x8x128xbf16, #tpu.memory_space<vmem>>, vector<8x1x128xbf16>,
    %c7 = arith.constant 7 : index
    %c0_273 = arith.constant 0 : index
    %c0_274 = arith.constant 0 : index
    %493 = vector.load %arg1[%c7, %c0_273, %c0_274] : memref<8x8x512xbf16, #tpu.memory_space<vmem>>, vector<1x8x512xbf16>
    %494 = vector.shape_cast %493 : vector<1x8x512xbf16> to vector<8x512xbf16>
    %495 = arith.extf %494 : vector<8x512xbf16> to vector<8x512xf32>
    %c0_275 = arith.constant 0 : index
    %c0_276 = arith.constant 0 : index
    %c0_277 = arith.constant 0 : index
    %496 = vector.load %arg6[%c0_275, %c0_276, %c0_277] : memref<2x8x128xf32, #tpu.memory_space<vmem>>, vector<1x8x128xf32>
    %497 = vector.shape_cast %496 : vector<1x8x128xf32> to vector<8x128xf32>
    %498 = arith.truncf %497 : vector<8x128xf32> to vector<8x128xbf16>
    %c0_278 = arith.constant 0 : index
    %c0_279 = arith.constant 0 : index
    %499 = vector.load %arg2[%c0_278, %c0_279] : memref<128x512xbf16, #tpu.memory_space<vmem>>, vector<128x512xbf16>
    %cst_280 = arith.constant dense<0.000000e+00> : vector<8x512xf32>
    %500 = tpu.matmul %498, %499, %cst_280 {dimension_numbers = #tpu.dot_dimension_numbers<[1], [0], [0], [1], [0, 0, 1, 1], [], []>} : vector<8x128xbf16>, vector<128x512xbf16>, vector<8x512xf32> -> vector<8x512xf32>
    %501 = arith.addf %495, %500 : vector<8x512xf32>
    %c0_281 = arith.constant 0 : index
    %c0_282 = arith.constant 0 : index
    %c0_283 = arith.constant 0 : index
    %502 = vector.load %arg7[%c0_281, %c0_282, %c0_283] : memref<2x8x128xf32, #tpu.memory_space<vmem>>, vector<1x8x128xf32>
    %503 = vector.shape_cast %502 : vector<1x8x128xf32> to vector<8x128xf32>
    %504 = vector.extract_strided_slice %501 {offsets = [0, 0], sizes = [8, 384], strides = [1, 1]} : vector<8x512xf32> to vector<8x384xf32>
    %505 = arith.negf %504 : vector<8x384xf32>
    %506 = math.exp %505 : vector<8x384xf32>
    %cst_284 = arith.constant 1.000000e+00 : f32
    %507 = vector.broadcast %cst_284 : f32 to vector<8x384xf32>
    %508 = arith.addf %507, %506 : vector<8x384xf32>
    %509 = arith.divf %507, %508 : vector<8x384xf32>
    %510 = vector.extract_strided_slice %509 {offsets = [0, 0], sizes = [8, 128], strides = [1, 1]} : vector<8x384xf32> to vector<8x128xf32>
    %511 = vector.extract_strided_slice %509 {offsets = [0, 128], sizes = [8, 128], strides = [1, 1]} : vector<8x384xf32> to vector<8x128xf32>
    %512 = vector.extract_strided_slice %509 {offsets = [0, 256], sizes = [8, 128], strides = [1, 1]} : vector<8x384xf32> to vector<8x128xf32>
    %513 = vector.extract_strided_slice %501 {offsets = [0, 384], sizes = [8, 128], strides = [1, 1]} : vector<8x512xf32> to vector<8x128xf32>
    %514 = math.tanh %513 : vector<8x128xf32>
    %515 = arith.mulf %511, %503 : vector<8x128xf32>
    %516 = arith.mulf %510, %514 : vector<8x128xf32>
    %517 = arith.addf %515, %516 : vector<8x128xf32>
    %518 = math.tanh %517 : vector<8x128xf32>
    %519 = arith.mulf %512, %518 : vector<8x128xf32>
    %c0_285 = arith.constant 0 : index
    %c0_286 = arith.constant 0 : index
    %c0_287 = arith.constant 0 : index
    %520 = vector.load %arg6[%c0_285, %c0_286, %c0_287] : memref<2x8x128xf32, #tpu.memory_space<vmem>>, vector<1x8x128xf32>
    %521 = vector.shape_cast %520 : vector<1x8x128xf32> to vector<8x128xf32>
    %522 = vector.shape_cast %519 : vector<8x128xf32> to vector<1x8x128xf32>
    tpu.vector_store %arg6[%c0_285, %c0_286, %c0_287], %522 {strides = array<i32>} : memref<2x8x128xf32, #tpu.memory_space<vmem>>, vector<1x8x128xf32>,
    %c0_288 = arith.constant 0 : index
    %c0_289 = arith.constant 0 : index
    %c0_290 = arith.constant 0 : index
    %523 = vector.load %arg7[%c0_288, %c0_289, %c0_290] : memref<2x8x128xf32, #tpu.memory_space<vmem>>, vector<1x8x128xf32>
    %524 = vector.shape_cast %523 : vector<1x8x128xf32> to vector<8x128xf32>
    %525 = vector.shape_cast %517 : vector<8x128xf32> to vector<1x8x128xf32>
    tpu.vector_store %arg7[%c0_288, %c0_289, %c0_290], %525 {strides = array<i32>} : memref<2x8x128xf32, #tpu.memory_space<vmem>>, vector<1x8x128xf32>,
    %c1_291 = arith.constant 1 : index
    %c0_292 = arith.constant 0 : index
    %c0_293 = arith.constant 0 : index
    %526 = vector.load %arg6[%c1_291, %c0_292, %c0_293] : memref<2x8x128xf32, #tpu.memory_space<vmem>>, vector<1x8x128xf32>
    %527 = vector.shape_cast %526 : vector<1x8x128xf32> to vector<8x128xf32>
    %528 = tpu.concatenate %519, %527 in 1 : vector<8x128xf32>, vector<8x128xf32> -> vector<8x256xf32>
    %529 = arith.truncf %528 : vector<8x256xf32> to vector<8x256xbf16>
    %c0_294 = arith.constant 0 : index
    %c0_295 = arith.constant 0 : index
    %530 = vector.load %arg3[%c0_294, %c0_295] : memref<256x512xbf16, #tpu.memory_space<vmem>>, vector<256x512xbf16>
    %cst_296 = arith.constant dense<0.000000e+00> : vector<8x512xf32>
    %531 = tpu.matmul %529, %530, %cst_296 {dimension_numbers = #tpu.dot_dimension_numbers<[1], [0], [0], [1], [0, 0, 1, 1], [], []>} : vector<8x256xbf16>, vector<256x512xbf16>, vector<8x512xf32> -> vector<8x512xf32>
    %c0_297 = arith.constant 0 : index
    %c0_298 = arith.constant 0 : index
    %532 = vector.load %arg4[%c0_297, %c0_298] : memref<1x512xf32, #tpu.memory_space<vmem>>, vector<1x512xf32>
    %533 = vector.broadcast %532 : vector<1x512xf32> to vector<8x512xf32>
    %534 = arith.addf %531, %533 : vector<8x512xf32>
    %c1_299 = arith.constant 1 : index
    %c0_300 = arith.constant 0 : index
    %c0_301 = arith.constant 0 : index
    %535 = vector.load %arg7[%c1_299, %c0_300, %c0_301] : memref<2x8x128xf32, #tpu.memory_space<vmem>>, vector<1x8x128xf32>
    %536 = vector.shape_cast %535 : vector<1x8x128xf32> to vector<8x128xf32>
    %537 = vector.extract_strided_slice %534 {offsets = [0, 0], sizes = [8, 384], strides = [1, 1]} : vector<8x512xf32> to vector<8x384xf32>
    %538 = arith.negf %537 : vector<8x384xf32>
    %539 = math.exp %538 : vector<8x384xf32>
    %cst_302 = arith.constant 1.000000e+00 : f32
    %540 = vector.broadcast %cst_302 : f32 to vector<8x384xf32>
    %541 = arith.addf %540, %539 : vector<8x384xf32>
    %542 = arith.divf %540, %541 : vector<8x384xf32>
    %543 = vector.extract_strided_slice %542 {offsets = [0, 0], sizes = [8, 128], strides = [1, 1]} : vector<8x384xf32> to vector<8x128xf32>
    %544 = vector.extract_strided_slice %542 {offsets = [0, 128], sizes = [8, 128], strides = [1, 1]} : vector<8x384xf32> to vector<8x128xf32>
    %545 = vector.extract_strided_slice %542 {offsets = [0, 256], sizes = [8, 128], strides = [1, 1]} : vector<8x384xf32> to vector<8x128xf32>
    %546 = vector.extract_strided_slice %534 {offsets = [0, 384], sizes = [8, 128], strides = [1, 1]} : vector<8x512xf32> to vector<8x128xf32>
    %547 = math.tanh %546 : vector<8x128xf32>
    %548 = arith.mulf %544, %536 : vector<8x128xf32>
    %549 = arith.mulf %543, %547 : vector<8x128xf32>
    %550 = arith.addf %548, %549 : vector<8x128xf32>
    %551 = math.tanh %550 : vector<8x128xf32>
    %552 = arith.mulf %545, %551 : vector<8x128xf32>
    %c1_303 = arith.constant 1 : index
    %c0_304 = arith.constant 0 : index
    %c0_305 = arith.constant 0 : index
    %553 = vector.load %arg6[%c1_303, %c0_304, %c0_305] : memref<2x8x128xf32, #tpu.memory_space<vmem>>, vector<1x8x128xf32>
    %554 = vector.shape_cast %553 : vector<1x8x128xf32> to vector<8x128xf32>
    %555 = vector.shape_cast %552 : vector<8x128xf32> to vector<1x8x128xf32>
    tpu.vector_store %arg6[%c1_303, %c0_304, %c0_305], %555 {strides = array<i32>} : memref<2x8x128xf32, #tpu.memory_space<vmem>>, vector<1x8x128xf32>,
    %c1_306 = arith.constant 1 : index
    %c0_307 = arith.constant 0 : index
    %c0_308 = arith.constant 0 : index
    %556 = vector.load %arg7[%c1_306, %c0_307, %c0_308] : memref<2x8x128xf32, #tpu.memory_space<vmem>>, vector<1x8x128xf32>
    %557 = vector.shape_cast %556 : vector<1x8x128xf32> to vector<8x128xf32>
    %558 = vector.shape_cast %550 : vector<8x128xf32> to vector<1x8x128xf32>
    tpu.vector_store %arg7[%c1_306, %c0_307, %c0_308], %558 {strides = array<i32>} : memref<2x8x128xf32, #tpu.memory_space<vmem>>, vector<1x8x128xf32>,
    %559 = arith.truncf %552 : vector<8x128xf32> to vector<8x128xbf16>
    %c0_309 = arith.constant 0 : index
    %c7_310 = arith.constant 7 : index
    %c0_311 = arith.constant 0 : index
    %560 = vector.load %arg5[%c0_309, %c7_310, %c0_311] : memref<8x8x128xbf16, #tpu.memory_space<vmem>>, vector<8x1x128xbf16>
    %561 = vector.shape_cast %560 : vector<8x1x128xbf16> to vector<8x128xbf16>
    %562 = vector.shape_cast %559 : vector<8x128xbf16> to vector<8x1x128xbf16>
    tpu.vector_store %arg5[%c0_309, %c7_310, %c0_311], %562 {strides = array<i32>} : memref<8x8x128xbf16, #tpu.memory_space<vmem>>, vector<8x1x128xbf16>,
    return
  }
  func.func @transform_0(%arg0: i32) -> (i32, i32, i32) {
    %c0_i32 = arith.constant 0 : i32
    %c0_i32_0 = arith.constant 0 : i32
    %c0_i32_1 = arith.constant 0 : i32
    return %arg0, %c0_i32, %c0_i32_0 : i32, i32, i32
  }
  func.func @transform_1(%arg0: i32) -> (i32, i32) {
    %c0_i32 = arith.constant 0 : i32
    %c0_i32_0 = arith.constant 0 : i32
    %c0_i32_1 = arith.constant 0 : i32
    return %c0_i32, %c0_i32_0 : i32, i32
  }
  func.func @transform_2(%arg0: i32) -> (i32, i32) {
    %c0_i32 = arith.constant 0 : i32
    %c0_i32_0 = arith.constant 0 : i32
    %c0_i32_1 = arith.constant 0 : i32
    return %c0_i32, %c0_i32_0 : i32, i32
  }
  func.func @transform_3(%arg0: i32) -> (i32, i32) {
    %c0_i32 = arith.constant 0 : i32
    %c0_i32_0 = arith.constant 0 : i32
    %c0_i32_1 = arith.constant 0 : i32
    return %c0_i32, %c0_i32_0 : i32, i32
  }
  func.func @transform_4(%arg0: i32) -> (i32, i32, i32) {
    %c0_i32 = arith.constant 0 : i32
    %c0_i32_0 = arith.constant 0 : i32
    %c0_i32_1 = arith.constant 0 : i32
    return %c0_i32, %arg0, %c0_i32_0 : i32, i32, i32
  }
}

</mosaic_0001>

<llo_original>
// kernel: decoder_rnn_forward.5
$region0: #{decoder_rnn_forward.5}
  #allocation0 [shape = 'u32[]', space=smem, size = 0x4, offset = 0x4, fixed_abs, tag = 'smem constant byte address 0x4 - core index']
  #allocation1 [shape = 'u32[72,128]{1,0:T(1,128)}', space=vmem, size = 0x9000, scoped, tag = 'internal scratch']
  #allocation2 [shape = 'f32[56,128]{1,0:T(8,128)}', space=vmem, size = 0x7000, scoped, tag = 'scratch operand']
  %s0 = inlined_call_operand.vmem [shape: bf16[56,128], index: 0, kind: input, shape index: {}]
  %s1 = inlined_call_operand.vmem [shape: bf16[128,128], index: 1, kind: input, shape index: {}]
  %s2 = inlined_call_operand.vmem [shape: f32[1,128], index: 2, kind: input, shape index: {}]
  %s3 = inlined_call_operand.vmem [shape: f32[56,128], index: 3, kind: output, shape index: {}]
  %s4 = sld [smem:[#allocation0]]
  $region30: #{decoder_rnn_forward.5} parent=0
    _
  %s6 = ssub.s32 1, %s4
  %s7 = scalar_select 0, %s6, %s4
  // Predicated region
  $region2: #{decoder_rnn_forward.5} parent=0 // pred_check
    _
  $region3: #{decoder_rnn_forward.5} parent=0 // pred_check_branch
    %9 = sbr.rel (0) target = $region5
  $region4: #{decoder_rnn_forward.5} parent=0 // pred_region
    _
  $region5: #{decoder_rnn_forward.5} parent=0 // pred_fallthru
    _
  // Predicated region
  $region6: #{decoder_rnn_forward.5} parent=0 // pred_check
    _
  $region7: #{decoder_rnn_forward.5} parent=0 // pred_check_branch
    %11 = sbr.rel (0) target = $region9
  $region8: #{decoder_rnn_forward.5} parent=0 // pred_region
    _
  $region9: #{decoder_rnn_forward.5} parent=0 // pred_fallthru
    _
  // Predicated region
  $region10: #{decoder_rnn_forward.5} parent=0 // pred_check
    _
  $region11: #{decoder_rnn_forward.5} parent=0 // pred_check_branch
    %13 = sbr.rel (0) target = $region13
  $region12: #{decoder_rnn_forward.5} parent=0 // pred_region
    _
  $region13: #{decoder_rnn_forward.5} parent=0 // pred_fallthru
    _
  %p14 = scmp.eq.s32.totalorder 0, 0
  // Predicated region
  $region14: #{decoder_rnn_forward.5} parent=0 // pred_check
    %p15 = pneg %p14
  $region15: #{decoder_rnn_forward.5} parent=0 // pred_check_branch
    %17 = sbr.rel (%p15) target = $region17
  $region16: #{decoder_rnn_forward.5} parent=0 // pred_region
    %18 = vst [vmem:[#allocation2] sm:$0xff] 0.0
    %19 = vst [vmem:[#allocation2 + $0x8] sm:$0xff] 0.0
    %20 = vst [vmem:[#allocation2 + $0x10] sm:$0xff] 0.0
    %21 = vst [vmem:[#allocation2 + $0x18] sm:$0xff] 0.0
    %22 = vst [vmem:[#allocation2 + $0x20] sm:$0xff] 0.0
    %23 = vst [vmem:[#allocation2 + $0x28] sm:$0xff] 0.0
    %24 = vst [vmem:[#allocation2 + $0x30] sm:$0xff] 0.0
  $region17: #{decoder_rnn_forward.5} parent=0 // pred_fallthru
    _
  %v25 = vld [vmem:[#allocation2] sm:$0xff]
  %v26 = vld [vmem:[#allocation2 + $0x8] sm:$0xff]
  %v27 = vld [vmem:[#allocation2 + $0x10] sm:$0xff]
  %v28 = vld [vmem:[#allocation2 + $0x18] sm:$0xff]
  %v29 = vld [vmem:[#allocation2 + $0x20] sm:$0xff]
  %v30 = vld [vmem:[#allocation2 + $0x28] sm:$0xff]
  %v31 = vld [vmem:[#allocation2 + $0x30] sm:$0xff]
  %v32 = vld [vmem:[%s0] sm:$0xf]
  %v33 = vld [vmem:[%s0 + $0x4] sm:$0xf]
  %v34 = vld [vmem:[%s0 + $0x8] sm:$0xf]
  %v35 = vld [vmem:[%s0 + $0xc] sm:$0xf]
  %v36 = vld [vmem:[%s0 + $0x10] sm:$0xf]
  %v37 = vld [vmem:[%s0 + $0x14] sm:$0xf]
  %v38 = vld [vmem:[%s0 + $0x18] sm:$0xf]
  %v39 = vld [vmem:[%s1] sm:$0xf]
  %v40 = vld [vmem:[%s1 + $0x4] sm:$0xf]
  %v41 = vld [vmem:[%s1 + $0x8] sm:$0xf]
  %v42 = vld [vmem:[%s1 + $0xc] sm:$0xf]
  %v43 = vld [vmem:[%s1 + $0x10] sm:$0xf]
  %v44 = vld [vmem:[%s1 + $0x14] sm:$0xf]
  %v45 = vld [vmem:[%s1 + $0x18] sm:$0xf]
  %v46 = vld [vmem:[%s1 + $0x1c] sm:$0xf]
  %v47 = vld [vmem:[%s1 + $0x20] sm:$0xf]
  %v48 = vld [vmem:[%s1 + $0x24] sm:$0xf]
  %v49 = vld [vmem:[%s1 + $0x28] sm:$0xf]
  %v50 = vld [vmem:[%s1 + $0x2c] sm:$0xf]
  %v51 = vld [vmem:[%s1 + $0x30] sm:$0xf]
  %v52 = vld [vmem:[%s1 + $0x34] sm:$0xf]
  %v53 = vld [vmem:[%s1 + $0x38] sm:$0xf]
  %v54 = vld [vmem:[%s1 + $0x3c] sm:$0xf]
  %v62 = vunpack.c.l.b16 %v32
  %v63 = vunpack.c.l.b16 %v33
  %v64 = vunpack.c.l.b16 %v34
  %v65 = vunpack.c.l.b16 %v35
  %v66 = vunpack.c.l.b16 %v36
  %v67 = vunpack.c.l.b16 %v37
  %v68 = vunpack.c.l.b16 %v38
  %v69 = vpack.c.b16 %v63, %v62
  %v70 = vpack.c.b16 %v65, %v64
  %v71 = vpack.c.b16 %v67, %v66
  %v72 = vpack.c.b16 %v68, %v68
  %v93 = vunpack.c.l.b16 %v39
  %v94 = vunpack.c.l.b16 %v40
  %v95 = vunpack.c.l.b16 %v41
  %v96 = vunpack.c.l.b16 %v42
  %v97 = vunpack.c.l.b16 %v43
  %v98 = vunpack.c.l.b16 %v44
  %v99 = vunpack.c.l.b16 %v45
  %v100 = vunpack.c.l.b16 %v46
  %v101 = vunpack.c.l.b16 %v47
  %v102 = vunpack.c.l.b16 %v48
  %v103 = vunpack.c.l.b16 %v49
  %v104 = vunpack.c.l.b16 %v50
  %v105 = vunpack.c.l.b16 %v51
  %v106 = vunpack.c.l.b16 %v52
  %v107 = vunpack.c.l.b16 %v53
  %v108 = vunpack.c.l.b16 %v54
  %v109 = vpack.c.b16 %v94, %v93
  %v110 = vpack.c.b16 %v96, %v95
  %v111 = vpack.c.b16 %v98, %v97
  %v112 = vpack.c.b16 %v100, %v99
  %v113 = vpack.c.b16 %v102, %v101
  %v114 = vpack.c.b16 %v104, %v103
  %v115 = vpack.c.b16 %v106, %v105
  %v116 = vpack.c.b16 %v108, %v107
  %125 = vmatpush.bf16.msra.mxu0 %v116
  %126 = vmatpush.bf16.msra.mxu0 %v115
  %127 = vmatpush.bf16.msra.mxu0 %v114
  %128 = vmatpush.bf16.msra.mxu0 %v113
  %129 = vmatpush.bf16.msra.mxu0 %v112
  %130 = vmatpush.bf16.msra.mxu0 %v111
  %131 = vmatpush.bf16.msra.mxu0 %v110
  %132 = vmatpush.bf16.msra.mxu0 %v109
  %133 = vmatmul.bf16.gmra.mxu0 %v69
  %v134 = vpop.f32.mrf.mxu0
  %v135 = vadd.f32 0.0, %v134
  %v136 = vpop.f32.mrf.mxu0
  %v137 = vadd.f32 0.0, %v136
  %138 = vmatmul.bf16.gmra.mxu0 %v70
  %v139 = vpop.f32.mrf.mxu0
  %v140 = vadd.f32 0.0, %v139
  %v141 = vpop.f32.mrf.mxu0
  %v142 = vadd.f32 0.0, %v141
  %143 = vmatmul.bf16.gmra.mxu0 %v71
  %v144 = vpop.f32.mrf.mxu0
  %v145 = vadd.f32 0.0, %v144
  %v146 = vpop.f32.mrf.mxu0
  %v147 = vadd.f32 0.0, %v146
  %148 = vmatmul.bf16.gmra.mxu0 %v72
  %v149 = vpop.f32.mrf.mxu0
  %v150 = vadd.f32 0.0, %v149
  %v151 = vpop.f32.mrf.mxu0
  %152 = vdwg.mxu0
  %v153 = vadd.f32 %v25, %v135
  %v154 = vadd.f32 %v26, %v137
  %v155 = vadd.f32 %v27, %v140
  %v156 = vadd.f32 %v28, %v142
  %v157 = vadd.f32 %v29, %v145
  %v158 = vadd.f32 %v30, %v147
  %v159 = vadd.f32 %v31, %v150
  %160 = vst [vmem:[#allocation2] sm:$0xff] %v153
  %161 = vst [vmem:[#allocation2 + $0x8] sm:$0xff] %v154
  %162 = vst [vmem:[#allocation2 + $0x10] sm:$0xff] %v155
  %163 = vst [vmem:[#allocation2 + $0x18] sm:$0xff] %v156
  %164 = vst [vmem:[#allocation2 + $0x20] sm:$0xff] %v157
  %165 = vst [vmem:[#allocation2 + $0x28] sm:$0xff] %v158
  %166 = vst [vmem:[#allocation2 + $0x30] sm:$0xff] %v159
  // Predicated region
  $region18: #{decoder_rnn_forward.5} parent=0 // pred_check
    %p167 = pneg %p14
  $region19: #{decoder_rnn_forward.5} parent=0 // pred_check_branch
    %169 = sbr.rel (%p167) target = $region21
  $region20: #{decoder_rnn_forward.5} parent=0 // pred_region
    %v170 = vld [vmem:[#allocation2] sm:$0xff]
    %v171 = vld [vmem:[#allocation2 + $0x8] sm:$0xff]
    %v172 = vld [vmem:[#allocation2 + $0x10] sm:$0xff]
    %v173 = vld [vmem:[#allocation2 + $0x18] sm:$0xff]
    %v174 = vld [vmem:[#allocation2 + $0x20] sm:$0xff]
    %v175 = vld [vmem:[#allocation2 + $0x28] sm:$0xff]
    %v176 = vld [vmem:[#allocation2 + $0x30] sm:$0xff]
    %v177 = vld [vmem:[%s2] sm:$0x1]
    %v179 = vperm.slane %v177, 0
    %v181 = vadd.f32 %v170, %v179
    %v182 = vadd.f32 %v171, %v179
    %v183 = vadd.f32 %v172, %v179
    %v184 = vadd.f32 %v173, %v179
    %v185 = vadd.f32 %v174, %v179
    %v186 = vadd.f32 %v175, %v179
    %v187 = vadd.f32 %v176, %v179
    %188 = vst [vmem:[%s3] sm:$0xff] %v181
    %189 = vst [vmem:[%s3 + $0x8] sm:$0xff] %v182
    %190 = vst [vmem:[%s3 + $0x10] sm:$0xff] %v183
    %191 = vst [vmem:[%s3 + $0x18] sm:$0xff] %v184
    %192 = vst [vmem:[%s3 + $0x20] sm:$0xff] %v185
    %193 = vst [vmem:[%s3 + $0x28] sm:$0xff] %v186
    %194 = vst [vmem:[%s3 + $0x30] sm:$0xff] %v187
  $region21: #{decoder_rnn_forward.5} parent=0 // pred_fallthru
    _
  // Predicated region
  $region22: #{decoder_rnn_forward.5} parent=0 // pred_check
    _
  $region23: #{decoder_rnn_forward.5} parent=0 // pred_check_branch
    %196 = sbr.rel (0) target = $region25
  $region24: #{decoder_rnn_forward.5} parent=0 // pred_region
    _
  $region25: #{decoder_rnn_forward.5} parent=0 // pred_fallthru
    _
  // Predicated region
  $region26: #{decoder_rnn_forward.5} parent=0 // pred_check
    _
  $region27: #{decoder_rnn_forward.5} parent=0 // pred_check_branch
    %198 = sbr.rel (0) target = $region29
  $region28: #{decoder_rnn_forward.5} parent=0 // pred_region
    _
  $region29: #{decoder_rnn_forward.5} parent=0 // pred_fallthru
    _

// kernel: decoder_rnn_forward.3
$region0: #{decoder_rnn_forward.3}
  #allocation0 [shape = 'u32[]', space=smem, size = 0x4, offset = 0x4, fixed_abs, tag = 'smem constant byte address 0x4 - core index']
  #allocation1 [shape = 'u32[72,128]{1,0:T(1,128)}', space=vmem, size = 0x9000, scoped, tag = 'internal scratch']
  #allocation2 [shape = 'f32[64,512]{1,0:T(8,128)}', space=vmem, size = 0x20000, scoped, tag = 'scratch operand']
  %s0 = inlined_call_operand.vmem [shape: bf16[64,128], index: 0, kind: input, shape index: {}]
  %s1 = inlined_call_operand.hbm [shape: bf16[128,512], index: 1, kind: input, shape index: {}]
  %s2 = inlined_call_operand.vmem [shape: f32[1,512], index: 2, kind: input, shape index: {}]
  %s3 = inlined_call_operand.vmem [shape: bf16[64,512], index: 3, kind: output, shape index: {}]
  %s4 = sld [smem:[#allocation0]]
  $region34: #{decoder_rnn_forward.3} parent=0
    _
  %s6 = ssub.s32 1, %s4
  %s7 = scalar_select 0, %s6, %s4
  $region1: #{decoder_rnn_forward.3} parent=0
    #allocation3 [shape = 'u8[131072]{0}', space=vmem, size = 0x20000, scoped, tag = 'input window, operand 1, single buffered']
    #allocation4 [shape = 's32[1]{0}', space=sflag, size = 0x4, scoped, tag = 'scoped memory for decoder_rnn_forward.3']
    %8 = vsyncpa [#allocation4], 0
    // Predicated region
    $region2: #{decoder_rnn_forward.3} parent=1 // pred_check
      _
    $region3: #{decoder_rnn_forward.3} parent=1 // pred_check_branch
      %10 = sbr.rel (0) target = $region5
    $region4: #{decoder_rnn_forward.3} parent=1 // pred_region
      _
    $region5: #{decoder_rnn_forward.3} parent=1 // pred_fallthru
      _
    // Predicated region
    $region6: #{decoder_rnn_forward.3} parent=1 // pred_check
      _
    $region7: #{decoder_rnn_forward.3} parent=1 // pred_check_branch
      %12 = sbr.rel (0) target = $region9
    $region8: #{decoder_rnn_forward.3} parent=1 // pred_region
      %14 = vsyncadd [#allocation4], 0
      %s15 = sshll.u32 %s1, 4
      %s16 = int_to_ptr.hbm [resolvable:$true] %s15
      %s17 = sshll.u32 [#allocation3], 4
      %s18 = int_to_ptr.vmem [resolvable:$true] %s17
      %23 = dma.hbm_to_vmem [thread:$0]  %s16, 4096, %s18, [#allocation4], 256, 256, 16
    $region9: #{decoder_rnn_forward.3} parent=1 // pred_fallthru
      _
    // Predicated region
    $region10: #{decoder_rnn_forward.3} parent=1 // pred_check
      _
    $region11: #{decoder_rnn_forward.3} parent=1 // pred_check_branch
      %25 = sbr.rel (0) target = $region13
    $region12: #{decoder_rnn_forward.3} parent=1 // pred_region
      _
    $region13: #{decoder_rnn_forward.3} parent=1 // pred_fallthru
      _
    // Predicated region
    $region14: #{decoder_rnn_forward.3} parent=1 // pred_check
      _
    $region15: #{decoder_rnn_forward.3} parent=1 // pred_check_branch
      %27 = sbr.rel (0) target = $region17
    $region16: #{decoder_rnn_forward.3} parent=1 // pred_region
      %29 = dma.done [#allocation4], 4096
    $region17: #{decoder_rnn_forward.3} parent=1 // pred_fallthru
      _
    %p30 = scmp.eq.s32.totalorder 0, 0
    // Predicated region
    $region18: #{decoder_rnn_forward.3} parent=1 // pred_check
      %p31 = pneg %p30
    $region19: #{decoder_rnn_forward.3} parent=1 // pred_check_branch
      %33 = sbr.rel (%p31) target = $region21
    $region20: #{decoder_rnn_forward.3} parent=1 // pred_region
      %34 = vst [vmem:[#allocation2] sm:$0xff] 0.0
      %35 = vst [vmem:[#allocation2 + $0x8] sm:$0xff] 0.0
      %36 = vst [vmem:[#allocation2 + $0x10] sm:$0xff] 0.0
      %37 = vst [vmem:[#allocation2 + $0x18] sm:$0xff] 0.0
      %38 = vst [vmem:[#allocation2 + $0x20] sm:$0xff] 0.0
      %39 = vst [vmem:[#allocation2 + $0x28] sm:$0xff] 0.0
      %40 = vst [vmem:[#allocation2 + $0x30] sm:$0xff] 0.0
      %41 = vst [vmem:[#allocation2 + $0x38] sm:$0xff] 0.0
      %42 = vst [vmem:[#allocation2 + $0x40] sm:$0xff] 0.0
      %43 = vst [vmem:[#allocation2 + $0x48] sm:$0xff] 0.0
      %44 = vst [vmem:[#allocation2 + $0x50] sm:$0xff] 0.0
      %45 = vst [vmem:[#allocation2 + $0x58] sm:$0xff] 0.0
      %46 = vst [vmem:[#allocation2 + $0x60] sm:$0xff] 0.0
      %47 = vst [vmem:[#allocation2 + $0x68] sm:$0xff] 0.0
      %48 = vst [vmem:[#allocation2 + $0x70] sm:$0xff] 0.0
      %49 = vst [vmem:[#allocation2 + $0x78] sm:$0xff] 0.0
      %50 = vst [vmem:[#allocation2 + $0x80] sm:$0xff] 0.0
      %51 = vst [vmem:[#allocation2 + $0x88] sm:$0xff] 0.0
      %52 = vst [vmem:[#allocation2 + $0x90] sm:$0xff] 0.0
      %53 = vst [vmem:[#allocation2 + $0x98] sm:$0xff] 0.0
      %54 = vst [vmem:[#allocation2 + $0xa0] sm:$0xff] 0.0
      %55 = vst [vmem:[#allocation2 + $0xa8] sm:$0xff] 0.0
      %56 = vst [vmem:[#allocation2 + $0xb0] sm:$0xff] 0.0
      %57 = vst [vmem:[#allocation2 + $0xb8] sm:$0xff] 0.0
      %58 = vst [vmem:[#allocation2 + $0xc0] sm:$0xff] 0.0
      %59 = vst [vmem:[#allocation2 + $0xc8] sm:$0xff] 0.0
      %60 = vst [vmem:[#allocation2 + $0xd0] sm:$0xff] 0.0
      %61 = vst [vmem:[#allocation2 + $0xd8] sm:$0xff] 0.0
      %62 = vst [vmem:[#allocation2 + $0xe0] sm:$0xff] 0.0
      %63 = vst [vmem:[#allocation2 + $0xe8] sm:$0xff] 0.0
      %64 = vst [vmem:[#allocation2 + $0xf0] sm:$0xff] 0.0
      %65 = vst [vmem:[#allocation2 + $0xf8] sm:$0xff] 0.0
    $region21: #{decoder_rnn_forward.3} parent=1 // pred_fallthru
      _
    %v66 = vld [vmem:[#allocation2] sm:$0xff]
    %v67 = vld [vmem:[#allocation2 + $0x8] sm:$0xff]
    %v68 = vld [vmem:[#allocation2 + $0x10] sm:$0xff]
    %v69 = vld [vmem:[#allocation2 + $0x18] sm:$0xff]
    %v70 = vld [vmem:[#allocation2 + $0x20] sm:$0xff]
    %v71 = vld [vmem:[#allocation2 + $0x28] sm:$0xff]
    %v72 = vld [vmem:[#allocation2 + $0x30] sm:$0xff]
    %v73 = vld [vmem:[#allocation2 + $0x38] sm:$0xff]
    %v74 = vld [vmem:[#allocation2 + $0x40] sm:$0xff]
    %v75 = vld [vmem:[#allocation2 + $0x48] sm:$0xff]
    %v76 = vld [vmem:[#allocation2 + $0x50] sm:$0xff]
    %v77 = vld [vmem:[#allocation2 + $0x58] sm:$0xff]
    %v78 = vld [vmem:[#allocation2 + $0x60] sm:$0xff]
    %v79 = vld [vmem:[#allocation2 + $0x68] sm:$0xff]
    %v80 = vld [vmem:[#allocation2 + $0x70] sm:$0xff]
    %v81 = vld [vmem:[#allocation2 + $0x78] sm:$0xff]
    %v82 = vld [vmem:[#allocation2 + $0x80] sm:$0xff]
    %v83 = vld [vmem:[#allocation2 + $0x88] sm:$0xff]
    %v84 = vld [vmem:[#allocation2 + $0x90] sm:$0xff]
    %v85 = vld [vmem:[#allocation2 + $0x98] sm:$0xff]
    %v86 = vld [vmem:[#allocation2 + $0xa0] sm:$0xff]
    %v87 = vld [vmem:[#allocation2 + $0xa8] sm:$0xff]
    %v88 = vld [vmem:[#allocation2 + $0xb0] sm:$0xff]
    %v89 = vld [vmem:[#allocation2 + $0xb8] sm:$0xff]
    %v90 = vld [vmem:[#allocation2 + $0xc0] sm:$0xff]
    %v91 = vld [vmem:[#allocation2 + $0xc8] sm:$0xff]
    %v92 = vld [vmem:[#allocation2 + $0xd0] sm:$0xff]
    %v93 = vld [vmem:[#allocation2 + $0xd8] sm:$0xff]
    %v94 = vld [vmem:[#allocation2 + $0xe0] sm:$0xff]
    %v95 = vld [vmem:[#allocation2 + $0xe8] sm:$0xff]
    %v96 = vld [vmem:[#allocation2 + $0xf0] sm:$0xff]
    %v97 = vld [vmem:[#allocation2 + $0xf8] sm:$0xff]
    %v98 = vld [vmem:[%s0] sm:$0xf]
    %v99 = vld [vmem:[%s0 + $0x4] sm:$0xf]
    %v100 = vld [vmem:[%s0 + $0x8] sm:$0xf]
    %v101 = vld [vmem:[%s0 + $0xc] sm:$0xf]
    %v102 = vld [vmem:[%s0 + $0x10] sm:$0xf]
    %v103 = vld [vmem:[%s0 + $0x14] sm:$0xf]
    %v104 = vld [vmem:[%s0 + $0x18] sm:$0xf]
    %v105 = vld [vmem:[%s0 + $0x1c] sm:$0xf]
    %v106 = vld [vmem:[#allocation3] sm:$0xff]
    %v107 = vld [vmem:[#allocation3 + $0x8] sm:$0xff]
    %v108 = vld [vmem:[#allocation3 + $0x10] sm:$0xff]
    %v109 = vld [vmem:[#allocation3 + $0x18] sm:$0xff]
    %v110 = vld [vmem:[#allocation3 + $0x20] sm:$0xff]
    %v111 = vld [vmem:[#allocation3 + $0x28] sm:$0xff]
    %v112 = vld [vmem:[#allocation3 + $0x30] sm:$0xff]
    %v113 = vld [vmem:[#allocation3 + $0x38] sm:$0xff]
    %v114 = vld [vmem:[#allocation3 + $0x40] sm:$0xff]
    %v115 = vld [vmem:[#allocation3 + $0x48] sm:$0xff]
    %v116 = vld [vmem:[#allocation3 + $0x50] sm:$0xff]
    %v117 = vld [vmem:[#allocation3 + $0x58] sm:$0xff]
    %v118 = vld [vmem:[#allocation3 + $0x60] sm:$0xff]
    %v119 = vld [vmem:[#allocation3 + $0x68] sm:$0xff]
    %v120 = vld [vmem:[#allocation3 + $0x70] sm:$0xff]
    %v121 = vld [vmem:[#allocation3 + $0x78] sm:$0xff]
    %v122 = vld [vmem:[#allocation3 + $0x80] sm:$0xff]
    %v123 = vld [vmem:[#allocation3 + $0x88] sm:$0xff]
    %v124 = vld [vmem:[#allocation3 + $0x90] sm:$0xff]
    %v125 = vld [vmem:[#allocation3 + $0x98] sm:$0xff]
    %v126 = vld [vmem:[#allocation3 + $0xa0] sm:$0xff]
    %v127 = vld [vmem:[#allocation3 + $0xa8] sm:$0xff]
    %v128 = vld [vmem:[#allocation3 + $0xb0] sm:$0xff]
    %v129 = vld [vmem:[#allocation3 + $0xb8] sm:$0xff]
    %v130 = vld [vmem:[#allocation3 + $0xc0] sm:$0xff]
    %v131 = vld [vmem:[#allocation3 + $0xc8] sm:$0xff]
    %v132 = vld [vmem:[#allocation3 + $0xd0] sm:$0xff]
    %v133 = vld [vmem:[#allocation3 + $0xd8] sm:$0xff]
    %v134 = vld [vmem:[#allocation3 + $0xe0] sm:$0xff]
    %v135 = vld [vmem:[#allocation3 + $0xe8] sm:$0xff]
    %v136 = vld [vmem:[#allocation3 + $0xf0] sm:$0xff]
    %v137 = vld [vmem:[#allocation3 + $0xf8] sm:$0xff]
    %v146 = vunpack.c.l.b16 %v98
    %v147 = vunpack.c.l.b16 %v99
    %v148 = vunpack.c.l.b16 %v100
    %v149 = vunpack.c.l.b16 %v101
    %v150 = vunpack.c.l.b16 %v102
    %v151 = vunpack.c.l.b16 %v103
    %v152 = vunpack.c.l.b16 %v104
    %v153 = vunpack.c.l.b16 %v105
    %v154 = vpack.c.b16 %v147, %v146
    %v155 = vpack.c.b16 %v149, %v148
    %v156 = vpack.c.b16 %v151, %v150
    %v157 = vpack.c.b16 %v153, %v152
    %v194 = vunpack.c.l.b16 %v106
    %v195 = vunpack.c.h.b16 %v106
    %v196 = vunpack.c.l.b16 %v107
    %v197 = vunpack.c.h.b16 %v107
    %v198 = vunpack.c.l.b16 %v108
    %v199 = vunpack.c.h.b16 %v108
    %v200 = vunpack.c.l.b16 %v109
    %v201 = vunpack.c.h.b16 %v109
    %v202 = vunpack.c.l.b16 %v110
    %v203 = vunpack.c.h.b16 %v110
    %v204 = vunpack.c.l.b16 %v111
    %v205 = vunpack.c.h.b16 %v111
    %v206 = vunpack.c.l.b16 %v112
    %v207 = vunpack.c.h.b16 %v112
    %v208 = vunpack.c.l.b16 %v113
    %v209 = vunpack.c.h.b16 %v113
    %v210 = vunpack.c.l.b16 %v114
    %v211 = vunpack.c.h.b16 %v114
    %v212 = vunpack.c.l.b16 %v115
    %v213 = vunpack.c.h.b16 %v115
    %v214 = vunpack.c.l.b16 %v116
    %v215 = vunpack.c.h.b16 %v116
    %v216 = vunpack.c.l.b16 %v117
    %v217 = vunpack.c.h.b16 %v117
    %v218 = vunpack.c.l.b16 %v118
    %v219 = vunpack.c.h.b16 %v118
    %v220 = vunpack.c.l.b16 %v119
    %v221 = vunpack.c.h.b16 %v119
    %v222 = vunpack.c.l.b16 %v120
    %v223 = vunpack.c.h.b16 %v120
    %v224 = vunpack.c.l.b16 %v121
    %v225 = vunpack.c.h.b16 %v121
    %v226 = vunpack.c.l.b16 %v122
    %v227 = vunpack.c.h.b16 %v122
    %v228 = vunpack.c.l.b16 %v123
    %v229 = vunpack.c.h.b16 %v123
    %v230 = vunpack.c.l.b16 %v124
    %v231 = vunpack.c.h.b16 %v124
    %v232 = vunpack.c.l.b16 %v125
    %v233 = vunpack.c.h.b16 %v125
    %v234 = vunpack.c.l.b16 %v126
    %v235 = vunpack.c.h.b16 %v126
    %v236 = vunpack.c.l.b16 %v127
    %v237 = vunpack.c.h.b16 %v127
    %v238 = vunpack.c.l.b16 %v128
    %v239 = vunpack.c.h.b16 %v128
    %v240 = vunpack.c.l.b16 %v129
    %v241 = vunpack.c.h.b16 %v129
    %v242 = vunpack.c.l.b16 %v130
    %v243 = vunpack.c.h.b16 %v130
    %v244 = vunpack.c.l.b16 %v131
    %v245 = vunpack.c.h.b16 %v131
    %v246 = vunpack.c.l.b16 %v132
    %v247 = vunpack.c.h.b16 %v132
    %v248 = vunpack.c.l.b16 %v133
    %v249 = vunpack.c.h.b16 %v133
    %v250 = vunpack.c.l.b16 %v134
    %v251 = vunpack.c.h.b16 %v134
    %v252 = vunpack.c.l.b16 %v135
    %v253 = vunpack.c.h.b16 %v135
    %v254 = vunpack.c.l.b16 %v136
    %v255 = vunpack.c.h.b16 %v136
    %v256 = vunpack.c.l.b16 %v137
    %v257 = vunpack.c.h.b16 %v137
    %v258 = vpack.c.b16 %v198, %v194
    %v259 = vpack.c.b16 %v199, %v195
    %v260 = vpack.c.b16 %v200, %v196
    %v261 = vpack.c.b16 %v201, %v197
    %v262 = vpack.c.b16 %v206, %v202
    %v263 = vpack.c.b16 %v207, %v203
    %v264 = vpack.c.b16 %v208, %v204
    %v265 = vpack.c.b16 %v209, %v205
    %v266 = vpack.c.b16 %v214, %v210
    %v267 = vpack.c.b16 %v215, %v211
    %v268 = vpack.c.b16 %v216, %v212
    %v269 = vpack.c.b16 %v217, %v213
    %v270 = vpack.c.b16 %v222, %v218
    %v271 = vpack.c.b16 %v223, %v219
    %v272 = vpack.c.b16 %v224, %v220
    %v273 = vpack.c.b16 %v225, %v221
    %v274 = vpack.c.b16 %v230, %v226
    %v275 = vpack.c.b16 %v231, %v227
    %v276 = vpack.c.b16 %v232, %v228
    %v277 = vpack.c.b16 %v233, %v229
    %v278 = vpack.c.b16 %v238, %v234
    %v279 = vpack.c.b16 %v239, %v235
    %v280 = vpack.c.b16 %v240, %v236
    %v281 = vpack.c.b16 %v241, %v237
    %v282 = vpack.c.b16 %v246, %v242
    %v283 = vpack.c.b16 %v247, %v243
    %v284 = vpack.c.b16 %v248, %v244
    %v285 = vpack.c.b16 %v249, %v245
    %v286 = vpack.c.b16 %v254, %v250
    %v287 = vpack.c.b16 %v255, %v251
    %v288 = vpack.c.b16 %v256, %v252
    %v289 = vpack.c.b16 %v257, %v253
    %322 = vmatpush.bf16.msra.mxu0 %v286
    %323 = vmatpush.bf16.msra.mxu0 %v282
    %324 = vmatpush.bf16.msra.mxu0 %v278
    %325 = vmatpush.bf16.msra.mxu0 %v274
    %326 = vmatpush.bf16.msra.mxu0 %v270
    %327 = vmatpush.bf16.msra.mxu0 %v266
    %328 = vmatpush.bf16.msra.mxu0 %v262
    %329 = vmatpush.bf16.msra.mxu0 %v258
    %330 = vmatmul.bf16.gmra.mxu0 %v154
    %v331 = vpop.f32.mrf.mxu0
    %v332 = vadd.f32 0.0, %v331
    %v333 = vpop.f32.mrf.mxu0
    %v334 = vadd.f32 0.0, %v333
    %335 = vmatmul.bf16.gmra.mxu0 %v155
    %v336 = vpop.f32.mrf.mxu0
    %v337 = vadd.f32 0.0, %v336
    %v338 = vpop.f32.mrf.mxu0
    %v339 = vadd.f32 0.0, %v338
    %340 = vmatmul.bf16.gmra.mxu0 %v156
    %v341 = vpop.f32.mrf.mxu0
    %v342 = vadd.f32 0.0, %v341
    %v343 = vpop.f32.mrf.mxu0
    %v344 = vadd.f32 0.0, %v343
    %345 = vmatmul.bf16.gmra.mxu0 %v157
    %v346 = vpop.f32.mrf.mxu0
    %v347 = vadd.f32 0.0, %v346
    %v348 = vpop.f32.mrf.mxu0
    %v349 = vadd.f32 0.0, %v348
    %350 = vdwg.mxu0
    %351 = vmatpush.bf16.msra.mxu0 %v287
    %352 = vmatpush.bf16.msra.mxu0 %v283
    %353 = vmatpush.bf16.msra.mxu0 %v279
    %354 = vmatpush.bf16.msra.mxu0 %v275
    %355 = vmatpush.bf16.msra.mxu0 %v271
    %356 = vmatpush.bf16.msra.mxu0 %v267
    %357 = vmatpush.bf16.msra.mxu0 %v263
    %358 = vmatpush.bf16.msra.mxu0 %v259
    %359 = vmatmul.bf16.gmra.mxu0 %v154
    %v360 = vpop.f32.mrf.mxu0
    %v361 = vadd.f32 0.0, %v360
    %v362 = vpop.f32.mrf.mxu0
    %v363 = vadd.f32 0.0, %v362
    %364 = vmatmul.bf16.gmra.mxu0 %v155
    %v365 = vpop.f32.mrf.mxu0
    %v366 = vadd.f32 0.0, %v365
    %v367 = vpop.f32.mrf.mxu0
    %v368 = vadd.f32 0.0, %v367
    %369 = vmatmul.bf16.gmra.mxu0 %v156
    %v370 = vpop.f32.mrf.mxu0
    %v371 = vadd.f32 0.0, %v370
    %v372 = vpop.f32.mrf.mxu0
    %v373 = vadd.f32 0.0, %v372
    %374 = vmatmul.bf16.gmra.mxu0 %v157
    %v375 = vpop.f32.mrf.mxu0
    %v376 = vadd.f32 0.0, %v375
    %v377 = vpop.f32.mrf.mxu0
    %v378 = vadd.f32 0.0, %v377
    %379 = vdwg.mxu0
    %380 = vmatpush.bf16.msra.mxu0 %v288
    %381 = vmatpush.bf16.msra.mxu0 %v284
    %382 = vmatpush.bf16.msra.mxu0 %v280
    %383 = vmatpush.bf16.msra.mxu0 %v276
    %384 = vmatpush.bf16.msra.mxu0 %v272
    %385 = vmatpush.bf16.msra.mxu0 %v268
    %386 = vmatpush.bf16.msra.mxu0 %v264
    %387 = vmatpush.bf16.msra.mxu0 %v260
    %388 = vmatmul.bf16.gmra.mxu0 %v154
    %v389 = vpop.f32.mrf.mxu0
    %v390 = vadd.f32 0.0, %v389
    %v391 = vpop.f32.mrf.mxu0
    %v392 = vadd.f32 0.0, %v391
    %393 = vmatmul.bf16.gmra.mxu0 %v155
    %v394 = vpop.f32.mrf.mxu0
    %v395 = vadd.f32 0.0, %v394
    %v396 = vpop.f32.mrf.mxu0
    %v397 = vadd.f32 0.0, %v396
    %398 = vmatmul.bf16.gmra.mxu0 %v156
    %v399 = vpop.f32.mrf.mxu0
    %v400 = vadd.f32 0.0, %v399
    %v401 = vpop.f32.mrf.mxu0
    %v402 = vadd.f32 0.0, %v401
    %403 = vmatmul.bf16.gmra.mxu0 %v157
    %v404 = vpop.f32.mrf.mxu0
    %v405 = vadd.f32 0.0, %v404
    %v406 = vpop.f32.mrf.mxu0
    %v407 = vadd.f32 0.0, %v406
    %408 = vdwg.mxu0
    %409 = vmatpush.bf16.msra.mxu0 %v289
    %410 = vmatpush.bf16.msra.mxu0 %v285
    %411 = vmatpush.bf16.msra.mxu0 %v281
    %412 = vmatpush.bf16.msra.mxu0 %v277
    %413 = vmatpush.bf16.msra.mxu0 %v273
    %414 = vmatpush.bf16.msra.mxu0 %v269
    %415 = vmatpush.bf16.msra.mxu0 %v265
    %416 = vmatpush.bf16.msra.mxu0 %v261
    %417 = vmatmul.bf16.gmra.mxu0 %v154
    %v418 = vpop.f32.mrf.mxu0
    %v419 = vadd.f32 0.0, %v418
    %v420 = vpop.f32.mrf.mxu0
    %v421 = vadd.f32 0.0, %v420
    %422 = vmatmul.bf16.gmra.mxu0 %v155
    %v423 = vpop.f32.mrf.mxu0
    %v424 = vadd.f32 0.0, %v423
    %v425 = vpop.f32.mrf.mxu0
    %v426 = vadd.f32 0.0, %v425
    %427 = vmatmul.bf16.gmra.mxu0 %v156
    %v428 = vpop.f32.mrf.mxu0
    %v429 = vadd.f32 0.0, %v428
    %v430 = vpop.f32.mrf.mxu0
    %v431 = vadd.f32 0.0, %v430
    %432 = vmatmul.bf16.gmra.mxu0 %v157
    %v433 = vpop.f32.mrf.mxu0
    %v434 = vadd.f32 0.0, %v433
    %v435 = vpop.f32.mrf.mxu0
    %v436 = vadd.f32 0.0, %v435
    %437 = vdwg.mxu0
    %v438 = vadd.f32 %v66, %v332
    %v439 = vadd.f32 %v67, %v361
    %v440 = vadd.f32 %v68, %v390
    %v441 = vadd.f32 %v69, %v419
    %v442 = vadd.f32 %v70, %v334
    %v443 = vadd.f32 %v71, %v363
    %v444 = vadd.f32 %v72, %v392
    %v445 = vadd.f32 %v73, %v421
    %v446 = vadd.f32 %v74, %v337
    %v447 = vadd.f32 %v75, %v366
    %v448 = vadd.f32 %v76, %v395
    %v449 = vadd.f32 %v77, %v424
    %v450 = vadd.f32 %v78, %v339
    %v451 = vadd.f32 %v79, %v368
    %v452 = vadd.f32 %v80, %v397
    %v453 = vadd.f32 %v81, %v426
    %v454 = vadd.f32 %v82, %v342
    %v455 = vadd.f32 %v83, %v371
    %v456 = vadd.f32 %v84, %v400
    %v457 = vadd.f32 %v85, %v429
    %v458 = vadd.f32 %v86, %v344
    %v459 = vadd.f32 %v87, %v373
    %v460 = vadd.f32 %v88, %v402
    %v461 = vadd.f32 %v89, %v431
    %v462 = vadd.f32 %v90, %v347
    %v463 = vadd.f32 %v91, %v376
    %v464 = vadd.f32 %v92, %v405
    %v465 = vadd.f32 %v93, %v434
    %v466 = vadd.f32 %v94, %v349
    %v467 = vadd.f32 %v95, %v378
    %v468 = vadd.f32 %v96, %v407
    %v469 = vadd.f32 %v97, %v436
    %470 = vst [vmem:[#allocation2] sm:$0xff] %v438
    %471 = vst [vmem:[#allocation2 + $0x8] sm:$0xff] %v439
    %472 = vst [vmem:[#allocation2 + $0x10] sm:$0xff] %v440
    %473 = vst [vmem:[#allocation2 + $0x18] sm:$0xff] %v441
    %474 = vst [vmem:[#allocation2 + $0x20] sm:$0xff] %v442
    %475 = vst [vmem:[#allocation2 + $0x28] sm:$0xff] %v443
    %476 = vst [vmem:[#allocation2 + $0x30] sm:$0xff] %v444
    %477 = vst [vmem:[#allocation2 + $0x38] sm:$0xff] %v445
    %478 = vst [vmem:[#allocation2 + $0x40] sm:$0xff] %v446
    %479 = vst [vmem:[#allocation2 + $0x48] sm:$0xff] %v447
    %480 = vst [vmem:[#allocation2 + $0x50] sm:$0xff] %v448
    %481 = vst [vmem:[#allocation2 + $0x58] sm:$0xff] %v449
    %482 = vst [vmem:[#allocation2 + $0x60] sm:$0xff] %v450
    %483 = vst [vmem:[#allocation2 + $0x68] sm:$0xff] %v451
    %484 = vst [vmem:[#allocation2 + $0x70] sm:$0xff] %v452
    %485 = vst [vmem:[#allocation2 + $0x78] sm:$0xff] %v453
    %486 = vst [vmem:[#allocation2 + $0x80] sm:$0xff] %v454
    %487 = vst [vmem:[#allocation2 + $0x88] sm:$0xff] %v455
    %488 = vst [vmem:[#allocation2 + $0x90] sm:$0xff] %v456
    %489 = vst [vmem:[#allocation2 + $0x98] sm:$0xff] %v457
    %490 = vst [vmem:[#allocation2 + $0xa0] sm:$0xff] %v458
    %491 = vst [vmem:[#allocation2 + $0xa8] sm:$0xff] %v459
    %492 = vst [vmem:[#allocation2 + $0xb0] sm:$0xff] %v460
    %493 = vst [vmem:[#allocation2 + $0xb8] sm:$0xff] %v461
    %494 = vst [vmem:[#allocation2 + $0xc0] sm:$0xff] %v462
    %495 = vst [vmem:[#allocation2 + $0xc8] sm:$0xff] %v463
    %496 = vst [vmem:[#allocation2 + $0xd0] sm:$0xff] %v464
    %497 = vst [vmem:[#allocation2 + $0xd8] sm:$0xff] %v465
    %498 = vst [vmem:[#allocation2 + $0xe0] sm:$0xff] %v466
    %499 = vst [vmem:[#allocation2 + $0xe8] sm:$0xff] %v467
    %500 = vst [vmem:[#allocation2 + $0xf0] sm:$0xff] %v468
    %501 = vst [vmem:[#allocation2 + $0xf8] sm:$0xff] %v469
    // Predicated region
    $region22: #{decoder_rnn_forward.3} parent=1 // pred_check
      %p502 = pneg %p30
    $region23: #{decoder_rnn_forward.3} parent=1 // pred_check_branch
      %504 = sbr.rel (%p502) target = $region25
    $region24: #{decoder_rnn_forward.3} parent=1 // pred_region
      %v505 = vld [vmem:[#allocation2] sm:$0xff]
      %v506 = vld [vmem:[#allocation2 + $0x8] sm:$0xff]
      %v507 = vld [vmem:[#allocation2 + $0x10] sm:$0xff]
      %v508 = vld [vmem:[#allocation2 + $0x18] sm:$0xff]
      %v509 = vld [vmem:[#allocation2 + $0x20] sm:$0xff]
      %v510 = vld [vmem:[#allocation2 + $0x28] sm:$0xff]
      %v511 = vld [vmem:[#allocation2 + $0x30] sm:$0xff]
      %v512 = vld [vmem:[#allocation2 + $0x38] sm:$0xff]
      %v513 = vld [vmem:[#allocation2 + $0x40] sm:$0xff]
      %v514 = vld [vmem:[#allocation2 + $0x48] sm:$0xff]
      %v515 = vld [vmem:[#allocation2 + $0x50] sm:$0xff]
      %v516 = vld [vmem:[#allocation2 + $0x58] sm:$0xff]
      %v517 = vld [vmem:[#allocation2 + $0x60] sm:$0xff]
      %v518 = vld [vmem:[#allocation2 + $0x68] sm:$0xff]
      %v519 = vld [vmem:[#allocation2 + $0x70] sm:$0xff]
      %v520 = vld [vmem:[#allocation2 + $0x78] sm:$0xff]
      %v521 = vld [vmem:[#allocation2 + $0x80] sm:$0xff]
      %v522 = vld [vmem:[#allocation2 + $0x88] sm:$0xff]
      %v523 = vld [vmem:[#allocation2 + $0x90] sm:$0xff]
      %v524 = vld [vmem:[#allocation2 + $0x98] sm:$0xff]
      %v525 = vld [vmem:[#allocation2 + $0xa0] sm:$0xff]
      %v526 = vld [vmem:[#allocation2 + $0xa8] sm:$0xff]
      %v527 = vld [vmem:[#allocation2 + $0xb0] sm:$0xff]
      %v528 = vld [vmem:[#allocation2 + $0xb8] sm:$0xff]
      %v529 = vld [vmem:[#allocation2 + $0xc0] sm:$0xff]
      %v530 = vld [vmem:[#allocation2 + $0xc8] sm:$0xff]
      %v531 = vld [vmem:[#allocation2 + $0xd0] sm:$0xff]
      %v532 = vld [vmem:[#allocation2 + $0xd8] sm:$0xff]
      %v533 = vld [vmem:[#allocation2 + $0xe0] sm:$0xff]
      %v534 = vld [vmem:[#allocation2 + $0xe8] sm:$0xff]
      %v535 = vld [vmem:[#allocation2 + $0xf0] sm:$0xff]
      %v536 = vld [vmem:[#allocation2 + $0xf8] sm:$0xff]
      %v537 = vld [vmem:[%s2] sm:$0xf]
      %v539 = vperm.slane %v537, 0
      %v540 = vperm.slane %v537, 1
      %v541 = vperm.slane %v537, 2
      %v542 = vperm.slane %v537, 3
      %v547 = vadd.f32 %v505, %v539
      %v548 = vadd.f32 %v506, %v540
      %v549 = vadd.f32 %v507, %v541
      %v550 = vadd.f32 %v508, %v542
      %v551 = vadd.f32 %v509, %v539
      %v552 = vadd.f32 %v510, %v540
      %v553 = vadd.f32 %v511, %v541
      %v554 = vadd.f32 %v512, %v542
      %v555 = vadd.f32 %v513, %v539
      %v556 = vadd.f32 %v514, %v540
      %v557 = vadd.f32 %v515, %v541
      %v558 = vadd.f32 %v516, %v542
      %v559 = vadd.f32 %v517, %v539
      %v560 = vadd.f32 %v518, %v540
      %v561 = vadd.f32 %v519, %v541
      %v562 = vadd.f32 %v520, %v542
      %v563 = vadd.f32 %v521, %v539
      %v564 = vadd.f32 %v522, %v540
      %v565 = vadd.f32 %v523, %v541
      %v566 = vadd.f32 %v524, %v542
      %v567 = vadd.f32 %v525, %v539
      %v568 = vadd.f32 %v526, %v540
      %v569 = vadd.f32 %v527, %v541
      %v570 = vadd.f32 %v528, %v542
      %v571 = vadd.f32 %v529, %v539
      %v572 = vadd.f32 %v530, %v540
      %v573 = vadd.f32 %v531, %v541
      %v574 = vadd.f32 %v532, %v542
      %v575 = vadd.f32 %v533, %v539
      %v576 = vadd.f32 %v534, %v540
      %v577 = vadd.f32 %v535, %v541
      %v578 = vadd.f32 %v536, %v542
      %v579 = vpack.c.bf16 %v548, %v547
      %v580 = vpack.c.bf16 %v550, %v549
      %v581 = vpack.c.bf16 %v552, %v551
      %v582 = vpack.c.bf16 %v554, %v553
      %v583 = vpack.c.bf16 %v556, %v555
      %v584 = vpack.c.bf16 %v558, %v557
      %v585 = vpack.c.bf16 %v560, %v559
      %v586 = vpack.c.bf16 %v562, %v561
      %v587 = vpack.c.bf16 %v564, %v563
      %v588 = vpack.c.bf16 %v566, %v565
      %v589 = vpack.c.bf16 %v568, %v567
      %v590 = vpack.c.bf16 %v570, %v569
      %v591 = vpack.c.bf16 %v572, %v571
      %v592 = vpack.c.bf16 %v574, %v573
      %v593 = vpack.c.bf16 %v576, %v575
      %v594 = vpack.c.bf16 %v578, %v577
      %595 = vst [vmem:[%s3] sm:$0xff] %v579
      %596 = vst [vmem:[%s3 + $0x8] sm:$0xff] %v580
      %597 = vst [vmem:[%s3 + $0x10] sm:$0xff] %v581
      %598 = vst [vmem:[%s3 + $0x18] sm:$0xff] %v582
      %599 = vst [vmem:[%s3 + $0x20] sm:$0xff] %v583
      %600 = vst [vmem:[%s3 + $0x28] sm:$0xff] %v584
      %601 = vst [vmem:[%s3 + $0x30] sm:$0xff] %v585
      %602 = vst [vmem:[%s3 + $0x38] sm:$0xff] %v586
      %603 = vst [vmem:[%s3 + $0x40] sm:$0xff] %v587
      %604 = vst [vmem:[%s3 + $0x48] sm:$0xff] %v588
      %605 = vst [vmem:[%s3 + $0x50] sm:$0xff] %v589
      %606 = vst [vmem:[%s3 + $0x58] sm:$0xff] %v590
      %607 = vst [vmem:[%s3 + $0x60] sm:$0xff] %v591
      %608 = vst [vmem:[%s3 + $0x68] sm:$0xff] %v592
      %609 = vst [vmem:[%s3 + $0x70] sm:$0xff] %v593
      %610 = vst [vmem:[%s3 + $0x78] sm:$0xff] %v594
    $region25: #{decoder_rnn_forward.3} parent=1 // pred_fallthru
      _
    // Predicated region
    $region26: #{decoder_rnn_forward.3} parent=1 // pred_check
      _
    $region27: #{decoder_rnn_forward.3} parent=1 // pred_check_branch
      %612 = sbr.rel (0) target = $region29
    $region28: #{decoder_rnn_forward.3} parent=1 // pred_region
      _
    $region29: #{decoder_rnn_forward.3} parent=1 // pred_fallthru
      _
    // Predicated region
    $region30: #{decoder_rnn_forward.3} parent=1 // pred_check
      _
    $region31: #{decoder_rnn_forward.3} parent=1 // pred_check_branch
      %614 = sbr.rel (0) target = $region33
    $region32: #{decoder_rnn_forward.3} parent=1 // pred_region
      _
    $region33: #{decoder_rnn_forward.3} parent=1 // pred_fallthru
      _
    %615 = vsyncpa [#allocation4], 1

// kernel: decoder_rnn_forward.4
$region0: #{decoder_rnn_forward.4}
  #allocation0 [shape = 'u32[]', space=smem, size = 0x4, offset = 0x4, fixed_abs, tag = 'smem constant byte address 0x4 - core index']
  #allocation1 [shape = 'u32[72,128]{1,0:T(1,128)}', space=vmem, size = 0x9000, scoped, tag = 'internal scratch']
  #allocation2 [shape = 'f32[2,8,128]{2,1,0:T(8,128)}', space=vmem, size = 0x2000, scoped, tag = 'scratch operand']
  #allocation3 [shape = 'f32[2,8,128]{2,1,0:T(8,128)}', space=vmem, size = 0x2000, scoped, tag = 'scratch operand']
  %s0 = inlined_call_operand.vmem [shape: bf16[8,8,512], index: 0, kind: input, shape index: {}]
  %s1 = inlined_call_operand.hbm [shape: bf16[128,512], index: 1, kind: input, shape index: {}]
  %s2 = inlined_call_operand.hbm [shape: bf16[256,512], index: 2, kind: input, shape index: {}]
  %s3 = inlined_call_operand.vmem [shape: f32[1,512], index: 3, kind: input, shape index: {}]
  %s4 = inlined_call_operand.vmem [shape: bf16[8,8,128], index: 4, kind: output, shape index: {}]
  %s5 = sld [smem:[#allocation0]]
  $region38: #{decoder_rnn_forward.4} parent=0
    _
  %s7 = ssub.s32 1, %s5
  %s8 = scalar_select 0, %s7, %s5
  $region1: #{decoder_rnn_forward.4} parent=0
    #allocation4 [shape = 'u8[131072]{0}', space=vmem, size = 0x20000, scoped, tag = 'input window, operand 1, single buffered']
    #allocation5 [shape = 's32[1]{0}', space=sflag, size = 0x4, scoped, tag = 'scoped memory for decoder_rnn_forward.4']
    #allocation6 [shape = 'u8[262144]{0}', space=vmem, size = 0x40000, scoped, tag = 'input window, operand 2, single buffered']
    #allocation7 [shape = 's32[1]{0}', space=sflag, size = 0x4, scoped, tag = 'scoped memory for decoder_rnn_forward.4']
    %9 = vsyncpa [#allocation5], 0
    %10 = vsyncpa [#allocation7], 0
    // Predicated region
    $region2: #{decoder_rnn_forward.4} parent=1 // pred_check
      _
    $region3: #{decoder_rnn_forward.4} parent=1 // pred_check_branch
      %12 = sbr.rel (0) target = $region5
    $region4: #{decoder_rnn_forward.4} parent=1 // pred_region
      _
    $region5: #{decoder_rnn_forward.4} parent=1 // pred_fallthru
      _
    // Predicated region
    $region6: #{decoder_rnn_forward.4} parent=1 // pred_check
      _
    $region7: #{decoder_rnn_forward.4} parent=1 // pred_check_branch
      %14 = sbr.rel (0) target = $region9
    $region8: #{decoder_rnn_forward.4} parent=1 // pred_region
      %16 = vsyncadd [#allocation5], 0
      %s17 = sshll.u32 %s1, 4
      %s18 = int_to_ptr.hbm [resolvable:$true] %s17
      %s19 = sshll.u32 [#allocation4], 4
      %s20 = int_to_ptr.vmem [resolvable:$true] %s19
      %25 = dma.hbm_to_vmem [thread:$0]  %s18, 4096, %s20, [#allocation5], 256, 256, 16
    $region9: #{decoder_rnn_forward.4} parent=1 // pred_fallthru
      _
    // Predicated region
    $region10: #{decoder_rnn_forward.4} parent=1 // pred_check
      _
    $region11: #{decoder_rnn_forward.4} parent=1 // pred_check_branch
      %27 = sbr.rel (0) target = $region13
    $region12: #{decoder_rnn_forward.4} parent=1 // pred_region
      %29 = vsyncadd [#allocation7], 0
      %s30 = sshll.u32 %s2, 4
      %s31 = int_to_ptr.hbm [resolvable:$true] %s30
      %s32 = sshll.u32 [#allocation6], 4
      %s33 = int_to_ptr.vmem [resolvable:$true] %s32
      %38 = dma.hbm_to_vmem [thread:$0]  %s31, 8192, %s33, [#allocation7], 256, 256, 16
    $region13: #{decoder_rnn_forward.4} parent=1 // pred_fallthru
      _
    // Predicated region
    $region14: #{decoder_rnn_forward.4} parent=1 // pred_check
      _
    $region15: #{decoder_rnn_forward.4} parent=1 // pred_check_branch
      %40 = sbr.rel (0) target = $region17
    $region16: #{decoder_rnn_forward.4} parent=1 // pred_region
      _
    $region17: #{decoder_rnn_forward.4} parent=1 // pred_fallthru
      _
    // Predicated region
    $region18: #{decoder_rnn_forward.4} parent=1 // pred_check
      _
    $region19: #{decoder_rnn_forward.4} parent=1 // pred_check_branch
      %42 = sbr.rel (0) target = $region21
    $region20: #{decoder_rnn_forward.4} parent=1 // pred_region
      %44 = dma.done [#allocation5], 4096
    $region21: #{decoder_rnn_forward.4} parent=1 // pred_fallthru
      _
    // Predicated region
    $region22: #{decoder_rnn_forward.4} parent=1 // pred_check
      _
    $region23: #{decoder_rnn_forward.4} parent=1 // pred_check_branch
      %46 = sbr.rel (0) target = $region25
    $region24: #{decoder_rnn_forward.4} parent=1 // pred_region
      %48 = dma.done [#allocation7], 8192
    $region25: #{decoder_rnn_forward.4} parent=1 // pred_fallthru
      _
    %p49 = scmp.eq.s32.totalorder 0, 0
    // Predicated region
    $region26: #{decoder_rnn_forward.4} parent=1 // pred_check
      %p50 = pneg %p49
    $region27: #{decoder_rnn_forward.4} parent=1 // pred_check_branch
      %52 = sbr.rel (%p50) target = $region29
    $region28: #{decoder_rnn_forward.4} parent=1 // pred_region
      %53 = vst [vmem:[#allocation2] sm:$0xff] 0.0
      %54 = vst [vmem:[#allocation2 + $0x8] sm:$0xff] 0.0
      %55 = vst [vmem:[#allocation3] sm:$0xff] 0.0
      %56 = vst [vmem:[#allocation3 + $0x8] sm:$0xff] 0.0
    $region29: #{decoder_rnn_forward.4} parent=1 // pred_fallthru
      _
    %v57 = vld [vmem:[%s0] sm:$0xff]
    %v58 = vld [vmem:[%s0 + $0x8] sm:$0xff]
    %v59 = vunpack.c.l.bf16 %v57
    %v60 = vunpack.c.h.bf16 %v57
    %v61 = vunpack.c.l.bf16 %v58
    %v62 = vunpack.c.h.bf16 %v58
    %v63 = vld [vmem:[#allocation2] sm:$0xff]
    %v64 = vpack.c.bf16 %v63, %v63
    %v65 = vld [vmem:[#allocation4] sm:$0xff]
    %v66 = vld [vmem:[#allocation4 + $0x8] sm:$0xff]
    %v67 = vld [vmem:[#allocation4 + $0x10] sm:$0xff]
    %v68 = vld [vmem:[#allocation4 + $0x18] sm:$0xff]
    %v69 = vld [vmem:[#allocation4 + $0x20] sm:$0xff]
    %v70 = vld [vmem:[#allocation4 + $0x28] sm:$0xff]
    %v71 = vld [vmem:[#allocation4 + $0x30] sm:$0xff]
    %v72 = vld [vmem:[#allocation4 + $0x38] sm:$0xff]
    %v73 = vld [vmem:[#allocation4 + $0x40] sm:$0xff]
    %v74 = vld [vmem:[#allocation4 + $0x48] sm:$0xff]
    %v75 = vld [vmem:[#allocation4 + $0x50] sm:$0xff]
    %v76 = vld [vmem:[#allocation4 + $0x58] sm:$0xff]
    %v77 = vld [vmem:[#allocation4 + $0x60] sm:$0xff]
    %v78 = vld [vmem:[#allocation4 + $0x68] sm:$0xff]
    %v79 = vld [vmem:[#allocation4 + $0x70] sm:$0xff]
    %v80 = vld [vmem:[#allocation4 + $0x78] sm:$0xff]
    %v81 = vld [vmem:[#allocation4 + $0x80] sm:$0xff]
    %v82 = vld [vmem:[#allocation4 + $0x88] sm:$0xff]
    %v83 = vld [vmem:[#allocation4 + $0x90] sm:$0xff]
    %v84 = vld [vmem:[#allocation4 + $0x98] sm:$0xff]
    %v85 = vld [vmem:[#allocation4 + $0xa0] sm:$0xff]
    %v86 = vld [vmem:[#allocation4 + $0xa8] sm:$0xff]
    %v87 = vld [vmem:[#allocation4 + $0xb0] sm:$0xff]
    %v88 = vld [vmem:[#allocation4 + $0xb8] sm:$0xff]
    %v89 = vld [vmem:[#allocation4 + $0xc0] sm:$0xff]
    %v90 = vld [vmem:[#allocation4 + $0xc8] sm:$0xff]
    %v91 = vld [vmem:[#allocation4 + $0xd0] sm:$0xff]
    %v92 = vld [vmem:[#allocation4 + $0xd8] sm:$0xff]
    %v93 = vld [vmem:[#allocation4 + $0xe0] sm:$0xff]
    %v94 = vld [vmem:[#allocation4 + $0xe8] sm:$0xff]
    %v95 = vld [vmem:[#allocation4 + $0xf0] sm:$0xff]
    %v96 = vld [vmem:[#allocation4 + $0xf8] sm:$0xff]
    %v129 = vunpack.c.l.b16 %v65
    %v130 = vunpack.c.h.b16 %v65
    %v131 = vunpack.c.l.b16 %v66
    %v132 = vunpack.c.h.b16 %v66
    %v133 = vunpack.c.l.b16 %v67
    %v134 = vunpack.c.h.b16 %v67
    %v135 = vunpack.c.l.b16 %v68
    %v136 = vunpack.c.h.b16 %v68
    %v137 = vunpack.c.l.b16 %v69
    %v138 = vunpack.c.h.b16 %v69
    %v139 = vunpack.c.l.b16 %v70
    %v140 = vunpack.c.h.b16 %v70
    %v141 = vunpack.c.l.b16 %v71
    %v142 = vunpack.c.h.b16 %v71
    %v143 = vunpack.c.l.b16 %v72
    %v144 = vunpack.c.h.b16 %v72
    %v145 = vunpack.c.l.b16 %v73
    %v146 = vunpack.c.h.b16 %v73
    %v147 = vunpack.c.l.b16 %v74
    %v148 = vunpack.c.h.b16 %v74
    %v149 = vunpack.c.l.b16 %v75
    %v150 = vunpack.c.h.b16 %v75
    %v151 = vunpack.c.l.b16 %v76
    %v152 = vunpack.c.h.b16 %v76
    %v153 = vunpack.c.l.b16 %v77
    %v154 = vunpack.c.h.b16 %v77
    %v155 = vunpack.c.l.b16 %v78
    %v156 = vunpack.c.h.b16 %v78
    %v157 = vunpack.c.l.b16 %v79
    %v158 = vunpack.c.h.b16 %v79
    %v159 = vunpack.c.l.b16 %v80
    %v160 = vunpack.c.h.b16 %v80
    %v161 = vunpack.c.l.b16 %v81
    %v162 = vunpack.c.h.b16 %v81
    %v163 = vunpack.c.l.b16 %v82
    %v164 = vunpack.c.h.b16 %v82
    %v165 = vunpack.c.l.b16 %v83
    %v166 = vunpack.c.h.b16 %v83
    %v167 = vunpack.c.l.b16 %v84
    %v168 = vunpack.c.h.b16 %v84
    %v169 = vunpack.c.l.b16 %v85
    %v170 = vunpack.c.h.b16 %v85
    %v171 = vunpack.c.l.b16 %v86
    %v172 = vunpack.c.h.b16 %v86
    %v173 = vunpack.c.l.b16 %v87
    %v174 = vunpack.c.h.b16 %v87
    %v175 = vunpack.c.l.b16 %v88
    %v176 = vunpack.c.h.b16 %v88
    %v177 = vunpack.c.l.b16 %v89
    %v178 = vunpack.c.h.b16 %v89
    %v179 = vunpack.c.l.b16 %v90
    %v180 = vunpack.c.h.b16 %v90
    %v181 = vunpack.c.l.b16 %v91
    %v182 = vunpack.c.h.b16 %v91
    %v183 = vunpack.c.l.b16 %v92
    %v184 = vunpack.c.h.b16 %v92
    %v185 = vunpack.c.l.b16 %v93
    %v186 = vunpack.c.h.b16 %v93
    %v187 = vunpack.c.l.b16 %v94
    %v188 = vunpack.c.h.b16 %v94
    %v189 = vunpack.c.l.b16 %v95
    %v190 = vunpack.c.h.b16 %v95
    %v191 = vunpack.c.l.b16 %v96
    %v192 = vunpack.c.h.b16 %v96
    %v193 = vpack.c.b16 %v133, %v129
    %v194 = vpack.c.b16 %v134, %v130
    %v195 = vpack.c.b16 %v135, %v131
    %v196 = vpack.c.b16 %v136, %v132
    %v197 = vpack.c.b16 %v141, %v137
    %v198 = vpack.c.b16 %v142, %v138
    %v199 = vpack.c.b16 %v143, %v139
    %v200 = vpack.c.b16 %v144, %v140
    %v201 = vpack.c.b16 %v149, %v145
    %v202 = vpack.c.b16 %v150, %v146
    %v203 = vpack.c.b16 %v151, %v147
    %v204 = vpack.c.b16 %v152, %v148
    %v205 = vpack.c.b16 %v157, %v153
    %v206 = vpack.c.b16 %v158, %v154
    %v207 = vpack.c.b16 %v159, %v155
    %v208 = vpack.c.b16 %v160, %v156
    %v209 = vpack.c.b16 %v165, %v161
    %v210 = vpack.c.b16 %v166, %v162
    %v211 = vpack.c.b16 %v167, %v163
    %v212 = vpack.c.b16 %v168, %v164
    %v213 = vpack.c.b16 %v173, %v169
    %v214 = vpack.c.b16 %v174, %v170
    %v215 = vpack.c.b16 %v175, %v171
    %v216 = vpack.c.b16 %v176, %v172
    %v217 = vpack.c.b16 %v181, %v177
    %v218 = vpack.c.b16 %v182, %v178
    %v219 = vpack.c.b16 %v183, %v179
    %v220 = vpack.c.b16 %v184, %v180
    %v221 = vpack.c.b16 %v189, %v185
    %v222 = vpack.c.b16 %v190, %v186
    %v223 = vpack.c.b16 %v191, %v187
    %v224 = vpack.c.b16 %v192, %v188
    %257 = vmatpush.bf16.msra.mxu0 %v221
    %258 = vmatpush.bf16.msra.mxu0 %v217
    %259 = vmatpush.bf16.msra.mxu0 %v213
    %260 = vmatpush.bf16.msra.mxu0 %v209
    %261 = vmatpush.bf16.msra.mxu0 %v205
    %262 = vmatpush.bf16.msra.mxu0 %v201
    %263 = vmatpush.bf16.msra.mxu0 %v197
    %264 = vmatpush.bf16.msra.mxu0 %v193
    %265 = vmatmul.bf16.gmra.mxu0 %v64
    %v266 = vpop.f32.mrf.mxu0
    %v267 = vadd.f32 0.0, %v266
    %v268 = vpop.f32.mrf.mxu0
    %269 = vdwg.mxu0
    %270 = vmatpush.bf16.msra.mxu0 %v222
    %271 = vmatpush.bf16.msra.mxu0 %v218
    %272 = vmatpush.bf16.msra.mxu0 %v214
    %273 = vmatpush.bf16.msra.mxu0 %v210
    %274 = vmatpush.bf16.msra.mxu0 %v206
    %275 = vmatpush.bf16.msra.mxu0 %v202
    %276 = vmatpush.bf16.msra.mxu0 %v198
    %277 = vmatpush.bf16.msra.mxu0 %v194
    %278 = vmatmul.bf16.gmra.mxu0 %v64
    %v279 = vpop.f32.mrf.mxu0
    %v280 = vadd.f32 0.0, %v279
    %v281 = vpop.f32.mrf.mxu0
    %282 = vdwg.mxu0
    %283 = vmatpush.bf16.msra.mxu0 %v223
    %284 = vmatpush.bf16.msra.mxu0 %v219
    %285 = vmatpush.bf16.msra.mxu0 %v215
    %286 = vmatpush.bf16.msra.mxu0 %v211
    %287 = vmatpush.bf16.msra.mxu0 %v207
    %288 = vmatpush.bf16.msra.mxu0 %v203
    %289 = vmatpush.bf16.msra.mxu0 %v199
    %290 = vmatpush.bf16.msra.mxu0 %v195
    %291 = vmatmul.bf16.gmra.mxu0 %v64
    %v292 = vpop.f32.mrf.mxu0
    %v293 = vadd.f32 0.0, %v292
    %v294 = vpop.f32.mrf.mxu0
    %295 = vdwg.mxu0
    %296 = vmatpush.bf16.msra.mxu0 %v224
    %297 = vmatpush.bf16.msra.mxu0 %v220
    %298 = vmatpush.bf16.msra.mxu0 %v216
    %299 = vmatpush.bf16.msra.mxu0 %v212
    %300 = vmatpush.bf16.msra.mxu0 %v208
    %301 = vmatpush.bf16.msra.mxu0 %v204
    %302 = vmatpush.bf16.msra.mxu0 %v200
    %303 = vmatpush.bf16.msra.mxu0 %v196
    %304 = vmatmul.bf16.gmra.mxu0 %v64
    %v305 = vpop.f32.mrf.mxu0
    %v306 = vadd.f32 0.0, %v305
    %v307 = vpop.f32.mrf.mxu0
    %308 = vdwg.mxu0
    %v309 = vadd.f32 %v59, %v267
    %v310 = vadd.f32 %v60, %v280
    %v311 = vadd.f32 %v61, %v293
    %v312 = vadd.f32 %v62, %v306
    %v313 = vld [vmem:[#allocation3] sm:$0xff]
    %v314 = vxor.u32 %v309, 2147483648
    %v315 = vxor.u32 %v310, 2147483648
    %v316 = vxor.u32 %v311, 2147483648
    %v317 = vmul.f32 %v314, 1.442695
    %v318 = vpow.pop %v317
    %v319 = vmul.f32 %v315, 1.442695
    %v320 = vpow.pop %v319
    %v321 = vmul.f32 %v316, 1.442695
    %v322 = vpow.pop %v321
    %v323 = vadd.f32 %v318, 1.0
    %v324 = vadd.f32 %v320, 1.0
    %v325 = vadd.f32 %v322, 1.0
    %v326 = vrcp.pop %v323
    %v327 = vmul.f32 %v323, %v326
    %v328 = vsub.f32 1.0, %v327
    %v329 = vmul.f32 %v326, %v328
    %v330 = vadd.f32 %v326, %v329
    %vm331 = vweird.f32 %v323
    %vm332 = vweird.f32 %v326
    %vm333 = vmor %vm331, %vm332
    %v334 = vsel %vm333, %v326, %v330
    %v335 = vand.u32 2147483647, %v323
    %vm336 = vcmp.eq.f32.partialorder %v335, 8.507059e+37
    %v337 = vand.u32 %v323, 2147483648
    %v338 = vor.u32 1.1754944e-38, %v337
    %v339 = vsel %vm336, %v338, %v334
    %v340 = vmul.f32 1.0, %v339
    %v341 = vrcp.pop %v324
    %v342 = vmul.f32 %v324, %v341
    %v343 = vsub.f32 1.0, %v342
    %v344 = vmul.f32 %v341, %v343
    %v345 = vadd.f32 %v341, %v344
    %vm346 = vweird.f32 %v324
    %vm347 = vweird.f32 %v341
    %vm348 = vmor %vm346, %vm347
    %v349 = vsel %vm348, %v341, %v345
    %v350 = vand.u32 2147483647, %v324
    %vm351 = vcmp.eq.f32.partialorder %v350, 8.507059e+37
    %v352 = vand.u32 %v324, 2147483648
    %v353 = vor.u32 1.1754944e-38, %v352
    %v354 = vsel %vm351, %v353, %v349
    %v355 = vmul.f32 1.0, %v354
    %v356 = vrcp.pop %v325
    %v357 = vmul.f32 %v325, %v356
    %v358 = vsub.f32 1.0, %v357
    %v359 = vmul.f32 %v356, %v358
    %v360 = vadd.f32 %v356, %v359
    %vm361 = vweird.f32 %v325
    %vm362 = vweird.f32 %v356
    %vm363 = vmor %vm361, %vm362
    %v364 = vsel %vm363, %v356, %v360
    %v365 = vand.u32 2147483647, %v325
    %vm366 = vcmp.eq.f32.partialorder %v365, 8.507059e+37
    %v367 = vand.u32 %v325, 2147483648
    %v368 = vor.u32 1.1754944e-38, %v367
    %v369 = vsel %vm366, %v368, %v364
    %v370 = vmul.f32 1.0, %v369
    %v371 = vtanh.pop %v312
    %v372 = vmul.f32 %v355, %v313
    %v373 = vmul.f32 %v340, %v371
    %v374 = vadd.f32 %v372, %v373
    %v375 = vtanh.pop %v374
    %v376 = vmul.f32 %v370, %v375
    %377 = vst [vmem:[#allocation2] sm:$0xff] %v376
    %378 = vst [vmem:[#allocation3] sm:$0xff] %v374
    %s379 = scalar_lea.vmem [#allocation2], 8
    %v380 = vld [vmem:[%s379] sm:$0xff]
    %v381 = vpack.c.bf16 %v376, %v376
    %v382 = vpack.c.bf16 %v380, %v380
    %v383 = vld [vmem:[#allocation6] sm:$0xff]
    %v384 = vld [vmem:[#allocation6 + $0x8] sm:$0xff]
    %v385 = vld [vmem:[#allocation6 + $0x10] sm:$0xff]
    %v386 = vld [vmem:[#allocation6 + $0x18] sm:$0xff]
    %v387 = vld [vmem:[#allocation6 + $0x20] sm:$0xff]
    %v388 = vld [vmem:[#allocation6 + $0x28] sm:$0xff]
    %v389 = vld [vmem:[#allocation6 + $0x30] sm:$0xff]
    %v390 = vld [vmem:[#allocation6 + $0x38] sm:$0xff]
    %v391 = vld [vmem:[#allocation6 + $0x40] sm:$0xff]
    %v392 = vld [vmem:[#allocation6 + $0x48] sm:$0xff]
    %v393 = vld [vmem:[#allocation6 + $0x50] sm:$0xff]
    %v394 = vld [vmem:[#allocation6 + $0x58] sm:$0xff]
    %v395 = vld [vmem:[#allocation6 + $0x60] sm:$0xff]
    %v396 = vld [vmem:[#allocation6 + $0x68] sm:$0xff]
    %v397 = vld [vmem:[#allocation6 + $0x70] sm:$0xff]
    %v398 = vld [vmem:[#allocation6 + $0x78] sm:$0xff]
    %v399 = vld [vmem:[#allocation6 + $0x80] sm:$0xff]
    %v400 = vld [vmem:[#allocation6 + $0x88] sm:$0xff]
    %v401 = vld [vmem:[#allocation6 + $0x90] sm:$0xff]
    %v402 = vld [vmem:[#allocation6 + $0x98] sm:$0xff]
    %v403 = vld [vmem:[#allocation6 + $0xa0] sm:$0xff]
    %v404 = vld [vmem:[#allocation6 + $0xa8] sm:$0xff]
    %v405 = vld [vmem:[#allocation6 + $0xb0] sm:$0xff]
    %v406 = vld [vmem:[#allocation6 + $0xb8] sm:$0xff]
    %v407 = vld [vmem:[#allocation6 + $0xc0] sm:$0xff]
    %v408 = vld [vmem:[#allocation6 + $0xc8] sm:$0xff]
    %v409 = vld [vmem:[#allocation6 + $0xd0] sm:$0xff]
    %v410 = vld [vmem:[#allocation6 + $0xd8] sm:$0xff]
    %v411 = vld [vmem:[#allocation6 + $0xe0] sm:$0xff]
    %v412 = vld [vmem:[#allocation6 + $0xe8] sm:$0xff]
    %v413 = vld [vmem:[#allocation6 + $0xf0] sm:$0xff]
    %v414 = vld [vmem:[#allocation6 + $0xf8] sm:$0xff]
    %v415 = vld [vmem:[#allocation6 + $0x100] sm:$0xff]
    %v416 = vld [vmem:[#allocation6 + $0x108] sm:$0xff]
    %v417 = vld [vmem:[#allocation6 + $0x110] sm:$0xff]
    %v418 = vld [vmem:[#allocation6 + $0x118] sm:$0xff]
    %v419 = vld [vmem:[#allocation6 + $0x120] sm:$0xff]
    %v420 = vld [vmem:[#allocation6 + $0x128] sm:$0xff]
    %v421 = vld [vmem:[#allocation6 + $0x130] sm:$0xff]
    %v422 = vld [vmem:[#allocation6 + $0x138] sm:$0xff]
    %v423 = vld [vmem:[#allocation6 + $0x140] sm:$0xff]
    %v424 = vld [vmem:[#allocation6 + $0x148] sm:$0xff]
    %v425 = vld [vmem:[#allocation6 + $0x150] sm:$0xff]
    %v426 = vld [vmem:[#allocation6 + $0x158] sm:$0xff]
    %v427 = vld [vmem:[#allocation6 + $0x160] sm:$0xff]
    %v428 = vld [vmem:[#allocation6 + $0x168] sm:$0xff]
    %v429 = vld [vmem:[#allocation6 + $0x170] sm:$0xff]
    %v430 = vld [vmem:[#allocation6 + $0x178] sm:$0xff]
    %v431 = vld [vmem:[#allocation6 + $0x180] sm:$0xff]
    %v432 = vld [vmem:[#allocation6 + $0x188] sm:$0xff]
    %v433 = vld [vmem:[#allocation6 + $0x190] sm:$0xff]
    %v434 = vld [vmem:[#allocation6 + $0x198] sm:$0xff]
    %v435 = vld [vmem:[#allocation6 + $0x1a0] sm:$0xff]
    %v436 = vld [vmem:[#allocation6 + $0x1a8] sm:$0xff]
    %v437 = vld [vmem:[#allocation6 + $0x1b0] sm:$0xff]
    %v438 = vld [vmem:[#allocation6 + $0x1b8] sm:$0xff]
    %v439 = vld [vmem:[#allocation6 + $0x1c0] sm:$0xff]
    %v440 = vld [vmem:[#allocation6 + $0x1c8] sm:$0xff]
    %v441 = vld [vmem:[#allocation6 + $0x1d0] sm:$0xff]
    %v442 = vld [vmem:[#allocation6 + $0x1d8] sm:$0xff]
    %v443 = vld [vmem:[#allocation6 + $0x1e0] sm:$0xff]
    %v444 = vld [vmem:[#allocation6 + $0x1e8] sm:$0xff]
    %v445 = vld [vmem:[#allocation6 + $0x1f0] sm:$0xff]
    %v446 = vld [vmem:[#allocation6 + $0x1f8] sm:$0xff]
    %v447 = vld [vmem:[%s3] sm:$0xf]
    %v449 = vperm.slane %v447, 0
    %v450 = vperm.slane %v447, 1
    %v451 = vperm.slane %v447, 2
    %v452 = vperm.slane %v447, 3
    %v521 = vunpack.c.l.b16 %v383
    %v522 = vunpack.c.h.b16 %v383
    %v523 = vunpack.c.l.b16 %v384
    %v524 = vunpack.c.h.b16 %v384
    %v525 = vunpack.c.l.b16 %v385
    %v526 = vunpack.c.h.b16 %v385
    %v527 = vunpack.c.l.b16 %v386
    %v528 = vunpack.c.h.b16 %v386
    %v529 = vunpack.c.l.b16 %v387
    %v530 = vunpack.c.h.b16 %v387
    %v531 = vunpack.c.l.b16 %v388
    %v532 = vunpack.c.h.b16 %v388
    %v533 = vunpack.c.l.b16 %v389
    %v534 = vunpack.c.h.b16 %v389
    %v535 = vunpack.c.l.b16 %v390
    %v536 = vunpack.c.h.b16 %v390
    %v537 = vunpack.c.l.b16 %v391
    %v538 = vunpack.c.h.b16 %v391
    %v539 = vunpack.c.l.b16 %v392
    %v540 = vunpack.c.h.b16 %v392
    %v541 = vunpack.c.l.b16 %v393
    %v542 = vunpack.c.h.b16 %v393
    %v543 = vunpack.c.l.b16 %v394
    %v544 = vunpack.c.h.b16 %v394
    %v545 = vunpack.c.l.b16 %v395
    %v546 = vunpack.c.h.b16 %v395
    %v547 = vunpack.c.l.b16 %v396
    %v548 = vunpack.c.h.b16 %v396
    %v549 = vunpack.c.l.b16 %v397
    %v550 = vunpack.c.h.b16 %v397
    %v551 = vunpack.c.l.b16 %v398
    %v552 = vunpack.c.h.b16 %v398
    %v553 = vunpack.c.l.b16 %v399
    %v554 = vunpack.c.h.b16 %v399
    %v555 = vunpack.c.l.b16 %v400
    %v556 = vunpack.c.h.b16 %v400
    %v557 = vunpack.c.l.b16 %v401
    %v558 = vunpack.c.h.b16 %v401
    %v559 = vunpack.c.l.b16 %v402
    %v560 = vunpack.c.h.b16 %v402
    %v561 = vunpack.c.l.b16 %v403
    %v562 = vunpack.c.h.b16 %v403
    %v563 = vunpack.c.l.b16 %v404
    %v564 = vunpack.c.h.b16 %v404
    %v565 = vunpack.c.l.b16 %v405
    %v566 = vunpack.c.h.b16 %v405
    %v567 = vunpack.c.l.b16 %v406
    %v568 = vunpack.c.h.b16 %v406
    %v569 = vunpack.c.l.b16 %v407
    %v570 = vunpack.c.h.b16 %v407
    %v571 = vunpack.c.l.b16 %v408
    %v572 = vunpack.c.h.b16 %v408
    %v573 = vunpack.c.l.b16 %v409
    %v574 = vunpack.c.h.b16 %v409
    %v575 = vunpack.c.l.b16 %v410
    %v576 = vunpack.c.h.b16 %v410
    %v577 = vunpack.c.l.b16 %v411
    %v578 = vunpack.c.h.b16 %v411
    %v579 = vunpack.c.l.b16 %v412
    %v580 = vunpack.c.h.b16 %v412
    %v581 = vunpack.c.l.b16 %v413
    %v582 = vunpack.c.h.b16 %v413
    %v583 = vunpack.c.l.b16 %v414
    %v584 = vunpack.c.h.b16 %v414
    %v585 = vunpack.c.l.b16 %v415
    %v586 = vunpack.c.h.b16 %v415
    %v587 = vunpack.c.l.b16 %v416
    %v588 = vunpack.c.h.b16 %v416
    %v589 = vunpack.c.l.b16 %v417
    %v590 = vunpack.c.h.b16 %v417
    %v591 = vunpack.c.l.b16 %v418
    %v592 = vunpack.c.h.b16 %v418
    %v593 = vunpack.c.l.b16 %v419
    %v594 = vunpack.c.h.b16 %v419
    %v595 = vunpack.c.l.b16 %v420
    %v596 = vunpack.c.h.b16 %v420
    %v597 = vunpack.c.l.b16 %v421
    %v598 = vunpack.c.h.b16 %v421
    %v599 = vunpack.c.l.b16 %v422
    %v600 = vunpack.c.h.b16 %v422
    %v601 = vunpack.c.l.b16 %v423
    %v602 = vunpack.c.h.b16 %v423
    %v603 = vunpack.c.l.b16 %v424
    %v604 = vunpack.c.h.b16 %v424
    %v605 = vunpack.c.l.b16 %v425
    %v606 = vunpack.c.h.b16 %v425
    %v607 = vunpack.c.l.b16 %v426
    %v608 = vunpack.c.h.b16 %v426
    %v609 = vunpack.c.l.b16 %v427
    %v610 = vunpack.c.h.b16 %v427
    %v611 = vunpack.c.l.b16 %v428
    %v612 = vunpack.c.h.b16 %v428
    %v613 = vunpack.c.l.b16 %v429
    %v614 = vunpack.c.h.b16 %v429
    %v615 = vunpack.c.l.b16 %v430
    %v616 = vunpack.c.h.b16 %v430
    %v617 = vunpack.c.l.b16 %v431
    %v618 = vunpack.c.h.b16 %v431
    %v619 = vunpack.c.l.b16 %v432
    %v620 = vunpack.c.h.b16 %v432
    %v621 = vunpack.c.l.b16 %v433
    %v622 = vunpack.c.h.b16 %v433
    %v623 = vunpack.c.l.b16 %v434
    %v624 = vunpack.c.h.b16 %v434
    %v625 = vunpack.c.l.b16 %v435
    %v626 = vunpack.c.h.b16 %v435
    %v627 = vunpack.c.l.b16 %v436
    %v628 = vunpack.c.h.b16 %v436
    %v629 = vunpack.c.l.b16 %v437
    %v630 = vunpack.c.h.b16 %v437
    %v631 = vunpack.c.l.b16 %v438
    %v632 = vunpack.c.h.b16 %v438
    %v633 = vunpack.c.l.b16 %v439
    %v634 = vunpack.c.h.b16 %v439
    %v635 = vunpack.c.l.b16 %v440
    %v636 = vunpack.c.h.b16 %v440
    %v637 = vunpack.c.l.b16 %v441
    %v638 = vunpack.c.h.b16 %v441
    %v639 = vunpack.c.l.b16 %v442
    %v640 = vunpack.c.h.b16 %v442
    %v641 = vunpack.c.l.b16 %v443
    %v642 = vunpack.c.h.b16 %v443
    %v643 = vunpack.c.l.b16 %v444
    %v644 = vunpack.c.h.b16 %v444
    %v645 = vunpack.c.l.b16 %v445
    %v646 = vunpack.c.h.b16 %v445
    %v647 = vunpack.c.l.b16 %v446
    %v648 = vunpack.c.h.b16 %v446
    %v649 = vpack.c.b16 %v525, %v521
    %v650 = vpack.c.b16 %v526, %v522
    %v651 = vpack.c.b16 %v527, %v523
    %v652 = vpack.c.b16 %v528, %v524
    %v653 = vpack.c.b16 %v533, %v529
    %v654 = vpack.c.b16 %v534, %v530
    %v655 = vpack.c.b16 %v535, %v531
    %v656 = vpack.c.b16 %v536, %v532
    %v657 = vpack.c.b16 %v541, %v537
    %v658 = vpack.c.b16 %v542, %v538
    %v659 = vpack.c.b16 %v543, %v539
    %v660 = vpack.c.b16 %v544, %v540
    %v661 = vpack.c.b16 %v549, %v545
    %v662 = vpack.c.b16 %v550, %v546
    %v663 = vpack.c.b16 %v551, %v547
    %v664 = vpack.c.b16 %v552, %v548
    %v665 = vpack.c.b16 %v557, %v553
    %v666 = vpack.c.b16 %v558, %v554
    %v667 = vpack.c.b16 %v559, %v555
    %v668 = vpack.c.b16 %v560, %v556
    %v669 = vpack.c.b16 %v565, %v561
    %v670 = vpack.c.b16 %v566, %v562
    %v671 = vpack.c.b16 %v567, %v563
    %v672 = vpack.c.b16 %v568, %v564
    %v673 = vpack.c.b16 %v573, %v569
    %v674 = vpack.c.b16 %v574, %v570
    %v675 = vpack.c.b16 %v575, %v571
    %v676 = vpack.c.b16 %v576, %v572
    %v677 = vpack.c.b16 %v581, %v577
    %v678 = vpack.c.b16 %v582, %v578
    %v679 = vpack.c.b16 %v583, %v579
    %v680 = vpack.c.b16 %v584, %v580
    %v681 = vpack.c.b16 %v589, %v585
    %v682 = vpack.c.b16 %v590, %v586
    %v683 = vpack.c.b16 %v591, %v587
    %v684 = vpack.c.b16 %v592, %v588
    %v685 = vpack.c.b16 %v597, %v593
    %v686 = vpack.c.b16 %v598, %v594
    %v687 = vpack.c.b16 %v599, %v595
    %v688 = vpack.c.b16 %v600, %v596
    %v689 = vpack.c.b16 %v605, %v601
    %v690 = vpack.c.b16 %v606, %v602
    %v691 = vpack.c.b16 %v607, %v603
    %v692 = vpack.c.b16 %v608, %v604
    %v693 = vpack.c.b16 %v613, %v609
    %v694 = vpack.c.b16 %v614, %v610
    %v695 = vpack.c.b16 %v615, %v611
    %v696 = vpack.c.b16 %v616, %v612
    %v697 = vpack.c.b16 %v621, %v617
    %v698 = vpack.c.b16 %v622, %v618
    %v699 = vpack.c.b16 %v623, %v619
    %v700 = vpack.c.b16 %v624, %v620
    %v701 = vpack.c.b16 %v629, %v625
    %v702 = vpack.c.b16 %v630, %v626
    %v703 = vpack.c.b16 %v631, %v627
    %v704 = vpack.c.b16 %v632, %v628
    %v705 = vpack.c.b16 %v637, %v633
    %v706 = vpack.c.b16 %v638, %v634
    %v707 = vpack.c.b16 %v639, %v635
    %v708 = vpack.c.b16 %v640, %v636
    %v709 = vpack.c.b16 %v645, %v641
    %v710 = vpack.c.b16 %v646, %v642
    %v711 = vpack.c.b16 %v647, %v643
    %v712 = vpack.c.b16 %v648, %v644
    %777 = vmatpush.bf16.msra.mxu0 %v677
    %778 = vmatpush.bf16.msra.mxu0 %v673
    %779 = vmatpush.bf16.msra.mxu0 %v669
    %780 = vmatpush.bf16.msra.mxu0 %v665
    %781 = vmatpush.bf16.msra.mxu0 %v661
    %782 = vmatpush.bf16.msra.mxu0 %v657
    %783 = vmatpush.bf16.msra.mxu0 %v653
    %784 = vmatpush.bf16.msra.mxu0 %v649
    %785 = vmatmul.bf16.gmra.mxu0 %v381
    %v786 = vpop.f32.mrf.mxu0
    %v787 = vadd.f32 %v449, %v786
    %v788 = vpop.f32.mrf.mxu0
    %789 = vdwg.mxu0
    %790 = vmatpush.bf16.msra.mxu0 %v709
    %791 = vmatpush.bf16.msra.mxu0 %v705
    %792 = vmatpush.bf16.msra.mxu0 %v701
    %793 = vmatpush.bf16.msra.mxu0 %v697
    %794 = vmatpush.bf16.msra.mxu0 %v693
    %795 = vmatpush.bf16.msra.mxu0 %v689
    %796 = vmatpush.bf16.msra.mxu0 %v685
    %797 = vmatpush.bf16.msra.mxu0 %v681
    %798 = vmatmul.bf16.gmra.mxu0 %v382
    %v799 = vpop.f32.mrf.mxu0
    %v800 = vadd.f32 %v787, %v799
    %v801 = vpop.f32.mrf.mxu0
    %802 = vdwg.mxu0
    %803 = vmatpush.bf16.msra.mxu0 %v678
    %804 = vmatpush.bf16.msra.mxu0 %v674
    %805 = vmatpush.bf16.msra.mxu0 %v670
    %806 = vmatpush.bf16.msra.mxu0 %v666
    %807 = vmatpush.bf16.msra.mxu0 %v662
    %808 = vmatpush.bf16.msra.mxu0 %v658
    %809 = vmatpush.bf16.msra.mxu0 %v654
    %810 = vmatpush.bf16.msra.mxu0 %v650
    %811 = vmatmul.bf16.gmra.mxu0 %v381
    %v812 = vpop.f32.mrf.mxu0
    %v813 = vadd.f32 %v450, %v812
    %v814 = vpop.f32.mrf.mxu0
    %815 = vdwg.mxu0
    %816 = vmatpush.bf16.msra.mxu0 %v710
    %817 = vmatpush.bf16.msra.mxu0 %v706
    %818 = vmatpush.bf16.msra.mxu0 %v702
    %819 = vmatpush.bf16.msra.mxu0 %v698
    %820 = vmatpush.bf16.msra.mxu0 %v694
    %821 = vmatpush.bf16.msra.mxu0 %v690
    %822 = vmatpush.bf16.msra.mxu0 %v686
    %823 = vmatpush.bf16.msra.mxu0 %v682
    %824 = vmatmul.bf16.gmra.mxu0 %v382
    %v825 = vpop.f32.mrf.mxu0
    %v826 = vadd.f32 %v813, %v825
    %v827 = vpop.f32.mrf.mxu0
    %828 = vdwg.mxu0
    %829 = vmatpush.bf16.msra.mxu0 %v679
    %830 = vmatpush.bf16.msra.mxu0 %v675
    %831 = vmatpush.bf16.msra.mxu0 %v671
    %832 = vmatpush.bf16.msra.mxu0 %v667
    %833 = vmatpush.bf16.msra.mxu0 %v663
    %834 = vmatpush.bf16.msra.mxu0 %v659
    %835 = vmatpush.bf16.msra.mxu0 %v655
    %836 = vmatpush.bf16.msra.mxu0 %v651
    %837 = vmatmul.bf16.gmra.mxu0 %v381
    %v838 = vpop.f32.mrf.mxu0
    %v839 = vadd.f32 %v451, %v838
    %v840 = vpop.f32.mrf.mxu0
    %841 = vdwg.mxu0
    %842 = vmatpush.bf16.msra.mxu0 %v711
    %843 = vmatpush.bf16.msra.mxu0 %v707
    %844 = vmatpush.bf16.msra.mxu0 %v703
    %845 = vmatpush.bf16.msra.mxu0 %v699
    %846 = vmatpush.bf16.msra.mxu0 %v695
    %847 = vmatpush.bf16.msra.mxu0 %v691
    %848 = vmatpush.bf16.msra.mxu0 %v687
    %849 = vmatpush.bf16.msra.mxu0 %v683
    %850 = vmatmul.bf16.gmra.mxu0 %v382
    %v851 = vpop.f32.mrf.mxu0
    %v852 = vadd.f32 %v839, %v851
    %v853 = vpop.f32.mrf.mxu0
    %854 = vdwg.mxu0
    %855 = vmatpush.bf16.msra.mxu0 %v680
    %856 = vmatpush.bf16.msra.mxu0 %v676
    %857 = vmatpush.bf16.msra.mxu0 %v672
    %858 = vmatpush.bf16.msra.mxu0 %v668
    %859 = vmatpush.bf16.msra.mxu0 %v664
    %860 = vmatpush.bf16.msra.mxu0 %v660
    %861 = vmatpush.bf16.msra.mxu0 %v656
    %862 = vmatpush.bf16.msra.mxu0 %v652
    %863 = vmatmul.bf16.gmra.mxu0 %v381
    %v864 = vpop.f32.mrf.mxu0
    %v865 = vadd.f32 %v452, %v864
    %v866 = vpop.f32.mrf.mxu0
    %867 = vdwg.mxu0
    %868 = vmatpush.bf16.msra.mxu0 %v712
    %869 = vmatpush.bf16.msra.mxu0 %v708
    %870 = vmatpush.bf16.msra.mxu0 %v704
    %871 = vmatpush.bf16.msra.mxu0 %v700
    %872 = vmatpush.bf16.msra.mxu0 %v696
    %873 = vmatpush.bf16.msra.mxu0 %v692
    %874 = vmatpush.bf16.msra.mxu0 %v688
    %875 = vmatpush.bf16.msra.mxu0 %v684
    %876 = vmatmul.bf16.gmra.mxu0 %v382
    %v877 = vpop.f32.mrf.mxu0
    %v878 = vadd.f32 %v865, %v877
    %v879 = vpop.f32.mrf.mxu0
    %880 = vdwg.mxu0
    %s881 = scalar_lea.vmem [#allocation3], 8
    %v882 = vld [vmem:[%s881] sm:$0xff]
    %v883 = vxor.u32 %v800, 2147483648
    %v884 = vxor.u32 %v826, 2147483648
    %v885 = vxor.u32 %v852, 2147483648
    %v886 = vmul.f32 %v883, 1.442695
    %v887 = vpow.pop %v886
    %v888 = vmul.f32 %v884, 1.442695
    %v889 = vpow.pop %v888
    %v890 = vmul.f32 %v885, 1.442695
    %v891 = vpow.pop %v890
    %v892 = vadd.f32 %v887, 1.0
    %v893 = vadd.f32 %v889, 1.0
    %v894 = vadd.f32 %v891, 1.0
    %v895 = vrcp.pop %v892
    %v896 = vmul.f32 %v892, %v895
    %v897 = vsub.f32 1.0, %v896
    %v898 = vmul.f32 %v895, %v897
    %v899 = vadd.f32 %v895, %v898
    %vm900 = vweird.f32 %v892
    %vm901 = vweird.f32 %v895
    %vm902 = vmor %vm900, %vm901
    %v903 = vsel %vm902, %v895, %v899
    %v904 = vand.u32 2147483647, %v892
    %vm905 = vcmp.eq.f32.partialorder %v904, 8.507059e+37
    %v906 = vand.u32 %v892, 2147483648
    %v907 = vor.u32 1.1754944e-38, %v906
    %v908 = vsel %vm905, %v907, %v903
    %v909 = vmul.f32 1.0, %v908
    %v910 = vrcp.pop %v893
    %v911 = vmul.f32 %v893, %v910
    %v912 = vsub.f32 1.0, %v911
    %v913 = vmul.f32 %v910, %v912
    %v914 = vadd.f32 %v910, %v913
    %vm915 = vweird.f32 %v893
    %vm916 = vweird.f32 %v910
    %vm917 = vmor %vm915, %vm916
    %v918 = vsel %vm917, %v910, %v914
    %v919 = vand.u32 2147483647, %v893
    %vm920 = vcmp.eq.f32.partialorder %v919, 8.507059e+37
    %v921 = vand.u32 %v893, 2147483648
    %v922 = vor.u32 1.1754944e-38, %v921
    %v923 = vsel %vm920, %v922, %v918
    %v924 = vmul.f32 1.0, %v923
    %v925 = vrcp.pop %v894
    %v926 = vmul.f32 %v894, %v925
    %v927 = vsub.f32 1.0, %v926
    %v928 = vmul.f32 %v925, %v927
    %v929 = vadd.f32 %v925, %v928
    %vm930 = vweird.f32 %v894
    %vm931 = vweird.f32 %v925
    %vm932 = vmor %vm930, %vm931
    %v933 = vsel %vm932, %v925, %v929
    %v934 = vand.u32 2147483647, %v894
    %vm935 = vcmp.eq.f32.partialorder %v934, 8.507059e+37
    %v936 = vand.u32 %v894, 2147483648
    %v937 = vor.u32 1.1754944e-38, %v936
    %v938 = vsel %vm935, %v937, %v933
    %v939 = vmul.f32 1.0, %v938
    %v940 = vtanh.pop %v878
    %v941 = vmul.f32 %v924, %v882
    %v942 = vmul.f32 %v909, %v940
    %v943 = vadd.f32 %v941, %v942
    %v944 = vtanh.pop %v943
    %v945 = vmul.f32 %v939, %v944
    %946 = vst [vmem:[%s379] sm:$0xff] %v945
    %947 = vst [vmem:[%s881] sm:$0xff] %v943
    %v948 = vpack.c.bf16 %v945, %v945
    %v950 = vrot.slane %v948, 3
    %vm951 = vcmask 1040384
    %v954 = vsel %vm951, %v948, %v950
    %vm956 = vcmask 1041409
    %v957 = vsel %vm956, %v948, %v950
    %v959 = vrot.slane %v957, 1
    %vm960 = vcmask 1042434
    %v961 = vsel %vm960, %v948, %v950
    %v963 = vrot.slane %v961, 2
    %vm964 = vcmask 1043459
    %v965 = vsel %vm964, %v948, %v950
    %v967 = vrot.slane %v965, 3
    %v968 = vunpack.i.l.s16 %v954
    %v969 = vunpack.i.h.s16 %v954
    %v970 = vunpack.i.l.s16 %v959
    %v971 = vunpack.i.h.s16 %v959
    %v972 = vunpack.i.l.s16 %v963
    %v973 = vunpack.i.h.s16 %v963
    %v974 = vunpack.i.l.s16 %v967
    %v975 = vunpack.i.h.s16 %v967
    %v976 = vpack.i.b16 %v968, %v968
    %v977 = vpack.i.b16 %v969, %v969
    %v978 = vpack.i.b16 %v970, %v970
    %v979 = vpack.i.b16 %v971, %v971
    %v980 = vpack.i.b16 %v972, %v972
    %v981 = vpack.i.b16 %v973, %v973
    %v982 = vpack.i.b16 %v974, %v974
    %v983 = vpack.i.b16 %v975, %v975
    %v985 = vunpack.c.l.s4 286326784
    %v986 = vunpack.c.0.s8 %v985
    %v987 = vperm.slane %v976, %v986
    %v989 = vunpack.c.l.s4 286326784
    %v990 = vunpack.c.0.s8 %v989
    %v991 = vperm.slane %v977, %v990
    %v993 = vunpack.c.l.s4 286326784
    %v994 = vunpack.c.0.s8 %v993
    %v995 = vperm.slane %v978, %v994
    %v997 = vunpack.c.l.s4 286326784
    %v998 = vunpack.c.0.s8 %v997
    %v999 = vperm.slane %v979, %v998
    %v1001 = vunpack.c.l.s4 286326784
    %v1002 = vunpack.c.0.s8 %v1001
    %v1003 = vperm.slane %v980, %v1002
    %v1005 = vunpack.c.l.s4 286326784
    %v1006 = vunpack.c.0.s8 %v1005
    %v1007 = vperm.slane %v981, %v1006
    %v1009 = vunpack.c.l.s4 286326784
    %v1010 = vunpack.c.0.s8 %v1009
    %v1011 = vperm.slane %v982, %v1010
    %v1013 = vunpack.c.l.s4 286326784
    %v1014 = vunpack.c.0.s8 %v1013
    %v1015 = vperm.slane %v983, %v1014
    %vm1024 = vcmask 1040384
    %vm1025 = vsmask.f32 256
    %vm1026 = vmand %vm1024, %vm1025
    %v1027 = vld [vmem:[%s4] sm:$0x1]
    %v1028 = vsel %vm1026, %v987, %v1027
    %1029 = vst [vmem:[%s4] sm:$0x1] %v1028
    %v1030 = vld [vmem:[%s4 + $0x4] sm:$0x1]
    %v1031 = vsel %vm1026, %v991, %v1030
    %1032 = vst [vmem:[%s4 + $0x4] sm:$0x1] %v1031
    %v1033 = vld [vmem:[%s4 + $0x8] sm:$0x1]
    %v1034 = vsel %vm1026, %v995, %v1033
    %1035 = vst [vmem:[%s4 + $0x8] sm:$0x1] %v1034
    %v1036 = vld [vmem:[%s4 + $0xc] sm:$0x1]
    %v1037 = vsel %vm1026, %v999, %v1036
    %1038 = vst [vmem:[%s4 + $0xc] sm:$0x1] %v1037
    %v1039 = vld [vmem:[%s4 + $0x10] sm:$0x1]
    %v1040 = vsel %vm1026, %v1003, %v1039
    %1041 = vst [vmem:[%s4 + $0x10] sm:$0x1] %v1040
    %v1042 = vld [vmem:[%s4 + $0x14] sm:$0x1]
    %v1043 = vsel %vm1026, %v1007, %v1042
    %1044 = vst [vmem:[%s4 + $0x14] sm:$0x1] %v1043
    %v1045 = vld [vmem:[%s4 + $0x18] sm:$0x1]
    %v1046 = vsel %vm1026, %v1011, %v1045
    %1047 = vst [vmem:[%s4 + $0x18] sm:$0x1] %v1046
    %v1048 = vld [vmem:[%s4 + $0x1c] sm:$0x1]
    %v1049 = vsel %vm1026, %v1015, %v1048
    %1050 = vst [vmem:[%s4 + $0x1c] sm:$0x1] %v1049
    %s1051 = scalar_lea.vmem %s0, 16
    %v1052 = vld [vmem:[%s1051] sm:$0xff]
    %v1053 = vld [vmem:[%s1051 + $0x8] sm:$0xff]
    %v1054 = vunpack.c.l.bf16 %v1052
    %v1055 = vunpack.c.h.bf16 %v1052
    %v1056 = vunpack.c.l.bf16 %v1053
    %v1057 = vunpack.c.h.bf16 %v1053
    %v1058 = vld [vmem:[#allocation2] sm:$0xff]
    %v1059 = vpack.c.bf16 %v1058, %v1058
    %v1060 = vld [vmem:[#allocation4] sm:$0xff]
    %v1061 = vld [vmem:[#allocation4 + $0x8] sm:$0xff]
    %v1062 = vld [vmem:[#allocation4 + $0x10] sm:$0xff]
    %v1063 = vld [vmem:[#allocation4 + $0x18] sm:$0xff]
    %v1064 = vld [vmem:[#allocation4 + $0x20] sm:$0xff]
    %v1065 = vld [vmem:[#allocation4 + $0x28] sm:$0xff]
    %v1066 = vld [vmem:[#allocation4 + $0x30] sm:$0xff]
    %v1067 = vld [vmem:[#allocation4 + $0x38] sm:$0xff]
    %v1068 = vld [vmem:[#allocation4 + $0x40] sm:$0xff]
    %v1069 = vld [vmem:[#allocation4 + $0x48] sm:$0xff]
    %v1070 = vld [vmem:[#allocation4 + $0x50] sm:$0xff]
    %v1071 = vld [vmem:[#allocation4 + $0x58] sm:$0xff]
    %v1072 = vld [vmem:[#allocation4 + $0x60] sm:$0xff]
    %v1073 = vld [vmem:[#allocation4 + $0x68] sm:$0xff]
    %v1074 = vld [vmem:[#allocation4 + $0x70] sm:$0xff]
    %v1075 = vld [vmem:[#allocation4 + $0x78] sm:$0xff]
    %v1076 = vld [vmem:[#allocation4 + $0x80] sm:$0xff]
    %v1077 = vld [vmem:[#allocation4 + $0x88] sm:$0xff]
    %v1078 = vld [vmem:[#allocation4 + $0x90] sm:$0xff]
    %v1079 = vld [vmem:[#allocation4 + $0x98] sm:$0xff]
    %v1080 = vld [vmem:[#allocation4 + $0xa0] sm:$0xff]
    %v1081 = vld [vmem:[#allocation4 + $0xa8] sm:$0xff]
    %v1082 = vld [vmem:[#allocation4 + $0xb0] sm:$0xff]
    %v1083 = vld [vmem:[#allocation4 + $0xb8] sm:$0xff]
    %v1084 = vld [vmem:[#allocation4 + $0xc0] sm:$0xff]
    %v1085 = vld [vmem:[#allocation4 + $0xc8] sm:$0xff]
    %v1086 = vld [vmem:[#allocation4 + $0xd0] sm:$0xff]
    %v1087 = vld [vmem:[#allocation4 + $0xd8] sm:$0xff]
    %v1088 = vld [vmem:[#allocation4 + $0xe0] sm:$0xff]
    %v1089 = vld [vmem:[#allocation4 + $0xe8] sm:$0xff]
    %v1090 = vld [vmem:[#allocation4 + $0xf0] sm:$0xff]
    %v1091 = vld [vmem:[#allocation4 + $0xf8] sm:$0xff]
    %v1124 = vunpack.c.l.b16 %v1060
    %v1125 = vunpack.c.h.b16 %v1060
    %v1126 = vunpack.c.l.b16 %v1061
    %v1127 = vunpack.c.h.b16 %v1061
    %v1128 = vunpack.c.l.b16 %v1062
    %v1129 = vunpack.c.h.b16 %v1062
    %v1130 = vunpack.c.l.b16 %v1063
    %v1131 = vunpack.c.h.b16 %v1063
    %v1132 = vunpack.c.l.b16 %v1064
    %v1133 = vunpack.c.h.b16 %v1064
    %v1134 = vunpack.c.l.b16 %v1065
    %v1135 = vunpack.c.h.b16 %v1065
    %v1136 = vunpack.c.l.b16 %v1066
    %v1137 = vunpack.c.h.b16 %v1066
    %v1138 = vunpack.c.l.b16 %v1067
    %v1139 = vunpack.c.h.b16 %v1067
    %v1140 = vunpack.c.l.b16 %v1068
    %v1141 = vunpack.c.h.b16 %v1068
    %v1142 = vunpack.c.l.b16 %v1069
    %v1143 = vunpack.c.h.b16 %v1069
    %v1144 = vunpack.c.l.b16 %v1070
    %v1145 = vunpack.c.h.b16 %v1070
    %v1146 = vunpack.c.l.b16 %v1071
    %v1147 = vunpack.c.h.b16 %v1071
    %v1148 = vunpack.c.l.b16 %v1072
    %v1149 = vunpack.c.h.b16 %v1072
    %v1150 = vunpack.c.l.b16 %v1073
    %v1151 = vunpack.c.h.b16 %v1073
    %v1152 = vunpack.c.l.b16 %v1074
    %v1153 = vunpack.c.h.b16 %v1074
    %v1154 = vunpack.c.l.b16 %v1075
    %v1155 = vunpack.c.h.b16 %v1075
    %v1156 = vunpack.c.l.b16 %v1076
    %v1157 = vunpack.c.h.b16 %v1076
    %v1158 = vunpack.c.l.b16 %v1077
    %v1159 = vunpack.c.h.b16 %v1077
    %v1160 = vunpack.c.l.b16 %v1078
    %v1161 = vunpack.c.h.b16 %v1078
    %v1162 = vunpack.c.l.b16 %v1079
    %v1163 = vunpack.c.h.b16 %v1079
    %v1164 = vunpack.c.l.b16 %v1080
    %v1165 = vunpack.c.h.b16 %v1080
    %v1166 = vunpack.c.l.b16 %v1081
    %v1167 = vunpack.c.h.b16 %v1081
    %v1168 = vunpack.c.l.b16 %v1082
    %v1169 = vunpack.c.h.b16 %v1082
    %v1170 = vunpack.c.l.b16 %v1083
    %v1171 = vunpack.c.h.b16 %v1083
    %v1172 = vunpack.c.l.b16 %v1084
    %v1173 = vunpack.c.h.b16 %v1084
    %v1174 = vunpack.c.l.b16 %v1085
    %v1175 = vunpack.c.h.b16 %v1085
    %v1176 = vunpack.c.l.b16 %v1086
    %v1177 = vunpack.c.h.b16 %v1086
    %v1178 = vunpack.c.l.b16 %v1087
    %v1179 = vunpack.c.h.b16 %v1087
    %v1180 = vunpack.c.l.b16 %v1088
    %v1181 = vunpack.c.h.b16 %v1088
    %v1182 = vunpack.c.l.b16 %v1089
    %v1183 = vunpack.c.h.b16 %v1089
    %v1184 = vunpack.c.l.b16 %v1090
    %v1185 = vunpack.c.h.b16 %v1090
    %v1186 = vunpack.c.l.b16 %v1091
    %v1187 = vunpack.c.h.b16 %v1091
    %v1188 = vpack.c.b16 %v1128, %v1124
    %v1189 = vpack.c.b16 %v1129, %v1125
    %v1190 = vpack.c.b16 %v1130, %v1126
    %v1191 = vpack.c.b16 %v1131, %v1127
    %v1192 = vpack.c.b16 %v1136, %v1132
    %v1193 = vpack.c.b16 %v1137, %v1133
    %v1194 = vpack.c.b16 %v1138, %v1134
    %v1195 = vpack.c.b16 %v1139, %v1135
    %v1196 = vpack.c.b16 %v1144, %v1140
    %v1197 = vpack.c.b16 %v1145, %v1141
    %v1198 = vpack.c.b16 %v1146, %v1142
    %v1199 = vpack.c.b16 %v1147, %v1143
    %v1200 = vpack.c.b16 %v1152, %v1148
    %v1201 = vpack.c.b16 %v1153, %v1149
    %v1202 = vpack.c.b16 %v1154, %v1150
    %v1203 = vpack.c.b16 %v1155, %v1151
    %v1204 = vpack.c.b16 %v1160, %v1156
    %v1205 = vpack.c.b16 %v1161, %v1157
    %v1206 = vpack.c.b16 %v1162, %v1158
    %v1207 = vpack.c.b16 %v1163, %v1159
    %v1208 = vpack.c.b16 %v1168, %v1164
    %v1209 = vpack.c.b16 %v1169, %v1165
    %v1210 = vpack.c.b16 %v1170, %v1166
    %v1211 = vpack.c.b16 %v1171, %v1167
    %v1212 = vpack.c.b16 %v1176, %v1172
    %v1213 = vpack.c.b16 %v1177, %v1173
    %v1214 = vpack.c.b16 %v1178, %v1174
    %v1215 = vpack.c.b16 %v1179, %v1175
    %v1216 = vpack.c.b16 %v1184, %v1180
    %v1217 = vpack.c.b16 %v1185, %v1181
    %v1218 = vpack.c.b16 %v1186, %v1182
    %v1219 = vpack.c.b16 %v1187, %v1183
    %1252 = vmatpush.bf16.msra.mxu0 %v1216
    %1253 = vmatpush.bf16.msra.mxu0 %v1212
    %1254 = vmatpush.bf16.msra.mxu0 %v1208
    %1255 = vmatpush.bf16.msra.mxu0 %v1204
    %1256 = vmatpush.bf16.msra.mxu0 %v1200
    %1257 = vmatpush.bf16.msra.mxu0 %v1196
    %1258 = vmatpush.bf16.msra.mxu0 %v1192
    %1259 = vmatpush.bf16.msra.mxu0 %v1188
    %1260 = vmatmul.bf16.gmra.mxu0 %v1059
    %v1261 = vpop.f32.mrf.mxu0
    %v1262 = vadd.f32 0.0, %v1261
    %v1263 = vpop.f32.mrf.mxu0
    %1264 = vdwg.mxu0
    %1265 = vmatpush.bf16.msra.mxu0 %v1217
    %1266 = vmatpush.bf16.msra.mxu0 %v1213
    %1267 = vmatpush.bf16.msra.mxu0 %v1209
    %1268 = vmatpush.bf16.msra.mxu0 %v1205
    %1269 = vmatpush.bf16.msra.mxu0 %v1201
    %1270 = vmatpush.bf16.msra.mxu0 %v1197
    %1271 = vmatpush.bf16.msra.mxu0 %v1193
    %1272 = vmatpush.bf16.msra.mxu0 %v1189
    %1273 = vmatmul.bf16.gmra.mxu0 %v1059
    %v1274 = vpop.f32.mrf.mxu0
    %v1275 = vadd.f32 0.0, %v1274
    %v1276 = vpop.f32.mrf.mxu0
    %1277 = vdwg.mxu0
    %1278 = vmatpush.bf16.msra.mxu0 %v1218
    %1279 = vmatpush.bf16.msra.mxu0 %v1214
    %1280 = vmatpush.bf16.msra.mxu0 %v1210
    %1281 = vmatpush.bf16.msra.mxu0 %v1206
    %1282 = vmatpush.bf16.msra.mxu0 %v1202
    %1283 = vmatpush.bf16.msra.mxu0 %v1198
    %1284 = vmatpush.bf16.msra.mxu0 %v1194
    %1285 = vmatpush.bf16.msra.mxu0 %v1190
    %1286 = vmatmul.bf16.gmra.mxu0 %v1059
    %v1287 = vpop.f32.mrf.mxu0
    %v1288 = vadd.f32 0.0, %v1287
    %v1289 = vpop.f32.mrf.mxu0
    %1290 = vdwg.mxu0
    %1291 = vmatpush.bf16.msra.mxu0 %v1219
    %1292 = vmatpush.bf16.msra.mxu0 %v1215
    %1293 = vmatpush.bf16.msra.mxu0 %v1211
    %1294 = vmatpush.bf16.msra.mxu0 %v1207
    %1295 = vmatpush.bf16.msra.mxu0 %v1203
    %1296 = vmatpush.bf16.msra.mxu0 %v1199
    %1297 = vmatpush.bf16.msra.mxu0 %v1195
    %1298 = vmatpush.bf16.msra.mxu0 %v1191
    %1299 = vmatmul.bf16.gmra.mxu0 %v1059
    %v1300 = vpop.f32.mrf.mxu0
    %v1301 = vadd.f32 0.0, %v1300
    %v1302 = vpop.f32.mrf.mxu0
    %1303 = vdwg.mxu0
    %v1304 = vadd.f32 %v1054, %v1262
    %v1305 = vadd.f32 %v1055, %v1275
    %v1306 = vadd.f32 %v1056, %v1288
    %v1307 = vadd.f32 %v1057, %v1301
    %v1308 = vld [vmem:[#allocation3] sm:$0xff]
    %v1309 = vxor.u32 %v1304, 2147483648
    %v1310 = vxor.u32 %v1305, 2147483648
    %v1311 = vxor.u32 %v1306, 2147483648
    %v1312 = vmul.f32 %v1309, 1.442695
    %v1313 = vpow.pop %v1312
    %v1314 = vmul.f32 %v1310, 1.442695
    %v1315 = vpow.pop %v1314
    %v1316 = vmul.f32 %v1311, 1.442695
    %v1317 = vpow.pop %v1316
    %v1318 = vadd.f32 %v1313, 1.0
    %v1319 = vadd.f32 %v1315, 1.0
    %v1320 = vadd.f32 %v1317, 1.0
    %v1321 = vrcp.pop %v1318
    %v1322 = vmul.f32 %v1318, %v1321
    %v1323 = vsub.f32 1.0, %v1322
    %v1324 = vmul.f32 %v1321, %v1323
    %v1325 = vadd.f32 %v1321, %v1324
    %vm1326 = vweird.f32 %v1318
    %vm1327 = vweird.f32 %v1321
    %vm1328 = vmor %vm1326, %vm1327
    %v1329 = vsel %vm1328, %v1321, %v1325
    %v1330 = vand.u32 2147483647, %v1318
    %vm1331 = vcmp.eq.f32.partialorder %v1330, 8.507059e+37
    %v1332 = vand.u32 %v1318, 2147483648
    %v1333 = vor.u32 1.1754944e-38, %v1332
    %v1334 = vsel %vm1331, %v1333, %v1329
    %v1335 = vmul.f32 1.0, %v1334
    %v1336 = vrcp.pop %v1319
    %v1337 = vmul.f32 %v1319, %v1336
    %v1338 = vsub.f32 1.0, %v1337
    %v1339 = vmul.f32 %v1336, %v1338
    %v1340 = vadd.f32 %v1336, %v1339
    %vm1341 = vweird.f32 %v1319
    %vm1342 = vweird.f32 %v1336
    %vm1343 = vmor %vm1341, %vm1342
    %v1344 = vsel %vm1343, %v1336, %v1340
    %v1345 = vand.u32 2147483647, %v1319
    %vm1346 = vcmp.eq.f32.partialorder %v1345, 8.507059e+37
    %v1347 = vand.u32 %v1319, 2147483648
    %v1348 = vor.u32 1.1754944e-38, %v1347
    %v1349 = vsel %vm1346, %v1348, %v1344
    %v1350 = vmul.f32 1.0, %v1349
    %v1351 = vrcp.pop %v1320
    %v1352 = vmul.f32 %v1320, %v1351
    %v1353 = vsub.f32 1.0, %v1352
    %v1354 = vmul.f32 %v1351, %v1353
    %v1355 = vadd.f32 %v1351, %v1354
    %vm1356 = vweird.f32 %v1320
    %vm1357 = vweird.f32 %v1351
    %vm1358 = vmor %vm1356, %vm1357
    %v1359 = vsel %vm1358, %v1351, %v1355
    %v1360 = vand.u32 2147483647, %v1320
    %vm1361 = vcmp.eq.f32.partialorder %v1360, 8.507059e+37
    %v1362 = vand.u32 %v1320, 2147483648
    %v1363 = vor.u32 1.1754944e-38, %v1362
    %v1364 = vsel %vm1361, %v1363, %v1359
    %v1365 = vmul.f32 1.0, %v1364
    %v1366 = vtanh.pop %v1307
    %v1367 = vmul.f32 %v1350, %v1308
    %v1368 = vmul.f32 %v1335, %v1366
    %v1369 = vadd.f32 %v1367, %v1368
    %v1370 = vtanh.pop %v1369
    %v1371 = vmul.f32 %v1365, %v1370
    %1372 = vst [vmem:[#allocation2] sm:$0xff] %v1371
    %1373 = vst [vmem:[#allocation3] sm:$0xff] %v1369
    %v1374 = vld [vmem:[%s379] sm:$0xff]
    %v1375 = vpack.c.bf16 %v1371, %v1371
    %v1376 = vpack.c.bf16 %v1374, %v1374
    %v1377 = vld [vmem:[#allocation6] sm:$0xff]
    %v1378 = vld [vmem:[#allocation6 + $0x8] sm:$0xff]
    %v1379 = vld [vmem:[#allocation6 + $0x10] sm:$0xff]
    %v1380 = vld [vmem:[#allocation6 + $0x18] sm:$0xff]
    %v1381 = vld [vmem:[#allocation6 + $0x20] sm:$0xff]
    %v1382 = vld [vmem:[#allocation6 + $0x28] sm:$0xff]
    %v1383 = vld [vmem:[#allocation6 + $0x30] sm:$0xff]
    %v1384 = vld [vmem:[#allocation6 + $0x38] sm:$0xff]
    %v1385 = vld [vmem:[#allocation6 + $0x40] sm:$0xff]
    %v1386 = vld [vmem:[#allocation6 + $0x48] sm:$0xff]
    %v1387 = vld [vmem:[#allocation6 + $0x50] sm:$0xff]
    %v1388 = vld [vmem:[#allocation6 + $0x58] sm:$0xff]
    %v1389 = vld [vmem:[#allocation6 + $0x60] sm:$0xff]
    %v1390 = vld [vmem:[#allocation6 + $0x68] sm:$0xff]
    %v1391 = vld [vmem:[#allocation6 + $0x70] sm:$0xff]
    %v1392 = vld [vmem:[#allocation6 + $0x78] sm:$0xff]
    %v1393 = vld [vmem:[#allocation6 + $0x80] sm:$0xff]
    %v1394 = vld [vmem:[#allocation6 + $0x88] sm:$0xff]
    %v1395 = vld [vmem:[#allocation6 + $0x90] sm:$0xff]
    %v1396 = vld [vmem:[#allocation6 + $0x98] sm:$0xff]
    %v1397 = vld [vmem:[#allocation6 + $0xa0] sm:$0xff]
    %v1398 = vld [vmem:[#allocation6 + $0xa8] sm:$0xff]
    %v1399 = vld [vmem:[#allocation6 + $0xb0] sm:$0xff]
    %v1400 = vld [vmem:[#allocation6 + $0xb8] sm:$0xff]
    %v1401 = vld [vmem:[#allocation6 + $0xc0] sm:$0xff]
    %v1402 = vld [vmem:[#allocation6 + $0xc8] sm:$0xff]
    %v1403 = vld [vmem:[#allocation6 + $0xd0] sm:$0xff]
    %v1404 = vld [vmem:[#allocation6 + $0xd8] sm:$0xff]
    %v1405 = vld [vmem:[#allocation6 + $0xe0] sm:$0xff]
    %v1406 = vld [vmem:[#allocation6 + $0xe8] sm:$0xff]
    %v1407 = vld [vmem:[#allocation6 + $0xf0] sm:$0xff]
    %v1408 = vld [vmem:[#allocation6 + $0xf8] sm:$0xff]
    %v1409 = vld [vmem:[#allocation6 + $0x100] sm:$0xff]
    %v1410 = vld [vmem:[#allocation6 + $0x108] sm:$0xff]
    %v1411 = vld [vmem:[#allocation6 + $0x110] sm:$0xff]
    %v1412 = vld [vmem:[#allocation6 + $0x118] sm:$0xff]
    %v1413 = vld [vmem:[#allocation6 + $0x120] sm:$0xff]
    %v1414 = vld [vmem:[#allocation6 + $0x128] sm:$0xff]
    %v1415 = vld [vmem:[#allocation6 + $0x130] sm:$0xff]
    %v1416 = vld [vmem:[#allocation6 + $0x138] sm:$0xff]
    %v1417 = vld [vmem:[#allocation6 + $0x140] sm:$0xff]
    %v1418 = vld [vmem:[#allocation6 + $0x148] sm:$0xff]
    %v1419 = vld [vmem:[#allocation6 + $0x150] sm:$0xff]
    %v1420 = vld [vmem:[#allocation6 + $0x158] sm:$0xff]
    %v1421 = vld [vmem:[#allocation6 + $0x160] sm:$0xff]
    %v1422 = vld [vmem:[#allocation6 + $0x168] sm:$0xff]
    %v1423 = vld [vmem:[#allocation6 + $0x170] sm:$0xff]
    %v1424 = vld [vmem:[#allocation6 + $0x178] sm:$0xff]
    %v1425 = vld [vmem:[#allocation6 + $0x180] sm:$0xff]
    %v1426 = vld [vmem:[#allocation6 + $0x188] sm:$0xff]
    %v1427 = vld [vmem:[#allocation6 + $0x190] sm:$0xff]
    %v1428 = vld [vmem:[#allocation6 + $0x198] sm:$0xff]
    %v1429 = vld [vmem:[#allocation6 + $0x1a0] sm:$0xff]
    %v1430 = vld [vmem:[#allocation6 + $0x1a8] sm:$0xff]
    %v1431 = vld [vmem:[#allocation6 + $0x1b0] sm:$0xff]
    %v1432 = vld [vmem:[#allocation6 + $0x1b8] sm:$0xff]
    %v1433 = vld [vmem:[#allocation6 + $0x1c0] sm:$0xff]
    %v1434 = vld [vmem:[#allocation6 + $0x1c8] sm:$0xff]
    %v1435 = vld [vmem:[#allocation6 + $0x1d0] sm:$0xff]
    %v1436 = vld [vmem:[#allocation6 + $0x1d8] sm:$0xff]
    %v1437 = vld [vmem:[#allocation6 + $0x1e0] sm:$0xff]
    %v1438 = vld [vmem:[#allocation6 + $0x1e8] sm:$0xff]
    %v1439 = vld [vmem:[#allocation6 + $0x1f0] sm:$0xff]
    %v1440 = vld [vmem:[#allocation6 + $0x1f8] sm:$0xff]
    %v1441 = vld [vmem:[%s3] sm:$0xf]
    %v1443 = vperm.slane %v1441, 0
    %v1444 = vperm.slane %v1441, 1
    %v1445 = vperm.slane %v1441, 2
    %v1446 = vperm.slane %v1441, 3
    %v1515 = vunpack.c.l.b16 %v1377
    %v1516 = vunpack.c.h.b16 %v1377
    %v1517 = vunpack.c.l.b16 %v1378
    %v1518 = vunpack.c.h.b16 %v1378
    %v1519 = vunpack.c.l.b16 %v1379
    %v1520 = vunpack.c.h.b16 %v1379
    %v1521 = vunpack.c.l.b16 %v1380
    %v1522 = vunpack.c.h.b16 %v1380
    %v1523 = vunpack.c.l.b16 %v1381
    %v1524 = vunpack.c.h.b16 %v1381
    %v1525 = vunpack.c.l.b16 %v1382
    %v1526 = vunpack.c.h.b16 %v1382
    %v1527 = vunpack.c.l.b16 %v1383
    %v1528 = vunpack.c.h.b16 %v1383
    %v1529 = vunpack.c.l.b16 %v1384
    %v1530 = vunpack.c.h.b16 %v1384
    %v1531 = vunpack.c.l.b16 %v1385
    %v1532 = vunpack.c.h.b16 %v1385
    %v1533 = vunpack.c.l.b16 %v1386
    %v1534 = vunpack.c.h.b16 %v1386
    %v1535 = vunpack.c.l.b16 %v1387
    %v1536 = vunpack.c.h.b16 %v1387
    %v1537 = vunpack.c.l.b16 %v1388
    %v1538 = vunpack.c.h.b16 %v1388
    %v1539 = vunpack.c.l.b16 %v1389
    %v1540 = vunpack.c.h.b16 %v1389
    %v1541 = vunpack.c.l.b16 %v1390
    %v1542 = vunpack.c.h.b16 %v1390
    %v1543 = vunpack.c.l.b16 %v1391
    %v1544 = vunpack.c.h.b16 %v1391
    %v1545 = vunpack.c.l.b16 %v1392
    %v1546 = vunpack.c.h.b16 %v1392
    %v1547 = vunpack.c.l.b16 %v1393
    %v1548 = vunpack.c.h.b16 %v1393
    %v1549 = vunpack.c.l.b16 %v1394
    %v1550 = vunpack.c.h.b16 %v1394
    %v1551 = vunpack.c.l.b16 %v1395
    %v1552 = vunpack.c.h.b16 %v1395
    %v1553 = vunpack.c.l.b16 %v1396
    %v1554 = vunpack.c.h.b16 %v1396
    %v1555 = vunpack.c.l.b16 %v1397
    %v1556 = vunpack.c.h.b16 %v1397
    %v1557 = vunpack.c.l.b16 %v1398
    %v1558 = vunpack.c.h.b16 %v1398
    %v1559 = vunpack.c.l.b16 %v1399
    %v1560 = vunpack.c.h.b16 %v1399
    %v1561 = vunpack.c.l.b16 %v1400
    %v1562 = vunpack.c.h.b16 %v1400
    %v1563 = vunpack.c.l.b16 %v1401
    %v1564 = vunpack.c.h.b16 %v1401
    %v1565 = vunpack.c.l.b16 %v1402
    %v1566 = vunpack.c.h.b16 %v1402
    %v1567 = vunpack.c.l.b16 %v1403
    %v1568 = vunpack.c.h.b16 %v1403
    %v1569 = vunpack.c.l.b16 %v1404
    %v1570 = vunpack.c.h.b16 %v1404
    %v1571 = vunpack.c.l.b16 %v1405
    %v1572 = vunpack.c.h.b16 %v1405
    %v1573 = vunpack.c.l.b16 %v1406
    %v1574 = vunpack.c.h.b16 %v1406
    %v1575 = vunpack.c.l.b16 %v1407
    %v1576 = vunpack.c.h.b16 %v1407
    %v1577 = vunpack.c.l.b16 %v1408
    %v1578 = vunpack.c.h.b16 %v1408
    %v1579 = vunpack.c.l.b16 %v1409
    %v1580 = vunpack.c.h.b16 %v1409
    %v1581 = vunpack.c.l.b16 %v1410
    %v1582 = vunpack.c.h.b16 %v1410
    %v1583 = vunpack.c.l.b16 %v1411
    %v1584 = vunpack.c.h.b16 %v1411
    %v1585 = vunpack.c.l.b16 %v1412
    %v1586 = vunpack.c.h.b16 %v1412
    %v1587 = vunpack.c.l.b16 %v1413
    %v1588 = vunpack.c.h.b16 %v1413
    %v1589 = vunpack.c.l.b16 %v1414
    %v1590 = vunpack.c.h.b16 %v1414
    %v1591 = vunpack.c.l.b16 %v1415
    %v1592 = vunpack.c.h.b16 %v1415
    %v1593 = vunpack.c.l.b16 %v1416
    %v1594 = vunpack.c.h.b16 %v1416
    %v1595 = vunpack.c.l.b16 %v1417
    %v1596 = vunpack.c.h.b16 %v1417
    %v1597 = vunpack.c.l.b16 %v1418
    %v1598 = vunpack.c.h.b16 %v1418
    %v1599 = vunpack.c.l.b16 %v1419
    %v1600 = vunpack.c.h.b16 %v1419
    %v1601 = vunpack.c.l.b16 %v1420
    %v1602 = vunpack.c.h.b16 %v1420
    %v1603 = vunpack.c.l.b16 %v1421
    %v1604 = vunpack.c.h.b16 %v1421
    %v1605 = vunpack.c.l.b16 %v1422
    %v1606 = vunpack.c.h.b16 %v1422
    %v1607 = vunpack.c.l.b16 %v1423
    %v1608 = vunpack.c.h.b16 %v1423
    %v1609 = vunpack.c.l.b16 %v1424
    %v1610 = vunpack.c.h.b16 %v1424
    %v1611 = vunpack.c.l.b16 %v1425
    %v1612 = vunpack.c.h.b16 %v1425
    %v1613 = vunpack.c.l.b16 %v1426
    %v1614 = vunpack.c.h.b16 %v1426
    %v1615 = vunpack.c.l.b16 %v1427
    %v1616 = vunpack.c.h.b16 %v1427
    %v1617 = vunpack.c.l.b16 %v1428
    %v1618 = vunpack.c.h.b16 %v1428
    %v1619 = vunpack.c.l.b16 %v1429
    %v1620 = vunpack.c.h.b16 %v1429
    %v1621 = vunpack.c.l.b16 %v1430
    %v1622 = vunpack.c.h.b16 %v1430
    %v1623 = vunpack.c.l.b16 %v1431
    %v1624 = vunpack.c.h.b16 %v1431
    %v1625 = vunpack.c.l.b16 %v1432
    %v1626 = vunpack.c.h.b16 %v1432
    %v1627 = vunpack.c.l.b16 %v1433
    %v1628 = vunpack.c.h.b16 %v1433
    %v1629 = vunpack.c.l.b16 %v1434
    %v1630 = vunpack.c.h.b16 %v1434
    %v1631 = vunpack.c.l.b16 %v1435
    %v1632 = vunpack.c.h.b16 %v1435
    %v1633 = vunpack.c.l.b16 %v1436
    %v1634 = vunpack.c.h.b16 %v1436
    %v1635 = vunpack.c.l.b16 %v1437
    %v1636 = vunpack.c.h.b16 %v1437
    %v1637 = vunpack.c.l.b16 %v1438
    %v1638 = vunpack.c.h.b16 %v1438
    %v1639 = vunpack.c.l.b16 %v1439
    %v1640 = vunpack.c.h.b16 %v1439
    %v1641 = vunpack.c.l.b16 %v1440
    %v1642 = vunpack.c.h.b16 %v1440
    %v1643 = vpack.c.b16 %v1519, %v1515
    %v1644 = vpack.c.b16 %v1520, %v1516
    %v1645 = vpack.c.b16 %v1521, %v1517
    %v1646 = vpack.c.b16 %v1522, %v1518
    %v1647 = vpack.c.b16 %v1527, %v1523
    %v1648 = vpack.c.b16 %v1528, %v1524
    %v1649 = vpack.c.b16 %v1529, %v1525
    %v1650 = vpack.c.b16 %v1530, %v1526
    %v1651 = vpack.c.b16 %v1535, %v1531
    %v1652 = vpack.c.b16 %v1536, %v1532
    %v1653 = vpack.c.b16 %v1537, %v1533
    %v1654 = vpack.c.b16 %v1538, %v1534
    %v1655 = vpack.c.b16 %v1543, %v1539
    %v1656 = vpack.c.b16 %v1544, %v1540
    %v1657 = vpack.c.b16 %v1545, %v1541
    %v1658 = vpack.c.b16 %v1546, %v1542
    %v1659 = vpack.c.b16 %v1551, %v1547
    %v1660 = vpack.c.b16 %v1552, %v1548
    %v1661 = vpack.c.b16 %v1553, %v1549
    %v1662 = vpack.c.b16 %v1554, %v1550
    %v1663 = vpack.c.b16 %v1559, %v1555
    %v1664 = vpack.c.b16 %v1560, %v1556
    %v1665 = vpack.c.b16 %v1561, %v1557
    %v1666 = vpack.c.b16 %v1562, %v1558
    %v1667 = vpack.c.b16 %v1567, %v1563
    %v1668 = vpack.c.b16 %v1568, %v1564
    %v1669 = vpack.c.b16 %v1569, %v1565
    %v1670 = vpack.c.b16 %v1570, %v1566
    %v1671 = vpack.c.b16 %v1575, %v1571
    %v1672 = vpack.c.b16 %v1576, %v1572
    %v1673 = vpack.c.b16 %v1577, %v1573
    %v1674 = vpack.c.b16 %v1578, %v1574
    %v1675 = vpack.c.b16 %v1583, %v1579
    %v1676 = vpack.c.b16 %v1584, %v1580
    %v1677 = vpack.c.b16 %v1585, %v1581
    %v1678 = vpack.c.b16 %v1586, %v1582
    %v1679 = vpack.c.b16 %v1591, %v1587
    %v1680 = vpack.c.b16 %v1592, %v1588
    %v1681 = vpack.c.b16 %v1593, %v1589
    %v1682 = vpack.c.b16 %v1594, %v1590
    %v1683 = vpack.c.b16 %v1599, %v1595
    %v1684 = vpack.c.b16 %v1600, %v1596
    %v1685 = vpack.c.b16 %v1601, %v1597
    %v1686 = vpack.c.b16 %v1602, %v1598
    %v1687 = vpack.c.b16 %v1607, %v1603
    %v1688 = vpack.c.b16 %v1608, %v1604
    %v1689 = vpack.c.b16 %v1609, %v1605
    %v1690 = vpack.c.b16 %v1610, %v1606
    %v1691 = vpack.c.b16 %v1615, %v1611
    %v1692 = vpack.c.b16 %v1616, %v1612
    %v1693 = vpack.c.b16 %v1617, %v1613
    %v1694 = vpack.c.b16 %v1618, %v1614
    %v1695 = vpack.c.b16 %v1623, %v1619
    %v1696 = vpack.c.b16 %v1624, %v1620
    %v1697 = vpack.c.b16 %v1625, %v1621
    %v1698 = vpack.c.b16 %v1626, %v1622
    %v1699 = vpack.c.b16 %v1631, %v1627
    %v1700 = vpack.c.b16 %v1632, %v1628
    %v1701 = vpack.c.b16 %v1633, %v1629
    %v1702 = vpack.c.b16 %v1634, %v1630
    %v1703 = vpack.c.b16 %v1639, %v1635
    %v1704 = vpack.c.b16 %v1640, %v1636
    %v1705 = vpack.c.b16 %v1641, %v1637
    %v1706 = vpack.c.b16 %v1642, %v1638
    %1771 = vmatpush.bf16.msra.mxu0 %v1671
    %1772 = vmatpush.bf16.msra.mxu0 %v1667
    %1773 = vmatpush.bf16.msra.mxu0 %v1663
    %1774 = vmatpush.bf16.msra.mxu0 %v1659
    %1775 = vmatpush.bf16.msra.mxu0 %v1655
    %1776 = vmatpush.bf16.msra.mxu0 %v1651
    %1777 = vmatpush.bf16.msra.mxu0 %v1647
    %1778 = vmatpush.bf16.msra.mxu0 %v1643
    %1779 = vmatmul.bf16.gmra.mxu0 %v1375
    %v1780 = vpop.f32.mrf.mxu0
    %v1781 = vadd.f32 %v1443, %v1780
    %v1782 = vpop.f32.mrf.mxu0
    %1783 = vdwg.mxu0
    %1784 = vmatpush.bf16.msra.mxu0 %v1703
    %1785 = vmatpush.bf16.msra.mxu0 %v1699
    %1786 = vmatpush.bf16.msra.mxu0 %v1695
    %1787 = vmatpush.bf16.msra.mxu0 %v1691
    %1788 = vmatpush.bf16.msra.mxu0 %v1687
    %1789 = vmatpush.bf16.msra.mxu0 %v1683
    %1790 = vmatpush.bf16.msra.mxu0 %v1679
    %1791 = vmatpush.bf16.msra.mxu0 %v1675
    %1792 = vmatmul.bf16.gmra.mxu0 %v1376
    %v1793 = vpop.f32.mrf.mxu0
    %v1794 = vadd.f32 %v1781, %v1793
    %v1795 = vpop.f32.mrf.mxu0
    %1796 = vdwg.mxu0
    %1797 = vmatpush.bf16.msra.mxu0 %v1672
    %1798 = vmatpush.bf16.msra.mxu0 %v1668
    %1799 = vmatpush.bf16.msra.mxu0 %v1664
    %1800 = vmatpush.bf16.msra.mxu0 %v1660
    %1801 = vmatpush.bf16.msra.mxu0 %v1656
    %1802 = vmatpush.bf16.msra.mxu0 %v1652
    %1803 = vmatpush.bf16.msra.mxu0 %v1648
    %1804 = vmatpush.bf16.msra.mxu0 %v1644
    %1805 = vmatmul.bf16.gmra.mxu0 %v1375
    %v1806 = vpop.f32.mrf.mxu0
    %v1807 = vadd.f32 %v1444, %v1806
    %v1808 = vpop.f32.mrf.mxu0
    %1809 = vdwg.mxu0
    %1810 = vmatpush.bf16.msra.mxu0 %v1704
    %1811 = vmatpush.bf16.msra.mxu0 %v1700
    %1812 = vmatpush.bf16.msra.mxu0 %v1696
    %1813 = vmatpush.bf16.msra.mxu0 %v1692
    %1814 = vmatpush.bf16.msra.mxu0 %v1688
    %1815 = vmatpush.bf16.msra.mxu0 %v1684
    %1816 = vmatpush.bf16.msra.mxu0 %v1680
    %1817 = vmatpush.bf16.msra.mxu0 %v1676
    %1818 = vmatmul.bf16.gmra.mxu0 %v1376
    %v1819 = vpop.f32.mrf.mxu0
    %v1820 = vadd.f32 %v1807, %v1819
    %v1821 = vpop.f32.mrf.mxu0
    %1822 = vdwg.mxu0
    %1823 = vmatpush.bf16.msra.mxu0 %v1673
    %1824 = vmatpush.bf16.msra.mxu0 %v1669
    %1825 = vmatpush.bf16.msra.mxu0 %v1665
    %1826 = vmatpush.bf16.msra.mxu0 %v1661
    %1827 = vmatpush.bf16.msra.mxu0 %v1657
    %1828 = vmatpush.bf16.msra.mxu0 %v1653
    %1829 = vmatpush.bf16.msra.mxu0 %v1649
    %1830 = vmatpush.bf16.msra.mxu0 %v1645
    %1831 = vmatmul.bf16.gmra.mxu0 %v1375
    %v1832 = vpop.f32.mrf.mxu0
    %v1833 = vadd.f32 %v1445, %v1832
    %v1834 = vpop.f32.mrf.mxu0
    %1835 = vdwg.mxu0
    %1836 = vmatpush.bf16.msra.mxu0 %v1705
    %1837 = vmatpush.bf16.msra.mxu0 %v1701
    %1838 = vmatpush.bf16.msra.mxu0 %v1697
    %1839 = vmatpush.bf16.msra.mxu0 %v1693
    %1840 = vmatpush.bf16.msra.mxu0 %v1689
    %1841 = vmatpush.bf16.msra.mxu0 %v1685
    %1842 = vmatpush.bf16.msra.mxu0 %v1681
    %1843 = vmatpush.bf16.msra.mxu0 %v1677
    %1844 = vmatmul.bf16.gmra.mxu0 %v1376
    %v1845 = vpop.f32.mrf.mxu0
    %v1846 = vadd.f32 %v1833, %v1845
    %v1847 = vpop.f32.mrf.mxu0
    %1848 = vdwg.mxu0
    %1849 = vmatpush.bf16.msra.mxu0 %v1674
    %1850 = vmatpush.bf16.msra.mxu0 %v1670
    %1851 = vmatpush.bf16.msra.mxu0 %v1666
    %1852 = vmatpush.bf16.msra.mxu0 %v1662
    %1853 = vmatpush.bf16.msra.mxu0 %v1658
    %1854 = vmatpush.bf16.msra.mxu0 %v1654
    %1855 = vmatpush.bf16.msra.mxu0 %v1650
    %1856 = vmatpush.bf16.msra.mxu0 %v1646
    %1857 = vmatmul.bf16.gmra.mxu0 %v1375
    %v1858 = vpop.f32.mrf.mxu0
    %v1859 = vadd.f32 %v1446, %v1858
    %v1860 = vpop.f32.mrf.mxu0
    %1861 = vdwg.mxu0
    %1862 = vmatpush.bf16.msra.mxu0 %v1706
    %1863 = vmatpush.bf16.msra.mxu0 %v1702
    %1864 = vmatpush.bf16.msra.mxu0 %v1698
    %1865 = vmatpush.bf16.msra.mxu0 %v1694
    %1866 = vmatpush.bf16.msra.mxu0 %v1690
    %1867 = vmatpush.bf16.msra.mxu0 %v1686
    %1868 = vmatpush.bf16.msra.mxu0 %v1682
    %1869 = vmatpush.bf16.msra.mxu0 %v1678
    %1870 = vmatmul.bf16.gmra.mxu0 %v1376
    %v1871 = vpop.f32.mrf.mxu0
    %v1872 = vadd.f32 %v1859, %v1871
    %v1873 = vpop.f32.mrf.mxu0
    %1874 = vdwg.mxu0
    %v1875 = vld [vmem:[%s881] sm:$0xff]
    %v1876 = vxor.u32 %v1794, 2147483648
    %v1877 = vxor.u32 %v1820, 2147483648
    %v1878 = vxor.u32 %v1846, 2147483648
    %v1879 = vmul.f32 %v1876, 1.442695
    %v1880 = vpow.pop %v1879
    %v1881 = vmul.f32 %v1877, 1.442695
    %v1882 = vpow.pop %v1881
    %v1883 = vmul.f32 %v1878, 1.442695
    %v1884 = vpow.pop %v1883
    %v1885 = vadd.f32 %v1880, 1.0
    %v1886 = vadd.f32 %v1882, 1.0
    %v1887 = vadd.f32 %v1884, 1.0
    %v1888 = vrcp.pop %v1885
    %v1889 = vmul.f32 %v1885, %v1888
    %v1890 = vsub.f32 1.0, %v1889
    %v1891 = vmul.f32 %v1888, %v1890
    %v1892 = vadd.f32 %v1888, %v1891
    %vm1893 = vweird.f32 %v1885
    %vm1894 = vweird.f32 %v1888
    %vm1895 = vmor %vm1893, %vm1894
    %v1896 = vsel %vm1895, %v1888, %v1892
    %v1897 = vand.u32 2147483647, %v1885
    %vm1898 = vcmp.eq.f32.partialorder %v1897, 8.507059e+37
    %v1899 = vand.u32 %v1885, 2147483648
    %v1900 = vor.u32 1.1754944e-38, %v1899
    %v1901 = vsel %vm1898, %v1900, %v1896
    %v1902 = vmul.f32 1.0, %v1901
    %v1903 = vrcp.pop %v1886
    %v1904 = vmul.f32 %v1886, %v1903
    %v1905 = vsub.f32 1.0, %v1904
    %v1906 = vmul.f32 %v1903, %v1905
    %v1907 = vadd.f32 %v1903, %v1906
    %vm1908 = vweird.f32 %v1886
    %vm1909 = vweird.f32 %v1903
    %vm1910 = vmor %vm1908, %vm1909
    %v1911 = vsel %vm1910, %v1903, %v1907
    %v1912 = vand.u32 2147483647, %v1886
    %vm1913 = vcmp.eq.f32.partialorder %v1912, 8.507059e+37
    %v1914 = vand.u32 %v1886, 2147483648
    %v1915 = vor.u32 1.1754944e-38, %v1914
    %v1916 = vsel %vm1913, %v1915, %v1911
    %v1917 = vmul.f32 1.0, %v1916
    %v1918 = vrcp.pop %v1887
    %v1919 = vmul.f32 %v1887, %v1918
    %v1920 = vsub.f32 1.0, %v1919
    %v1921 = vmul.f32 %v1918, %v1920
    %v1922 = vadd.f32 %v1918, %v1921
    %vm1923 = vweird.f32 %v1887
    %vm1924 = vweird.f32 %v1918
    %vm1925 = vmor %vm1923, %vm1924
    %v1926 = vsel %vm1925, %v1918, %v1922
    %v1927 = vand.u32 2147483647, %v1887
    %vm1928 = vcmp.eq.f32.partialorder %v1927, 8.507059e+37
    %v1929 = vand.u32 %v1887, 2147483648
    %v1930 = vor.u32 1.1754944e-38, %v1929
    %v1931 = vsel %vm1928, %v1930, %v1926
    %v1932 = vmul.f32 1.0, %v1931
    %v1933 = vtanh.pop %v1872
    %v1934 = vmul.f32 %v1917, %v1875
    %v1935 = vmul.f32 %v1902, %v1933
    %v1936 = vadd.f32 %v1934, %v1935
    %v1937 = vtanh.pop %v1936
    %v1938 = vmul.f32 %v1932, %v1937
    %1939 = vst [vmem:[%s379] sm:$0xff] %v1938
    %1940 = vst [vmem:[%s881] sm:$0xff] %v1936
    %v1941 = vpack.c.bf16 %v1938, %v1938
    %v1943 = vrot.slane %v1941, 3
    %v1946 = vsel %vm951, %v1941, %v1943
    %v1948 = vsel %vm956, %v1941, %v1943
    %v1950 = vrot.slane %v1948, 1
    %v1951 = vsel %vm960, %v1941, %v1943
    %v1953 = vrot.slane %v1951, 2
    %v1954 = vsel %vm964, %v1941, %v1943
    %v1956 = vrot.slane %v1954, 3
    %v1957 = vunpack.i.l.s16 %v1946
    %v1958 = vunpack.i.h.s16 %v1946
    %v1959 = vunpack.i.l.s16 %v1950
    %v1960 = vunpack.i.h.s16 %v1950
    %v1961 = vunpack.i.l.s16 %v1953
    %v1962 = vunpack.i.h.s16 %v1953
    %v1963 = vunpack.i.l.s16 %v1956
    %v1964 = vunpack.i.h.s16 %v1956
    %v1965 = vpack.i.b16 %v1957, %v1957
    %v1966 = vpack.i.b16 %v1958, %v1958
    %v1967 = vpack.i.b16 %v1959, %v1959
    %v1968 = vpack.i.b16 %v1960, %v1960
    %v1969 = vpack.i.b16 %v1961, %v1961
    %v1970 = vpack.i.b16 %v1962, %v1962
    %v1971 = vpack.i.b16 %v1963, %v1963
    %v1972 = vpack.i.b16 %v1964, %v1964
    %v1974 = vunpack.c.l.s4 286326784
    %v1975 = vunpack.c.0.s8 %v1974
    %v1976 = vperm.slane %v1965, %v1975
    %v1978 = vunpack.c.l.s4 286326784
    %v1979 = vunpack.c.0.s8 %v1978
    %v1980 = vperm.slane %v1966, %v1979
    %v1982 = vunpack.c.l.s4 286326784
    %v1983 = vunpack.c.0.s8 %v1982
    %v1984 = vperm.slane %v1967, %v1983
    %v1986 = vunpack.c.l.s4 286326784
    %v1987 = vunpack.c.0.s8 %v1986
    %v1988 = vperm.slane %v1968, %v1987
    %v1990 = vunpack.c.l.s4 286326784
    %v1991 = vunpack.c.0.s8 %v1990
    %v1992 = vperm.slane %v1969, %v1991
    %v1994 = vunpack.c.l.s4 286326784
    %v1995 = vunpack.c.0.s8 %v1994
    %v1996 = vperm.slane %v1970, %v1995
    %v1998 = vunpack.c.l.s4 286326784
    %v1999 = vunpack.c.0.s8 %v1998
    %v2000 = vperm.slane %v1971, %v1999
    %v2002 = vunpack.c.l.s4 286326784
    %v2003 = vunpack.c.0.s8 %v2002
    %v2004 = vperm.slane %v1972, %v2003
    %vm2013 = vsmask.f32 7938
    %vm2014 = vmand %vm1024, %vm2013
    %v2015 = vld [vmem:[%s4] sm:$0x1]
    %v2016 = vsel %vm2014, %v1976, %v2015
    %2017 = vst [vmem:[%s4] sm:$0x1] %v2016
    %v2018 = vld [vmem:[%s4 + $0x4] sm:$0x1]
    %v2019 = vsel %vm2014, %v1980, %v2018
    %2020 = vst [vmem:[%s4 + $0x4] sm:$0x1] %v2019
    %v2021 = vld [vmem:[%s4 + $0x8] sm:$0x1]
    %v2022 = vsel %vm2014, %v1984, %v2021
    %2023 = vst [vmem:[%s4 + $0x8] sm:$0x1] %v2022
    %v2024 = vld [vmem:[%s4 + $0xc] sm:$0x1]
    %v2025 = vsel %vm2014, %v1988, %v2024
    %2026 = vst [vmem:[%s4 + $0xc] sm:$0x1] %v2025
    %v2027 = vld [vmem:[%s4 + $0x10] sm:$0x1]
    %v2028 = vsel %vm2014, %v1992, %v2027
    %2029 = vst [vmem:[%s4 + $0x10] sm:$0x1] %v2028
    %v2030 = vld [vmem:[%s4 + $0x14] sm:$0x1]
    %v2031 = vsel %vm2014, %v1996, %v2030
    %2032 = vst [vmem:[%s4 + $0x14] sm:$0x1] %v2031
    %v2033 = vld [vmem:[%s4 + $0x18] sm:$0x1]
    %v2034 = vsel %vm2014, %v2000, %v2033
    %2035 = vst [vmem:[%s4 + $0x18] sm:$0x1] %v2034
    %v2036 = vld [vmem:[%s4 + $0x1c] sm:$0x1]
    %v2037 = vsel %vm2014, %v2004, %v2036
    %2038 = vst [vmem:[%s4 + $0x1c] sm:$0x1] %v2037
    %s2039 = scalar_lea.vmem %s0, 32
    %v2040 = vld [vmem:[%s2039] sm:$0xff]
    %v2041 = vld [vmem:[%s2039 + $0x8] sm:$0xff]
    %v2042 = vunpack.c.l.bf16 %v2040
    %v2043 = vunpack.c.h.bf16 %v2040
    %v2044 = vunpack.c.l.bf16 %v2041
    %v2045 = vunpack.c.h.bf16 %v2041
    %v2046 = vld [vmem:[#allocation2] sm:$0xff]
    %v2047 = vpack.c.bf16 %v2046, %v2046
    %v2048 = vld [vmem:[#allocation4] sm:$0xff]
    %v2049 = vld [vmem:[#allocation4 + $0x8] sm:$0xff]
    %v2050 = vld [vmem:[#allocation4 + $0x10] sm:$0xff]
    %v2051 = vld [vmem:[#allocation4 + $0x18] sm:$0xff]
    %v2052 = vld [vmem:[#allocation4 + $0x20] sm:$0xff]
    %v2053 = vld [vmem:[#allocation4 + $0x28] sm:$0xff]
    %v2054 = vld [vmem:[#allocation4 + $0x30] sm:$0xff]
    %v2055 = vld [vmem:[#allocation4 + $0x38] sm:$0xff]
    %v2056 = vld [vmem:[#allocation4 + $0x40] sm:$0xff]
    %v2057 = vld [vmem:[#allocation4 + $0x48] sm:$0xff]
    %v2058 = vld [vmem:[#allocation4 + $0x50] sm:$0xff]
    %v2059 = vld [vmem:[#allocation4 + $0x58] sm:$0xff]
    %v2060 = vld [vmem:[#allocation4 + $0x60] sm:$0xff]
    %v2061 = vld [vmem:[#allocation4 + $0x68] sm:$0xff]
    %v2062 = vld [vmem:[#allocation4 + $0x70] sm:$0xff]
    %v2063 = vld [vmem:[#allocation4 + $0x78] sm:$0xff]
    %v2064 = vld [vmem:[#allocation4 + $0x80] sm:$0xff]
    %v2065 = vld [vmem:[#allocation4 + $0x88] sm:$0xff]
    %v2066 = vld [vmem:[#allocation4 + $0x90] sm:$0xff]
    %v2067 = vld [vmem:[#allocation4 + $0x98] sm:$0xff]
    %v2068 = vld [vmem:[#allocation4 + $0xa0] sm:$0xff]
    %v2069 = vld [vmem:[#allocation4 + $0xa8] sm:$0xff]
    %v2070 = vld [vmem:[#allocation4 + $0xb0] sm:$0xff]
    %v2071 = vld [vmem:[#allocation4 + $0xb8] sm:$0xff]
    %v2072 = vld [vmem:[#allocation4 + $0xc0] sm:$0xff]
    %v2073 = vld [vmem:[#allocation4 + $0xc8] sm:$0xff]
    %v2074 = vld [vmem:[#allocation4 + $0xd0] sm:$0xff]
    %v2075 = vld [vmem:[#allocation4 + $0xd8] sm:$0xff]
    %v2076 = vld [vmem:[#allocation4 + $0xe0] sm:$0xff]
    %v2077 = vld [vmem:[#allocation4 + $0xe8] sm:$0xff]
    %v2078 = vld [vmem:[#allocation4 + $0xf0] sm:$0xff]
    %v2079 = vld [vmem:[#allocation4 + $0xf8] sm:$0xff]
    %v2112 = vunpack.c.l.b16 %v2048
    %v2113 = vunpack.c.h.b16 %v2048
    %v2114 = vunpack.c.l.b16 %v2049
    %v2115 = vunpack.c.h.b16 %v2049
    %v2116 = vunpack.c.l.b16 %v2050
    %v2117 = vunpack.c.h.b16 %v2050
    %v2118 = vunpack.c.l.b16 %v2051
    %v2119 = vunpack.c.h.b16 %v2051
    %v2120 = vunpack.c.l.b16 %v2052
    %v2121 = vunpack.c.h.b16 %v2052
    %v2122 = vunpack.c.l.b16 %v2053
    %v2123 = vunpack.c.h.b16 %v2053
    %v2124 = vunpack.c.l.b16 %v2054
    %v2125 = vunpack.c.h.b16 %v2054
    %v2126 = vunpack.c.l.b16 %v2055
    %v2127 = vunpack.c.h.b16 %v2055
    %v2128 = vunpack.c.l.b16 %v2056
    %v2129 = vunpack.c.h.b16 %v2056
    %v2130 = vunpack.c.l.b16 %v2057
    %v2131 = vunpack.c.h.b16 %v2057
    %v2132 = vunpack.c.l.b16 %v2058
    %v2133 = vunpack.c.h.b16 %v2058
    %v2134 = vunpack.c.l.b16 %v2059
    %v2135 = vunpack.c.h.b16 %v2059
    %v2136 = vunpack.c.l.b16 %v2060
    %v2137 = vunpack.c.h.b16 %v2060
    %v2138 = vunpack.c.l.b16 %v2061
    %v2139 = vunpack.c.h.b16 %v2061
    %v2140 = vunpack.c.l.b16 %v2062
    %v2141 = vunpack.c.h.b16 %v2062
    %v2142 = vunpack.c.l.b16 %v2063
    %v2143 = vunpack.c.h.b16 %v2063
    %v2144 = vunpack.c.l.b16 %v2064
    %v2145 = vunpack.c.h.b16 %v2064
    %v2146 = vunpack.c.l.b16 %v2065
    %v2147 = vunpack.c.h.b16 %v2065
    %v2148 = vunpack.c.l.b16 %v2066
    %v2149 = vunpack.c.h.b16 %v2066
    %v2150 = vunpack.c.l.b16 %v2067
    %v2151 = vunpack.c.h.b16 %v2067
    %v2152 = vunpack.c.l.b16 %v2068
    %v2153 = vunpack.c.h.b16 %v2068
    %v2154 = vunpack.c.l.b16 %v2069
    %v2155 = vunpack.c.h.b16 %v2069
    %v2156 = vunpack.c.l.b16 %v2070
    %v2157 = vunpack.c.h.b16 %v2070
    %v2158 = vunpack.c.l.b16 %v2071
    %v2159 = vunpack.c.h.b16 %v2071
    %v2160 = vunpack.c.l.b16 %v2072
    %v2161 = vunpack.c.h.b16 %v2072
    %v2162 = vunpack.c.l.b16 %v2073
    %v2163 = vunpack.c.h.b16 %v2073
    %v2164 = vunpack.c.l.b16 %v2074
    %v2165 = vunpack.c.h.b16 %v2074
    %v2166 = vunpack.c.l.b16 %v2075
    %v2167 = vunpack.c.h.b16 %v2075
    %v2168 = vunpack.c.l.b16 %v2076
    %v2169 = vunpack.c.h.b16 %v2076
    %v2170 = vunpack.c.l.b16 %v2077
    %v2171 = vunpack.c.h.b16 %v2077
    %v2172 = vunpack.c.l.b16 %v2078
    %v2173 = vunpack.c.h.b16 %v2078
    %v2174 = vunpack.c.l.b16 %v2079
    %v2175 = vunpack.c.h.b16 %v2079
    %v2176 = vpack.c.b16 %v2116, %v2112
    %v2177 = vpack.c.b16 %v2117, %v2113
    %v2178 = vpack.c.b16 %v2118, %v2114
    %v2179 = vpack.c.b16 %v2119, %v2115
    %v2180 = vpack.c.b16 %v2124, %v2120
    %v2181 = vpack.c.b16 %v2125, %v2121
    %v2182 = vpack.c.b16 %v2126, %v2122
    %v2183 = vpack.c.b16 %v2127, %v2123
    %v2184 = vpack.c.b16 %v2132, %v2128
    %v2185 = vpack.c.b16 %v2133, %v2129
    %v2186 = vpack.c.b16 %v2134, %v2130
    %v2187 = vpack.c.b16 %v2135, %v2131
    %v2188 = vpack.c.b16 %v2140, %v2136
    %v2189 = vpack.c.b16 %v2141, %v2137
    %v2190 = vpack.c.b16 %v2142, %v2138
    %v2191 = vpack.c.b16 %v2143, %v2139
    %v2192 = vpack.c.b16 %v2148, %v2144
    %v2193 = vpack.c.b16 %v2149, %v2145
    %v2194 = vpack.c.b16 %v2150, %v2146
    %v2195 = vpack.c.b16 %v2151, %v2147
    %v2196 = vpack.c.b16 %v2156, %v2152
    %v2197 = vpack.c.b16 %v2157, %v2153
    %v2198 = vpack.c.b16 %v2158, %v2154
    %v2199 = vpack.c.b16 %v2159, %v2155
    %v2200 = vpack.c.b16 %v2164, %v2160
    %v2201 = vpack.c.b16 %v2165, %v2161
    %v2202 = vpack.c.b16 %v2166, %v2162
    %v2203 = vpack.c.b16 %v2167, %v2163
    %v2204 = vpack.c.b16 %v2172, %v2168
    %v2205 = vpack.c.b16 %v2173, %v2169
    %v2206 = vpack.c.b16 %v2174, %v2170
    %v2207 = vpack.c.b16 %v2175, %v2171
    %2240 = vmatpush.bf16.msra.mxu0 %v2204
    %2241 = vmatpush.bf16.msra.mxu0 %v2200
    %2242 = vmatpush.bf16.msra.mxu0 %v2196
    %2243 = vmatpush.bf16.msra.mxu0 %v2192
    %2244 = vmatpush.bf16.msra.mxu0 %v2188
    %2245 = vmatpush.bf16.msra.mxu0 %v2184
    %2246 = vmatpush.bf16.msra.mxu0 %v2180
    %2247 = vmatpush.bf16.msra.mxu0 %v2176
    %2248 = vmatmul.bf16.gmra.mxu0 %v2047
    %v2249 = vpop.f32.mrf.mxu0
    %v2250 = vadd.f32 0.0, %v2249
    %v2251 = vpop.f32.mrf.mxu0
    %2252 = vdwg.mxu0
    %2253 = vmatpush.bf16.msra.mxu0 %v2205
    %2254 = vmatpush.bf16.msra.mxu0 %v2201
    %2255 = vmatpush.bf16.msra.mxu0 %v2197
    %2256 = vmatpush.bf16.msra.mxu0 %v2193
    %2257 = vmatpush.bf16.msra.mxu0 %v2189
    %2258 = vmatpush.bf16.msra.mxu0 %v2185
    %2259 = vmatpush.bf16.msra.mxu0 %v2181
    %2260 = vmatpush.bf16.msra.mxu0 %v2177
    %2261 = vmatmul.bf16.gmra.mxu0 %v2047
    %v2262 = vpop.f32.mrf.mxu0
    %v2263 = vadd.f32 0.0, %v2262
    %v2264 = vpop.f32.mrf.mxu0
    %2265 = vdwg.mxu0
    %2266 = vmatpush.bf16.msra.mxu0 %v2206
    %2267 = vmatpush.bf16.msra.mxu0 %v2202
    %2268 = vmatpush.bf16.msra.mxu0 %v2198
    %2269 = vmatpush.bf16.msra.mxu0 %v2194
    %2270 = vmatpush.bf16.msra.mxu0 %v2190
    %2271 = vmatpush.bf16.msra.mxu0 %v2186
    %2272 = vmatpush.bf16.msra.mxu0 %v2182
    %2273 = vmatpush.bf16.msra.mxu0 %v2178
    %2274 = vmatmul.bf16.gmra.mxu0 %v2047
    %v2275 = vpop.f32.mrf.mxu0
    %v2276 = vadd.f32 0.0, %v2275
    %v2277 = vpop.f32.mrf.mxu0
    %2278 = vdwg.mxu0
    %2279 = vmatpush.bf16.msra.mxu0 %v2207
    %2280 = vmatpush.bf16.msra.mxu0 %v2203
    %2281 = vmatpush.bf16.msra.mxu0 %v2199
    %2282 = vmatpush.bf16.msra.mxu0 %v2195
    %2283 = vmatpush.bf16.msra.mxu0 %v2191
    %2284 = vmatpush.bf16.msra.mxu0 %v2187
    %2285 = vmatpush.bf16.msra.mxu0 %v2183
    %2286 = vmatpush.bf16.msra.mxu0 %v2179
    %2287 = vmatmul.bf16.gmra.mxu0 %v2047
    %v2288 = vpop.f32.mrf.mxu0
    %v2289 = vadd.f32 0.0, %v2288
    %v2290 = vpop.f32.mrf.mxu0
    %2291 = vdwg.mxu0
    %v2292 = vadd.f32 %v2042, %v2250
    %v2293 = vadd.f32 %v2043, %v2263
    %v2294 = vadd.f32 %v2044, %v2276
    %v2295 = vadd.f32 %v2045, %v2289
    %v2296 = vld [vmem:[#allocation3] sm:$0xff]
    %v2297 = vxor.u32 %v2292, 2147483648
    %v2298 = vxor.u32 %v2293, 2147483648
    %v2299 = vxor.u32 %v2294, 2147483648
    %v2300 = vmul.f32 %v2297, 1.442695
    %v2301 = vpow.pop %v2300
    %v2302 = vmul.f32 %v2298, 1.442695
    %v2303 = vpow.pop %v2302
    %v2304 = vmul.f32 %v2299, 1.442695
    %v2305 = vpow.pop %v2304
    %v2306 = vadd.f32 %v2301, 1.0
    %v2307 = vadd.f32 %v2303, 1.0
    %v2308 = vadd.f32 %v2305, 1.0
    %v2309 = vrcp.pop %v2306
    %v2310 = vmul.f32 %v2306, %v2309
    %v2311 = vsub.f32 1.0, %v2310
    %v2312 = vmul.f32 %v2309, %v2311
    %v2313 = vadd.f32 %v2309, %v2312
    %vm2314 = vweird.f32 %v2306
    %vm2315 = vweird.f32 %v2309
    %vm2316 = vmor %vm2314, %vm2315
    %v2317 = vsel %vm2316, %v2309, %v2313
    %v2318 = vand.u32 2147483647, %v2306
    %vm2319 = vcmp.eq.f32.partialorder %v2318, 8.507059e+37
    %v2320 = vand.u32 %v2306, 2147483648
    %v2321 = vor.u32 1.1754944e-38, %v2320
    %v2322 = vsel %vm2319, %v2321, %v2317
    %v2323 = vmul.f32 1.0, %v2322
    %v2324 = vrcp.pop %v2307
    %v2325 = vmul.f32 %v2307, %v2324
    %v2326 = vsub.f32 1.0, %v2325
    %v2327 = vmul.f32 %v2324, %v2326
    %v2328 = vadd.f32 %v2324, %v2327
    %vm2329 = vweird.f32 %v2307
    %vm2330 = vweird.f32 %v2324
    %vm2331 = vmor %vm2329, %vm2330
    %v2332 = vsel %vm2331, %v2324, %v2328
    %v2333 = vand.u32 2147483647, %v2307
    %vm2334 = vcmp.eq.f32.partialorder %v2333, 8.507059e+37
    %v2335 = vand.u32 %v2307, 2147483648
    %v2336 = vor.u32 1.1754944e-38, %v2335
    %v2337 = vsel %vm2334, %v2336, %v2332
    %v2338 = vmul.f32 1.0, %v2337
    %v2339 = vrcp.pop %v2308
    %v2340 = vmul.f32 %v2308, %v2339
    %v2341 = vsub.f32 1.0, %v2340
    %v2342 = vmul.f32 %v2339, %v2341
    %v2343 = vadd.f32 %v2339, %v2342
    %vm2344 = vweird.f32 %v2308
    %vm2345 = vweird.f32 %v2339
    %vm2346 = vmor %vm2344, %vm2345
    %v2347 = vsel %vm2346, %v2339, %v2343
    %v2348 = vand.u32 2147483647, %v2308
    %vm2349 = vcmp.eq.f32.partialorder %v2348, 8.507059e+37
    %v2350 = vand.u32 %v2308, 2147483648
    %v2351 = vor.u32 1.1754944e-38, %v2350
    %v2352 = vsel %vm2349, %v2351, %v2347
    %v2353 = vmul.f32 1.0, %v2352
    %v2354 = vtanh.pop %v2295
    %v2355 = vmul.f32 %v2338, %v2296
    %v2356 = vmul.f32 %v2323, %v2354
    %v2357 = vadd.f32 %v2355, %v2356
    %v2358 = vtanh.pop %v2357
    %v2359 = vmul.f32 %v2353, %v2358
    %2360 = vst [vmem:[#allocation2] sm:$0xff] %v2359
    %2361 = vst [vmem:[#allocation3] sm:$0xff] %v2357
    %v2362 = vld [vmem:[%s379] sm:$0xff]
    %v2363 = vpack.c.bf16 %v2359, %v2359
    %v2364 = vpack.c.bf16 %v2362, %v2362
    %v2365 = vld [vmem:[#allocation6] sm:$0xff]
    %v2366 = vld [vmem:[#allocation6 + $0x8] sm:$0xff]
    %v2367 = vld [vmem:[#allocation6 + $0x10] sm:$0xff]
    %v2368 = vld [vmem:[#allocation6 + $0x18] sm:$0xff]
    %v2369 = vld [vmem:[#allocation6 + $0x20] sm:$0xff]
    %v2370 = vld [vmem:[#allocation6 + $0x28] sm:$0xff]
    %v2371 = vld [vmem:[#allocation6 + $0x30] sm:$0xff]
    %v2372 = vld [vmem:[#allocation6 + $0x38] sm:$0xff]
    %v2373 = vld [vmem:[#allocation6 + $0x40] sm:$0xff]
    %v2374 = vld [vmem:[#allocation6 + $0x48] sm:$0xff]
    %v2375 = vld [vmem:[#allocation6 + $0x50] sm:$0xff]
    %v2376 = vld [vmem:[#allocation6 + $0x58] sm:$0xff]
    %v2377 = vld [vmem:[#allocation6 + $0x60] sm:$0xff]
    %v2378 = vld [vmem:[#allocation6 + $0x68] sm:$0xff]
    %v2379 = vld [vmem:[#allocation6 + $0x70] sm:$0xff]
    %v2380 = vld [vmem:[#allocation6 + $0x78] sm:$0xff]
    %v2381 = vld [vmem:[#allocation6 + $0x80] sm:$0xff]
    %v2382 = vld [vmem:[#allocation6 + $0x88] sm:$0xff]
    %v2383 = vld [vmem:[#allocation6 + $0x90] sm:$0xff]
    %v2384 = vld [vmem:[#allocation6 + $0x98] sm:$0xff]
    %v2385 = vld [vmem:[#allocation6 + $0xa0] sm:$0xff]
    %v2386 = vld [vmem:[#allocation6 + $0xa8] sm:$0xff]
    %v2387 = vld [vmem:[#allocation6 + $0xb0] sm:$0xff]
    %v2388 = vld [vmem:[#allocation6 + $0xb8] sm:$0xff]
    %v2389 = vld [vmem:[#allocation6 + $0xc0] sm:$0xff]
    %v2390 = vld [vmem:[#allocation6 + $0xc8] sm:$0xff]
    %v2391 = vld [vmem:[#allocation6 + $0xd0] sm:$0xff]
    %v2392 = vld [vmem:[#allocation6 + $0xd8] sm:$0xff]
    %v2393 = vld [vmem:[#allocation6 + $0xe0] sm:$0xff]
    %v2394 = vld [vmem:[#allocation6 + $0xe8] sm:$0xff]
    %v2395 = vld [vmem:[#allocation6 + $0xf0] sm:$0xff]
    %v2396 = vld [vmem:[#allocation6 + $0xf8] sm:$0xff]
    %v2397 = vld [vmem:[#allocation6 + $0x100] sm:$0xff]
    %v2398 = vld [vmem:[#allocation6 + $0x108] sm:$0xff]
    %v2399 = vld [vmem:[#allocation6 + $0x110] sm:$0xff]
    %v2400 = vld [vmem:[#allocation6 + $0x118] sm:$0xff]
    %v2401 = vld [vmem:[#allocation6 + $0x120] sm:$0xff]
    %v2402 = vld [vmem:[#allocation6 + $0x128] sm:$0xff]
    %v2403 = vld [vmem:[#allocation6 + $0x130] sm:$0xff]
    %v2404 = vld [vmem:[#allocation6 + $0x138] sm:$0xff]
    %v2405 = vld [vmem:[#allocation6 + $0x140] sm:$0xff]
    %v2406 = vld [vmem:[#allocation6 + $0x148] sm:$0xff]
    %v2407 = vld [vmem:[#allocation6 + $0x150] sm:$0xff]
    %v2408 = vld [vmem:[#allocation6 + $0x158] sm:$0xff]
    %v2409 = vld [vmem:[#allocation6 + $0x160] sm:$0xff]
    %v2410 = vld [vmem:[#allocation6 + $0x168] sm:$0xff]
    %v2411 = vld [vmem:[#allocation6 + $0x170] sm:$0xff]
    %v2412 = vld [vmem:[#allocation6 + $0x178] sm:$0xff]
    %v2413 = vld [vmem:[#allocation6 + $0x180] sm:$0xff]
    %v2414 = vld [vmem:[#allocation6 + $0x188] sm:$0xff]
    %v2415 = vld [vmem:[#allocation6 + $0x190] sm:$0xff]
    %v2416 = vld [vmem:[#allocation6 + $0x198] sm:$0xff]
    %v2417 = vld [vmem:[#allocation6 + $0x1a0] sm:$0xff]
    %v2418 = vld [vmem:[#allocation6 + $0x1a8] sm:$0xff]
    %v2419 = vld [vmem:[#allocation6 + $0x1b0] sm:$0xff]
    %v2420 = vld [vmem:[#allocation6 + $0x1b8] sm:$0xff]
    %v2421 = vld [vmem:[#allocation6 + $0x1c0] sm:$0xff]
    %v2422 = vld [vmem:[#allocation6 + $0x1c8] sm:$0xff]
    %v2423 = vld [vmem:[#allocation6 + $0x1d0] sm:$0xff]
    %v2424 = vld [vmem:[#allocation6 + $0x1d8] sm:$0xff]
    %v2425 = vld [vmem:[#allocation6 + $0x1e0] sm:$0xff]
    %v2426 = vld [vmem:[#allocation6 + $0x1e8] sm:$0xff]
    %v2427 = vld [vmem:[#allocation6 + $0x1f0] sm:$0xff]
    %v2428 = vld [vmem:[#allocation6 + $0x1f8] sm:$0xff]
    %v2429 = vld [vmem:[%s3] sm:$0xf]
    %v2431 = vperm.slane %v2429, 0
    %v2432 = vperm.slane %v2429, 1
    %v2433 = vperm.slane %v2429, 2
    %v2434 = vperm.slane %v2429, 3
    %v2503 = vunpack.c.l.b16 %v2365
    %v2504 = vunpack.c.h.b16 %v2365
    %v2505 = vunpack.c.l.b16 %v2366
    %v2506 = vunpack.c.h.b16 %v2366
    %v2507 = vunpack.c.l.b16 %v2367
    %v2508 = vunpack.c.h.b16 %v2367
    %v2509 = vunpack.c.l.b16 %v2368
    %v2510 = vunpack.c.h.b16 %v2368
    %v2511 = vunpack.c.l.b16 %v2369
    %v2512 = vunpack.c.h.b16 %v2369
    %v2513 = vunpack.c.l.b16 %v2370
    %v2514 = vunpack.c.h.b16 %v2370
    %v2515 = vunpack.c.l.b16 %v2371
    %v2516 = vunpack.c.h.b16 %v2371
    %v2517 = vunpack.c.l.b16 %v2372
    %v2518 = vunpack.c.h.b16 %v2372
    %v2519 = vunpack.c.l.b16 %v2373
    %v2520 = vunpack.c.h.b16 %v2373
    %v2521 = vunpack.c.l.b16 %v2374
    %v2522 = vunpack.c.h.b16 %v2374
    %v2523 = vunpack.c.l.b16 %v2375
    %v2524 = vunpack.c.h.b16 %v2375
    %v2525 = vunpack.c.l.b16 %v2376
    %v2526 = vunpack.c.h.b16 %v2376
    %v2527 = vunpack.c.l.b16 %v2377
    %v2528 = vunpack.c.h.b16 %v2377
    %v2529 = vunpack.c.l.b16 %v2378
    %v2530 = vunpack.c.h.b16 %v2378
    %v2531 = vunpack.c.l.b16 %v2379
    %v2532 = vunpack.c.h.b16 %v2379
    %v2533 = vunpack.c.l.b16 %v2380
    %v2534 = vunpack.c.h.b16 %v2380
    %v2535 = vunpack.c.l.b16 %v2381
    %v2536 = vunpack.c.h.b16 %v2381
    %v2537 = vunpack.c.l.b16 %v2382
    %v2538 = vunpack.c.h.b16 %v2382
    %v2539 = vunpack.c.l.b16 %v2383
    %v2540 = vunpack.c.h.b16 %v2383
    %v2541 = vunpack.c.l.b16 %v2384
    %v2542 = vunpack.c.h.b16 %v2384
    %v2543 = vunpack.c.l.b16 %v2385
    %v2544 = vunpack.c.h.b16 %v2385
    %v2545 = vunpack.c.l.b16 %v2386
    %v2546 = vunpack.c.h.b16 %v2386
    %v2547 = vunpack.c.l.b16 %v2387
    %v2548 = vunpack.c.h.b16 %v2387
    %v2549 = vunpack.c.l.b16 %v2388
    %v2550 = vunpack.c.h.b16 %v2388
    %v2551 = vunpack.c.l.b16 %v2389
    %v2552 = vunpack.c.h.b16 %v2389
    %v2553 = vunpack.c.l.b16 %v2390
    %v2554 = vunpack.c.h.b16 %v2390
    %v2555 = vunpack.c.l.b16 %v2391
    %v2556 = vunpack.c.h.b16 %v2391
    %v2557 = vunpack.c.l.b16 %v2392
    %v2558 = vunpack.c.h.b16 %v2392
    %v2559 = vunpack.c.l.b16 %v2393
    %v2560 = vunpack.c.h.b16 %v2393
    %v2561 = vunpack.c.l.b16 %v2394
    %v2562 = vunpack.c.h.b16 %v2394
    %v2563 = vunpack.c.l.b16 %v2395
    %v2564 = vunpack.c.h.b16 %v2395
    %v2565 = vunpack.c.l.b16 %v2396
    %v2566 = vunpack.c.h.b16 %v2396
    %v2567 = vunpack.c.l.b16 %v2397
    %v2568 = vunpack.c.h.b16 %v2397
    %v2569 = vunpack.c.l.b16 %v2398
    %v2570 = vunpack.c.h.b16 %v2398
    %v2571 = vunpack.c.l.b16 %v2399
    %v2572 = vunpack.c.h.b16 %v2399
    %v2573 = vunpack.c.l.b16 %v2400
    %v2574 = vunpack.c.h.b16 %v2400
    %v2575 = vunpack.c.l.b16 %v2401
    %v2576 = vunpack.c.h.b16 %v2401
    %v2577 = vunpack.c.l.b16 %v2402
    %v2578 = vunpack.c.h.b16 %v2402
    %v2579 = vunpack.c.l.b16 %v2403
    %v2580 = vunpack.c.h.b16 %v2403
    %v2581 = vunpack.c.l.b16 %v2404
    %v2582 = vunpack.c.h.b16 %v2404
    %v2583 = vunpack.c.l.b16 %v2405
    %v2584 = vunpack.c.h.b16 %v2405
    %v2585 = vunpack.c.l.b16 %v2406
    %v2586 = vunpack.c.h.b16 %v2406
    %v2587 = vunpack.c.l.b16 %v2407
    %v2588 = vunpack.c.h.b16 %v2407
    %v2589 = vunpack.c.l.b16 %v2408
    %v2590 = vunpack.c.h.b16 %v2408
    %v2591 = vunpack.c.l.b16 %v2409
    %v2592 = vunpack.c.h.b16 %v2409
    %v2593 = vunpack.c.l.b16 %v2410
    %v2594 = vunpack.c.h.b16 %v2410
    %v2595 = vunpack.c.l.b16 %v2411
    %v2596 = vunpack.c.h.b16 %v2411
    %v2597 = vunpack.c.l.b16 %v2412
    %v2598 = vunpack.c.h.b16 %v2412
    %v2599 = vunpack.c.l.b16 %v2413
    %v2600 = vunpack.c.h.b16 %v2413
    %v2601 = vunpack.c.l.b16 %v2414
    %v2602 = vunpack.c.h.b16 %v2414
    %v2603 = vunpack.c.l.b16 %v2415
    %v2604 = vunpack.c.h.b16 %v2415
    %v2605 = vunpack.c.l.b16 %v2416
    %v2606 = vunpack.c.h.b16 %v2416
    %v2607 = vunpack.c.l.b16 %v2417
    %v2608 = vunpack.c.h.b16 %v2417
    %v2609 = vunpack.c.l.b16 %v2418
    %v2610 = vunpack.c.h.b16 %v2418
    %v2611 = vunpack.c.l.b16 %v2419
    %v2612 = vunpack.c.h.b16 %v2419
    %v2613 = vunpack.c.l.b16 %v2420
    %v2614 = vunpack.c.h.b16 %v2420
    %v2615 = vunpack.c.l.b16 %v2421
    %v2616 = vunpack.c.h.b16 %v2421
    %v2617 = vunpack.c.l.b16 %v2422
    %v2618 = vunpack.c.h.b16 %v2422
    %v2619 = vunpack.c.l.b16 %v2423
    %v2620 = vunpack.c.h.b16 %v2423
    %v2621 = vunpack.c.l.b16 %v2424
    %v2622 = vunpack.c.h.b16 %v2424
    %v2623 = vunpack.c.l.b16 %v2425
    %v2624 = vunpack.c.h.b16 %v2425
    %v2625 = vunpack.c.l.b16 %v2426
    %v2626 = vunpack.c.h.b16 %v2426
    %v2627 = vunpack.c.l.b16 %v2427
    %v2628 = vunpack.c.h.b16 %v2427
    %v2629 = vunpack.c.l.b16 %v2428
    %v2630 = vunpack.c.h.b16 %v2428
    %v2631 = vpack.c.b16 %v2507, %v2503
    %v2632 = vpack.c.b16 %v2508, %v2504
    %v2633 = vpack.c.b16 %v2509, %v2505
    %v2634 = vpack.c.b16 %v2510, %v2506
    %v2635 = vpack.c.b16 %v2515, %v2511
    %v2636 = vpack.c.b16 %v2516, %v2512
    %v2637 = vpack.c.b16 %v2517, %v2513
    %v2638 = vpack.c.b16 %v2518, %v2514
    %v2639 = vpack.c.b16 %v2523, %v2519
    %v2640 = vpack.c.b16 %v2524, %v2520
    %v2641 = vpack.c.b16 %v2525, %v2521
    %v2642 = vpack.c.b16 %v2526, %v2522
    %v2643 = vpack.c.b16 %v2531, %v2527
    %v2644 = vpack.c.b16 %v2532, %v2528
    %v2645 = vpack.c.b16 %v2533, %v2529
    %v2646 = vpack.c.b16 %v2534, %v2530
    %v2647 = vpack.c.b16 %v2539, %v2535
    %v2648 = vpack.c.b16 %v2540, %v2536
    %v2649 = vpack.c.b16 %v2541, %v2537
    %v2650 = vpack.c.b16 %v2542, %v2538
    %v2651 = vpack.c.b16 %v2547, %v2543
    %v2652 = vpack.c.b16 %v2548, %v2544
    %v2653 = vpack.c.b16 %v2549, %v2545
    %v2654 = vpack.c.b16 %v2550, %v2546
    %v2655 = vpack.c.b16 %v2555, %v2551
    %v2656 = vpack.c.b16 %v2556, %v2552
    %v2657 = vpack.c.b16 %v2557, %v2553
    %v2658 = vpack.c.b16 %v2558, %v2554
    %v2659 = vpack.c.b16 %v2563, %v2559
    %v2660 = vpack.c.b16 %v2564, %v2560
    %v2661 = vpack.c.b16 %v2565, %v2561
    %v2662 = vpack.c.b16 %v2566, %v2562
    %v2663 = vpack.c.b16 %v2571, %v2567
    %v2664 = vpack.c.b16 %v2572, %v2568
    %v2665 = vpack.c.b16 %v2573, %v2569
    %v2666 = vpack.c.b16 %v2574, %v2570
    %v2667 = vpack.c.b16 %v2579, %v2575
    %v2668 = vpack.c.b16 %v2580, %v2576
    %v2669 = vpack.c.b16 %v2581, %v2577
    %v2670 = vpack.c.b16 %v2582, %v2578
    %v2671 = vpack.c.b16 %v2587, %v2583
    %v2672 = vpack.c.b16 %v2588, %v2584
    %v2673 = vpack.c.b16 %v2589, %v2585
    %v2674 = vpack.c.b16 %v2590, %v2586
    %v2675 = vpack.c.b16 %v2595, %v2591
    %v2676 = vpack.c.b16 %v2596, %v2592
    %v2677 = vpack.c.b16 %v2597, %v2593
    %v2678 = vpack.c.b16 %v2598, %v2594
    %v2679 = vpack.c.b16 %v2603, %v2599
    %v2680 = vpack.c.b16 %v2604, %v2600
    %v2681 = vpack.c.b16 %v2605, %v2601
    %v2682 = vpack.c.b16 %v2606, %v2602
    %v2683 = vpack.c.b16 %v2611, %v2607
    %v2684 = vpack.c.b16 %v2612, %v2608
    %v2685 = vpack.c.b16 %v2613, %v2609
    %v2686 = vpack.c.b16 %v2614, %v2610
    %v2687 = vpack.c.b16 %v2619, %v2615
    %v2688 = vpack.c.b16 %v2620, %v2616
    %v2689 = vpack.c.b16 %v2621, %v2617
    %v2690 = vpack.c.b16 %v2622, %v2618
    %v2691 = vpack.c.b16 %v2627, %v2623
    %v2692 = vpack.c.b16 %v2628, %v2624
    %v2693 = vpack.c.b16 %v2629, %v2625
    %v2694 = vpack.c.b16 %v2630, %v2626
    %2759 = vmatpush.bf16.msra.mxu0 %v2659
    %2760 = vmatpush.bf16.msra.mxu0 %v2655
    %2761 = vmatpush.bf16.msra.mxu0 %v2651
    %2762 = vmatpush.bf16.msra.mxu0 %v2647
    %2763 = vmatpush.bf16.msra.mxu0 %v2643
    %2764 = vmatpush.bf16.msra.mxu0 %v2639
    %2765 = vmatpush.bf16.msra.mxu0 %v2635
    %2766 = vmatpush.bf16.msra.mxu0 %v2631
    %2767 = vmatmul.bf16.gmra.mxu0 %v2363
    %v2768 = vpop.f32.mrf.mxu0
    %v2769 = vadd.f32 %v2431, %v2768
    %v2770 = vpop.f32.mrf.mxu0
    %2771 = vdwg.mxu0
    %2772 = vmatpush.bf16.msra.mxu0 %v2691
    %2773 = vmatpush.bf16.msra.mxu0 %v2687
    %2774 = vmatpush.bf16.msra.mxu0 %v2683
    %2775 = vmatpush.bf16.msra.mxu0 %v2679
    %2776 = vmatpush.bf16.msra.mxu0 %v2675
    %2777 = vmatpush.bf16.msra.mxu0 %v2671
    %2778 = vmatpush.bf16.msra.mxu0 %v2667
    %2779 = vmatpush.bf16.msra.mxu0 %v2663
    %2780 = vmatmul.bf16.gmra.mxu0 %v2364
    %v2781 = vpop.f32.mrf.mxu0
    %v2782 = vadd.f32 %v2769, %v2781
    %v2783 = vpop.f32.mrf.mxu0
    %2784 = vdwg.mxu0
    %2785 = vmatpush.bf16.msra.mxu0 %v2660
    %2786 = vmatpush.bf16.msra.mxu0 %v2656
    %2787 = vmatpush.bf16.msra.mxu0 %v2652
    %2788 = vmatpush.bf16.msra.mxu0 %v2648
    %2789 = vmatpush.bf16.msra.mxu0 %v2644
    %2790 = vmatpush.bf16.msra.mxu0 %v2640
    %2791 = vmatpush.bf16.msra.mxu0 %v2636
    %2792 = vmatpush.bf16.msra.mxu0 %v2632
    %2793 = vmatmul.bf16.gmra.mxu0 %v2363
    %v2794 = vpop.f32.mrf.mxu0
    %v2795 = vadd.f32 %v2432, %v2794
    %v2796 = vpop.f32.mrf.mxu0
    %2797 = vdwg.mxu0
    %2798 = vmatpush.bf16.msra.mxu0 %v2692
    %2799 = vmatpush.bf16.msra.mxu0 %v2688
    %2800 = vmatpush.bf16.msra.mxu0 %v2684
    %2801 = vmatpush.bf16.msra.mxu0 %v2680
    %2802 = vmatpush.bf16.msra.mxu0 %v2676
    %2803 = vmatpush.bf16.msra.mxu0 %v2672
    %2804 = vmatpush.bf16.msra.mxu0 %v2668
    %2805 = vmatpush.bf16.msra.mxu0 %v2664
    %2806 = vmatmul.bf16.gmra.mxu0 %v2364
    %v2807 = vpop.f32.mrf.mxu0
    %v2808 = vadd.f32 %v2795, %v2807
    %v2809 = vpop.f32.mrf.mxu0
    %2810 = vdwg.mxu0
    %2811 = vmatpush.bf16.msra.mxu0 %v2661
    %2812 = vmatpush.bf16.msra.mxu0 %v2657
    %2813 = vmatpush.bf16.msra.mxu0 %v2653
    %2814 = vmatpush.bf16.msra.mxu0 %v2649
    %2815 = vmatpush.bf16.msra.mxu0 %v2645
    %2816 = vmatpush.bf16.msra.mxu0 %v2641
    %2817 = vmatpush.bf16.msra.mxu0 %v2637
    %2818 = vmatpush.bf16.msra.mxu0 %v2633
    %2819 = vmatmul.bf16.gmra.mxu0 %v2363
    %v2820 = vpop.f32.mrf.mxu0
    %v2821 = vadd.f32 %v2433, %v2820
    %v2822 = vpop.f32.mrf.mxu0
    %2823 = vdwg.mxu0
    %2824 = vmatpush.bf16.msra.mxu0 %v2693
    %2825 = vmatpush.bf16.msra.mxu0 %v2689
    %2826 = vmatpush.bf16.msra.mxu0 %v2685
    %2827 = vmatpush.bf16.msra.mxu0 %v2681
    %2828 = vmatpush.bf16.msra.mxu0 %v2677
    %2829 = vmatpush.bf16.msra.mxu0 %v2673
    %2830 = vmatpush.bf16.msra.mxu0 %v2669
    %2831 = vmatpush.bf16.msra.mxu0 %v2665
    %2832 = vmatmul.bf16.gmra.mxu0 %v2364
    %v2833 = vpop.f32.mrf.mxu0
    %v2834 = vadd.f32 %v2821, %v2833
    %v2835 = vpop.f32.mrf.mxu0
    %2836 = vdwg.mxu0
    %2837 = vmatpush.bf16.msra.mxu0 %v2662
    %2838 = vmatpush.bf16.msra.mxu0 %v2658
    %2839 = vmatpush.bf16.msra.mxu0 %v2654
    %2840 = vmatpush.bf16.msra.mxu0 %v2650
    %2841 = vmatpush.bf16.msra.mxu0 %v2646
    %2842 = vmatpush.bf16.msra.mxu0 %v2642
    %2843 = vmatpush.bf16.msra.mxu0 %v2638
    %2844 = vmatpush.bf16.msra.mxu0 %v2634
    %2845 = vmatmul.bf16.gmra.mxu0 %v2363
    %v2846 = vpop.f32.mrf.mxu0
    %v2847 = vadd.f32 %v2434, %v2846
    %v2848 = vpop.f32.mrf.mxu0
    %2849 = vdwg.mxu0
    %2850 = vmatpush.bf16.msra.mxu0 %v2694
    %2851 = vmatpush.bf16.msra.mxu0 %v2690
    %2852 = vmatpush.bf16.msra.mxu0 %v2686
    %2853 = vmatpush.bf16.msra.mxu0 %v2682
    %2854 = vmatpush.bf16.msra.mxu0 %v2678
    %2855 = vmatpush.bf16.msra.mxu0 %v2674
    %2856 = vmatpush.bf16.msra.mxu0 %v2670
    %2857 = vmatpush.bf16.msra.mxu0 %v2666
    %2858 = vmatmul.bf16.gmra.mxu0 %v2364
    %v2859 = vpop.f32.mrf.mxu0
    %v2860 = vadd.f32 %v2847, %v2859
    %v2861 = vpop.f32.mrf.mxu0
    %2862 = vdwg.mxu0
    %v2863 = vld [vmem:[%s881] sm:$0xff]
    %v2864 = vxor.u32 %v2782, 2147483648
    %v2865 = vxor.u32 %v2808, 2147483648
    %v2866 = vxor.u32 %v2834, 2147483648
    %v2867 = vmul.f32 %v2864, 1.442695
    %v2868 = vpow.pop %v2867
    %v2869 = vmul.f32 %v2865, 1.442695
    %v2870 = vpow.pop %v2869
    %v2871 = vmul.f32 %v2866, 1.442695
    %v2872 = vpow.pop %v2871
    %v2873 = vadd.f32 %v2868, 1.0
    %v2874 = vadd.f32 %v2870, 1.0
    %v2875 = vadd.f32 %v2872, 1.0
    %v2876 = vrcp.pop %v2873
    %v2877 = vmul.f32 %v2873, %v2876
    %v2878 = vsub.f32 1.0, %v2877
    %v2879 = vmul.f32 %v2876, %v2878
    %v2880 = vadd.f32 %v2876, %v2879
    %vm2881 = vweird.f32 %v2873
    %vm2882 = vweird.f32 %v2876
    %vm2883 = vmor %vm2881, %vm2882
    %v2884 = vsel %vm2883, %v2876, %v2880
    %v2885 = vand.u32 2147483647, %v2873
    %vm2886 = vcmp.eq.f32.partialorder %v2885, 8.507059e+37
    %v2887 = vand.u32 %v2873, 2147483648
    %v2888 = vor.u32 1.1754944e-38, %v2887
    %v2889 = vsel %vm2886, %v2888, %v2884
    %v2890 = vmul.f32 1.0, %v2889
    %v2891 = vrcp.pop %v2874
    %v2892 = vmul.f32 %v2874, %v2891
    %v2893 = vsub.f32 1.0, %v2892
    %v2894 = vmul.f32 %v2891, %v2893
    %v2895 = vadd.f32 %v2891, %v2894
    %vm2896 = vweird.f32 %v2874
    %vm2897 = vweird.f32 %v2891
    %vm2898 = vmor %vm2896, %vm2897
    %v2899 = vsel %vm2898, %v2891, %v2895
    %v2900 = vand.u32 2147483647, %v2874
    %vm2901 = vcmp.eq.f32.partialorder %v2900, 8.507059e+37
    %v2902 = vand.u32 %v2874, 2147483648
    %v2903 = vor.u32 1.1754944e-38, %v2902
    %v2904 = vsel %vm2901, %v2903, %v2899
    %v2905 = vmul.f32 1.0, %v2904
    %v2906 = vrcp.pop %v2875
    %v2907 = vmul.f32 %v2875, %v2906
    %v2908 = vsub.f32 1.0, %v2907
    %v2909 = vmul.f32 %v2906, %v2908
    %v2910 = vadd.f32 %v2906, %v2909
    %vm2911 = vweird.f32 %v2875
    %vm2912 = vweird.f32 %v2906
    %vm2913 = vmor %vm2911, %vm2912
    %v2914 = vsel %vm2913, %v2906, %v2910
    %v2915 = vand.u32 2147483647, %v2875
    %vm2916 = vcmp.eq.f32.partialorder %v2915, 8.507059e+37
    %v2917 = vand.u32 %v2875, 2147483648
    %v2918 = vor.u32 1.1754944e-38, %v2917
    %v2919 = vsel %vm2916, %v2918, %v2914
    %v2920 = vmul.f32 1.0, %v2919
    %v2921 = vtanh.pop %v2860
    %v2922 = vmul.f32 %v2905, %v2863
    %v2923 = vmul.f32 %v2890, %v2921
    %v2924 = vadd.f32 %v2922, %v2923
    %v2925 = vtanh.pop %v2924
    %v2926 = vmul.f32 %v2920, %v2925
    %2927 = vst [vmem:[%s379] sm:$0xff] %v2926
    %2928 = vst [vmem:[%s881] sm:$0xff] %v2924
    %v2929 = vpack.c.bf16 %v2926, %v2926
    %v2931 = vrot.slane %v2929, 3
    %v2934 = vsel %vm951, %v2929, %v2931
    %v2936 = vsel %vm956, %v2929, %v2931
    %v2938 = vrot.slane %v2936, 1
    %v2939 = vsel %vm960, %v2929, %v2931
    %v2941 = vrot.slane %v2939, 2
    %v2942 = vsel %vm964, %v2929, %v2931
    %v2944 = vrot.slane %v2942, 3
    %v2945 = vunpack.i.l.s16 %v2934
    %v2946 = vunpack.i.h.s16 %v2934
    %v2947 = vunpack.i.l.s16 %v2938
    %v2948 = vunpack.i.h.s16 %v2938
    %v2949 = vunpack.i.l.s16 %v2941
    %v2950 = vunpack.i.h.s16 %v2941
    %v2951 = vunpack.i.l.s16 %v2944
    %v2952 = vunpack.i.h.s16 %v2944
    %v2953 = vpack.i.b16 %v2945, %v2945
    %v2954 = vpack.i.b16 %v2946, %v2946
    %v2955 = vpack.i.b16 %v2947, %v2947
    %v2956 = vpack.i.b16 %v2948, %v2948
    %v2957 = vpack.i.b16 %v2949, %v2949
    %v2958 = vpack.i.b16 %v2950, %v2950
    %v2959 = vpack.i.b16 %v2951, %v2951
    %v2960 = vpack.i.b16 %v2952, %v2952
    %v2962 = vunpack.c.l.s4 286326784
    %v2963 = vunpack.c.0.s8 %v2962
    %v2964 = vperm.slane %v2953, %v2963
    %v2966 = vunpack.c.l.s4 286326784
    %v2967 = vunpack.c.0.s8 %v2966
    %v2968 = vperm.slane %v2954, %v2967
    %v2970 = vunpack.c.l.s4 286326784
    %v2971 = vunpack.c.0.s8 %v2970
    %v2972 = vperm.slane %v2955, %v2971
    %v2974 = vunpack.c.l.s4 286326784
    %v2975 = vunpack.c.0.s8 %v2974
    %v2976 = vperm.slane %v2956, %v2975
    %v2978 = vunpack.c.l.s4 286326784
    %v2979 = vunpack.c.0.s8 %v2978
    %v2980 = vperm.slane %v2957, %v2979
    %v2982 = vunpack.c.l.s4 286326784
    %v2983 = vunpack.c.0.s8 %v2982
    %v2984 = vperm.slane %v2958, %v2983
    %v2986 = vunpack.c.l.s4 286326784
    %v2987 = vunpack.c.0.s8 %v2986
    %v2988 = vperm.slane %v2959, %v2987
    %v2990 = vunpack.c.l.s4 286326784
    %v2991 = vunpack.c.0.s8 %v2990
    %v2992 = vperm.slane %v2960, %v2991
    %vm3001 = vcmask 1041409
    %vm3002 = vsmask.f32 1280
    %vm3003 = vmand %vm3001, %vm3002
    %v3004 = vld [vmem:[%s4] sm:$0x2]
    %v3005 = vsel %vm3003, %v2964, %v3004
    %3006 = vst [vmem:[%s4] sm:$0x2] %v3005
    %v3007 = vld [vmem:[%s4 + $0x4] sm:$0x2]
    %v3008 = vsel %vm3003, %v2968, %v3007
    %3009 = vst [vmem:[%s4 + $0x4] sm:$0x2] %v3008
    %v3010 = vld [vmem:[%s4 + $0x8] sm:$0x2]
    %v3011 = vsel %vm3003, %v2972, %v3010
    %3012 = vst [vmem:[%s4 + $0x8] sm:$0x2] %v3011
    %v3013 = vld [vmem:[%s4 + $0xc] sm:$0x2]
    %v3014 = vsel %vm3003, %v2976, %v3013
    %3015 = vst [vmem:[%s4 + $0xc] sm:$0x2] %v3014
    %v3016 = vld [vmem:[%s4 + $0x10] sm:$0x2]
    %v3017 = vsel %vm3003, %v2980, %v3016
    %3018 = vst [vmem:[%s4 + $0x10] sm:$0x2] %v3017
    %v3019 = vld [vmem:[%s4 + $0x14] sm:$0x2]
    %v3020 = vsel %vm3003, %v2984, %v3019
    %3021 = vst [vmem:[%s4 + $0x14] sm:$0x2] %v3020
    %v3022 = vld [vmem:[%s4 + $0x18] sm:$0x2]
    %v3023 = vsel %vm3003, %v2988, %v3022
    %3024 = vst [vmem:[%s4 + $0x18] sm:$0x2] %v3023
    %v3025 = vld [vmem:[%s4 + $0x1c] sm:$0x2]
    %v3026 = vsel %vm3003, %v2992, %v3025
    %3027 = vst [vmem:[%s4 + $0x1c] sm:$0x2] %v3026
    %s3028 = scalar_lea.vmem %s0, 48
    %v3029 = vld [vmem:[%s3028] sm:$0xff]
    %v3030 = vld [vmem:[%s3028 + $0x8] sm:$0xff]
    %v3031 = vunpack.c.l.bf16 %v3029
    %v3032 = vunpack.c.h.bf16 %v3029
    %v3033 = vunpack.c.l.bf16 %v3030
    %v3034 = vunpack.c.h.bf16 %v3030
    %v3035 = vld [vmem:[#allocation2] sm:$0xff]
    %v3036 = vpack.c.bf16 %v3035, %v3035
    %v3037 = vld [vmem:[#allocation4] sm:$0xff]
    %v3038 = vld [vmem:[#allocation4 + $0x8] sm:$0xff]
    %v3039 = vld [vmem:[#allocation4 + $0x10] sm:$0xff]
    %v3040 = vld [vmem:[#allocation4 + $0x18] sm:$0xff]
    %v3041 = vld [vmem:[#allocation4 + $0x20] sm:$0xff]
    %v3042 = vld [vmem:[#allocation4 + $0x28] sm:$0xff]
    %v3043 = vld [vmem:[#allocation4 + $0x30] sm:$0xff]
    %v3044 = vld [vmem:[#allocation4 + $0x38] sm:$0xff]
    %v3045 = vld [vmem:[#allocation4 + $0x40] sm:$0xff]
    %v3046 = vld [vmem:[#allocation4 + $0x48] sm:$0xff]
    %v3047 = vld [vmem:[#allocation4 + $0x50] sm:$0xff]
    %v3048 = vld [vmem:[#allocation4 + $0x58] sm:$0xff]
    %v3049 = vld [vmem:[#allocation4 + $0x60] sm:$0xff]
    %v3050 = vld [vmem:[#allocation4 + $0x68] sm:$0xff]
    %v3051 = vld [vmem:[#allocation4 + $0x70] sm:$0xff]
    %v3052 = vld [vmem:[#allocation4 + $0x78] sm:$0xff]
    %v3053 = vld [vmem:[#allocation4 + $0x80] sm:$0xff]
    %v3054 = vld [vmem:[#allocation4 + $0x88] sm:$0xff]
    %v3055 = vld [vmem:[#allocation4 + $0x90] sm:$0xff]
    %v3056 = vld [vmem:[#allocation4 + $0x98] sm:$0xff]
    %v3057 = vld [vmem:[#allocation4 + $0xa0] sm:$0xff]
    %v3058 = vld [vmem:[#allocation4 + $0xa8] sm:$0xff]
    %v3059 = vld [vmem:[#allocation4 + $0xb0] sm:$0xff]
    %v3060 = vld [vmem:[#allocation4 + $0xb8] sm:$0xff]
    %v3061 = vld [vmem:[#allocation4 + $0xc0] sm:$0xff]
    %v3062 = vld [vmem:[#allocation4 + $0xc8] sm:$0xff]
    %v3063 = vld [vmem:[#allocation4 + $0xd0] sm:$0xff]
    %v3064 = vld [vmem:[#allocation4 + $0xd8] sm:$0xff]
    %v3065 = vld [vmem:[#allocation4 + $0xe0] sm:$0xff]
    %v3066 = vld [vmem:[#allocation4 + $0xe8] sm:$0xff]
    %v3067 = vld [vmem:[#allocation4 + $0xf0] sm:$0xff]
    %v3068 = vld [vmem:[#allocation4 + $0xf8] sm:$0xff]
    %v3101 = vunpack.c.l.b16 %v3037
    %v3102 = vunpack.c.h.b16 %v3037
    %v3103 = vunpack.c.l.b16 %v3038
    %v3104 = vunpack.c.h.b16 %v3038
    %v3105 = vunpack.c.l.b16 %v3039
    %v3106 = vunpack.c.h.b16 %v3039
    %v3107 = vunpack.c.l.b16 %v3040
    %v3108 = vunpack.c.h.b16 %v3040
    %v3109 = vunpack.c.l.b16 %v3041
    %v3110 = vunpack.c.h.b16 %v3041
    %v3111 = vunpack.c.l.b16 %v3042
    %v3112 = vunpack.c.h.b16 %v3042
    %v3113 = vunpack.c.l.b16 %v3043
    %v3114 = vunpack.c.h.b16 %v3043
    %v3115 = vunpack.c.l.b16 %v3044
    %v3116 = vunpack.c.h.b16 %v3044
    %v3117 = vunpack.c.l.b16 %v3045
    %v3118 = vunpack.c.h.b16 %v3045
    %v3119 = vunpack.c.l.b16 %v3046
    %v3120 = vunpack.c.h.b16 %v3046
    %v3121 = vunpack.c.l.b16 %v3047
    %v3122 = vunpack.c.h.b16 %v3047
    %v3123 = vunpack.c.l.b16 %v3048
    %v3124 = vunpack.c.h.b16 %v3048
    %v3125 = vunpack.c.l.b16 %v3049
    %v3126 = vunpack.c.h.b16 %v3049
    %v3127 = vunpack.c.l.b16 %v3050
    %v3128 = vunpack.c.h.b16 %v3050
    %v3129 = vunpack.c.l.b16 %v3051
    %v3130 = vunpack.c.h.b16 %v3051
    %v3131 = vunpack.c.l.b16 %v3052
    %v3132 = vunpack.c.h.b16 %v3052
    %v3133 = vunpack.c.l.b16 %v3053
    %v3134 = vunpack.c.h.b16 %v3053
    %v3135 = vunpack.c.l.b16 %v3054
    %v3136 = vunpack.c.h.b16 %v3054
    %v3137 = vunpack.c.l.b16 %v3055
    %v3138 = vunpack.c.h.b16 %v3055
    %v3139 = vunpack.c.l.b16 %v3056
    %v3140 = vunpack.c.h.b16 %v3056
    %v3141 = vunpack.c.l.b16 %v3057
    %v3142 = vunpack.c.h.b16 %v3057
    %v3143 = vunpack.c.l.b16 %v3058
    %v3144 = vunpack.c.h.b16 %v3058
    %v3145 = vunpack.c.l.b16 %v3059
    %v3146 = vunpack.c.h.b16 %v3059
    %v3147 = vunpack.c.l.b16 %v3060
    %v3148 = vunpack.c.h.b16 %v3060
    %v3149 = vunpack.c.l.b16 %v3061
    %v3150 = vunpack.c.h.b16 %v3061
    %v3151 = vunpack.c.l.b16 %v3062
    %v3152 = vunpack.c.h.b16 %v3062
    %v3153 = vunpack.c.l.b16 %v3063
    %v3154 = vunpack.c.h.b16 %v3063
    %v3155 = vunpack.c.l.b16 %v3064
    %v3156 = vunpack.c.h.b16 %v3064
    %v3157 = vunpack.c.l.b16 %v3065
    %v3158 = vunpack.c.h.b16 %v3065
    %v3159 = vunpack.c.l.b16 %v3066
    %v3160 = vunpack.c.h.b16 %v3066
    %v3161 = vunpack.c.l.b16 %v3067
    %v3162 = vunpack.c.h.b16 %v3067
    %v3163 = vunpack.c.l.b16 %v3068
    %v3164 = vunpack.c.h.b16 %v3068
    %v3165 = vpack.c.b16 %v3105, %v3101
    %v3166 = vpack.c.b16 %v3106, %v3102
    %v3167 = vpack.c.b16 %v3107, %v3103
    %v3168 = vpack.c.b16 %v3108, %v3104
    %v3169 = vpack.c.b16 %v3113, %v3109
    %v3170 = vpack.c.b16 %v3114, %v3110
    %v3171 = vpack.c.b16 %v3115, %v3111
    %v3172 = vpack.c.b16 %v3116, %v3112
    %v3173 = vpack.c.b16 %v3121, %v3117
    %v3174 = vpack.c.b16 %v3122, %v3118
    %v3175 = vpack.c.b16 %v3123, %v3119
    %v3176 = vpack.c.b16 %v3124, %v3120
    %v3177 = vpack.c.b16 %v3129, %v3125
    %v3178 = vpack.c.b16 %v3130, %v3126
    %v3179 = vpack.c.b16 %v3131, %v3127
    %v3180 = vpack.c.b16 %v3132, %v3128
    %v3181 = vpack.c.b16 %v3137, %v3133
    %v3182 = vpack.c.b16 %v3138, %v3134
    %v3183 = vpack.c.b16 %v3139, %v3135
    %v3184 = vpack.c.b16 %v3140, %v3136
    %v3185 = vpack.c.b16 %v3145, %v3141
    %v3186 = vpack.c.b16 %v3146, %v3142
    %v3187 = vpack.c.b16 %v3147, %v3143
    %v3188 = vpack.c.b16 %v3148, %v3144
    %v3189 = vpack.c.b16 %v3153, %v3149
    %v3190 = vpack.c.b16 %v3154, %v3150
    %v3191 = vpack.c.b16 %v3155, %v3151
    %v3192 = vpack.c.b16 %v3156, %v3152
    %v3193 = vpack.c.b16 %v3161, %v3157
    %v3194 = vpack.c.b16 %v3162, %v3158
    %v3195 = vpack.c.b16 %v3163, %v3159
    %v3196 = vpack.c.b16 %v3164, %v3160
    %3229 = vmatpush.bf16.msra.mxu0 %v3193
    %3230 = vmatpush.bf16.msra.mxu0 %v3189
    %3231 = vmatpush.bf16.msra.mxu0 %v3185
    %3232 = vmatpush.bf16.msra.mxu0 %v3181
    %3233 = vmatpush.bf16.msra.mxu0 %v3177
    %3234 = vmatpush.bf16.msra.mxu0 %v3173
    %3235 = vmatpush.bf16.msra.mxu0 %v3169
    %3236 = vmatpush.bf16.msra.mxu0 %v3165
    %3237 = vmatmul.bf16.gmra.mxu0 %v3036
    %v3238 = vpop.f32.mrf.mxu0
    %v3239 = vadd.f32 0.0, %v3238
    %v3240 = vpop.f32.mrf.mxu0
    %3241 = vdwg.mxu0
    %3242 = vmatpush.bf16.msra.mxu0 %v3194
    %3243 = vmatpush.bf16.msra.mxu0 %v3190
    %3244 = vmatpush.bf16.msra.mxu0 %v3186
    %3245 = vmatpush.bf16.msra.mxu0 %v3182
    %3246 = vmatpush.bf16.msra.mxu0 %v3178
    %3247 = vmatpush.bf16.msra.mxu0 %v3174
    %3248 = vmatpush.bf16.msra.mxu0 %v3170
    %3249 = vmatpush.bf16.msra.mxu0 %v3166
    %3250 = vmatmul.bf16.gmra.mxu0 %v3036
    %v3251 = vpop.f32.mrf.mxu0
    %v3252 = vadd.f32 0.0, %v3251
    %v3253 = vpop.f32.mrf.mxu0
    %3254 = vdwg.mxu0
    %3255 = vmatpush.bf16.msra.mxu0 %v3195
    %3256 = vmatpush.bf16.msra.mxu0 %v3191
    %3257 = vmatpush.bf16.msra.mxu0 %v3187
    %3258 = vmatpush.bf16.msra.mxu0 %v3183
    %3259 = vmatpush.bf16.msra.mxu0 %v3179
    %3260 = vmatpush.bf16.msra.mxu0 %v3175
    %3261 = vmatpush.bf16.msra.mxu0 %v3171
    %3262 = vmatpush.bf16.msra.mxu0 %v3167
    %3263 = vmatmul.bf16.gmra.mxu0 %v3036
    %v3264 = vpop.f32.mrf.mxu0
    %v3265 = vadd.f32 0.0, %v3264
    %v3266 = vpop.f32.mrf.mxu0
    %3267 = vdwg.mxu0
    %3268 = vmatpush.bf16.msra.mxu0 %v3196
    %3269 = vmatpush.bf16.msra.mxu0 %v3192
    %3270 = vmatpush.bf16.msra.mxu0 %v3188
    %3271 = vmatpush.bf16.msra.mxu0 %v3184
    %3272 = vmatpush.bf16.msra.mxu0 %v3180
    %3273 = vmatpush.bf16.msra.mxu0 %v3176
    %3274 = vmatpush.bf16.msra.mxu0 %v3172
    %3275 = vmatpush.bf16.msra.mxu0 %v3168
    %3276 = vmatmul.bf16.gmra.mxu0 %v3036
    %v3277 = vpop.f32.mrf.mxu0
    %v3278 = vadd.f32 0.0, %v3277
    %v3279 = vpop.f32.mrf.mxu0
    %3280 = vdwg.mxu0
    %v3281 = vadd.f32 %v3031, %v3239
    %v3282 = vadd.f32 %v3032, %v3252
    %v3283 = vadd.f32 %v3033, %v3265
    %v3284 = vadd.f32 %v3034, %v3278
    %v3285 = vld [vmem:[#allocation3] sm:$0xff]
    %v3286 = vxor.u32 %v3281, 2147483648
    %v3287 = vxor.u32 %v3282, 2147483648
    %v3288 = vxor.u32 %v3283, 2147483648
    %v3289 = vmul.f32 %v3286, 1.442695
    %v3290 = vpow.pop %v3289
    %v3291 = vmul.f32 %v3287, 1.442695
    %v3292 = vpow.pop %v3291
    %v3293 = vmul.f32 %v3288, 1.442695
    %v3294 = vpow.pop %v3293
    %v3295 = vadd.f32 %v3290, 1.0
    %v3296 = vadd.f32 %v3292, 1.0
    %v3297 = vadd.f32 %v3294, 1.0
    %v3298 = vrcp.pop %v3295
    %v3299 = vmul.f32 %v3295, %v3298
    %v3300 = vsub.f32 1.0, %v3299
    %v3301 = vmul.f32 %v3298, %v3300
    %v3302 = vadd.f32 %v3298, %v3301
    %vm3303 = vweird.f32 %v3295
    %vm3304 = vweird.f32 %v3298
    %vm3305 = vmor %vm3303, %vm3304
    %v3306 = vsel %vm3305, %v3298, %v3302
    %v3307 = vand.u32 2147483647, %v3295
    %vm3308 = vcmp.eq.f32.partialorder %v3307, 8.507059e+37
    %v3309 = vand.u32 %v3295, 2147483648
    %v3310 = vor.u32 1.1754944e-38, %v3309
    %v3311 = vsel %vm3308, %v3310, %v3306
    %v3312 = vmul.f32 1.0, %v3311
    %v3313 = vrcp.pop %v3296
    %v3314 = vmul.f32 %v3296, %v3313
    %v3315 = vsub.f32 1.0, %v3314
    %v3316 = vmul.f32 %v3313, %v3315
    %v3317 = vadd.f32 %v3313, %v3316
    %vm3318 = vweird.f32 %v3296
    %vm3319 = vweird.f32 %v3313
    %vm3320 = vmor %vm3318, %vm3319
    %v3321 = vsel %vm3320, %v3313, %v3317
    %v3322 = vand.u32 2147483647, %v3296
    %vm3323 = vcmp.eq.f32.partialorder %v3322, 8.507059e+37
    %v3324 = vand.u32 %v3296, 2147483648
    %v3325 = vor.u32 1.1754944e-38, %v3324
    %v3326 = vsel %vm3323, %v3325, %v3321
    %v3327 = vmul.f32 1.0, %v3326
    %v3328 = vrcp.pop %v3297
    %v3329 = vmul.f32 %v3297, %v3328
    %v3330 = vsub.f32 1.0, %v3329
    %v3331 = vmul.f32 %v3328, %v3330
    %v3332 = vadd.f32 %v3328, %v3331
    %vm3333 = vweird.f32 %v3297
    %vm3334 = vweird.f32 %v3328
    %vm3335 = vmor %vm3333, %vm3334
    %v3336 = vsel %vm3335, %v3328, %v3332
    %v3337 = vand.u32 2147483647, %v3297
    %vm3338 = vcmp.eq.f32.partialorder %v3337, 8.507059e+37
    %v3339 = vand.u32 %v3297, 2147483648
    %v3340 = vor.u32 1.1754944e-38, %v3339
    %v3341 = vsel %vm3338, %v3340, %v3336
    %v3342 = vmul.f32 1.0, %v3341
    %v3343 = vtanh.pop %v3284
    %v3344 = vmul.f32 %v3327, %v3285
    %v3345 = vmul.f32 %v3312, %v3343
    %v3346 = vadd.f32 %v3344, %v3345
    %v3347 = vtanh.pop %v3346
    %v3348 = vmul.f32 %v3342, %v3347
    %3349 = vst [vmem:[#allocation2] sm:$0xff] %v3348
    %3350 = vst [vmem:[#allocation3] sm:$0xff] %v3346
    %v3351 = vld [vmem:[%s379] sm:$0xff]
    %v3352 = vpack.c.bf16 %v3348, %v3348
    %v3353 = vpack.c.bf16 %v3351, %v3351
    %v3354 = vld [vmem:[#allocation6] sm:$0xff]
    %v3355 = vld [vmem:[#allocation6 + $0x8] sm:$0xff]
    %v3356 = vld [vmem:[#allocation6 + $0x10] sm:$0xff]
    %v3357 = vld [vmem:[#allocation6 + $0x18] sm:$0xff]
    %v3358 = vld [vmem:[#allocation6 + $0x20] sm:$0xff]
    %v3359 = vld [vmem:[#allocation6 + $0x28] sm:$0xff]
    %v3360 = vld [vmem:[#allocation6 + $0x30] sm:$0xff]
    %v3361 = vld [vmem:[#allocation6 + $0x38] sm:$0xff]
    %v3362 = vld [vmem:[#allocation6 + $0x40] sm:$0xff]
    %v3363 = vld [vmem:[#allocation6 + $0x48] sm:$0xff]
    %v3364 = vld [vmem:[#allocation6 + $0x50] sm:$0xff]
    %v3365 = vld [vmem:[#allocation6 + $0x58] sm:$0xff]
    %v3366 = vld [vmem:[#allocation6 + $0x60] sm:$0xff]
    %v3367 = vld [vmem:[#allocation6 + $0x68] sm:$0xff]
    %v3368 = vld [vmem:[#allocation6 + $0x70] sm:$0xff]
    %v3369 = vld [vmem:[#allocation6 + $0x78] sm:$0xff]
    %v3370 = vld [vmem:[#allocation6 + $0x80] sm:$0xff]
    %v3371 = vld [vmem:[#allocation6 + $0x88] sm:$0xff]
    %v3372 = vld [vmem:[#allocation6 + $0x90] sm:$0xff]
    %v3373 = vld [vmem:[#allocation6 + $0x98] sm:$0xff]
    %v3374 = vld [vmem:[#allocation6 + $0xa0] sm:$0xff]
    %v3375 = vld [vmem:[#allocation6 + $0xa8] sm:$0xff]
    %v3376 = vld [vmem:[#allocation6 + $0xb0] sm:$0xff]
    %v3377 = vld [vmem:[#allocation6 + $0xb8] sm:$0xff]
    %v3378 = vld [vmem:[#allocation6 + $0xc0] sm:$0xff]
    %v3379 = vld [vmem:[#allocation6 + $0xc8] sm:$0xff]
    %v3380 = vld [vmem:[#allocation6 + $0xd0] sm:$0xff]
    %v3381 = vld [vmem:[#allocation6 + $0xd8] sm:$0xff]
    %v3382 = vld [vmem:[#allocation6 + $0xe0] sm:$0xff]
    %v3383 = vld [vmem:[#allocation6 + $0xe8] sm:$0xff]
    %v3384 = vld [vmem:[#allocation6 + $0xf0] sm:$0xff]
    %v3385 = vld [vmem:[#allocation6 + $0xf8] sm:$0xff]
    %v3386 = vld [vmem:[#allocation6 + $0x100] sm:$0xff]
    %v3387 = vld [vmem:[#allocation6 + $0x108] sm:$0xff]
    %v3388 = vld [vmem:[#allocation6 + $0x110] sm:$0xff]
    %v3389 = vld [vmem:[#allocation6 + $0x118] sm:$0xff]
    %v3390 = vld [vmem:[#allocation6 + $0x120] sm:$0xff]
    %v3391 = vld [vmem:[#allocation6 + $0x128] sm:$0xff]
    %v3392 = vld [vmem:[#allocation6 + $0x130] sm:$0xff]
    %v3393 = vld [vmem:[#allocation6 + $0x138] sm:$0xff]
    %v3394 = vld [vmem:[#allocation6 + $0x140] sm:$0xff]
    %v3395 = vld [vmem:[#allocation6 + $0x148] sm:$0xff]
    %v3396 = vld [vmem:[#allocation6 + $0x150] sm:$0xff]
    %v3397 = vld [vmem:[#allocation6 + $0x158] sm:$0xff]
    %v3398 = vld [vmem:[#allocation6 + $0x160] sm:$0xff]
    %v3399 = vld [vmem:[#allocation6 + $0x168] sm:$0xff]
    %v3400 = vld [vmem:[#allocation6 + $0x170] sm:$0xff]
    %v3401 = vld [vmem:[#allocation6 + $0x178] sm:$0xff]
    %v3402 = vld [vmem:[#allocation6 + $0x180] sm:$0xff]
    %v3403 = vld [vmem:[#allocation6 + $0x188] sm:$0xff]
    %v3404 = vld [vmem:[#allocation6 + $0x190] sm:$0xff]
    %v3405 = vld [vmem:[#allocation6 + $0x198] sm:$0xff]
    %v3406 = vld [vmem:[#allocation6 + $0x1a0] sm:$0xff]
    %v3407 = vld [vmem:[#allocation6 + $0x1a8] sm:$0xff]
    %v3408 = vld [vmem:[#allocation6 + $0x1b0] sm:$0xff]
    %v3409 = vld [vmem:[#allocation6 + $0x1b8] sm:$0xff]
    %v3410 = vld [vmem:[#allocation6 + $0x1c0] sm:$0xff]
    %v3411 = vld [vmem:[#allocation6 + $0x1c8] sm:$0xff]
    %v3412 = vld [vmem:[#allocation6 + $0x1d0] sm:$0xff]
    %v3413 = vld [vmem:[#allocation6 + $0x1d8] sm:$0xff]
    %v3414 = vld [vmem:[#allocation6 + $0x1e0] sm:$0xff]
    %v3415 = vld [vmem:[#allocation6 + $0x1e8] sm:$0xff]
    %v3416 = vld [vmem:[#allocation6 + $0x1f0] sm:$0xff]
    %v3417 = vld [vmem:[#allocation6 + $0x1f8] sm:$0xff]
    %v3418 = vld [vmem:[%s3] sm:$0xf]
    %v3420 = vperm.slane %v3418, 0
    %v3421 = vperm.slane %v3418, 1
    %v3422 = vperm.slane %v3418, 2
    %v3423 = vperm.slane %v3418, 3
    %v3492 = vunpack.c.l.b16 %v3354
    %v3493 = vunpack.c.h.b16 %v3354
    %v3494 = vunpack.c.l.b16 %v3355
    %v3495 = vunpack.c.h.b16 %v3355
    %v3496 = vunpack.c.l.b16 %v3356
    %v3497 = vunpack.c.h.b16 %v3356
    %v3498 = vunpack.c.l.b16 %v3357
    %v3499 = vunpack.c.h.b16 %v3357
    %v3500 = vunpack.c.l.b16 %v3358
    %v3501 = vunpack.c.h.b16 %v3358
    %v3502 = vunpack.c.l.b16 %v3359
    %v3503 = vunpack.c.h.b16 %v3359
    %v3504 = vunpack.c.l.b16 %v3360
    %v3505 = vunpack.c.h.b16 %v3360
    %v3506 = vunpack.c.l.b16 %v3361
    %v3507 = vunpack.c.h.b16 %v3361
    %v3508 = vunpack.c.l.b16 %v3362
    %v3509 = vunpack.c.h.b16 %v3362
    %v3510 = vunpack.c.l.b16 %v3363
    %v3511 = vunpack.c.h.b16 %v3363
    %v3512 = vunpack.c.l.b16 %v3364
    %v3513 = vunpack.c.h.b16 %v3364
    %v3514 = vunpack.c.l.b16 %v3365
    %v3515 = vunpack.c.h.b16 %v3365
    %v3516 = vunpack.c.l.b16 %v3366
    %v3517 = vunpack.c.h.b16 %v3366
    %v3518 = vunpack.c.l.b16 %v3367
    %v3519 = vunpack.c.h.b16 %v3367
    %v3520 = vunpack.c.l.b16 %v3368
    %v3521 = vunpack.c.h.b16 %v3368
    %v3522 = vunpack.c.l.b16 %v3369
    %v3523 = vunpack.c.h.b16 %v3369
    %v3524 = vunpack.c.l.b16 %v3370
    %v3525 = vunpack.c.h.b16 %v3370
    %v3526 = vunpack.c.l.b16 %v3371
    %v3527 = vunpack.c.h.b16 %v3371
    %v3528 = vunpack.c.l.b16 %v3372
    %v3529 = vunpack.c.h.b16 %v3372
    %v3530 = vunpack.c.l.b16 %v3373
    %v3531 = vunpack.c.h.b16 %v3373
    %v3532 = vunpack.c.l.b16 %v3374
    %v3533 = vunpack.c.h.b16 %v3374
    %v3534 = vunpack.c.l.b16 %v3375
    %v3535 = vunpack.c.h.b16 %v3375
    %v3536 = vunpack.c.l.b16 %v3376
    %v3537 = vunpack.c.h.b16 %v3376
    %v3538 = vunpack.c.l.b16 %v3377
    %v3539 = vunpack.c.h.b16 %v3377
    %v3540 = vunpack.c.l.b16 %v3378
    %v3541 = vunpack.c.h.b16 %v3378
    %v3542 = vunpack.c.l.b16 %v3379
    %v3543 = vunpack.c.h.b16 %v3379
    %v3544 = vunpack.c.l.b16 %v3380
    %v3545 = vunpack.c.h.b16 %v3380
    %v3546 = vunpack.c.l.b16 %v3381
    %v3547 = vunpack.c.h.b16 %v3381
    %v3548 = vunpack.c.l.b16 %v3382
    %v3549 = vunpack.c.h.b16 %v3382
    %v3550 = vunpack.c.l.b16 %v3383
    %v3551 = vunpack.c.h.b16 %v3383
    %v3552 = vunpack.c.l.b16 %v3384
    %v3553 = vunpack.c.h.b16 %v3384
    %v3554 = vunpack.c.l.b16 %v3385
    %v3555 = vunpack.c.h.b16 %v3385
    %v3556 = vunpack.c.l.b16 %v3386
    %v3557 = vunpack.c.h.b16 %v3386
    %v3558 = vunpack.c.l.b16 %v3387
    %v3559 = vunpack.c.h.b16 %v3387
    %v3560 = vunpack.c.l.b16 %v3388
    %v3561 = vunpack.c.h.b16 %v3388
    %v3562 = vunpack.c.l.b16 %v3389
    %v3563 = vunpack.c.h.b16 %v3389
    %v3564 = vunpack.c.l.b16 %v3390
    %v3565 = vunpack.c.h.b16 %v3390
    %v3566 = vunpack.c.l.b16 %v3391
    %v3567 = vunpack.c.h.b16 %v3391
    %v3568 = vunpack.c.l.b16 %v3392
    %v3569 = vunpack.c.h.b16 %v3392
    %v3570 = vunpack.c.l.b16 %v3393
    %v3571 = vunpack.c.h.b16 %v3393
    %v3572 = vunpack.c.l.b16 %v3394
    %v3573 = vunpack.c.h.b16 %v3394
    %v3574 = vunpack.c.l.b16 %v3395
    %v3575 = vunpack.c.h.b16 %v3395
    %v3576 = vunpack.c.l.b16 %v3396
    %v3577 = vunpack.c.h.b16 %v3396
    %v3578 = vunpack.c.l.b16 %v3397
    %v3579 = vunpack.c.h.b16 %v3397
    %v3580 = vunpack.c.l.b16 %v3398
    %v3581 = vunpack.c.h.b16 %v3398
    %v3582 = vunpack.c.l.b16 %v3399
    %v3583 = vunpack.c.h.b16 %v3399
    %v3584 = vunpack.c.l.b16 %v3400
    %v3585 = vunpack.c.h.b16 %v3400
    %v3586 = vunpack.c.l.b16 %v3401
    %v3587 = vunpack.c.h.b16 %v3401
    %v3588 = vunpack.c.l.b16 %v3402
    %v3589 = vunpack.c.h.b16 %v3402
    %v3590 = vunpack.c.l.b16 %v3403
    %v3591 = vunpack.c.h.b16 %v3403
    %v3592 = vunpack.c.l.b16 %v3404
    %v3593 = vunpack.c.h.b16 %v3404
    %v3594 = vunpack.c.l.b16 %v3405
    %v3595 = vunpack.c.h.b16 %v3405
    %v3596 = vunpack.c.l.b16 %v3406
    %v3597 = vunpack.c.h.b16 %v3406
    %v3598 = vunpack.c.l.b16 %v3407
    %v3599 = vunpack.c.h.b16 %v3407
    %v3600 = vunpack.c.l.b16 %v3408
    %v3601 = vunpack.c.h.b16 %v3408
    %v3602 = vunpack.c.l.b16 %v3409
    %v3603 = vunpack.c.h.b16 %v3409
    %v3604 = vunpack.c.l.b16 %v3410
    %v3605 = vunpack.c.h.b16 %v3410
    %v3606 = vunpack.c.l.b16 %v3411
    %v3607 = vunpack.c.h.b16 %v3411
    %v3608 = vunpack.c.l.b16 %v3412
    %v3609 = vunpack.c.h.b16 %v3412
    %v3610 = vunpack.c.l.b16 %v3413
    %v3611 = vunpack.c.h.b16 %v3413
    %v3612 = vunpack.c.l.b16 %v3414
    %v3613 = vunpack.c.h.b16 %v3414
    %v3614 = vunpack.c.l.b16 %v3415
    %v3615 = vunpack.c.h.b16 %v3415
    %v3616 = vunpack.c.l.b16 %v3416
    %v3617 = vunpack.c.h.b16 %v3416
    %v3618 = vunpack.c.l.b16 %v3417
    %v3619 = vunpack.c.h.b16 %v3417
    %v3620 = vpack.c.b16 %v3496, %v3492
    %v3621 = vpack.c.b16 %v3497, %v3493
    %v3622 = vpack.c.b16 %v3498, %v3494
    %v3623 = vpack.c.b16 %v3499, %v3495
    %v3624 = vpack.c.b16 %v3504, %v3500
    %v3625 = vpack.c.b16 %v3505, %v3501
    %v3626 = vpack.c.b16 %v3506, %v3502
    %v3627 = vpack.c.b16 %v3507, %v3503
    %v3628 = vpack.c.b16 %v3512, %v3508
    %v3629 = vpack.c.b16 %v3513, %v3509
    %v3630 = vpack.c.b16 %v3514, %v3510
    %v3631 = vpack.c.b16 %v3515, %v3511
    %v3632 = vpack.c.b16 %v3520, %v3516
    %v3633 = vpack.c.b16 %v3521, %v3517
    %v3634 = vpack.c.b16 %v3522, %v3518
    %v3635 = vpack.c.b16 %v3523, %v3519
    %v3636 = vpack.c.b16 %v3528, %v3524
    %v3637 = vpack.c.b16 %v3529, %v3525
    %v3638 = vpack.c.b16 %v3530, %v3526
    %v3639 = vpack.c.b16 %v3531, %v3527
    %v3640 = vpack.c.b16 %v3536, %v3532
    %v3641 = vpack.c.b16 %v3537, %v3533
    %v3642 = vpack.c.b16 %v3538, %v3534
    %v3643 = vpack.c.b16 %v3539, %v3535
    %v3644 = vpack.c.b16 %v3544, %v3540
    %v3645 = vpack.c.b16 %v3545, %v3541
    %v3646 = vpack.c.b16 %v3546, %v3542
    %v3647 = vpack.c.b16 %v3547, %v3543
    %v3648 = vpack.c.b16 %v3552, %v3548
    %v3649 = vpack.c.b16 %v3553, %v3549
    %v3650 = vpack.c.b16 %v3554, %v3550
    %v3651 = vpack.c.b16 %v3555, %v3551
    %v3652 = vpack.c.b16 %v3560, %v3556
    %v3653 = vpack.c.b16 %v3561, %v3557
    %v3654 = vpack.c.b16 %v3562, %v3558
    %v3655 = vpack.c.b16 %v3563, %v3559
    %v3656 = vpack.c.b16 %v3568, %v3564
    %v3657 = vpack.c.b16 %v3569, %v3565
    %v3658 = vpack.c.b16 %v3570, %v3566
    %v3659 = vpack.c.b16 %v3571, %v3567
    %v3660 = vpack.c.b16 %v3576, %v3572
    %v3661 = vpack.c.b16 %v3577, %v3573
    %v3662 = vpack.c.b16 %v3578, %v3574
    %v3663 = vpack.c.b16 %v3579, %v3575
    %v3664 = vpack.c.b16 %v3584, %v3580
    %v3665 = vpack.c.b16 %v3585, %v3581
    %v3666 = vpack.c.b16 %v3586, %v3582
    %v3667 = vpack.c.b16 %v3587, %v3583
    %v3668 = vpack.c.b16 %v3592, %v3588
    %v3669 = vpack.c.b16 %v3593, %v3589
    %v3670 = vpack.c.b16 %v3594, %v3590
    %v3671 = vpack.c.b16 %v3595, %v3591
    %v3672 = vpack.c.b16 %v3600, %v3596
    %v3673 = vpack.c.b16 %v3601, %v3597
    %v3674 = vpack.c.b16 %v3602, %v3598
    %v3675 = vpack.c.b16 %v3603, %v3599
    %v3676 = vpack.c.b16 %v3608, %v3604
    %v3677 = vpack.c.b16 %v3609, %v3605
    %v3678 = vpack.c.b16 %v3610, %v3606
    %v3679 = vpack.c.b16 %v3611, %v3607
    %v3680 = vpack.c.b16 %v3616, %v3612
    %v3681 = vpack.c.b16 %v3617, %v3613
    %v3682 = vpack.c.b16 %v3618, %v3614
    %v3683 = vpack.c.b16 %v3619, %v3615
    %3748 = vmatpush.bf16.msra.mxu0 %v3648
    %3749 = vmatpush.bf16.msra.mxu0 %v3644
    %3750 = vmatpush.bf16.msra.mxu0 %v3640
    %3751 = vmatpush.bf16.msra.mxu0 %v3636
    %3752 = vmatpush.bf16.msra.mxu0 %v3632
    %3753 = vmatpush.bf16.msra.mxu0 %v3628
    %3754 = vmatpush.bf16.msra.mxu0 %v3624
    %3755 = vmatpush.bf16.msra.mxu0 %v3620
    %3756 = vmatmul.bf16.gmra.mxu0 %v3352
    %v3757 = vpop.f32.mrf.mxu0
    %v3758 = vadd.f32 %v3420, %v3757
    %v3759 = vpop.f32.mrf.mxu0
    %3760 = vdwg.mxu0
    %3761 = vmatpush.bf16.msra.mxu0 %v3680
    %3762 = vmatpush.bf16.msra.mxu0 %v3676
    %3763 = vmatpush.bf16.msra.mxu0 %v3672
    %3764 = vmatpush.bf16.msra.mxu0 %v3668
    %3765 = vmatpush.bf16.msra.mxu0 %v3664
    %3766 = vmatpush.bf16.msra.mxu0 %v3660
    %3767 = vmatpush.bf16.msra.mxu0 %v3656
    %3768 = vmatpush.bf16.msra.mxu0 %v3652
    %3769 = vmatmul.bf16.gmra.mxu0 %v3353
    %v3770 = vpop.f32.mrf.mxu0
    %v3771 = vadd.f32 %v3758, %v3770
    %v3772 = vpop.f32.mrf.mxu0
    %3773 = vdwg.mxu0
    %3774 = vmatpush.bf16.msra.mxu0 %v3649
    %3775 = vmatpush.bf16.msra.mxu0 %v3645
    %3776 = vmatpush.bf16.msra.mxu0 %v3641
    %3777 = vmatpush.bf16.msra.mxu0 %v3637
    %3778 = vmatpush.bf16.msra.mxu0 %v3633
    %3779 = vmatpush.bf16.msra.mxu0 %v3629
    %3780 = vmatpush.bf16.msra.mxu0 %v3625
    %3781 = vmatpush.bf16.msra.mxu0 %v3621
    %3782 = vmatmul.bf16.gmra.mxu0 %v3352
    %v3783 = vpop.f32.mrf.mxu0
    %v3784 = vadd.f32 %v3421, %v3783
    %v3785 = vpop.f32.mrf.mxu0
    %3786 = vdwg.mxu0
    %3787 = vmatpush.bf16.msra.mxu0 %v3681
    %3788 = vmatpush.bf16.msra.mxu0 %v3677
    %3789 = vmatpush.bf16.msra.mxu0 %v3673
    %3790 = vmatpush.bf16.msra.mxu0 %v3669
    %3791 = vmatpush.bf16.msra.mxu0 %v3665
    %3792 = vmatpush.bf16.msra.mxu0 %v3661
    %3793 = vmatpush.bf16.msra.mxu0 %v3657
    %3794 = vmatpush.bf16.msra.mxu0 %v3653
    %3795 = vmatmul.bf16.gmra.mxu0 %v3353
    %v3796 = vpop.f32.mrf.mxu0
    %v3797 = vadd.f32 %v3784, %v3796
    %v3798 = vpop.f32.mrf.mxu0
    %3799 = vdwg.mxu0
    %3800 = vmatpush.bf16.msra.mxu0 %v3650
    %3801 = vmatpush.bf16.msra.mxu0 %v3646
    %3802 = vmatpush.bf16.msra.mxu0 %v3642
    %3803 = vmatpush.bf16.msra.mxu0 %v3638
    %3804 = vmatpush.bf16.msra.mxu0 %v3634
    %3805 = vmatpush.bf16.msra.mxu0 %v3630
    %3806 = vmatpush.bf16.msra.mxu0 %v3626
    %3807 = vmatpush.bf16.msra.mxu0 %v3622
    %3808 = vmatmul.bf16.gmra.mxu0 %v3352
    %v3809 = vpop.f32.mrf.mxu0
    %v3810 = vadd.f32 %v3422, %v3809
    %v3811 = vpop.f32.mrf.mxu0
    %3812 = vdwg.mxu0
    %3813 = vmatpush.bf16.msra.mxu0 %v3682
    %3814 = vmatpush.bf16.msra.mxu0 %v3678
    %3815 = vmatpush.bf16.msra.mxu0 %v3674
    %3816 = vmatpush.bf16.msra.mxu0 %v3670
    %3817 = vmatpush.bf16.msra.mxu0 %v3666
    %3818 = vmatpush.bf16.msra.mxu0 %v3662
    %3819 = vmatpush.bf16.msra.mxu0 %v3658
    %3820 = vmatpush.bf16.msra.mxu0 %v3654
    %3821 = vmatmul.bf16.gmra.mxu0 %v3353
    %v3822 = vpop.f32.mrf.mxu0
    %v3823 = vadd.f32 %v3810, %v3822
    %v3824 = vpop.f32.mrf.mxu0
    %3825 = vdwg.mxu0
    %3826 = vmatpush.bf16.msra.mxu0 %v3651
    %3827 = vmatpush.bf16.msra.mxu0 %v3647
    %3828 = vmatpush.bf16.msra.mxu0 %v3643
    %3829 = vmatpush.bf16.msra.mxu0 %v3639
    %3830 = vmatpush.bf16.msra.mxu0 %v3635
    %3831 = vmatpush.bf16.msra.mxu0 %v3631
    %3832 = vmatpush.bf16.msra.mxu0 %v3627
    %3833 = vmatpush.bf16.msra.mxu0 %v3623
    %3834 = vmatmul.bf16.gmra.mxu0 %v3352
    %v3835 = vpop.f32.mrf.mxu0
    %v3836 = vadd.f32 %v3423, %v3835
    %v3837 = vpop.f32.mrf.mxu0
    %3838 = vdwg.mxu0
    %3839 = vmatpush.bf16.msra.mxu0 %v3683
    %3840 = vmatpush.bf16.msra.mxu0 %v3679
    %3841 = vmatpush.bf16.msra.mxu0 %v3675
    %3842 = vmatpush.bf16.msra.mxu0 %v3671
    %3843 = vmatpush.bf16.msra.mxu0 %v3667
    %3844 = vmatpush.bf16.msra.mxu0 %v3663
    %3845 = vmatpush.bf16.msra.mxu0 %v3659
    %3846 = vmatpush.bf16.msra.mxu0 %v3655
    %3847 = vmatmul.bf16.gmra.mxu0 %v3353
    %v3848 = vpop.f32.mrf.mxu0
    %v3849 = vadd.f32 %v3836, %v3848
    %v3850 = vpop.f32.mrf.mxu0
    %3851 = vdwg.mxu0
    %v3852 = vld [vmem:[%s881] sm:$0xff]
    %v3853 = vxor.u32 %v3771, 2147483648
    %v3854 = vxor.u32 %v3797, 2147483648
    %v3855 = vxor.u32 %v3823, 2147483648
    %v3856 = vmul.f32 %v3853, 1.442695
    %v3857 = vpow.pop %v3856
    %v3858 = vmul.f32 %v3854, 1.442695
    %v3859 = vpow.pop %v3858
    %v3860 = vmul.f32 %v3855, 1.442695
    %v3861 = vpow.pop %v3860
    %v3862 = vadd.f32 %v3857, 1.0
    %v3863 = vadd.f32 %v3859, 1.0
    %v3864 = vadd.f32 %v3861, 1.0
    %v3865 = vrcp.pop %v3862
    %v3866 = vmul.f32 %v3862, %v3865
    %v3867 = vsub.f32 1.0, %v3866
    %v3868 = vmul.f32 %v3865, %v3867
    %v3869 = vadd.f32 %v3865, %v3868
    %vm3870 = vweird.f32 %v3862
    %vm3871 = vweird.f32 %v3865
    %vm3872 = vmor %vm3870, %vm3871
    %v3873 = vsel %vm3872, %v3865, %v3869
    %v3874 = vand.u32 2147483647, %v3862
    %vm3875 = vcmp.eq.f32.partialorder %v3874, 8.507059e+37
    %v3876 = vand.u32 %v3862, 2147483648
    %v3877 = vor.u32 1.1754944e-38, %v3876
    %v3878 = vsel %vm3875, %v3877, %v3873
    %v3879 = vmul.f32 1.0, %v3878
    %v3880 = vrcp.pop %v3863
    %v3881 = vmul.f32 %v3863, %v3880
    %v3882 = vsub.f32 1.0, %v3881
    %v3883 = vmul.f32 %v3880, %v3882
    %v3884 = vadd.f32 %v3880, %v3883
    %vm3885 = vweird.f32 %v3863
    %vm3886 = vweird.f32 %v3880
    %vm3887 = vmor %vm3885, %vm3886
    %v3888 = vsel %vm3887, %v3880, %v3884
    %v3889 = vand.u32 2147483647, %v3863
    %vm3890 = vcmp.eq.f32.partialorder %v3889, 8.507059e+37
    %v3891 = vand.u32 %v3863, 2147483648
    %v3892 = vor.u32 1.1754944e-38, %v3891
    %v3893 = vsel %vm3890, %v3892, %v3888
    %v3894 = vmul.f32 1.0, %v3893
    %v3895 = vrcp.pop %v3864
    %v3896 = vmul.f32 %v3864, %v3895
    %v3897 = vsub.f32 1.0, %v3896
    %v3898 = vmul.f32 %v3895, %v3897
    %v3899 = vadd.f32 %v3895, %v3898
    %vm3900 = vweird.f32 %v3864
    %vm3901 = vweird.f32 %v3895
    %vm3902 = vmor %vm3900, %vm3901
    %v3903 = vsel %vm3902, %v3895, %v3899
    %v3904 = vand.u32 2147483647, %v3864
    %vm3905 = vcmp.eq.f32.partialorder %v3904, 8.507059e+37
    %v3906 = vand.u32 %v3864, 2147483648
    %v3907 = vor.u32 1.1754944e-38, %v3906
    %v3908 = vsel %vm3905, %v3907, %v3903
    %v3909 = vmul.f32 1.0, %v3908
    %v3910 = vtanh.pop %v3849
    %v3911 = vmul.f32 %v3894, %v3852
    %v3912 = vmul.f32 %v3879, %v3910
    %v3913 = vadd.f32 %v3911, %v3912
    %v3914 = vtanh.pop %v3913
    %v3915 = vmul.f32 %v3909, %v3914
    %3916 = vst [vmem:[%s379] sm:$0xff] %v3915
    %3917 = vst [vmem:[%s881] sm:$0xff] %v3913
    %v3918 = vpack.c.bf16 %v3915, %v3915
    %v3920 = vrot.slane %v3918, 3
    %v3923 = vsel %vm951, %v3918, %v3920
    %v3925 = vsel %vm956, %v3918, %v3920
    %v3927 = vrot.slane %v3925, 1
    %v3928 = vsel %vm960, %v3918, %v3920
    %v3930 = vrot.slane %v3928, 2
    %v3931 = vsel %vm964, %v3918, %v3920
    %v3933 = vrot.slane %v3931, 3
    %v3934 = vunpack.i.l.s16 %v3923
    %v3935 = vunpack.i.h.s16 %v3923
    %v3936 = vunpack.i.l.s16 %v3927
    %v3937 = vunpack.i.h.s16 %v3927
    %v3938 = vunpack.i.l.s16 %v3930
    %v3939 = vunpack.i.h.s16 %v3930
    %v3940 = vunpack.i.l.s16 %v3933
    %v3941 = vunpack.i.h.s16 %v3933
    %v3942 = vpack.i.b16 %v3934, %v3934
    %v3943 = vpack.i.b16 %v3935, %v3935
    %v3944 = vpack.i.b16 %v3936, %v3936
    %v3945 = vpack.i.b16 %v3937, %v3937
    %v3946 = vpack.i.b16 %v3938, %v3938
    %v3947 = vpack.i.b16 %v3939, %v3939
    %v3948 = vpack.i.b16 %v3940, %v3940
    %v3949 = vpack.i.b16 %v3941, %v3941
    %v3951 = vunpack.c.l.s4 286326784
    %v3952 = vunpack.c.0.s8 %v3951
    %v3953 = vperm.slane %v3942, %v3952
    %v3955 = vunpack.c.l.s4 286326784
    %v3956 = vunpack.c.0.s8 %v3955
    %v3957 = vperm.slane %v3943, %v3956
    %v3959 = vunpack.c.l.s4 286326784
    %v3960 = vunpack.c.0.s8 %v3959
    %v3961 = vperm.slane %v3944, %v3960
    %v3963 = vunpack.c.l.s4 286326784
    %v3964 = vunpack.c.0.s8 %v3963
    %v3965 = vperm.slane %v3945, %v3964
    %v3967 = vunpack.c.l.s4 286326784
    %v3968 = vunpack.c.0.s8 %v3967
    %v3969 = vperm.slane %v3946, %v3968
    %v3971 = vunpack.c.l.s4 286326784
    %v3972 = vunpack.c.0.s8 %v3971
    %v3973 = vperm.slane %v3947, %v3972
    %v3975 = vunpack.c.l.s4 286326784
    %v3976 = vunpack.c.0.s8 %v3975
    %v3977 = vperm.slane %v3948, %v3976
    %v3979 = vunpack.c.l.s4 286326784
    %v3980 = vunpack.c.0.s8 %v3979
    %v3981 = vperm.slane %v3949, %v3980
    %vm3990 = vsmask.f32 7942
    %vm3991 = vmand %vm3001, %vm3990
    %v3992 = vld [vmem:[%s4] sm:$0x2]
    %v3993 = vsel %vm3991, %v3953, %v3992
    %3994 = vst [vmem:[%s4] sm:$0x2] %v3993
    %v3995 = vld [vmem:[%s4 + $0x4] sm:$0x2]
    %v3996 = vsel %vm3991, %v3957, %v3995
    %3997 = vst [vmem:[%s4 + $0x4] sm:$0x2] %v3996
    %v3998 = vld [vmem:[%s4 + $0x8] sm:$0x2]
    %v3999 = vsel %vm3991, %v3961, %v3998
    %4000 = vst [vmem:[%s4 + $0x8] sm:$0x2] %v3999
    %v4001 = vld [vmem:[%s4 + $0xc] sm:$0x2]
    %v4002 = vsel %vm3991, %v3965, %v4001
    %4003 = vst [vmem:[%s4 + $0xc] sm:$0x2] %v4002
    %v4004 = vld [vmem:[%s4 + $0x10] sm:$0x2]
    %v4005 = vsel %vm3991, %v3969, %v4004
    %4006 = vst [vmem:[%s4 + $0x10] sm:$0x2] %v4005
    %v4007 = vld [vmem:[%s4 + $0x14] sm:$0x2]
    %v4008 = vsel %vm3991, %v3973, %v4007
    %4009 = vst [vmem:[%s4 + $0x14] sm:$0x2] %v4008
    %v4010 = vld [vmem:[%s4 + $0x18] sm:$0x2]
    %v4011 = vsel %vm3991, %v3977, %v4010
    %4012 = vst [vmem:[%s4 + $0x18] sm:$0x2] %v4011
    %v4013 = vld [vmem:[%s4 + $0x1c] sm:$0x2]
    %v4014 = vsel %vm3991, %v3981, %v4013
    %4015 = vst [vmem:[%s4 + $0x1c] sm:$0x2] %v4014
    %s4016 = scalar_lea.vmem %s0, 64
    %v4017 = vld [vmem:[%s4016] sm:$0xff]
    %v4018 = vld [vmem:[%s4016 + $0x8] sm:$0xff]
    %v4019 = vunpack.c.l.bf16 %v4017
    %v4020 = vunpack.c.h.bf16 %v4017
    %v4021 = vunpack.c.l.bf16 %v4018
    %v4022 = vunpack.c.h.bf16 %v4018
    %v4023 = vld [vmem:[#allocation2] sm:$0xff]
    %v4024 = vpack.c.bf16 %v4023, %v4023
    %v4025 = vld [vmem:[#allocation4] sm:$0xff]
    %v4026 = vld [vmem:[#allocation4 + $0x8] sm:$0xff]
    %v4027 = vld [vmem:[#allocation4 + $0x10] sm:$0xff]
    %v4028 = vld [vmem:[#allocation4 + $0x18] sm:$0xff]
    %v4029 = vld [vmem:[#allocation4 + $0x20] sm:$0xff]
    %v4030 = vld [vmem:[#allocation4 + $0x28] sm:$0xff]
    %v4031 = vld [vmem:[#allocation4 + $0x30] sm:$0xff]
    %v4032 = vld [vmem:[#allocation4 + $0x38] sm:$0xff]
    %v4033 = vld [vmem:[#allocation4 + $0x40] sm:$0xff]
    %v4034 = vld [vmem:[#allocation4 + $0x48] sm:$0xff]
    %v4035 = vld [vmem:[#allocation4 + $0x50] sm:$0xff]
    %v4036 = vld [vmem:[#allocation4 + $0x58] sm:$0xff]
    %v4037 = vld [vmem:[#allocation4 + $0x60] sm:$0xff]
    %v4038 = vld [vmem:[#allocation4 + $0x68] sm:$0xff]
    %v4039 = vld [vmem:[#allocation4 + $0x70] sm:$0xff]
    %v4040 = vld [vmem:[#allocation4 + $0x78] sm:$0xff]
    %v4041 = vld [vmem:[#allocation4 + $0x80] sm:$0xff]
    %v4042 = vld [vmem:[#allocation4 + $0x88] sm:$0xff]
    %v4043 = vld [vmem:[#allocation4 + $0x90] sm:$0xff]
    %v4044 = vld [vmem:[#allocation4 + $0x98] sm:$0xff]
    %v4045 = vld [vmem:[#allocation4 + $0xa0] sm:$0xff]
    %v4046 = vld [vmem:[#allocation4 + $0xa8] sm:$0xff]
    %v4047 = vld [vmem:[#allocation4 + $0xb0] sm:$0xff]
    %v4048 = vld [vmem:[#allocation4 + $0xb8] sm:$0xff]
    %v4049 = vld [vmem:[#allocation4 + $0xc0] sm:$0xff]
    %v4050 = vld [vmem:[#allocation4 + $0xc8] sm:$0xff]
    %v4051 = vld [vmem:[#allocation4 + $0xd0] sm:$0xff]
    %v4052 = vld [vmem:[#allocation4 + $0xd8] sm:$0xff]
    %v4053 = vld [vmem:[#allocation4 + $0xe0] sm:$0xff]
    %v4054 = vld [vmem:[#allocation4 + $0xe8] sm:$0xff]
    %v4055 = vld [vmem:[#allocation4 + $0xf0] sm:$0xff]
    %v4056 = vld [vmem:[#allocation4 + $0xf8] sm:$0xff]
    %v4089 = vunpack.c.l.b16 %v4025
    %v4090 = vunpack.c.h.b16 %v4025
    %v4091 = vunpack.c.l.b16 %v4026
    %v4092 = vunpack.c.h.b16 %v4026
    %v4093 = vunpack.c.l.b16 %v4027
    %v4094 = vunpack.c.h.b16 %v4027
    %v4095 = vunpack.c.l.b16 %v4028
    %v4096 = vunpack.c.h.b16 %v4028
    %v4097 = vunpack.c.l.b16 %v4029
    %v4098 = vunpack.c.h.b16 %v4029
    %v4099 = vunpack.c.l.b16 %v4030
    %v4100 = vunpack.c.h.b16 %v4030
    %v4101 = vunpack.c.l.b16 %v4031
    %v4102 = vunpack.c.h.b16 %v4031
    %v4103 = vunpack.c.l.b16 %v4032
    %v4104 = vunpack.c.h.b16 %v4032
    %v4105 = vunpack.c.l.b16 %v4033
    %v4106 = vunpack.c.h.b16 %v4033
    %v4107 = vunpack.c.l.b16 %v4034
    %v4108 = vunpack.c.h.b16 %v4034
    %v4109 = vunpack.c.l.b16 %v4035
    %v4110 = vunpack.c.h.b16 %v4035
    %v4111 = vunpack.c.l.b16 %v4036
    %v4112 = vunpack.c.h.b16 %v4036
    %v4113 = vunpack.c.l.b16 %v4037
    %v4114 = vunpack.c.h.b16 %v4037
    %v4115 = vunpack.c.l.b16 %v4038
    %v4116 = vunpack.c.h.b16 %v4038
    %v4117 = vunpack.c.l.b16 %v4039
    %v4118 = vunpack.c.h.b16 %v4039
    %v4119 = vunpack.c.l.b16 %v4040
    %v4120 = vunpack.c.h.b16 %v4040
    %v4121 = vunpack.c.l.b16 %v4041
    %v4122 = vunpack.c.h.b16 %v4041
    %v4123 = vunpack.c.l.b16 %v4042
    %v4124 = vunpack.c.h.b16 %v4042
    %v4125 = vunpack.c.l.b16 %v4043
    %v4126 = vunpack.c.h.b16 %v4043
    %v4127 = vunpack.c.l.b16 %v4044
    %v4128 = vunpack.c.h.b16 %v4044
    %v4129 = vunpack.c.l.b16 %v4045
    %v4130 = vunpack.c.h.b16 %v4045
    %v4131 = vunpack.c.l.b16 %v4046
    %v4132 = vunpack.c.h.b16 %v4046
    %v4133 = vunpack.c.l.b16 %v4047
    %v4134 = vunpack.c.h.b16 %v4047
    %v4135 = vunpack.c.l.b16 %v4048
    %v4136 = vunpack.c.h.b16 %v4048
    %v4137 = vunpack.c.l.b16 %v4049
    %v4138 = vunpack.c.h.b16 %v4049
    %v4139 = vunpack.c.l.b16 %v4050
    %v4140 = vunpack.c.h.b16 %v4050
    %v4141 = vunpack.c.l.b16 %v4051
    %v4142 = vunpack.c.h.b16 %v4051
    %v4143 = vunpack.c.l.b16 %v4052
    %v4144 = vunpack.c.h.b16 %v4052
    %v4145 = vunpack.c.l.b16 %v4053
    %v4146 = vunpack.c.h.b16 %v4053
    %v4147 = vunpack.c.l.b16 %v4054
    %v4148 = vunpack.c.h.b16 %v4054
    %v4149 = vunpack.c.l.b16 %v4055
    %v4150 = vunpack.c.h.b16 %v4055
    %v4151 = vunpack.c.l.b16 %v4056
    %v4152 = vunpack.c.h.b16 %v4056
    %v4153 = vpack.c.b16 %v4093, %v4089
    %v4154 = vpack.c.b16 %v4094, %v4090
    %v4155 = vpack.c.b16 %v4095, %v4091
    %v4156 = vpack.c.b16 %v4096, %v4092
    %v4157 = vpack.c.b16 %v4101, %v4097
    %v4158 = vpack.c.b16 %v4102, %v4098
    %v4159 = vpack.c.b16 %v4103, %v4099
    %v4160 = vpack.c.b16 %v4104, %v4100
    %v4161 = vpack.c.b16 %v4109, %v4105
    %v4162 = vpack.c.b16 %v4110, %v4106
    %v4163 = vpack.c.b16 %v4111, %v4107
    %v4164 = vpack.c.b16 %v4112, %v4108
    %v4165 = vpack.c.b16 %v4117, %v4113
    %v4166 = vpack.c.b16 %v4118, %v4114
    %v4167 = vpack.c.b16 %v4119, %v4115
    %v4168 = vpack.c.b16 %v4120, %v4116
    %v4169 = vpack.c.b16 %v4125, %v4121
    %v4170 = vpack.c.b16 %v4126, %v4122
    %v4171 = vpack.c.b16 %v4127, %v4123
    %v4172 = vpack.c.b16 %v4128, %v4124
    %v4173 = vpack.c.b16 %v4133, %v4129
    %v4174 = vpack.c.b16 %v4134, %v4130
    %v4175 = vpack.c.b16 %v4135, %v4131
    %v4176 = vpack.c.b16 %v4136, %v4132
    %v4177 = vpack.c.b16 %v4141, %v4137
    %v4178 = vpack.c.b16 %v4142, %v4138
    %v4179 = vpack.c.b16 %v4143, %v4139
    %v4180 = vpack.c.b16 %v4144, %v4140
    %v4181 = vpack.c.b16 %v4149, %v4145
    %v4182 = vpack.c.b16 %v4150, %v4146
    %v4183 = vpack.c.b16 %v4151, %v4147
    %v4184 = vpack.c.b16 %v4152, %v4148
    %4217 = vmatpush.bf16.msra.mxu0 %v4181
    %4218 = vmatpush.bf16.msra.mxu0 %v4177
    %4219 = vmatpush.bf16.msra.mxu0 %v4173
    %4220 = vmatpush.bf16.msra.mxu0 %v4169
    %4221 = vmatpush.bf16.msra.mxu0 %v4165
    %4222 = vmatpush.bf16.msra.mxu0 %v4161
    %4223 = vmatpush.bf16.msra.mxu0 %v4157
    %4224 = vmatpush.bf16.msra.mxu0 %v4153
    %4225 = vmatmul.bf16.gmra.mxu0 %v4024
    %v4226 = vpop.f32.mrf.mxu0
    %v4227 = vadd.f32 0.0, %v4226
    %v4228 = vpop.f32.mrf.mxu0
    %4229 = vdwg.mxu0
    %4230 = vmatpush.bf16.msra.mxu0 %v4182
    %4231 = vmatpush.bf16.msra.mxu0 %v4178
    %4232 = vmatpush.bf16.msra.mxu0 %v4174
    %4233 = vmatpush.bf16.msra.mxu0 %v4170
    %4234 = vmatpush.bf16.msra.mxu0 %v4166
    %4235 = vmatpush.bf16.msra.mxu0 %v4162
    %4236 = vmatpush.bf16.msra.mxu0 %v4158
    %4237 = vmatpush.bf16.msra.mxu0 %v4154
    %4238 = vmatmul.bf16.gmra.mxu0 %v4024
    %v4239 = vpop.f32.mrf.mxu0
    %v4240 = vadd.f32 0.0, %v4239
    %v4241 = vpop.f32.mrf.mxu0
    %4242 = vdwg.mxu0
    %4243 = vmatpush.bf16.msra.mxu0 %v4183
    %4244 = vmatpush.bf16.msra.mxu0 %v4179
    %4245 = vmatpush.bf16.msra.mxu0 %v4175
    %4246 = vmatpush.bf16.msra.mxu0 %v4171
    %4247 = vmatpush.bf16.msra.mxu0 %v4167
    %4248 = vmatpush.bf16.msra.mxu0 %v4163
    %4249 = vmatpush.bf16.msra.mxu0 %v4159
    %4250 = vmatpush.bf16.msra.mxu0 %v4155
    %4251 = vmatmul.bf16.gmra.mxu0 %v4024
    %v4252 = vpop.f32.mrf.mxu0
    %v4253 = vadd.f32 0.0, %v4252
    %v4254 = vpop.f32.mrf.mxu0
    %4255 = vdwg.mxu0
    %4256 = vmatpush.bf16.msra.mxu0 %v4184
    %4257 = vmatpush.bf16.msra.mxu0 %v4180
    %4258 = vmatpush.bf16.msra.mxu0 %v4176
    %4259 = vmatpush.bf16.msra.mxu0 %v4172
    %4260 = vmatpush.bf16.msra.mxu0 %v4168
    %4261 = vmatpush.bf16.msra.mxu0 %v4164
    %4262 = vmatpush.bf16.msra.mxu0 %v4160
    %4263 = vmatpush.bf16.msra.mxu0 %v4156
    %4264 = vmatmul.bf16.gmra.mxu0 %v4024
    %v4265 = vpop.f32.mrf.mxu0
    %v4266 = vadd.f32 0.0, %v4265
    %v4267 = vpop.f32.mrf.mxu0
    %4268 = vdwg.mxu0
    %v4269 = vadd.f32 %v4019, %v4227
    %v4270 = vadd.f32 %v4020, %v4240
    %v4271 = vadd.f32 %v4021, %v4253
    %v4272 = vadd.f32 %v4022, %v4266
    %v4273 = vld [vmem:[#allocation3] sm:$0xff]
    %v4274 = vxor.u32 %v4269, 2147483648
    %v4275 = vxor.u32 %v4270, 2147483648
    %v4276 = vxor.u32 %v4271, 2147483648
    %v4277 = vmul.f32 %v4274, 1.442695
    %v4278 = vpow.pop %v4277
    %v4279 = vmul.f32 %v4275, 1.442695
    %v4280 = vpow.pop %v4279
    %v4281 = vmul.f32 %v4276, 1.442695
    %v4282 = vpow.pop %v4281
    %v4283 = vadd.f32 %v4278, 1.0
    %v4284 = vadd.f32 %v4280, 1.0
    %v4285 = vadd.f32 %v4282, 1.0
    %v4286 = vrcp.pop %v4283
    %v4287 = vmul.f32 %v4283, %v4286
    %v4288 = vsub.f32 1.0, %v4287
    %v4289 = vmul.f32 %v4286, %v4288
    %v4290 = vadd.f32 %v4286, %v4289
    %vm4291 = vweird.f32 %v4283
    %vm4292 = vweird.f32 %v4286
    %vm4293 = vmor %vm4291, %vm4292
    %v4294 = vsel %vm4293, %v4286, %v4290
    %v4295 = vand.u32 2147483647, %v4283
    %vm4296 = vcmp.eq.f32.partialorder %v4295, 8.507059e+37
    %v4297 = vand.u32 %v4283, 2147483648
    %v4298 = vor.u32 1.1754944e-38, %v4297
    %v4299 = vsel %vm4296, %v4298, %v4294
    %v4300 = vmul.f32 1.0, %v4299
    %v4301 = vrcp.pop %v4284
    %v4302 = vmul.f32 %v4284, %v4301
    %v4303 = vsub.f32 1.0, %v4302
    %v4304 = vmul.f32 %v4301, %v4303
    %v4305 = vadd.f32 %v4301, %v4304
    %vm4306 = vweird.f32 %v4284
    %vm4307 = vweird.f32 %v4301
    %vm4308 = vmor %vm4306, %vm4307
    %v4309 = vsel %vm4308, %v4301, %v4305
    %v4310 = vand.u32 2147483647, %v4284
    %vm4311 = vcmp.eq.f32.partialorder %v4310, 8.507059e+37
    %v4312 = vand.u32 %v4284, 2147483648
    %v4313 = vor.u32 1.1754944e-38, %v4312
    %v4314 = vsel %vm4311, %v4313, %v4309
    %v4315 = vmul.f32 1.0, %v4314
    %v4316 = vrcp.pop %v4285
    %v4317 = vmul.f32 %v4285, %v4316
    %v4318 = vsub.f32 1.0, %v4317
    %v4319 = vmul.f32 %v4316, %v4318
    %v4320 = vadd.f32 %v4316, %v4319
    %vm4321 = vweird.f32 %v4285
    %vm4322 = vweird.f32 %v4316
    %vm4323 = vmor %vm4321, %vm4322
    %v4324 = vsel %vm4323, %v4316, %v4320
    %v4325 = vand.u32 2147483647, %v4285
    %vm4326 = vcmp.eq.f32.partialorder %v4325, 8.507059e+37
    %v4327 = vand.u32 %v4285, 2147483648
    %v4328 = vor.u32 1.1754944e-38, %v4327
    %v4329 = vsel %vm4326, %v4328, %v4324
    %v4330 = vmul.f32 1.0, %v4329
    %v4331 = vtanh.pop %v4272
    %v4332 = vmul.f32 %v4315, %v4273
    %v4333 = vmul.f32 %v4300, %v4331
    %v4334 = vadd.f32 %v4332, %v4333
    %v4335 = vtanh.pop %v4334
    %v4336 = vmul.f32 %v4330, %v4335
    %4337 = vst [vmem:[#allocation2] sm:$0xff] %v4336
    %4338 = vst [vmem:[#allocation3] sm:$0xff] %v4334
    %v4339 = vld [vmem:[%s379] sm:$0xff]
    %v4340 = vpack.c.bf16 %v4336, %v4336
    %v4341 = vpack.c.bf16 %v4339, %v4339
    %v4342 = vld [vmem:[#allocation6] sm:$0xff]
    %v4343 = vld [vmem:[#allocation6 + $0x8] sm:$0xff]
    %v4344 = vld [vmem:[#allocation6 + $0x10] sm:$0xff]
    %v4345 = vld [vmem:[#allocation6 + $0x18] sm:$0xff]
    %v4346 = vld [vmem:[#allocation6 + $0x20] sm:$0xff]
    %v4347 = vld [vmem:[#allocation6 + $0x28] sm:$0xff]
    %v4348 = vld [vmem:[#allocation6 + $0x30] sm:$0xff]
    %v4349 = vld [vmem:[#allocation6 + $0x38] sm:$0xff]
    %v4350 = vld [vmem:[#allocation6 + $0x40] sm:$0xff]
    %v4351 = vld [vmem:[#allocation6 + $0x48] sm:$0xff]
    %v4352 = vld [vmem:[#allocation6 + $0x50] sm:$0xff]
    %v4353 = vld [vmem:[#allocation6 + $0x58] sm:$0xff]
    %v4354 = vld [vmem:[#allocation6 + $0x60] sm:$0xff]
    %v4355 = vld [vmem:[#allocation6 + $0x68] sm:$0xff]
    %v4356 = vld [vmem:[#allocation6 + $0x70] sm:$0xff]
    %v4357 = vld [vmem:[#allocation6 + $0x78] sm:$0xff]
    %v4358 = vld [vmem:[#allocation6 + $0x80] sm:$0xff]
    %v4359 = vld [vmem:[#allocation6 + $0x88] sm:$0xff]
    %v4360 = vld [vmem:[#allocation6 + $0x90] sm:$0xff]
    %v4361 = vld [vmem:[#allocation6 + $0x98] sm:$0xff]
    %v4362 = vld [vmem:[#allocation6 + $0xa0] sm:$0xff]
    %v4363 = vld [vmem:[#allocation6 + $0xa8] sm:$0xff]
    %v4364 = vld [vmem:[#allocation6 + $0xb0] sm:$0xff]
    %v4365 = vld [vmem:[#allocation6 + $0xb8] sm:$0xff]
    %v4366 = vld [vmem:[#allocation6 + $0xc0] sm:$0xff]
    %v4367 = vld [vmem:[#allocation6 + $0xc8] sm:$0xff]
    %v4368 = vld [vmem:[#allocation6 + $0xd0] sm:$0xff]
    %v4369 = vld [vmem:[#allocation6 + $0xd8] sm:$0xff]
    %v4370 = vld [vmem:[#allocation6 + $0xe0] sm:$0xff]
    %v4371 = vld [vmem:[#allocation6 + $0xe8] sm:$0xff]
    %v4372 = vld [vmem:[#allocation6 + $0xf0] sm:$0xff]
    %v4373 = vld [vmem:[#allocation6 + $0xf8] sm:$0xff]
    %v4374 = vld [vmem:[#allocation6 + $0x100] sm:$0xff]
    %v4375 = vld [vmem:[#allocation6 + $0x108] sm:$0xff]
    %v4376 = vld [vmem:[#allocation6 + $0x110] sm:$0xff]
    %v4377 = vld [vmem:[#allocation6 + $0x118] sm:$0xff]
    %v4378 = vld [vmem:[#allocation6 + $0x120] sm:$0xff]
    %v4379 = vld [vmem:[#allocation6 + $0x128] sm:$0xff]
    %v4380 = vld [vmem:[#allocation6 + $0x130] sm:$0xff]
    %v4381 = vld [vmem:[#allocation6 + $0x138] sm:$0xff]
    %v4382 = vld [vmem:[#allocation6 + $0x140] sm:$0xff]
    %v4383 = vld [vmem:[#allocation6 + $0x148] sm:$0xff]
    %v4384 = vld [vmem:[#allocation6 + $0x150] sm:$0xff]
    %v4385 = vld [vmem:[#allocation6 + $0x158] sm:$0xff]
    %v4386 = vld [vmem:[#allocation6 + $0x160] sm:$0xff]
    %v4387 = vld [vmem:[#allocation6 + $0x168] sm:$0xff]
    %v4388 = vld [vmem:[#allocation6 + $0x170] sm:$0xff]
    %v4389 = vld [vmem:[#allocation6 + $0x178] sm:$0xff]
    %v4390 = vld [vmem:[#allocation6 + $0x180] sm:$0xff]
    %v4391 = vld [vmem:[#allocation6 + $0x188] sm:$0xff]
    %v4392 = vld [vmem:[#allocation6 + $0x190] sm:$0xff]
    %v4393 = vld [vmem:[#allocation6 + $0x198] sm:$0xff]
    %v4394 = vld [vmem:[#allocation6 + $0x1a0] sm:$0xff]
    %v4395 = vld [vmem:[#allocation6 + $0x1a8] sm:$0xff]
    %v4396 = vld [vmem:[#allocation6 + $0x1b0] sm:$0xff]
    %v4397 = vld [vmem:[#allocation6 + $0x1b8] sm:$0xff]
    %v4398 = vld [vmem:[#allocation6 + $0x1c0] sm:$0xff]
    %v4399 = vld [vmem:[#allocation6 + $0x1c8] sm:$0xff]
    %v4400 = vld [vmem:[#allocation6 + $0x1d0] sm:$0xff]
    %v4401 = vld [vmem:[#allocation6 + $0x1d8] sm:$0xff]
    %v4402 = vld [vmem:[#allocation6 + $0x1e0] sm:$0xff]
    %v4403 = vld [vmem:[#allocation6 + $0x1e8] sm:$0xff]
    %v4404 = vld [vmem:[#allocation6 + $0x1f0] sm:$0xff]
    %v4405 = vld [vmem:[#allocation6 + $0x1f8] sm:$0xff]
    %v4406 = vld [vmem:[%s3] sm:$0xf]
    %v4408 = vperm.slane %v4406, 0
    %v4409 = vperm.slane %v4406, 1
    %v4410 = vperm.slane %v4406, 2
    %v4411 = vperm.slane %v4406, 3
    %v4480 = vunpack.c.l.b16 %v4342
    %v4481 = vunpack.c.h.b16 %v4342
    %v4482 = vunpack.c.l.b16 %v4343
    %v4483 = vunpack.c.h.b16 %v4343
    %v4484 = vunpack.c.l.b16 %v4344
    %v4485 = vunpack.c.h.b16 %v4344
    %v4486 = vunpack.c.l.b16 %v4345
    %v4487 = vunpack.c.h.b16 %v4345
    %v4488 = vunpack.c.l.b16 %v4346
    %v4489 = vunpack.c.h.b16 %v4346
    %v4490 = vunpack.c.l.b16 %v4347
    %v4491 = vunpack.c.h.b16 %v4347
    %v4492 = vunpack.c.l.b16 %v4348
    %v4493 = vunpack.c.h.b16 %v4348
    %v4494 = vunpack.c.l.b16 %v4349
    %v4495 = vunpack.c.h.b16 %v4349
    %v4496 = vunpack.c.l.b16 %v4350
    %v4497 = vunpack.c.h.b16 %v4350
    %v4498 = vunpack.c.l.b16 %v4351
    %v4499 = vunpack.c.h.b16 %v4351
    %v4500 = vunpack.c.l.b16 %v4352
    %v4501 = vunpack.c.h.b16 %v4352
    %v4502 = vunpack.c.l.b16 %v4353
    %v4503 = vunpack.c.h.b16 %v4353
    %v4504 = vunpack.c.l.b16 %v4354
    %v4505 = vunpack.c.h.b16 %v4354
    %v4506 = vunpack.c.l.b16 %v4355
    %v4507 = vunpack.c.h.b16 %v4355
    %v4508 = vunpack.c.l.b16 %v4356
    %v4509 = vunpack.c.h.b16 %v4356
    %v4510 = vunpack.c.l.b16 %v4357
    %v4511 = vunpack.c.h.b16 %v4357
    %v4512 = vunpack.c.l.b16 %v4358
    %v4513 = vunpack.c.h.b16 %v4358
    %v4514 = vunpack.c.l.b16 %v4359
    %v4515 = vunpack.c.h.b16 %v4359
    %v4516 = vunpack.c.l.b16 %v4360
    %v4517 = vunpack.c.h.b16 %v4360
    %v4518 = vunpack.c.l.b16 %v4361
    %v4519 = vunpack.c.h.b16 %v4361
    %v4520 = vunpack.c.l.b16 %v4362
    %v4521 = vunpack.c.h.b16 %v4362
    %v4522 = vunpack.c.l.b16 %v4363
    %v4523 = vunpack.c.h.b16 %v4363
    %v4524 = vunpack.c.l.b16 %v4364
    %v4525 = vunpack.c.h.b16 %v4364
    %v4526 = vunpack.c.l.b16 %v4365
    %v4527 = vunpack.c.h.b16 %v4365
    %v4528 = vunpack.c.l.b16 %v4366
    %v4529 = vunpack.c.h.b16 %v4366
    %v4530 = vunpack.c.l.b16 %v4367
    %v4531 = vunpack.c.h.b16 %v4367
    %v4532 = vunpack.c.l.b16 %v4368
    %v4533 = vunpack.c.h.b16 %v4368
    %v4534 = vunpack.c.l.b16 %v4369
    %v4535 = vunpack.c.h.b16 %v4369
    %v4536 = vunpack.c.l.b16 %v4370
    %v4537 = vunpack.c.h.b16 %v4370
    %v4538 = vunpack.c.l.b16 %v4371
    %v4539 = vunpack.c.h.b16 %v4371
    %v4540 = vunpack.c.l.b16 %v4372
    %v4541 = vunpack.c.h.b16 %v4372
    %v4542 = vunpack.c.l.b16 %v4373
    %v4543 = vunpack.c.h.b16 %v4373
    %v4544 = vunpack.c.l.b16 %v4374
    %v4545 = vunpack.c.h.b16 %v4374
    %v4546 = vunpack.c.l.b16 %v4375
    %v4547 = vunpack.c.h.b16 %v4375
    %v4548 = vunpack.c.l.b16 %v4376
    %v4549 = vunpack.c.h.b16 %v4376
    %v4550 = vunpack.c.l.b16 %v4377
    %v4551 = vunpack.c.h.b16 %v4377
    %v4552 = vunpack.c.l.b16 %v4378
    %v4553 = vunpack.c.h.b16 %v4378
    %v4554 = vunpack.c.l.b16 %v4379
    %v4555 = vunpack.c.h.b16 %v4379
    %v4556 = vunpack.c.l.b16 %v4380
    %v4557 = vunpack.c.h.b16 %v4380
    %v4558 = vunpack.c.l.b16 %v4381
    %v4559 = vunpack.c.h.b16 %v4381
    %v4560 = vunpack.c.l.b16 %v4382
    %v4561 = vunpack.c.h.b16 %v4382
    %v4562 = vunpack.c.l.b16 %v4383
    %v4563 = vunpack.c.h.b16 %v4383
    %v4564 = vunpack.c.l.b16 %v4384
    %v4565 = vunpack.c.h.b16 %v4384
    %v4566 = vunpack.c.l.b16 %v4385
    %v4567 = vunpack.c.h.b16 %v4385
    %v4568 = vunpack.c.l.b16 %v4386
    %v4569 = vunpack.c.h.b16 %v4386
    %v4570 = vunpack.c.l.b16 %v4387
    %v4571 = vunpack.c.h.b16 %v4387
    %v4572 = vunpack.c.l.b16 %v4388
    %v4573 = vunpack.c.h.b16 %v4388
    %v4574 = vunpack.c.l.b16 %v4389
    %v4575 = vunpack.c.h.b16 %v4389
    %v4576 = vunpack.c.l.b16 %v4390
    %v4577 = vunpack.c.h.b16 %v4390
    %v4578 = vunpack.c.l.b16 %v4391
    %v4579 = vunpack.c.h.b16 %v4391
    %v4580 = vunpack.c.l.b16 %v4392
    %v4581 = vunpack.c.h.b16 %v4392
    %v4582 = vunpack.c.l.b16 %v4393
    %v4583 = vunpack.c.h.b16 %v4393
    %v4584 = vunpack.c.l.b16 %v4394
    %v4585 = vunpack.c.h.b16 %v4394
    %v4586 = vunpack.c.l.b16 %v4395
    %v4587 = vunpack.c.h.b16 %v4395
    %v4588 = vunpack.c.l.b16 %v4396
    %v4589 = vunpack.c.h.b16 %v4396
    %v4590 = vunpack.c.l.b16 %v4397
    %v4591 = vunpack.c.h.b16 %v4397
    %v4592 = vunpack.c.l.b16 %v4398
    %v4593 = vunpack.c.h.b16 %v4398
    %v4594 = vunpack.c.l.b16 %v4399
    %v4595 = vunpack.c.h.b16 %v4399
    %v4596 = vunpack.c.l.b16 %v4400
    %v4597 = vunpack.c.h.b16 %v4400
    %v4598 = vunpack.c.l.b16 %v4401
    %v4599 = vunpack.c.h.b16 %v4401
    %v4600 = vunpack.c.l.b16 %v4402
    %v4601 = vunpack.c.h.b16 %v4402
    %v4602 = vunpack.c.l.b16 %v4403
    %v4603 = vunpack.c.h.b16 %v4403
    %v4604 = vunpack.c.l.b16 %v4404
    %v4605 = vunpack.c.h.b16 %v4404
    %v4606 = vunpack.c.l.b16 %v4405
    %v4607 = vunpack.c.h.b16 %v4405
    %v4608 = vpack.c.b16 %v4484, %v4480
    %v4609 = vpack.c.b16 %v4485, %v4481
    %v4610 = vpack.c.b16 %v4486, %v4482
    %v4611 = vpack.c.b16 %v4487, %v4483
    %v4612 = vpack.c.b16 %v4492, %v4488
    %v4613 = vpack.c.b16 %v4493, %v4489
    %v4614 = vpack.c.b16 %v4494, %v4490
    %v4615 = vpack.c.b16 %v4495, %v4491
    %v4616 = vpack.c.b16 %v4500, %v4496
    %v4617 = vpack.c.b16 %v4501, %v4497
    %v4618 = vpack.c.b16 %v4502, %v4498
    %v4619 = vpack.c.b16 %v4503, %v4499
    %v4620 = vpack.c.b16 %v4508, %v4504
    %v4621 = vpack.c.b16 %v4509, %v4505
    %v4622 = vpack.c.b16 %v4510, %v4506
    %v4623 = vpack.c.b16 %v4511, %v4507
    %v4624 = vpack.c.b16 %v4516, %v4512
    %v4625 = vpack.c.b16 %v4517, %v4513
    %v4626 = vpack.c.b16 %v4518, %v4514
    %v4627 = vpack.c.b16 %v4519, %v4515
    %v4628 = vpack.c.b16 %v4524, %v4520
    %v4629 = vpack.c.b16 %v4525, %v4521
    %v4630 = vpack.c.b16 %v4526, %v4522
    %v4631 = vpack.c.b16 %v4527, %v4523
    %v4632 = vpack.c.b16 %v4532, %v4528
    %v4633 = vpack.c.b16 %v4533, %v4529
    %v4634 = vpack.c.b16 %v4534, %v4530
    %v4635 = vpack.c.b16 %v4535, %v4531
    %v4636 = vpack.c.b16 %v4540, %v4536
    %v4637 = vpack.c.b16 %v4541, %v4537
    %v4638 = vpack.c.b16 %v4542, %v4538
    %v4639 = vpack.c.b16 %v4543, %v4539
    %v4640 = vpack.c.b16 %v4548, %v4544
    %v4641 = vpack.c.b16 %v4549, %v4545
    %v4642 = vpack.c.b16 %v4550, %v4546
    %v4643 = vpack.c.b16 %v4551, %v4547
    %v4644 = vpack.c.b16 %v4556, %v4552
    %v4645 = vpack.c.b16 %v4557, %v4553
    %v4646 = vpack.c.b16 %v4558, %v4554
    %v4647 = vpack.c.b16 %v4559, %v4555
    %v4648 = vpack.c.b16 %v4564, %v4560
    %v4649 = vpack.c.b16 %v4565, %v4561
    %v4650 = vpack.c.b16 %v4566, %v4562
    %v4651 = vpack.c.b16 %v4567, %v4563
    %v4652 = vpack.c.b16 %v4572, %v4568
    %v4653 = vpack.c.b16 %v4573, %v4569
    %v4654 = vpack.c.b16 %v4574, %v4570
    %v4655 = vpack.c.b16 %v4575, %v4571
    %v4656 = vpack.c.b16 %v4580, %v4576
    %v4657 = vpack.c.b16 %v4581, %v4577
    %v4658 = vpack.c.b16 %v4582, %v4578
    %v4659 = vpack.c.b16 %v4583, %v4579
    %v4660 = vpack.c.b16 %v4588, %v4584
    %v4661 = vpack.c.b16 %v4589, %v4585
    %v4662 = vpack.c.b16 %v4590, %v4586
    %v4663 = vpack.c.b16 %v4591, %v4587
    %v4664 = vpack.c.b16 %v4596, %v4592
    %v4665 = vpack.c.b16 %v4597, %v4593
    %v4666 = vpack.c.b16 %v4598, %v4594
    %v4667 = vpack.c.b16 %v4599, %v4595
    %v4668 = vpack.c.b16 %v4604, %v4600
    %v4669 = vpack.c.b16 %v4605, %v4601
    %v4670 = vpack.c.b16 %v4606, %v4602
    %v4671 = vpack.c.b16 %v4607, %v4603
    %4736 = vmatpush.bf16.msra.mxu0 %v4636
    %4737 = vmatpush.bf16.msra.mxu0 %v4632
    %4738 = vmatpush.bf16.msra.mxu0 %v4628
    %4739 = vmatpush.bf16.msra.mxu0 %v4624
    %4740 = vmatpush.bf16.msra.mxu0 %v4620
    %4741 = vmatpush.bf16.msra.mxu0 %v4616
    %4742 = vmatpush.bf16.msra.mxu0 %v4612
    %4743 = vmatpush.bf16.msra.mxu0 %v4608
    %4744 = vmatmul.bf16.gmra.mxu0 %v4340
    %v4745 = vpop.f32.mrf.mxu0
    %v4746 = vadd.f32 %v4408, %v4745
    %v4747 = vpop.f32.mrf.mxu0
    %4748 = vdwg.mxu0
    %4749 = vmatpush.bf16.msra.mxu0 %v4668
    %4750 = vmatpush.bf16.msra.mxu0 %v4664
    %4751 = vmatpush.bf16.msra.mxu0 %v4660
    %4752 = vmatpush.bf16.msra.mxu0 %v4656
    %4753 = vmatpush.bf16.msra.mxu0 %v4652
    %4754 = vmatpush.bf16.msra.mxu0 %v4648
    %4755 = vmatpush.bf16.msra.mxu0 %v4644
    %4756 = vmatpush.bf16.msra.mxu0 %v4640
    %4757 = vmatmul.bf16.gmra.mxu0 %v4341
    %v4758 = vpop.f32.mrf.mxu0
    %v4759 = vadd.f32 %v4746, %v4758
    %v4760 = vpop.f32.mrf.mxu0
    %4761 = vdwg.mxu0
    %4762 = vmatpush.bf16.msra.mxu0 %v4637
    %4763 = vmatpush.bf16.msra.mxu0 %v4633
    %4764 = vmatpush.bf16.msra.mxu0 %v4629
    %4765 = vmatpush.bf16.msra.mxu0 %v4625
    %4766 = vmatpush.bf16.msra.mxu0 %v4621
    %4767 = vmatpush.bf16.msra.mxu0 %v4617
    %4768 = vmatpush.bf16.msra.mxu0 %v4613
    %4769 = vmatpush.bf16.msra.mxu0 %v4609
    %4770 = vmatmul.bf16.gmra.mxu0 %v4340
    %v4771 = vpop.f32.mrf.mxu0
    %v4772 = vadd.f32 %v4409, %v4771
    %v4773 = vpop.f32.mrf.mxu0
    %4774 = vdwg.mxu0
    %4775 = vmatpush.bf16.msra.mxu0 %v4669
    %4776 = vmatpush.bf16.msra.mxu0 %v4665
    %4777 = vmatpush.bf16.msra.mxu0 %v4661
    %4778 = vmatpush.bf16.msra.mxu0 %v4657
    %4779 = vmatpush.bf16.msra.mxu0 %v4653
    %4780 = vmatpush.bf16.msra.mxu0 %v4649
    %4781 = vmatpush.bf16.msra.mxu0 %v4645
    %4782 = vmatpush.bf16.msra.mxu0 %v4641
    %4783 = vmatmul.bf16.gmra.mxu0 %v4341
    %v4784 = vpop.f32.mrf.mxu0
    %v4785 = vadd.f32 %v4772, %v4784
    %v4786 = vpop.f32.mrf.mxu0
    %4787 = vdwg.mxu0
    %4788 = vmatpush.bf16.msra.mxu0 %v4638
    %4789 = vmatpush.bf16.msra.mxu0 %v4634
    %4790 = vmatpush.bf16.msra.mxu0 %v4630
    %4791 = vmatpush.bf16.msra.mxu0 %v4626
    %4792 = vmatpush.bf16.msra.mxu0 %v4622
    %4793 = vmatpush.bf16.msra.mxu0 %v4618
    %4794 = vmatpush.bf16.msra.mxu0 %v4614
    %4795 = vmatpush.bf16.msra.mxu0 %v4610
    %4796 = vmatmul.bf16.gmra.mxu0 %v4340
    %v4797 = vpop.f32.mrf.mxu0
    %v4798 = vadd.f32 %v4410, %v4797
    %v4799 = vpop.f32.mrf.mxu0
    %4800 = vdwg.mxu0
    %4801 = vmatpush.bf16.msra.mxu0 %v4670
    %4802 = vmatpush.bf16.msra.mxu0 %v4666
    %4803 = vmatpush.bf16.msra.mxu0 %v4662
    %4804 = vmatpush.bf16.msra.mxu0 %v4658
    %4805 = vmatpush.bf16.msra.mxu0 %v4654
    %4806 = vmatpush.bf16.msra.mxu0 %v4650
    %4807 = vmatpush.bf16.msra.mxu0 %v4646
    %4808 = vmatpush.bf16.msra.mxu0 %v4642
    %4809 = vmatmul.bf16.gmra.mxu0 %v4341
    %v4810 = vpop.f32.mrf.mxu0
    %v4811 = vadd.f32 %v4798, %v4810
    %v4812 = vpop.f32.mrf.mxu0
    %4813 = vdwg.mxu0
    %4814 = vmatpush.bf16.msra.mxu0 %v4639
    %4815 = vmatpush.bf16.msra.mxu0 %v4635
    %4816 = vmatpush.bf16.msra.mxu0 %v4631
    %4817 = vmatpush.bf16.msra.mxu0 %v4627
    %4818 = vmatpush.bf16.msra.mxu0 %v4623
    %4819 = vmatpush.bf16.msra.mxu0 %v4619
    %4820 = vmatpush.bf16.msra.mxu0 %v4615
    %4821 = vmatpush.bf16.msra.mxu0 %v4611
    %4822 = vmatmul.bf16.gmra.mxu0 %v4340
    %v4823 = vpop.f32.mrf.mxu0
    %v4824 = vadd.f32 %v4411, %v4823
    %v4825 = vpop.f32.mrf.mxu0
    %4826 = vdwg.mxu0
    %4827 = vmatpush.bf16.msra.mxu0 %v4671
    %4828 = vmatpush.bf16.msra.mxu0 %v4667
    %4829 = vmatpush.bf16.msra.mxu0 %v4663
    %4830 = vmatpush.bf16.msra.mxu0 %v4659
    %4831 = vmatpush.bf16.msra.mxu0 %v4655
    %4832 = vmatpush.bf16.msra.mxu0 %v4651
    %4833 = vmatpush.bf16.msra.mxu0 %v4647
    %4834 = vmatpush.bf16.msra.mxu0 %v4643
    %4835 = vmatmul.bf16.gmra.mxu0 %v4341
    %v4836 = vpop.f32.mrf.mxu0
    %v4837 = vadd.f32 %v4824, %v4836
    %v4838 = vpop.f32.mrf.mxu0
    %4839 = vdwg.mxu0
    %v4840 = vld [vmem:[%s881] sm:$0xff]
    %v4841 = vxor.u32 %v4759, 2147483648
    %v4842 = vxor.u32 %v4785, 2147483648
    %v4843 = vxor.u32 %v4811, 2147483648
    %v4844 = vmul.f32 %v4841, 1.442695
    %v4845 = vpow.pop %v4844
    %v4846 = vmul.f32 %v4842, 1.442695
    %v4847 = vpow.pop %v4846
    %v4848 = vmul.f32 %v4843, 1.442695
    %v4849 = vpow.pop %v4848
    %v4850 = vadd.f32 %v4845, 1.0
    %v4851 = vadd.f32 %v4847, 1.0
    %v4852 = vadd.f32 %v4849, 1.0
    %v4853 = vrcp.pop %v4850
    %v4854 = vmul.f32 %v4850, %v4853
    %v4855 = vsub.f32 1.0, %v4854
    %v4856 = vmul.f32 %v4853, %v4855
    %v4857 = vadd.f32 %v4853, %v4856
    %vm4858 = vweird.f32 %v4850
    %vm4859 = vweird.f32 %v4853
    %vm4860 = vmor %vm4858, %vm4859
    %v4861 = vsel %vm4860, %v4853, %v4857
    %v4862 = vand.u32 2147483647, %v4850
    %vm4863 = vcmp.eq.f32.partialorder %v4862, 8.507059e+37
    %v4864 = vand.u32 %v4850, 2147483648
    %v4865 = vor.u32 1.1754944e-38, %v4864
    %v4866 = vsel %vm4863, %v4865, %v4861
    %v4867 = vmul.f32 1.0, %v4866
    %v4868 = vrcp.pop %v4851
    %v4869 = vmul.f32 %v4851, %v4868
    %v4870 = vsub.f32 1.0, %v4869
    %v4871 = vmul.f32 %v4868, %v4870
    %v4872 = vadd.f32 %v4868, %v4871
    %vm4873 = vweird.f32 %v4851
    %vm4874 = vweird.f32 %v4868
    %vm4875 = vmor %vm4873, %vm4874
    %v4876 = vsel %vm4875, %v4868, %v4872
    %v4877 = vand.u32 2147483647, %v4851
    %vm4878 = vcmp.eq.f32.partialorder %v4877, 8.507059e+37
    %v4879 = vand.u32 %v4851, 2147483648
    %v4880 = vor.u32 1.1754944e-38, %v4879
    %v4881 = vsel %vm4878, %v4880, %v4876
    %v4882 = vmul.f32 1.0, %v4881
    %v4883 = vrcp.pop %v4852
    %v4884 = vmul.f32 %v4852, %v4883
    %v4885 = vsub.f32 1.0, %v4884
    %v4886 = vmul.f32 %v4883, %v4885
    %v4887 = vadd.f32 %v4883, %v4886
    %vm4888 = vweird.f32 %v4852
    %vm4889 = vweird.f32 %v4883
    %vm4890 = vmor %vm4888, %vm4889
    %v4891 = vsel %vm4890, %v4883, %v4887
    %v4892 = vand.u32 2147483647, %v4852
    %vm4893 = vcmp.eq.f32.partialorder %v4892, 8.507059e+37
    %v4894 = vand.u32 %v4852, 2147483648
    %v4895 = vor.u32 1.1754944e-38, %v4894
    %v4896 = vsel %vm4893, %v4895, %v4891
    %v4897 = vmul.f32 1.0, %v4896
    %v4898 = vtanh.pop %v4837
    %v4899 = vmul.f32 %v4882, %v4840
    %v4900 = vmul.f32 %v4867, %v4898
    %v4901 = vadd.f32 %v4899, %v4900
    %v4902 = vtanh.pop %v4901
    %v4903 = vmul.f32 %v4897, %v4902
    %4904 = vst [vmem:[%s379] sm:$0xff] %v4903
    %4905 = vst [vmem:[%s881] sm:$0xff] %v4901
    %v4906 = vpack.c.bf16 %v4903, %v4903
    %v4908 = vrot.slane %v4906, 3
    %v4911 = vsel %vm951, %v4906, %v4908
    %v4913 = vsel %vm956, %v4906, %v4908
    %v4915 = vrot.slane %v4913, 1
    %v4916 = vsel %vm960, %v4906, %v4908
    %v4918 = vrot.slane %v4916, 2
    %v4919 = vsel %vm964, %v4906, %v4908
    %v4921 = vrot.slane %v4919, 3
    %v4922 = vunpack.i.l.s16 %v4911
    %v4923 = vunpack.i.h.s16 %v4911
    %v4924 = vunpack.i.l.s16 %v4915
    %v4925 = vunpack.i.h.s16 %v4915
    %v4926 = vunpack.i.l.s16 %v4918
    %v4927 = vunpack.i.h.s16 %v4918
    %v4928 = vunpack.i.l.s16 %v4921
    %v4929 = vunpack.i.h.s16 %v4921
    %v4930 = vpack.i.b16 %v4922, %v4922
    %v4931 = vpack.i.b16 %v4923, %v4923
    %v4932 = vpack.i.b16 %v4924, %v4924
    %v4933 = vpack.i.b16 %v4925, %v4925
    %v4934 = vpack.i.b16 %v4926, %v4926
    %v4935 = vpack.i.b16 %v4927, %v4927
    %v4936 = vpack.i.b16 %v4928, %v4928
    %v4937 = vpack.i.b16 %v4929, %v4929
    %v4939 = vunpack.c.l.s4 286326784
    %v4940 = vunpack.c.0.s8 %v4939
    %v4941 = vperm.slane %v4930, %v4940
    %v4943 = vunpack.c.l.s4 286326784
    %v4944 = vunpack.c.0.s8 %v4943
    %v4945 = vperm.slane %v4931, %v4944
    %v4947 = vunpack.c.l.s4 286326784
    %v4948 = vunpack.c.0.s8 %v4947
    %v4949 = vperm.slane %v4932, %v4948
    %v4951 = vunpack.c.l.s4 286326784
    %v4952 = vunpack.c.0.s8 %v4951
    %v4953 = vperm.slane %v4933, %v4952
    %v4955 = vunpack.c.l.s4 286326784
    %v4956 = vunpack.c.0.s8 %v4955
    %v4957 = vperm.slane %v4934, %v4956
    %v4959 = vunpack.c.l.s4 286326784
    %v4960 = vunpack.c.0.s8 %v4959
    %v4961 = vperm.slane %v4935, %v4960
    %v4963 = vunpack.c.l.s4 286326784
    %v4964 = vunpack.c.0.s8 %v4963
    %v4965 = vperm.slane %v4936, %v4964
    %v4967 = vunpack.c.l.s4 286326784
    %v4968 = vunpack.c.0.s8 %v4967
    %v4969 = vperm.slane %v4937, %v4968
    %vm4978 = vcmask 1042434
    %vm4979 = vsmask.f32 2304
    %vm4980 = vmand %vm4978, %vm4979
    %v4981 = vld [vmem:[%s4] sm:$0x4]
    %v4982 = vsel %vm4980, %v4941, %v4981
    %4983 = vst [vmem:[%s4] sm:$0x4] %v4982
    %v4984 = vld [vmem:[%s4 + $0x4] sm:$0x4]
    %v4985 = vsel %vm4980, %v4945, %v4984
    %4986 = vst [vmem:[%s4 + $0x4] sm:$0x4] %v4985
    %v4987 = vld [vmem:[%s4 + $0x8] sm:$0x4]
    %v4988 = vsel %vm4980, %v4949, %v4987
    %4989 = vst [vmem:[%s4 + $0x8] sm:$0x4] %v4988
    %v4990 = vld [vmem:[%s4 + $0xc] sm:$0x4]
    %v4991 = vsel %vm4980, %v4953, %v4990
    %4992 = vst [vmem:[%s4 + $0xc] sm:$0x4] %v4991
    %v4993 = vld [vmem:[%s4 + $0x10] sm:$0x4]
    %v4994 = vsel %vm4980, %v4957, %v4993
    %4995 = vst [vmem:[%s4 + $0x10] sm:$0x4] %v4994
    %v4996 = vld [vmem:[%s4 + $0x14] sm:$0x4]
    %v4997 = vsel %vm4980, %v4961, %v4996
    %4998 = vst [vmem:[%s4 + $0x14] sm:$0x4] %v4997
    %v4999 = vld [vmem:[%s4 + $0x18] sm:$0x4]
    %v5000 = vsel %vm4980, %v4965, %v4999
    %5001 = vst [vmem:[%s4 + $0x18] sm:$0x4] %v5000
    %v5002 = vld [vmem:[%s4 + $0x1c] sm:$0x4]
    %v5003 = vsel %vm4980, %v4969, %v5002
    %5004 = vst [vmem:[%s4 + $0x1c] sm:$0x4] %v5003
    %s5005 = scalar_lea.vmem %s0, 80
    %v5006 = vld [vmem:[%s5005] sm:$0xff]
    %v5007 = vld [vmem:[%s5005 + $0x8] sm:$0xff]
    %v5008 = vunpack.c.l.bf16 %v5006
    %v5009 = vunpack.c.h.bf16 %v5006
    %v5010 = vunpack.c.l.bf16 %v5007
    %v5011 = vunpack.c.h.bf16 %v5007
    %v5012 = vld [vmem:[#allocation2] sm:$0xff]
    %v5013 = vpack.c.bf16 %v5012, %v5012
    %v5014 = vld [vmem:[#allocation4] sm:$0xff]
    %v5015 = vld [vmem:[#allocation4 + $0x8] sm:$0xff]
    %v5016 = vld [vmem:[#allocation4 + $0x10] sm:$0xff]
    %v5017 = vld [vmem:[#allocation4 + $0x18] sm:$0xff]
    %v5018 = vld [vmem:[#allocation4 + $0x20] sm:$0xff]
    %v5019 = vld [vmem:[#allocation4 + $0x28] sm:$0xff]
    %v5020 = vld [vmem:[#allocation4 + $0x30] sm:$0xff]
    %v5021 = vld [vmem:[#allocation4 + $0x38] sm:$0xff]
    %v5022 = vld [vmem:[#allocation4 + $0x40] sm:$0xff]
    %v5023 = vld [vmem:[#allocation4 + $0x48] sm:$0xff]
    %v5024 = vld [vmem:[#allocation4 + $0x50] sm:$0xff]
    %v5025 = vld [vmem:[#allocation4 + $0x58] sm:$0xff]
    %v5026 = vld [vmem:[#allocation4 + $0x60] sm:$0xff]
    %v5027 = vld [vmem:[#allocation4 + $0x68] sm:$0xff]
    %v5028 = vld [vmem:[#allocation4 + $0x70] sm:$0xff]
    %v5029 = vld [vmem:[#allocation4 + $0x78] sm:$0xff]
    %v5030 = vld [vmem:[#allocation4 + $0x80] sm:$0xff]
    %v5031 = vld [vmem:[#allocation4 + $0x88] sm:$0xff]
    %v5032 = vld [vmem:[#allocation4 + $0x90] sm:$0xff]
    %v5033 = vld [vmem:[#allocation4 + $0x98] sm:$0xff]
    %v5034 = vld [vmem:[#allocation4 + $0xa0] sm:$0xff]
    %v5035 = vld [vmem:[#allocation4 + $0xa8] sm:$0xff]
    %v5036 = vld [vmem:[#allocation4 + $0xb0] sm:$0xff]
    %v5037 = vld [vmem:[#allocation4 + $0xb8] sm:$0xff]
    %v5038 = vld [vmem:[#allocation4 + $0xc0] sm:$0xff]
    %v5039 = vld [vmem:[#allocation4 + $0xc8] sm:$0xff]
    %v5040 = vld [vmem:[#allocation4 + $0xd0] sm:$0xff]
    %v5041 = vld [vmem:[#allocation4 + $0xd8] sm:$0xff]
    %v5042 = vld [vmem:[#allocation4 + $0xe0] sm:$0xff]
    %v5043 = vld [vmem:[#allocation4 + $0xe8] sm:$0xff]
    %v5044 = vld [vmem:[#allocation4 + $0xf0] sm:$0xff]
    %v5045 = vld [vmem:[#allocation4 + $0xf8] sm:$0xff]
    %v5078 = vunpack.c.l.b16 %v5014
    %v5079 = vunpack.c.h.b16 %v5014
    %v5080 = vunpack.c.l.b16 %v5015
    %v5081 = vunpack.c.h.b16 %v5015
    %v5082 = vunpack.c.l.b16 %v5016
    %v5083 = vunpack.c.h.b16 %v5016
    %v5084 = vunpack.c.l.b16 %v5017
    %v5085 = vunpack.c.h.b16 %v5017
    %v5086 = vunpack.c.l.b16 %v5018
    %v5087 = vunpack.c.h.b16 %v5018
    %v5088 = vunpack.c.l.b16 %v5019
    %v5089 = vunpack.c.h.b16 %v5019
    %v5090 = vunpack.c.l.b16 %v5020
    %v5091 = vunpack.c.h.b16 %v5020
    %v5092 = vunpack.c.l.b16 %v5021
    %v5093 = vunpack.c.h.b16 %v5021
    %v5094 = vunpack.c.l.b16 %v5022
    %v5095 = vunpack.c.h.b16 %v5022
    %v5096 = vunpack.c.l.b16 %v5023
    %v5097 = vunpack.c.h.b16 %v5023
    %v5098 = vunpack.c.l.b16 %v5024
    %v5099 = vunpack.c.h.b16 %v5024
    %v5100 = vunpack.c.l.b16 %v5025
    %v5101 = vunpack.c.h.b16 %v5025
    %v5102 = vunpack.c.l.b16 %v5026
    %v5103 = vunpack.c.h.b16 %v5026
    %v5104 = vunpack.c.l.b16 %v5027
    %v5105 = vunpack.c.h.b16 %v5027
    %v5106 = vunpack.c.l.b16 %v5028
    %v5107 = vunpack.c.h.b16 %v5028
    %v5108 = vunpack.c.l.b16 %v5029
    %v5109 = vunpack.c.h.b16 %v5029
    %v5110 = vunpack.c.l.b16 %v5030
    %v5111 = vunpack.c.h.b16 %v5030
    %v5112 = vunpack.c.l.b16 %v5031
    %v5113 = vunpack.c.h.b16 %v5031
    %v5114 = vunpack.c.l.b16 %v5032
    %v5115 = vunpack.c.h.b16 %v5032
    %v5116 = vunpack.c.l.b16 %v5033
    %v5117 = vunpack.c.h.b16 %v5033
    %v5118 = vunpack.c.l.b16 %v5034
    %v5119 = vunpack.c.h.b16 %v5034
    %v5120 = vunpack.c.l.b16 %v5035
    %v5121 = vunpack.c.h.b16 %v5035
    %v5122 = vunpack.c.l.b16 %v5036
    %v5123 = vunpack.c.h.b16 %v5036
    %v5124 = vunpack.c.l.b16 %v5037
    %v5125 = vunpack.c.h.b16 %v5037
    %v5126 = vunpack.c.l.b16 %v5038
    %v5127 = vunpack.c.h.b16 %v5038
    %v5128 = vunpack.c.l.b16 %v5039
    %v5129 = vunpack.c.h.b16 %v5039
    %v5130 = vunpack.c.l.b16 %v5040
    %v5131 = vunpack.c.h.b16 %v5040
    %v5132 = vunpack.c.l.b16 %v5041
    %v5133 = vunpack.c.h.b16 %v5041
    %v5134 = vunpack.c.l.b16 %v5042
    %v5135 = vunpack.c.h.b16 %v5042
    %v5136 = vunpack.c.l.b16 %v5043
    %v5137 = vunpack.c.h.b16 %v5043
    %v5138 = vunpack.c.l.b16 %v5044
    %v5139 = vunpack.c.h.b16 %v5044
    %v5140 = vunpack.c.l.b16 %v5045
    %v5141 = vunpack.c.h.b16 %v5045
    %v5142 = vpack.c.b16 %v5082, %v5078
    %v5143 = vpack.c.b16 %v5083, %v5079
    %v5144 = vpack.c.b16 %v5084, %v5080
    %v5145 = vpack.c.b16 %v5085, %v5081
    %v5146 = vpack.c.b16 %v5090, %v5086
    %v5147 = vpack.c.b16 %v5091, %v5087
    %v5148 = vpack.c.b16 %v5092, %v5088
    %v5149 = vpack.c.b16 %v5093, %v5089
    %v5150 = vpack.c.b16 %v5098, %v5094
    %v5151 = vpack.c.b16 %v5099, %v5095
    %v5152 = vpack.c.b16 %v5100, %v5096
    %v5153 = vpack.c.b16 %v5101, %v5097
    %v5154 = vpack.c.b16 %v5106, %v5102
    %v5155 = vpack.c.b16 %v5107, %v5103
    %v5156 = vpack.c.b16 %v5108, %v5104
    %v5157 = vpack.c.b16 %v5109, %v5105
    %v5158 = vpack.c.b16 %v5114, %v5110
    %v5159 = vpack.c.b16 %v5115, %v5111
    %v5160 = vpack.c.b16 %v5116, %v5112
    %v5161 = vpack.c.b16 %v5117, %v5113
    %v5162 = vpack.c.b16 %v5122, %v5118
    %v5163 = vpack.c.b16 %v5123, %v5119
    %v5164 = vpack.c.b16 %v5124, %v5120
    %v5165 = vpack.c.b16 %v5125, %v5121
    %v5166 = vpack.c.b16 %v5130, %v5126
    %v5167 = vpack.c.b16 %v5131, %v5127
    %v5168 = vpack.c.b16 %v5132, %v5128
    %v5169 = vpack.c.b16 %v5133, %v5129
    %v5170 = vpack.c.b16 %v5138, %v5134
    %v5171 = vpack.c.b16 %v5139, %v5135
    %v5172 = vpack.c.b16 %v5140, %v5136
    %v5173 = vpack.c.b16 %v5141, %v5137
    %5206 = vmatpush.bf16.msra.mxu0 %v5170
    %5207 = vmatpush.bf16.msra.mxu0 %v5166
    %5208 = vmatpush.bf16.msra.mxu0 %v5162
    %5209 = vmatpush.bf16.msra.mxu0 %v5158
    %5210 = vmatpush.bf16.msra.mxu0 %v5154
    %5211 = vmatpush.bf16.msra.mxu0 %v5150
    %5212 = vmatpush.bf16.msra.mxu0 %v5146
    %5213 = vmatpush.bf16.msra.mxu0 %v5142
    %5214 = vmatmul.bf16.gmra.mxu0 %v5013
    %v5215 = vpop.f32.mrf.mxu0
    %v5216 = vadd.f32 0.0, %v5215
    %v5217 = vpop.f32.mrf.mxu0
    %5218 = vdwg.mxu0
    %5219 = vmatpush.bf16.msra.mxu0 %v5171
    %5220 = vmatpush.bf16.msra.mxu0 %v5167
    %5221 = vmatpush.bf16.msra.mxu0 %v5163
    %5222 = vmatpush.bf16.msra.mxu0 %v5159
    %5223 = vmatpush.bf16.msra.mxu0 %v5155
    %5224 = vmatpush.bf16.msra.mxu0 %v5151
    %5225 = vmatpush.bf16.msra.mxu0 %v5147
    %5226 = vmatpush.bf16.msra.mxu0 %v5143
    %5227 = vmatmul.bf16.gmra.mxu0 %v5013
    %v5228 = vpop.f32.mrf.mxu0
    %v5229 = vadd.f32 0.0, %v5228
    %v5230 = vpop.f32.mrf.mxu0
    %5231 = vdwg.mxu0
    %5232 = vmatpush.bf16.msra.mxu0 %v5172
    %5233 = vmatpush.bf16.msra.mxu0 %v5168
    %5234 = vmatpush.bf16.msra.mxu0 %v5164
    %5235 = vmatpush.bf16.msra.mxu0 %v5160
    %5236 = vmatpush.bf16.msra.mxu0 %v5156
    %5237 = vmatpush.bf16.msra.mxu0 %v5152
    %5238 = vmatpush.bf16.msra.mxu0 %v5148
    %5239 = vmatpush.bf16.msra.mxu0 %v5144
    %5240 = vmatmul.bf16.gmra.mxu0 %v5013
    %v5241 = vpop.f32.mrf.mxu0
    %v5242 = vadd.f32 0.0, %v5241
    %v5243 = vpop.f32.mrf.mxu0
    %5244 = vdwg.mxu0
    %5245 = vmatpush.bf16.msra.mxu0 %v5173
    %5246 = vmatpush.bf16.msra.mxu0 %v5169
    %5247 = vmatpush.bf16.msra.mxu0 %v5165
    %5248 = vmatpush.bf16.msra.mxu0 %v5161
    %5249 = vmatpush.bf16.msra.mxu0 %v5157
    %5250 = vmatpush.bf16.msra.mxu0 %v5153
    %5251 = vmatpush.bf16.msra.mxu0 %v5149
    %5252 = vmatpush.bf16.msra.mxu0 %v5145
    %5253 = vmatmul.bf16.gmra.mxu0 %v5013
    %v5254 = vpop.f32.mrf.mxu0
    %v5255 = vadd.f32 0.0, %v5254
    %v5256 = vpop.f32.mrf.mxu0
    %5257 = vdwg.mxu0
    %v5258 = vadd.f32 %v5008, %v5216
    %v5259 = vadd.f32 %v5009, %v5229
    %v5260 = vadd.f32 %v5010, %v5242
    %v5261 = vadd.f32 %v5011, %v5255
    %v5262 = vld [vmem:[#allocation3] sm:$0xff]
    %v5263 = vxor.u32 %v5258, 2147483648
    %v5264 = vxor.u32 %v5259, 2147483648
    %v5265 = vxor.u32 %v5260, 2147483648
    %v5266 = vmul.f32 %v5263, 1.442695
    %v5267 = vpow.pop %v5266
    %v5268 = vmul.f32 %v5264, 1.442695
    %v5269 = vpow.pop %v5268
    %v5270 = vmul.f32 %v5265, 1.442695
    %v5271 = vpow.pop %v5270
    %v5272 = vadd.f32 %v5267, 1.0
    %v5273 = vadd.f32 %v5269, 1.0
    %v5274 = vadd.f32 %v5271, 1.0
    %v5275 = vrcp.pop %v5272
    %v5276 = vmul.f32 %v5272, %v5275
    %v5277 = vsub.f32 1.0, %v5276
    %v5278 = vmul.f32 %v5275, %v5277
    %v5279 = vadd.f32 %v5275, %v5278
    %vm5280 = vweird.f32 %v5272
    %vm5281 = vweird.f32 %v5275
    %vm5282 = vmor %vm5280, %vm5281
    %v5283 = vsel %vm5282, %v5275, %v5279
    %v5284 = vand.u32 2147483647, %v5272
    %vm5285 = vcmp.eq.f32.partialorder %v5284, 8.507059e+37
    %v5286 = vand.u32 %v5272, 2147483648
    %v5287 = vor.u32 1.1754944e-38, %v5286
    %v5288 = vsel %vm5285, %v5287, %v5283
    %v5289 = vmul.f32 1.0, %v5288
    %v5290 = vrcp.pop %v5273
    %v5291 = vmul.f32 %v5273, %v5290
    %v5292 = vsub.f32 1.0, %v5291
    %v5293 = vmul.f32 %v5290, %v5292
    %v5294 = vadd.f32 %v5290, %v5293
    %vm5295 = vweird.f32 %v5273
    %vm5296 = vweird.f32 %v5290
    %vm5297 = vmor %vm5295, %vm5296
    %v5298 = vsel %vm5297, %v5290, %v5294
    %v5299 = vand.u32 2147483647, %v5273
    %vm5300 = vcmp.eq.f32.partialorder %v5299, 8.507059e+37
    %v5301 = vand.u32 %v5273, 2147483648
    %v5302 = vor.u32 1.1754944e-38, %v5301
    %v5303 = vsel %vm5300, %v5302, %v5298
    %v5304 = vmul.f32 1.0, %v5303
    %v5305 = vrcp.pop %v5274
    %v5306 = vmul.f32 %v5274, %v5305
    %v5307 = vsub.f32 1.0, %v5306
    %v5308 = vmul.f32 %v5305, %v5307
    %v5309 = vadd.f32 %v5305, %v5308
    %vm5310 = vweird.f32 %v5274
    %vm5311 = vweird.f32 %v5305
    %vm5312 = vmor %vm5310, %vm5311
    %v5313 = vsel %vm5312, %v5305, %v5309
    %v5314 = vand.u32 2147483647, %v5274
    %vm5315 = vcmp.eq.f32.partialorder %v5314, 8.507059e+37
    %v5316 = vand.u32 %v5274, 2147483648
    %v5317 = vor.u32 1.1754944e-38, %v5316
    %v5318 = vsel %vm5315, %v5317, %v5313
    %v5319 = vmul.f32 1.0, %v5318
    %v5320 = vtanh.pop %v5261
    %v5321 = vmul.f32 %v5304, %v5262
    %v5322 = vmul.f32 %v5289, %v5320
    %v5323 = vadd.f32 %v5321, %v5322
    %v5324 = vtanh.pop %v5323
    %v5325 = vmul.f32 %v5319, %v5324
    %5326 = vst [vmem:[#allocation2] sm:$0xff] %v5325
    %5327 = vst [vmem:[#allocation3] sm:$0xff] %v5323
    %v5328 = vld [vmem:[%s379] sm:$0xff]
    %v5329 = vpack.c.bf16 %v5325, %v5325
    %v5330 = vpack.c.bf16 %v5328, %v5328
    %v5331 = vld [vmem:[#allocation6] sm:$0xff]
    %v5332 = vld [vmem:[#allocation6 + $0x8] sm:$0xff]
    %v5333 = vld [vmem:[#allocation6 + $0x10] sm:$0xff]
    %v5334 = vld [vmem:[#allocation6 + $0x18] sm:$0xff]
    %v5335 = vld [vmem:[#allocation6 + $0x20] sm:$0xff]
    %v5336 = vld [vmem:[#allocation6 + $0x28] sm:$0xff]
    %v5337 = vld [vmem:[#allocation6 + $0x30] sm:$0xff]
    %v5338 = vld [vmem:[#allocation6 + $0x38] sm:$0xff]
    %v5339 = vld [vmem:[#allocation6 + $0x40] sm:$0xff]
    %v5340 = vld [vmem:[#allocation6 + $0x48] sm:$0xff]
    %v5341 = vld [vmem:[#allocation6 + $0x50] sm:$0xff]
    %v5342 = vld [vmem:[#allocation6 + $0x58] sm:$0xff]
    %v5343 = vld [vmem:[#allocation6 + $0x60] sm:$0xff]
    %v5344 = vld [vmem:[#allocation6 + $0x68] sm:$0xff]
    %v5345 = vld [vmem:[#allocation6 + $0x70] sm:$0xff]
    %v5346 = vld [vmem:[#allocation6 + $0x78] sm:$0xff]
    %v5347 = vld [vmem:[#allocation6 + $0x80] sm:$0xff]
    %v5348 = vld [vmem:[#allocation6 + $0x88] sm:$0xff]
    %v5349 = vld [vmem:[#allocation6 + $0x90] sm:$0xff]
    %v5350 = vld [vmem:[#allocation6 + $0x98] sm:$0xff]
    %v5351 = vld [vmem:[#allocation6 + $0xa0] sm:$0xff]
    %v5352 = vld [vmem:[#allocation6 + $0xa8] sm:$0xff]
    %v5353 = vld [vmem:[#allocation6 + $0xb0] sm:$0xff]
    %v5354 = vld [vmem:[#allocation6 + $0xb8] sm:$0xff]
    %v5355 = vld [vmem:[#allocation6 + $0xc0] sm:$0xff]
    %v5356 = vld [vmem:[#allocation6 + $0xc8] sm:$0xff]
    %v5357 = vld [vmem:[#allocation6 + $0xd0] sm:$0xff]
    %v5358 = vld [vmem:[#allocation6 + $0xd8] sm:$0xff]
    %v5359 = vld [vmem:[#allocation6 + $0xe0] sm:$0xff]
    %v5360 = vld [vmem:[#allocation6 + $0xe8] sm:$0xff]
    %v5361 = vld [vmem:[#allocation6 + $0xf0] sm:$0xff]
    %v5362 = vld [vmem:[#allocation6 + $0xf8] sm:$0xff]
    %v5363 = vld [vmem:[#allocation6 + $0x100] sm:$0xff]
    %v5364 = vld [vmem:[#allocation6 + $0x108] sm:$0xff]
    %v5365 = vld [vmem:[#allocation6 + $0x110] sm:$0xff]
    %v5366 = vld [vmem:[#allocation6 + $0x118] sm:$0xff]
    %v5367 = vld [vmem:[#allocation6 + $0x120] sm:$0xff]
    %v5368 = vld [vmem:[#allocation6 + $0x128] sm:$0xff]
    %v5369 = vld [vmem:[#allocation6 + $0x130] sm:$0xff]
    %v5370 = vld [vmem:[#allocation6 + $0x138] sm:$0xff]
    %v5371 = vld [vmem:[#allocation6 + $0x140] sm:$0xff]
    %v5372 = vld [vmem:[#allocation6 + $0x148] sm:$0xff]
    %v5373 = vld [vmem:[#allocation6 + $0x150] sm:$0xff]
    %v5374 = vld [vmem:[#allocation6 + $0x158] sm:$0xff]
    %v5375 = vld [vmem:[#allocation6 + $0x160] sm:$0xff]
    %v5376 = vld [vmem:[#allocation6 + $0x168] sm:$0xff]
    %v5377 = vld [vmem:[#allocation6 + $0x170] sm:$0xff]
    %v5378 = vld [vmem:[#allocation6 + $0x178] sm:$0xff]
    %v5379 = vld [vmem:[#allocation6 + $0x180] sm:$0xff]
    %v5380 = vld [vmem:[#allocation6 + $0x188] sm:$0xff]
    %v5381 = vld [vmem:[#allocation6 + $0x190] sm:$0xff]
    %v5382 = vld [vmem:[#allocation6 + $0x198] sm:$0xff]
    %v5383 = vld [vmem:[#allocation6 + $0x1a0] sm:$0xff]
    %v5384 = vld [vmem:[#allocation6 + $0x1a8] sm:$0xff]
    %v5385 = vld [vmem:[#allocation6 + $0x1b0] sm:$0xff]
    %v5386 = vld [vmem:[#allocation6 + $0x1b8] sm:$0xff]
    %v5387 = vld [vmem:[#allocation6 + $0x1c0] sm:$0xff]
    %v5388 = vld [vmem:[#allocation6 + $0x1c8] sm:$0xff]
    %v5389 = vld [vmem:[#allocation6 + $0x1d0] sm:$0xff]
    %v5390 = vld [vmem:[#allocation6 + $0x1d8] sm:$0xff]
    %v5391 = vld [vmem:[#allocation6 + $0x1e0] sm:$0xff]
    %v5392 = vld [vmem:[#allocation6 + $0x1e8] sm:$0xff]
    %v5393 = vld [vmem:[#allocation6 + $0x1f0] sm:$0xff]
    %v5394 = vld [vmem:[#allocation6 + $0x1f8] sm:$0xff]
    %v5395 = vld [vmem:[%s3] sm:$0xf]
    %v5397 = vperm.slane %v5395, 0
    %v5398 = vperm.slane %v5395, 1
    %v5399 = vperm.slane %v5395, 2
    %v5400 = vperm.slane %v5395, 3
    %v5469 = vunpack.c.l.b16 %v5331
    %v5470 = vunpack.c.h.b16 %v5331
    %v5471 = vunpack.c.l.b16 %v5332
    %v5472 = vunpack.c.h.b16 %v5332
    %v5473 = vunpack.c.l.b16 %v5333
    %v5474 = vunpack.c.h.b16 %v5333
    %v5475 = vunpack.c.l.b16 %v5334
    %v5476 = vunpack.c.h.b16 %v5334
    %v5477 = vunpack.c.l.b16 %v5335
    %v5478 = vunpack.c.h.b16 %v5335
    %v5479 = vunpack.c.l.b16 %v5336
    %v5480 = vunpack.c.h.b16 %v5336
    %v5481 = vunpack.c.l.b16 %v5337
    %v5482 = vunpack.c.h.b16 %v5337
    %v5483 = vunpack.c.l.b16 %v5338
    %v5484 = vunpack.c.h.b16 %v5338
    %v5485 = vunpack.c.l.b16 %v5339
    %v5486 = vunpack.c.h.b16 %v5339
    %v5487 = vunpack.c.l.b16 %v5340
    %v5488 = vunpack.c.h.b16 %v5340
    %v5489 = vunpack.c.l.b16 %v5341
    %v5490 = vunpack.c.h.b16 %v5341
    %v5491 = vunpack.c.l.b16 %v5342
    %v5492 = vunpack.c.h.b16 %v5342
    %v5493 = vunpack.c.l.b16 %v5343
    %v5494 = vunpack.c.h.b16 %v5343
    %v5495 = vunpack.c.l.b16 %v5344
    %v5496 = vunpack.c.h.b16 %v5344
    %v5497 = vunpack.c.l.b16 %v5345
    %v5498 = vunpack.c.h.b16 %v5345
    %v5499 = vunpack.c.l.b16 %v5346
    %v5500 = vunpack.c.h.b16 %v5346
    %v5501 = vunpack.c.l.b16 %v5347
    %v5502 = vunpack.c.h.b16 %v5347
    %v5503 = vunpack.c.l.b16 %v5348
    %v5504 = vunpack.c.h.b16 %v5348
    %v5505 = vunpack.c.l.b16 %v5349
    %v5506 = vunpack.c.h.b16 %v5349
    %v5507 = vunpack.c.l.b16 %v5350
    %v5508 = vunpack.c.h.b16 %v5350
    %v5509 = vunpack.c.l.b16 %v5351
    %v5510 = vunpack.c.h.b16 %v5351
    %v5511 = vunpack.c.l.b16 %v5352
    %v5512 = vunpack.c.h.b16 %v5352
    %v5513 = vunpack.c.l.b16 %v5353
    %v5514 = vunpack.c.h.b16 %v5353
    %v5515 = vunpack.c.l.b16 %v5354
    %v5516 = vunpack.c.h.b16 %v5354
    %v5517 = vunpack.c.l.b16 %v5355
    %v5518 = vunpack.c.h.b16 %v5355
    %v5519 = vunpack.c.l.b16 %v5356
    %v5520 = vunpack.c.h.b16 %v5356
    %v5521 = vunpack.c.l.b16 %v5357
    %v5522 = vunpack.c.h.b16 %v5357
    %v5523 = vunpack.c.l.b16 %v5358
    %v5524 = vunpack.c.h.b16 %v5358
    %v5525 = vunpack.c.l.b16 %v5359
    %v5526 = vunpack.c.h.b16 %v5359
    %v5527 = vunpack.c.l.b16 %v5360
    %v5528 = vunpack.c.h.b16 %v5360
    %v5529 = vunpack.c.l.b16 %v5361
    %v5530 = vunpack.c.h.b16 %v5361
    %v5531 = vunpack.c.l.b16 %v5362
    %v5532 = vunpack.c.h.b16 %v5362
    %v5533 = vunpack.c.l.b16 %v5363
    %v5534 = vunpack.c.h.b16 %v5363
    %v5535 = vunpack.c.l.b16 %v5364
    %v5536 = vunpack.c.h.b16 %v5364
    %v5537 = vunpack.c.l.b16 %v5365
    %v5538 = vunpack.c.h.b16 %v5365
    %v5539 = vunpack.c.l.b16 %v5366
    %v5540 = vunpack.c.h.b16 %v5366
    %v5541 = vunpack.c.l.b16 %v5367
    %v5542 = vunpack.c.h.b16 %v5367
    %v5543 = vunpack.c.l.b16 %v5368
    %v5544 = vunpack.c.h.b16 %v5368
    %v5545 = vunpack.c.l.b16 %v5369
    %v5546 = vunpack.c.h.b16 %v5369
    %v5547 = vunpack.c.l.b16 %v5370
    %v5548 = vunpack.c.h.b16 %v5370
    %v5549 = vunpack.c.l.b16 %v5371
    %v5550 = vunpack.c.h.b16 %v5371
    %v5551 = vunpack.c.l.b16 %v5372
    %v5552 = vunpack.c.h.b16 %v5372
    %v5553 = vunpack.c.l.b16 %v5373
    %v5554 = vunpack.c.h.b16 %v5373
    %v5555 = vunpack.c.l.b16 %v5374
    %v5556 = vunpack.c.h.b16 %v5374
    %v5557 = vunpack.c.l.b16 %v5375
    %v5558 = vunpack.c.h.b16 %v5375
    %v5559 = vunpack.c.l.b16 %v5376
    %v5560 = vunpack.c.h.b16 %v5376
    %v5561 = vunpack.c.l.b16 %v5377
    %v5562 = vunpack.c.h.b16 %v5377
    %v5563 = vunpack.c.l.b16 %v5378
    %v5564 = vunpack.c.h.b16 %v5378
    %v5565 = vunpack.c.l.b16 %v5379
    %v5566 = vunpack.c.h.b16 %v5379
    %v5567 = vunpack.c.l.b16 %v5380
    %v5568 = vunpack.c.h.b16 %v5380
    %v5569 = vunpack.c.l.b16 %v5381
    %v5570 = vunpack.c.h.b16 %v5381
    %v5571 = vunpack.c.l.b16 %v5382
    %v5572 = vunpack.c.h.b16 %v5382
    %v5573 = vunpack.c.l.b16 %v5383
    %v5574 = vunpack.c.h.b16 %v5383
    %v5575 = vunpack.c.l.b16 %v5384
    %v5576 = vunpack.c.h.b16 %v5384
    %v5577 = vunpack.c.l.b16 %v5385
    %v5578 = vunpack.c.h.b16 %v5385
    %v5579 = vunpack.c.l.b16 %v5386
    %v5580 = vunpack.c.h.b16 %v5386
    %v5581 = vunpack.c.l.b16 %v5387
    %v5582 = vunpack.c.h.b16 %v5387
    %v5583 = vunpack.c.l.b16 %v5388
    %v5584 = vunpack.c.h.b16 %v5388
    %v5585 = vunpack.c.l.b16 %v5389
    %v5586 = vunpack.c.h.b16 %v5389
    %v5587 = vunpack.c.l.b16 %v5390
    %v5588 = vunpack.c.h.b16 %v5390
    %v5589 = vunpack.c.l.b16 %v5391
    %v5590 = vunpack.c.h.b16 %v5391
    %v5591 = vunpack.c.l.b16 %v5392
    %v5592 = vunpack.c.h.b16 %v5392
    %v5593 = vunpack.c.l.b16 %v5393
    %v5594 = vunpack.c.h.b16 %v5393
    %v5595 = vunpack.c.l.b16 %v5394
    %v5596 = vunpack.c.h.b16 %v5394
    %v5597 = vpack.c.b16 %v5473, %v5469
    %v5598 = vpack.c.b16 %v5474, %v5470
    %v5599 = vpack.c.b16 %v5475, %v5471
    %v5600 = vpack.c.b16 %v5476, %v5472
    %v5601 = vpack.c.b16 %v5481, %v5477
    %v5602 = vpack.c.b16 %v5482, %v5478
    %v5603 = vpack.c.b16 %v5483, %v5479
    %v5604 = vpack.c.b16 %v5484, %v5480
    %v5605 = vpack.c.b16 %v5489, %v5485
    %v5606 = vpack.c.b16 %v5490, %v5486
    %v5607 = vpack.c.b16 %v5491, %v5487
    %v5608 = vpack.c.b16 %v5492, %v5488
    %v5609 = vpack.c.b16 %v5497, %v5493
    %v5610 = vpack.c.b16 %v5498, %v5494
    %v5611 = vpack.c.b16 %v5499, %v5495
    %v5612 = vpack.c.b16 %v5500, %v5496
    %v5613 = vpack.c.b16 %v5505, %v5501
    %v5614 = vpack.c.b16 %v5506, %v5502
    %v5615 = vpack.c.b16 %v5507, %v5503
    %v5616 = vpack.c.b16 %v5508, %v5504
    %v5617 = vpack.c.b16 %v5513, %v5509
    %v5618 = vpack.c.b16 %v5514, %v5510
    %v5619 = vpack.c.b16 %v5515, %v5511
    %v5620 = vpack.c.b16 %v5516, %v5512
    %v5621 = vpack.c.b16 %v5521, %v5517
    %v5622 = vpack.c.b16 %v5522, %v5518
    %v5623 = vpack.c.b16 %v5523, %v5519
    %v5624 = vpack.c.b16 %v5524, %v5520
    %v5625 = vpack.c.b16 %v5529, %v5525
    %v5626 = vpack.c.b16 %v5530, %v5526
    %v5627 = vpack.c.b16 %v5531, %v5527
    %v5628 = vpack.c.b16 %v5532, %v5528
    %v5629 = vpack.c.b16 %v5537, %v5533
    %v5630 = vpack.c.b16 %v5538, %v5534
    %v5631 = vpack.c.b16 %v5539, %v5535
    %v5632 = vpack.c.b16 %v5540, %v5536
    %v5633 = vpack.c.b16 %v5545, %v5541
    %v5634 = vpack.c.b16 %v5546, %v5542
    %v5635 = vpack.c.b16 %v5547, %v5543
    %v5636 = vpack.c.b16 %v5548, %v5544
    %v5637 = vpack.c.b16 %v5553, %v5549
    %v5638 = vpack.c.b16 %v5554, %v5550
    %v5639 = vpack.c.b16 %v5555, %v5551
    %v5640 = vpack.c.b16 %v5556, %v5552
    %v5641 = vpack.c.b16 %v5561, %v5557
    %v5642 = vpack.c.b16 %v5562, %v5558
    %v5643 = vpack.c.b16 %v5563, %v5559
    %v5644 = vpack.c.b16 %v5564, %v5560
    %v5645 = vpack.c.b16 %v5569, %v5565
    %v5646 = vpack.c.b16 %v5570, %v5566
    %v5647 = vpack.c.b16 %v5571, %v5567
    %v5648 = vpack.c.b16 %v5572, %v5568
    %v5649 = vpack.c.b16 %v5577, %v5573
    %v5650 = vpack.c.b16 %v5578, %v5574
    %v5651 = vpack.c.b16 %v5579, %v5575
    %v5652 = vpack.c.b16 %v5580, %v5576
    %v5653 = vpack.c.b16 %v5585, %v5581
    %v5654 = vpack.c.b16 %v5586, %v5582
    %v5655 = vpack.c.b16 %v5587, %v5583
    %v5656 = vpack.c.b16 %v5588, %v5584
    %v5657 = vpack.c.b16 %v5593, %v5589
    %v5658 = vpack.c.b16 %v5594, %v5590
    %v5659 = vpack.c.b16 %v5595, %v5591
    %v5660 = vpack.c.b16 %v5596, %v5592
    %5725 = vmatpush.bf16.msra.mxu0 %v5625
    %5726 = vmatpush.bf16.msra.mxu0 %v5621
    %5727 = vmatpush.bf16.msra.mxu0 %v5617
    %5728 = vmatpush.bf16.msra.mxu0 %v5613
    %5729 = vmatpush.bf16.msra.mxu0 %v5609
    %5730 = vmatpush.bf16.msra.mxu0 %v5605
    %5731 = vmatpush.bf16.msra.mxu0 %v5601
    %5732 = vmatpush.bf16.msra.mxu0 %v5597
    %5733 = vmatmul.bf16.gmra.mxu0 %v5329
    %v5734 = vpop.f32.mrf.mxu0
    %v5735 = vadd.f32 %v5397, %v5734
    %v5736 = vpop.f32.mrf.mxu0
    %5737 = vdwg.mxu0
    %5738 = vmatpush.bf16.msra.mxu0 %v5657
    %5739 = vmatpush.bf16.msra.mxu0 %v5653
    %5740 = vmatpush.bf16.msra.mxu0 %v5649
    %5741 = vmatpush.bf16.msra.mxu0 %v5645
    %5742 = vmatpush.bf16.msra.mxu0 %v5641
    %5743 = vmatpush.bf16.msra.mxu0 %v5637
    %5744 = vmatpush.bf16.msra.mxu0 %v5633
    %5745 = vmatpush.bf16.msra.mxu0 %v5629
    %5746 = vmatmul.bf16.gmra.mxu0 %v5330
    %v5747 = vpop.f32.mrf.mxu0
    %v5748 = vadd.f32 %v5735, %v5747
    %v5749 = vpop.f32.mrf.mxu0
    %5750 = vdwg.mxu0
    %5751 = vmatpush.bf16.msra.mxu0 %v5626
    %5752 = vmatpush.bf16.msra.mxu0 %v5622
    %5753 = vmatpush.bf16.msra.mxu0 %v5618
    %5754 = vmatpush.bf16.msra.mxu0 %v5614
    %5755 = vmatpush.bf16.msra.mxu0 %v5610
    %5756 = vmatpush.bf16.msra.mxu0 %v5606
    %5757 = vmatpush.bf16.msra.mxu0 %v5602
    %5758 = vmatpush.bf16.msra.mxu0 %v5598
    %5759 = vmatmul.bf16.gmra.mxu0 %v5329
    %v5760 = vpop.f32.mrf.mxu0
    %v5761 = vadd.f32 %v5398, %v5760
    %v5762 = vpop.f32.mrf.mxu0
    %5763 = vdwg.mxu0
    %5764 = vmatpush.bf16.msra.mxu0 %v5658
    %5765 = vmatpush.bf16.msra.mxu0 %v5654
    %5766 = vmatpush.bf16.msra.mxu0 %v5650
    %5767 = vmatpush.bf16.msra.mxu0 %v5646
    %5768 = vmatpush.bf16.msra.mxu0 %v5642
    %5769 = vmatpush.bf16.msra.mxu0 %v5638
    %5770 = vmatpush.bf16.msra.mxu0 %v5634
    %5771 = vmatpush.bf16.msra.mxu0 %v5630
    %5772 = vmatmul.bf16.gmra.mxu0 %v5330
    %v5773 = vpop.f32.mrf.mxu0
    %v5774 = vadd.f32 %v5761, %v5773
    %v5775 = vpop.f32.mrf.mxu0
    %5776 = vdwg.mxu0
    %5777 = vmatpush.bf16.msra.mxu0 %v5627
    %5778 = vmatpush.bf16.msra.mxu0 %v5623
    %5779 = vmatpush.bf16.msra.mxu0 %v5619
    %5780 = vmatpush.bf16.msra.mxu0 %v5615
    %5781 = vmatpush.bf16.msra.mxu0 %v5611
    %5782 = vmatpush.bf16.msra.mxu0 %v5607
    %5783 = vmatpush.bf16.msra.mxu0 %v5603
    %5784 = vmatpush.bf16.msra.mxu0 %v5599
    %5785 = vmatmul.bf16.gmra.mxu0 %v5329
    %v5786 = vpop.f32.mrf.mxu0
    %v5787 = vadd.f32 %v5399, %v5786
    %v5788 = vpop.f32.mrf.mxu0
    %5789 = vdwg.mxu0
    %5790 = vmatpush.bf16.msra.mxu0 %v5659
    %5791 = vmatpush.bf16.msra.mxu0 %v5655
    %5792 = vmatpush.bf16.msra.mxu0 %v5651
    %5793 = vmatpush.bf16.msra.mxu0 %v5647
    %5794 = vmatpush.bf16.msra.mxu0 %v5643
    %5795 = vmatpush.bf16.msra.mxu0 %v5639
    %5796 = vmatpush.bf16.msra.mxu0 %v5635
    %5797 = vmatpush.bf16.msra.mxu0 %v5631
    %5798 = vmatmul.bf16.gmra.mxu0 %v5330
    %v5799 = vpop.f32.mrf.mxu0
    %v5800 = vadd.f32 %v5787, %v5799
    %v5801 = vpop.f32.mrf.mxu0
    %5802 = vdwg.mxu0
    %5803 = vmatpush.bf16.msra.mxu0 %v5628
    %5804 = vmatpush.bf16.msra.mxu0 %v5624
    %5805 = vmatpush.bf16.msra.mxu0 %v5620
    %5806 = vmatpush.bf16.msra.mxu0 %v5616
    %5807 = vmatpush.bf16.msra.mxu0 %v5612
    %5808 = vmatpush.bf16.msra.mxu0 %v5608
    %5809 = vmatpush.bf16.msra.mxu0 %v5604
    %5810 = vmatpush.bf16.msra.mxu0 %v5600
    %5811 = vmatmul.bf16.gmra.mxu0 %v5329
    %v5812 = vpop.f32.mrf.mxu0
    %v5813 = vadd.f32 %v5400, %v5812
    %v5814 = vpop.f32.mrf.mxu0
    %5815 = vdwg.mxu0
    %5816 = vmatpush.bf16.msra.mxu0 %v5660
    %5817 = vmatpush.bf16.msra.mxu0 %v5656
    %5818 = vmatpush.bf16.msra.mxu0 %v5652
    %5819 = vmatpush.bf16.msra.mxu0 %v5648
    %5820 = vmatpush.bf16.msra.mxu0 %v5644
    %5821 = vmatpush.bf16.msra.mxu0 %v5640
    %5822 = vmatpush.bf16.msra.mxu0 %v5636
    %5823 = vmatpush.bf16.msra.mxu0 %v5632
    %5824 = vmatmul.bf16.gmra.mxu0 %v5330
    %v5825 = vpop.f32.mrf.mxu0
    %v5826 = vadd.f32 %v5813, %v5825
    %v5827 = vpop.f32.mrf.mxu0
    %5828 = vdwg.mxu0
    %v5829 = vld [vmem:[%s881] sm:$0xff]
    %v5830 = vxor.u32 %v5748, 2147483648
    %v5831 = vxor.u32 %v5774, 2147483648
    %v5832 = vxor.u32 %v5800, 2147483648
    %v5833 = vmul.f32 %v5830, 1.442695
    %v5834 = vpow.pop %v5833
    %v5835 = vmul.f32 %v5831, 1.442695
    %v5836 = vpow.pop %v5835
    %v5837 = vmul.f32 %v5832, 1.442695
    %v5838 = vpow.pop %v5837
    %v5839 = vadd.f32 %v5834, 1.0
    %v5840 = vadd.f32 %v5836, 1.0
    %v5841 = vadd.f32 %v5838, 1.0
    %v5842 = vrcp.pop %v5839
    %v5843 = vmul.f32 %v5839, %v5842
    %v5844 = vsub.f32 1.0, %v5843
    %v5845 = vmul.f32 %v5842, %v5844
    %v5846 = vadd.f32 %v5842, %v5845
    %vm5847 = vweird.f32 %v5839
    %vm5848 = vweird.f32 %v5842
    %vm5849 = vmor %vm5847, %vm5848
    %v5850 = vsel %vm5849, %v5842, %v5846
    %v5851 = vand.u32 2147483647, %v5839
    %vm5852 = vcmp.eq.f32.partialorder %v5851, 8.507059e+37
    %v5853 = vand.u32 %v5839, 2147483648
    %v5854 = vor.u32 1.1754944e-38, %v5853
    %v5855 = vsel %vm5852, %v5854, %v5850
    %v5856 = vmul.f32 1.0, %v5855
    %v5857 = vrcp.pop %v5840
    %v5858 = vmul.f32 %v5840, %v5857
    %v5859 = vsub.f32 1.0, %v5858
    %v5860 = vmul.f32 %v5857, %v5859
    %v5861 = vadd.f32 %v5857, %v5860
    %vm5862 = vweird.f32 %v5840
    %vm5863 = vweird.f32 %v5857
    %vm5864 = vmor %vm5862, %vm5863
    %v5865 = vsel %vm5864, %v5857, %v5861
    %v5866 = vand.u32 2147483647, %v5840
    %vm5867 = vcmp.eq.f32.partialorder %v5866, 8.507059e+37
    %v5868 = vand.u32 %v5840, 2147483648
    %v5869 = vor.u32 1.1754944e-38, %v5868
    %v5870 = vsel %vm5867, %v5869, %v5865
    %v5871 = vmul.f32 1.0, %v5870
    %v5872 = vrcp.pop %v5841
    %v5873 = vmul.f32 %v5841, %v5872
    %v5874 = vsub.f32 1.0, %v5873
    %v5875 = vmul.f32 %v5872, %v5874
    %v5876 = vadd.f32 %v5872, %v5875
    %vm5877 = vweird.f32 %v5841
    %vm5878 = vweird.f32 %v5872
    %vm5879 = vmor %vm5877, %vm5878
    %v5880 = vsel %vm5879, %v5872, %v5876
    %v5881 = vand.u32 2147483647, %v5841
    %vm5882 = vcmp.eq.f32.partialorder %v5881, 8.507059e+37
    %v5883 = vand.u32 %v5841, 2147483648
    %v5884 = vor.u32 1.1754944e-38, %v5883
    %v5885 = vsel %vm5882, %v5884, %v5880
    %v5886 = vmul.f32 1.0, %v5885
    %v5887 = vtanh.pop %v5826
    %v5888 = vmul.f32 %v5871, %v5829
    %v5889 = vmul.f32 %v5856, %v5887
    %v5890 = vadd.f32 %v5888, %v5889
    %v5891 = vtanh.pop %v5890
    %v5892 = vmul.f32 %v5886, %v5891
    %5893 = vst [vmem:[%s379] sm:$0xff] %v5892
    %5894 = vst [vmem:[%s881] sm:$0xff] %v5890
    %v5895 = vpack.c.bf16 %v5892, %v5892
    %v5897 = vrot.slane %v5895, 3
    %v5900 = vsel %vm951, %v5895, %v5897
    %v5902 = vsel %vm956, %v5895, %v5897
    %v5904 = vrot.slane %v5902, 1
    %v5905 = vsel %vm960, %v5895, %v5897
    %v5907 = vrot.slane %v5905, 2
    %v5908 = vsel %vm964, %v5895, %v5897
    %v5910 = vrot.slane %v5908, 3
    %v5911 = vunpack.i.l.s16 %v5900
    %v5912 = vunpack.i.h.s16 %v5900
    %v5913 = vunpack.i.l.s16 %v5904
    %v5914 = vunpack.i.h.s16 %v5904
    %v5915 = vunpack.i.l.s16 %v5907
    %v5916 = vunpack.i.h.s16 %v5907
    %v5917 = vunpack.i.l.s16 %v5910
    %v5918 = vunpack.i.h.s16 %v5910
    %v5919 = vpack.i.b16 %v5911, %v5911
    %v5920 = vpack.i.b16 %v5912, %v5912
    %v5921 = vpack.i.b16 %v5913, %v5913
    %v5922 = vpack.i.b16 %v5914, %v5914
    %v5923 = vpack.i.b16 %v5915, %v5915
    %v5924 = vpack.i.b16 %v5916, %v5916
    %v5925 = vpack.i.b16 %v5917, %v5917
    %v5926 = vpack.i.b16 %v5918, %v5918
    %v5928 = vunpack.c.l.s4 286326784
    %v5929 = vunpack.c.0.s8 %v5928
    %v5930 = vperm.slane %v5919, %v5929
    %v5932 = vunpack.c.l.s4 286326784
    %v5933 = vunpack.c.0.s8 %v5932
    %v5934 = vperm.slane %v5920, %v5933
    %v5936 = vunpack.c.l.s4 286326784
    %v5937 = vunpack.c.0.s8 %v5936
    %v5938 = vperm.slane %v5921, %v5937
    %v5940 = vunpack.c.l.s4 286326784
    %v5941 = vunpack.c.0.s8 %v5940
    %v5942 = vperm.slane %v5922, %v5941
    %v5944 = vunpack.c.l.s4 286326784
    %v5945 = vunpack.c.0.s8 %v5944
    %v5946 = vperm.slane %v5923, %v5945
    %v5948 = vunpack.c.l.s4 286326784
    %v5949 = vunpack.c.0.s8 %v5948
    %v5950 = vperm.slane %v5924, %v5949
    %v5952 = vunpack.c.l.s4 286326784
    %v5953 = vunpack.c.0.s8 %v5952
    %v5954 = vperm.slane %v5925, %v5953
    %v5956 = vunpack.c.l.s4 286326784
    %v5957 = vunpack.c.0.s8 %v5956
    %v5958 = vperm.slane %v5926, %v5957
    %vm5967 = vsmask.f32 7946
    %vm5968 = vmand %vm4978, %vm5967
    %v5969 = vld [vmem:[%s4] sm:$0x4]
    %v5970 = vsel %vm5968, %v5930, %v5969
    %5971 = vst [vmem:[%s4] sm:$0x4] %v5970
    %v5972 = vld [vmem:[%s4 + $0x4] sm:$0x4]
    %v5973 = vsel %vm5968, %v5934, %v5972
    %5974 = vst [vmem:[%s4 + $0x4] sm:$0x4] %v5973
    %v5975 = vld [vmem:[%s4 + $0x8] sm:$0x4]
    %v5976 = vsel %vm5968, %v5938, %v5975
    %5977 = vst [vmem:[%s4 + $0x8] sm:$0x4] %v5976
    %v5978 = vld [vmem:[%s4 + $0xc] sm:$0x4]
    %v5979 = vsel %vm5968, %v5942, %v5978
    %5980 = vst [vmem:[%s4 + $0xc] sm:$0x4] %v5979
    %v5981 = vld [vmem:[%s4 + $0x10] sm:$0x4]
    %v5982 = vsel %vm5968, %v5946, %v5981
    %5983 = vst [vmem:[%s4 + $0x10] sm:$0x4] %v5982
    %v5984 = vld [vmem:[%s4 + $0x14] sm:$0x4]
    %v5985 = vsel %vm5968, %v5950, %v5984
    %5986 = vst [vmem:[%s4 + $0x14] sm:$0x4] %v5985
    %v5987 = vld [vmem:[%s4 + $0x18] sm:$0x4]
    %v5988 = vsel %vm5968, %v5954, %v5987
    %5989 = vst [vmem:[%s4 + $0x18] sm:$0x4] %v5988
    %v5990 = vld [vmem:[%s4 + $0x1c] sm:$0x4]
    %v5991 = vsel %vm5968, %v5958, %v5990
    %5992 = vst [vmem:[%s4 + $0x1c] sm:$0x4] %v5991
    %s5993 = scalar_lea.vmem %s0, 96
    %v5994 = vld [vmem:[%s5993] sm:$0xff]
    %v5995 = vld [vmem:[%s5993 + $0x8] sm:$0xff]
    %v5996 = vunpack.c.l.bf16 %v5994
    %v5997 = vunpack.c.h.bf16 %v5994
    %v5998 = vunpack.c.l.bf16 %v5995
    %v5999 = vunpack.c.h.bf16 %v5995
    %v6000 = vld [vmem:[#allocation2] sm:$0xff]
    %v6001 = vpack.c.bf16 %v6000, %v6000
    %v6002 = vld [vmem:[#allocation4] sm:$0xff]
    %v6003 = vld [vmem:[#allocation4 + $0x8] sm:$0xff]
    %v6004 = vld [vmem:[#allocation4 + $0x10] sm:$0xff]
    %v6005 = vld [vmem:[#allocation4 + $0x18] sm:$0xff]
    %v6006 = vld [vmem:[#allocation4 + $0x20] sm:$0xff]
    %v6007 = vld [vmem:[#allocation4 + $0x28] sm:$0xff]
    %v6008 = vld [vmem:[#allocation4 + $0x30] sm:$0xff]
    %v6009 = vld [vmem:[#allocation4 + $0x38] sm:$0xff]
    %v6010 = vld [vmem:[#allocation4 + $0x40] sm:$0xff]
    %v6011 = vld [vmem:[#allocation4 + $0x48] sm:$0xff]
    %v6012 = vld [vmem:[#allocation4 + $0x50] sm:$0xff]
    %v6013 = vld [vmem:[#allocation4 + $0x58] sm:$0xff]
    %v6014 = vld [vmem:[#allocation4 + $0x60] sm:$0xff]
    %v6015 = vld [vmem:[#allocation4 + $0x68] sm:$0xff]
    %v6016 = vld [vmem:[#allocation4 + $0x70] sm:$0xff]
    %v6017 = vld [vmem:[#allocation4 + $0x78] sm:$0xff]
    %v6018 = vld [vmem:[#allocation4 + $0x80] sm:$0xff]
    %v6019 = vld [vmem:[#allocation4 + $0x88] sm:$0xff]
    %v6020 = vld [vmem:[#allocation4 + $0x90] sm:$0xff]
    %v6021 = vld [vmem:[#allocation4 + $0x98] sm:$0xff]
    %v6022 = vld [vmem:[#allocation4 + $0xa0] sm:$0xff]
    %v6023 = vld [vmem:[#allocation4 + $0xa8] sm:$0xff]
    %v6024 = vld [vmem:[#allocation4 + $0xb0] sm:$0xff]
    %v6025 = vld [vmem:[#allocation4 + $0xb8] sm:$0xff]
    %v6026 = vld [vmem:[#allocation4 + $0xc0] sm:$0xff]
    %v6027 = vld [vmem:[#allocation4 + $0xc8] sm:$0xff]
    %v6028 = vld [vmem:[#allocation4 + $0xd0] sm:$0xff]
    %v6029 = vld [vmem:[#allocation4 + $0xd8] sm:$0xff]
    %v6030 = vld [vmem:[#allocation4 + $0xe0] sm:$0xff]
    %v6031 = vld [vmem:[#allocation4 + $0xe8] sm:$0xff]
    %v6032 = vld [vmem:[#allocation4 + $0xf0] sm:$0xff]
    %v6033 = vld [vmem:[#allocation4 + $0xf8] sm:$0xff]
    %v6066 = vunpack.c.l.b16 %v6002
    %v6067 = vunpack.c.h.b16 %v6002
    %v6068 = vunpack.c.l.b16 %v6003
    %v6069 = vunpack.c.h.b16 %v6003
    %v6070 = vunpack.c.l.b16 %v6004
    %v6071 = vunpack.c.h.b16 %v6004
    %v6072 = vunpack.c.l.b16 %v6005
    %v6073 = vunpack.c.h.b16 %v6005
    %v6074 = vunpack.c.l.b16 %v6006
    %v6075 = vunpack.c.h.b16 %v6006
    %v6076 = vunpack.c.l.b16 %v6007
    %v6077 = vunpack.c.h.b16 %v6007
    %v6078 = vunpack.c.l.b16 %v6008
    %v6079 = vunpack.c.h.b16 %v6008
    %v6080 = vunpack.c.l.b16 %v6009
    %v6081 = vunpack.c.h.b16 %v6009
    %v6082 = vunpack.c.l.b16 %v6010
    %v6083 = vunpack.c.h.b16 %v6010
    %v6084 = vunpack.c.l.b16 %v6011
    %v6085 = vunpack.c.h.b16 %v6011
    %v6086 = vunpack.c.l.b16 %v6012
    %v6087 = vunpack.c.h.b16 %v6012
    %v6088 = vunpack.c.l.b16 %v6013
    %v6089 = vunpack.c.h.b16 %v6013
    %v6090 = vunpack.c.l.b16 %v6014
    %v6091 = vunpack.c.h.b16 %v6014
    %v6092 = vunpack.c.l.b16 %v6015
    %v6093 = vunpack.c.h.b16 %v6015
    %v6094 = vunpack.c.l.b16 %v6016
    %v6095 = vunpack.c.h.b16 %v6016
    %v6096 = vunpack.c.l.b16 %v6017
    %v6097 = vunpack.c.h.b16 %v6017
    %v6098 = vunpack.c.l.b16 %v6018
    %v6099 = vunpack.c.h.b16 %v6018
    %v6100 = vunpack.c.l.b16 %v6019
    %v6101 = vunpack.c.h.b16 %v6019
    %v6102 = vunpack.c.l.b16 %v6020
    %v6103 = vunpack.c.h.b16 %v6020
    %v6104 = vunpack.c.l.b16 %v6021
    %v6105 = vunpack.c.h.b16 %v6021
    %v6106 = vunpack.c.l.b16 %v6022
    %v6107 = vunpack.c.h.b16 %v6022
    %v6108 = vunpack.c.l.b16 %v6023
    %v6109 = vunpack.c.h.b16 %v6023
    %v6110 = vunpack.c.l.b16 %v6024
    %v6111 = vunpack.c.h.b16 %v6024
    %v6112 = vunpack.c.l.b16 %v6025
    %v6113 = vunpack.c.h.b16 %v6025
    %v6114 = vunpack.c.l.b16 %v6026
    %v6115 = vunpack.c.h.b16 %v6026
    %v6116 = vunpack.c.l.b16 %v6027
    %v6117 = vunpack.c.h.b16 %v6027
    %v6118 = vunpack.c.l.b16 %v6028
    %v6119 = vunpack.c.h.b16 %v6028
    %v6120 = vunpack.c.l.b16 %v6029
    %v6121 = vunpack.c.h.b16 %v6029
    %v6122 = vunpack.c.l.b16 %v6030
    %v6123 = vunpack.c.h.b16 %v6030
    %v6124 = vunpack.c.l.b16 %v6031
    %v6125 = vunpack.c.h.b16 %v6031
    %v6126 = vunpack.c.l.b16 %v6032
    %v6127 = vunpack.c.h.b16 %v6032
    %v6128 = vunpack.c.l.b16 %v6033
    %v6129 = vunpack.c.h.b16 %v6033
    %v6130 = vpack.c.b16 %v6070, %v6066
    %v6131 = vpack.c.b16 %v6071, %v6067
    %v6132 = vpack.c.b16 %v6072, %v6068
    %v6133 = vpack.c.b16 %v6073, %v6069
    %v6134 = vpack.c.b16 %v6078, %v6074
    %v6135 = vpack.c.b16 %v6079, %v6075
    %v6136 = vpack.c.b16 %v6080, %v6076
    %v6137 = vpack.c.b16 %v6081, %v6077
    %v6138 = vpack.c.b16 %v6086, %v6082
    %v6139 = vpack.c.b16 %v6087, %v6083
    %v6140 = vpack.c.b16 %v6088, %v6084
    %v6141 = vpack.c.b16 %v6089, %v6085
    %v6142 = vpack.c.b16 %v6094, %v6090
    %v6143 = vpack.c.b16 %v6095, %v6091
    %v6144 = vpack.c.b16 %v6096, %v6092
    %v6145 = vpack.c.b16 %v6097, %v6093
    %v6146 = vpack.c.b16 %v6102, %v6098
    %v6147 = vpack.c.b16 %v6103, %v6099
    %v6148 = vpack.c.b16 %v6104, %v6100
    %v6149 = vpack.c.b16 %v6105, %v6101
    %v6150 = vpack.c.b16 %v6110, %v6106
    %v6151 = vpack.c.b16 %v6111, %v6107
    %v6152 = vpack.c.b16 %v6112, %v6108
    %v6153 = vpack.c.b16 %v6113, %v6109
    %v6154 = vpack.c.b16 %v6118, %v6114
    %v6155 = vpack.c.b16 %v6119, %v6115
    %v6156 = vpack.c.b16 %v6120, %v6116
    %v6157 = vpack.c.b16 %v6121, %v6117
    %v6158 = vpack.c.b16 %v6126, %v6122
    %v6159 = vpack.c.b16 %v6127, %v6123
    %v6160 = vpack.c.b16 %v6128, %v6124
    %v6161 = vpack.c.b16 %v6129, %v6125
    %6194 = vmatpush.bf16.msra.mxu0 %v6158
    %6195 = vmatpush.bf16.msra.mxu0 %v6154
    %6196 = vmatpush.bf16.msra.mxu0 %v6150
    %6197 = vmatpush.bf16.msra.mxu0 %v6146
    %6198 = vmatpush.bf16.msra.mxu0 %v6142
    %6199 = vmatpush.bf16.msra.mxu0 %v6138
    %6200 = vmatpush.bf16.msra.mxu0 %v6134
    %6201 = vmatpush.bf16.msra.mxu0 %v6130
    %6202 = vmatmul.bf16.gmra.mxu0 %v6001
    %v6203 = vpop.f32.mrf.mxu0
    %v6204 = vadd.f32 0.0, %v6203
    %v6205 = vpop.f32.mrf.mxu0
    %6206 = vdwg.mxu0
    %6207 = vmatpush.bf16.msra.mxu0 %v6159
    %6208 = vmatpush.bf16.msra.mxu0 %v6155
    %6209 = vmatpush.bf16.msra.mxu0 %v6151
    %6210 = vmatpush.bf16.msra.mxu0 %v6147
    %6211 = vmatpush.bf16.msra.mxu0 %v6143
    %6212 = vmatpush.bf16.msra.mxu0 %v6139
    %6213 = vmatpush.bf16.msra.mxu0 %v6135
    %6214 = vmatpush.bf16.msra.mxu0 %v6131
    %6215 = vmatmul.bf16.gmra.mxu0 %v6001
    %v6216 = vpop.f32.mrf.mxu0
    %v6217 = vadd.f32 0.0, %v6216
    %v6218 = vpop.f32.mrf.mxu0
    %6219 = vdwg.mxu0
    %6220 = vmatpush.bf16.msra.mxu0 %v6160
    %6221 = vmatpush.bf16.msra.mxu0 %v6156
    %6222 = vmatpush.bf16.msra.mxu0 %v6152
    %6223 = vmatpush.bf16.msra.mxu0 %v6148
    %6224 = vmatpush.bf16.msra.mxu0 %v6144
    %6225 = vmatpush.bf16.msra.mxu0 %v6140
    %6226 = vmatpush.bf16.msra.mxu0 %v6136
    %6227 = vmatpush.bf16.msra.mxu0 %v6132
    %6228 = vmatmul.bf16.gmra.mxu0 %v6001
    %v6229 = vpop.f32.mrf.mxu0
    %v6230 = vadd.f32 0.0, %v6229
    %v6231 = vpop.f32.mrf.mxu0
    %6232 = vdwg.mxu0
    %6233 = vmatpush.bf16.msra.mxu0 %v6161
    %6234 = vmatpush.bf16.msra.mxu0 %v6157
    %6235 = vmatpush.bf16.msra.mxu0 %v6153
    %6236 = vmatpush.bf16.msra.mxu0 %v6149
    %6237 = vmatpush.bf16.msra.mxu0 %v6145
    %6238 = vmatpush.bf16.msra.mxu0 %v6141
    %6239 = vmatpush.bf16.msra.mxu0 %v6137
    %6240 = vmatpush.bf16.msra.mxu0 %v6133
    %6241 = vmatmul.bf16.gmra.mxu0 %v6001
    %v6242 = vpop.f32.mrf.mxu0
    %v6243 = vadd.f32 0.0, %v6242
    %v6244 = vpop.f32.mrf.mxu0
    %6245 = vdwg.mxu0
    %v6246 = vadd.f32 %v5996, %v6204
    %v6247 = vadd.f32 %v5997, %v6217
    %v6248 = vadd.f32 %v5998, %v6230
    %v6249 = vadd.f32 %v5999, %v6243
    %v6250 = vld [vmem:[#allocation3] sm:$0xff]
    %v6251 = vxor.u32 %v6246, 2147483648
    %v6252 = vxor.u32 %v6247, 2147483648
    %v6253 = vxor.u32 %v6248, 2147483648
    %v6254 = vmul.f32 %v6251, 1.442695
    %v6255 = vpow.pop %v6254
    %v6256 = vmul.f32 %v6252, 1.442695
    %v6257 = vpow.pop %v6256
    %v6258 = vmul.f32 %v6253, 1.442695
    %v6259 = vpow.pop %v6258
    %v6260 = vadd.f32 %v6255, 1.0
    %v6261 = vadd.f32 %v6257, 1.0
    %v6262 = vadd.f32 %v6259, 1.0
    %v6263 = vrcp.pop %v6260
    %v6264 = vmul.f32 %v6260, %v6263
    %v6265 = vsub.f32 1.0, %v6264
    %v6266 = vmul.f32 %v6263, %v6265
    %v6267 = vadd.f32 %v6263, %v6266
    %vm6268 = vweird.f32 %v6260
    %vm6269 = vweird.f32 %v6263
    %vm6270 = vmor %vm6268, %vm6269
    %v6271 = vsel %vm6270, %v6263, %v6267
    %v6272 = vand.u32 2147483647, %v6260
    %vm6273 = vcmp.eq.f32.partialorder %v6272, 8.507059e+37
    %v6274 = vand.u32 %v6260, 2147483648
    %v6275 = vor.u32 1.1754944e-38, %v6274
    %v6276 = vsel %vm6273, %v6275, %v6271
    %v6277 = vmul.f32 1.0, %v6276
    %v6278 = vrcp.pop %v6261
    %v6279 = vmul.f32 %v6261, %v6278
    %v6280 = vsub.f32 1.0, %v6279
    %v6281 = vmul.f32 %v6278, %v6280
    %v6282 = vadd.f32 %v6278, %v6281
    %vm6283 = vweird.f32 %v6261
    %vm6284 = vweird.f32 %v6278
    %vm6285 = vmor %vm6283, %vm6284
    %v6286 = vsel %vm6285, %v6278, %v6282
    %v6287 = vand.u32 2147483647, %v6261
    %vm6288 = vcmp.eq.f32.partialorder %v6287, 8.507059e+37
    %v6289 = vand.u32 %v6261, 2147483648
    %v6290 = vor.u32 1.1754944e-38, %v6289
    %v6291 = vsel %vm6288, %v6290, %v6286
    %v6292 = vmul.f32 1.0, %v6291
    %v6293 = vrcp.pop %v6262
    %v6294 = vmul.f32 %v6262, %v6293
    %v6295 = vsub.f32 1.0, %v6294
    %v6296 = vmul.f32 %v6293, %v6295
    %v6297 = vadd.f32 %v6293, %v6296
    %vm6298 = vweird.f32 %v6262
    %vm6299 = vweird.f32 %v6293
    %vm6300 = vmor %vm6298, %vm6299
    %v6301 = vsel %vm6300, %v6293, %v6297
    %v6302 = vand.u32 2147483647, %v6262
    %vm6303 = vcmp.eq.f32.partialorder %v6302, 8.507059e+37
    %v6304 = vand.u32 %v6262, 2147483648
    %v6305 = vor.u32 1.1754944e-38, %v6304
    %v6306 = vsel %vm6303, %v6305, %v6301
    %v6307 = vmul.f32 1.0, %v6306
    %v6308 = vtanh.pop %v6249
    %v6309 = vmul.f32 %v6292, %v6250
    %v6310 = vmul.f32 %v6277, %v6308
    %v6311 = vadd.f32 %v6309, %v6310
    %v6312 = vtanh.pop %v6311
    %v6313 = vmul.f32 %v6307, %v6312
    %6314 = vst [vmem:[#allocation2] sm:$0xff] %v6313
    %6315 = vst [vmem:[#allocation3] sm:$0xff] %v6311
    %v6316 = vld [vmem:[%s379] sm:$0xff]
    %v6317 = vpack.c.bf16 %v6313, %v6313
    %v6318 = vpack.c.bf16 %v6316, %v6316
    %v6319 = vld [vmem:[#allocation6] sm:$0xff]
    %v6320 = vld [vmem:[#allocation6 + $0x8] sm:$0xff]
    %v6321 = vld [vmem:[#allocation6 + $0x10] sm:$0xff]
    %v6322 = vld [vmem:[#allocation6 + $0x18] sm:$0xff]
    %v6323 = vld [vmem:[#allocation6 + $0x20] sm:$0xff]
    %v6324 = vld [vmem:[#allocation6 + $0x28] sm:$0xff]
    %v6325 = vld [vmem:[#allocation6 + $0x30] sm:$0xff]
    %v6326 = vld [vmem:[#allocation6 + $0x38] sm:$0xff]
    %v6327 = vld [vmem:[#allocation6 + $0x40] sm:$0xff]
    %v6328 = vld [vmem:[#allocation6 + $0x48] sm:$0xff]
    %v6329 = vld [vmem:[#allocation6 + $0x50] sm:$0xff]
    %v6330 = vld [vmem:[#allocation6 + $0x58] sm:$0xff]
    %v6331 = vld [vmem:[#allocation6 + $0x60] sm:$0xff]
    %v6332 = vld [vmem:[#allocation6 + $0x68] sm:$0xff]
    %v6333 = vld [vmem:[#allocation6 + $0x70] sm:$0xff]
    %v6334 = vld [vmem:[#allocation6 + $0x78] sm:$0xff]
    %v6335 = vld [vmem:[#allocation6 + $0x80] sm:$0xff]
    %v6336 = vld [vmem:[#allocation6 + $0x88] sm:$0xff]
    %v6337 = vld [vmem:[#allocation6 + $0x90] sm:$0xff]
    %v6338 = vld [vmem:[#allocation6 + $0x98] sm:$0xff]
    %v6339 = vld [vmem:[#allocation6 + $0xa0] sm:$0xff]
    %v6340 = vld [vmem:[#allocation6 + $0xa8] sm:$0xff]
    %v6341 = vld [vmem:[#allocation6 + $0xb0] sm:$0xff]
    %v6342 = vld [vmem:[#allocation6 + $0xb8] sm:$0xff]
    %v6343 = vld [vmem:[#allocation6 + $0xc0] sm:$0xff]
    %v6344 = vld [vmem:[#allocation6 + $0xc8] sm:$0xff]
    %v6345 = vld [vmem:[#allocation6 + $0xd0] sm:$0xff]
    %v6346 = vld [vmem:[#allocation6 + $0xd8] sm:$0xff]
    %v6347 = vld [vmem:[#allocation6 + $0xe0] sm:$0xff]
    %v6348 = vld [vmem:[#allocation6 + $0xe8] sm:$0xff]
    %v6349 = vld [vmem:[#allocation6 + $0xf0] sm:$0xff]
    %v6350 = vld [vmem:[#allocation6 + $0xf8] sm:$0xff]
    %v6351 = vld [vmem:[#allocation6 + $0x100] sm:$0xff]
    %v6352 = vld [vmem:[#allocation6 + $0x108] sm:$0xff]
    %v6353 = vld [vmem:[#allocation6 + $0x110] sm:$0xff]
    %v6354 = vld [vmem:[#allocation6 + $0x118] sm:$0xff]
    %v6355 = vld [vmem:[#allocation6 + $0x120] sm:$0xff]
    %v6356 = vld [vmem:[#allocation6 + $0x128] sm:$0xff]
    %v6357 = vld [vmem:[#allocation6 + $0x130] sm:$0xff]
    %v6358 = vld [vmem:[#allocation6 + $0x138] sm:$0xff]
    %v6359 = vld [vmem:[#allocation6 + $0x140] sm:$0xff]
    %v6360 = vld [vmem:[#allocation6 + $0x148] sm:$0xff]
    %v6361 = vld [vmem:[#allocation6 + $0x150] sm:$0xff]
    %v6362 = vld [vmem:[#allocation6 + $0x158] sm:$0xff]
    %v6363 = vld [vmem:[#allocation6 + $0x160] sm:$0xff]
    %v6364 = vld [vmem:[#allocation6 + $0x168] sm:$0xff]
    %v6365 = vld [vmem:[#allocation6 + $0x170] sm:$0xff]
    %v6366 = vld [vmem:[#allocation6 + $0x178] sm:$0xff]
    %v6367 = vld [vmem:[#allocation6 + $0x180] sm:$0xff]
    %v6368 = vld [vmem:[#allocation6 + $0x188] sm:$0xff]
    %v6369 = vld [vmem:[#allocation6 + $0x190] sm:$0xff]
    %v6370 = vld [vmem:[#allocation6 + $0x198] sm:$0xff]
    %v6371 = vld [vmem:[#allocation6 + $0x1a0] sm:$0xff]
    %v6372 = vld [vmem:[#allocation6 + $0x1a8] sm:$0xff]
    %v6373 = vld [vmem:[#allocation6 + $0x1b0] sm:$0xff]
    %v6374 = vld [vmem:[#allocation6 + $0x1b8] sm:$0xff]
    %v6375 = vld [vmem:[#allocation6 + $0x1c0] sm:$0xff]
    %v6376 = vld [vmem:[#allocation6 + $0x1c8] sm:$0xff]
    %v6377 = vld [vmem:[#allocation6 + $0x1d0] sm:$0xff]
    %v6378 = vld [vmem:[#allocation6 + $0x1d8] sm:$0xff]
    %v6379 = vld [vmem:[#allocation6 + $0x1e0] sm:$0xff]
    %v6380 = vld [vmem:[#allocation6 + $0x1e8] sm:$0xff]
    %v6381 = vld [vmem:[#allocation6 + $0x1f0] sm:$0xff]
    %v6382 = vld [vmem:[#allocation6 + $0x1f8] sm:$0xff]
    %v6383 = vld [vmem:[%s3] sm:$0xf]
    %v6385 = vperm.slane %v6383, 0
    %v6386 = vperm.slane %v6383, 1
    %v6387 = vperm.slane %v6383, 2
    %v6388 = vperm.slane %v6383, 3
    %v6457 = vunpack.c.l.b16 %v6319
    %v6458 = vunpack.c.h.b16 %v6319
    %v6459 = vunpack.c.l.b16 %v6320
    %v6460 = vunpack.c.h.b16 %v6320
    %v6461 = vunpack.c.l.b16 %v6321
    %v6462 = vunpack.c.h.b16 %v6321
    %v6463 = vunpack.c.l.b16 %v6322
    %v6464 = vunpack.c.h.b16 %v6322
    %v6465 = vunpack.c.l.b16 %v6323
    %v6466 = vunpack.c.h.b16 %v6323
    %v6467 = vunpack.c.l.b16 %v6324
    %v6468 = vunpack.c.h.b16 %v6324
    %v6469 = vunpack.c.l.b16 %v6325
    %v6470 = vunpack.c.h.b16 %v6325
    %v6471 = vunpack.c.l.b16 %v6326
    %v6472 = vunpack.c.h.b16 %v6326
    %v6473 = vunpack.c.l.b16 %v6327
    %v6474 = vunpack.c.h.b16 %v6327
    %v6475 = vunpack.c.l.b16 %v6328
    %v6476 = vunpack.c.h.b16 %v6328
    %v6477 = vunpack.c.l.b16 %v6329
    %v6478 = vunpack.c.h.b16 %v6329
    %v6479 = vunpack.c.l.b16 %v6330
    %v6480 = vunpack.c.h.b16 %v6330
    %v6481 = vunpack.c.l.b16 %v6331
    %v6482 = vunpack.c.h.b16 %v6331
    %v6483 = vunpack.c.l.b16 %v6332
    %v6484 = vunpack.c.h.b16 %v6332
    %v6485 = vunpack.c.l.b16 %v6333
    %v6486 = vunpack.c.h.b16 %v6333
    %v6487 = vunpack.c.l.b16 %v6334
    %v6488 = vunpack.c.h.b16 %v6334
    %v6489 = vunpack.c.l.b16 %v6335
    %v6490 = vunpack.c.h.b16 %v6335
    %v6491 = vunpack.c.l.b16 %v6336
    %v6492 = vunpack.c.h.b16 %v6336
    %v6493 = vunpack.c.l.b16 %v6337
    %v6494 = vunpack.c.h.b16 %v6337
    %v6495 = vunpack.c.l.b16 %v6338
    %v6496 = vunpack.c.h.b16 %v6338
    %v6497 = vunpack.c.l.b16 %v6339
    %v6498 = vunpack.c.h.b16 %v6339
    %v6499 = vunpack.c.l.b16 %v6340
    %v6500 = vunpack.c.h.b16 %v6340
    %v6501 = vunpack.c.l.b16 %v6341
    %v6502 = vunpack.c.h.b16 %v6341
    %v6503 = vunpack.c.l.b16 %v6342
    %v6504 = vunpack.c.h.b16 %v6342
    %v6505 = vunpack.c.l.b16 %v6343
    %v6506 = vunpack.c.h.b16 %v6343
    %v6507 = vunpack.c.l.b16 %v6344
    %v6508 = vunpack.c.h.b16 %v6344
    %v6509 = vunpack.c.l.b16 %v6345
    %v6510 = vunpack.c.h.b16 %v6345
    %v6511 = vunpack.c.l.b16 %v6346
    %v6512 = vunpack.c.h.b16 %v6346
    %v6513 = vunpack.c.l.b16 %v6347
    %v6514 = vunpack.c.h.b16 %v6347
    %v6515 = vunpack.c.l.b16 %v6348
    %v6516 = vunpack.c.h.b16 %v6348
    %v6517 = vunpack.c.l.b16 %v6349
    %v6518 = vunpack.c.h.b16 %v6349
    %v6519 = vunpack.c.l.b16 %v6350
    %v6520 = vunpack.c.h.b16 %v6350
    %v6521 = vunpack.c.l.b16 %v6351
    %v6522 = vunpack.c.h.b16 %v6351
    %v6523 = vunpack.c.l.b16 %v6352
    %v6524 = vunpack.c.h.b16 %v6352
    %v6525 = vunpack.c.l.b16 %v6353
    %v6526 = vunpack.c.h.b16 %v6353
    %v6527 = vunpack.c.l.b16 %v6354
    %v6528 = vunpack.c.h.b16 %v6354
    %v6529 = vunpack.c.l.b16 %v6355
    %v6530 = vunpack.c.h.b16 %v6355
    %v6531 = vunpack.c.l.b16 %v6356
    %v6532 = vunpack.c.h.b16 %v6356
    %v6533 = vunpack.c.l.b16 %v6357
    %v6534 = vunpack.c.h.b16 %v6357
    %v6535 = vunpack.c.l.b16 %v6358
    %v6536 = vunpack.c.h.b16 %v6358
    %v6537 = vunpack.c.l.b16 %v6359
    %v6538 = vunpack.c.h.b16 %v6359
    %v6539 = vunpack.c.l.b16 %v6360
    %v6540 = vunpack.c.h.b16 %v6360
    %v6541 = vunpack.c.l.b16 %v6361
    %v6542 = vunpack.c.h.b16 %v6361
    %v6543 = vunpack.c.l.b16 %v6362
    %v6544 = vunpack.c.h.b16 %v6362
    %v6545 = vunpack.c.l.b16 %v6363
    %v6546 = vunpack.c.h.b16 %v6363
    %v6547 = vunpack.c.l.b16 %v6364
    %v6548 = vunpack.c.h.b16 %v6364
    %v6549 = vunpack.c.l.b16 %v6365
    %v6550 = vunpack.c.h.b16 %v6365
    %v6551 = vunpack.c.l.b16 %v6366
    %v6552 = vunpack.c.h.b16 %v6366
    %v6553 = vunpack.c.l.b16 %v6367
    %v6554 = vunpack.c.h.b16 %v6367
    %v6555 = vunpack.c.l.b16 %v6368
    %v6556 = vunpack.c.h.b16 %v6368
    %v6557 = vunpack.c.l.b16 %v6369
    %v6558 = vunpack.c.h.b16 %v6369
    %v6559 = vunpack.c.l.b16 %v6370
    %v6560 = vunpack.c.h.b16 %v6370
    %v6561 = vunpack.c.l.b16 %v6371
    %v6562 = vunpack.c.h.b16 %v6371
    %v6563 = vunpack.c.l.b16 %v6372
    %v6564 = vunpack.c.h.b16 %v6372
    %v6565 = vunpack.c.l.b16 %v6373
    %v6566 = vunpack.c.h.b16 %v6373
    %v6567 = vunpack.c.l.b16 %v6374
    %v6568 = vunpack.c.h.b16 %v6374
    %v6569 = vunpack.c.l.b16 %v6375
    %v6570 = vunpack.c.h.b16 %v6375
    %v6571 = vunpack.c.l.b16 %v6376
    %v6572 = vunpack.c.h.b16 %v6376
    %v6573 = vunpack.c.l.b16 %v6377
    %v6574 = vunpack.c.h.b16 %v6377
    %v6575 = vunpack.c.l.b16 %v6378
    %v6576 = vunpack.c.h.b16 %v6378
    %v6577 = vunpack.c.l.b16 %v6379
    %v6578 = vunpack.c.h.b16 %v6379
    %v6579 = vunpack.c.l.b16 %v6380
    %v6580 = vunpack.c.h.b16 %v6380
    %v6581 = vunpack.c.l.b16 %v6381
    %v6582 = vunpack.c.h.b16 %v6381
    %v6583 = vunpack.c.l.b16 %v6382
    %v6584 = vunpack.c.h.b16 %v6382
    %v6585 = vpack.c.b16 %v6461, %v6457
    %v6586 = vpack.c.b16 %v6462, %v6458
    %v6587 = vpack.c.b16 %v6463, %v6459
    %v6588 = vpack.c.b16 %v6464, %v6460
    %v6589 = vpack.c.b16 %v6469, %v6465
    %v6590 = vpack.c.b16 %v6470, %v6466
    %v6591 = vpack.c.b16 %v6471, %v6467
    %v6592 = vpack.c.b16 %v6472, %v6468
    %v6593 = vpack.c.b16 %v6477, %v6473
    %v6594 = vpack.c.b16 %v6478, %v6474
    %v6595 = vpack.c.b16 %v6479, %v6475
    %v6596 = vpack.c.b16 %v6480, %v6476
    %v6597 = vpack.c.b16 %v6485, %v6481
    %v6598 = vpack.c.b16 %v6486, %v6482
    %v6599 = vpack.c.b16 %v6487, %v6483
    %v6600 = vpack.c.b16 %v6488, %v6484
    %v6601 = vpack.c.b16 %v6493, %v6489
    %v6602 = vpack.c.b16 %v6494, %v6490
    %v6603 = vpack.c.b16 %v6495, %v6491
    %v6604 = vpack.c.b16 %v6496, %v6492
    %v6605 = vpack.c.b16 %v6501, %v6497
    %v6606 = vpack.c.b16 %v6502, %v6498
    %v6607 = vpack.c.b16 %v6503, %v6499
    %v6608 = vpack.c.b16 %v6504, %v6500
    %v6609 = vpack.c.b16 %v6509, %v6505
    %v6610 = vpack.c.b16 %v6510, %v6506
    %v6611 = vpack.c.b16 %v6511, %v6507
    %v6612 = vpack.c.b16 %v6512, %v6508
    %v6613 = vpack.c.b16 %v6517, %v6513
    %v6614 = vpack.c.b16 %v6518, %v6514
    %v6615 = vpack.c.b16 %v6519, %v6515
    %v6616 = vpack.c.b16 %v6520, %v6516
    %v6617 = vpack.c.b16 %v6525, %v6521
    %v6618 = vpack.c.b16 %v6526, %v6522
    %v6619 = vpack.c.b16 %v6527, %v6523
    %v6620 = vpack.c.b16 %v6528, %v6524
    %v6621 = vpack.c.b16 %v6533, %v6529
    %v6622 = vpack.c.b16 %v6534, %v6530
    %v6623 = vpack.c.b16 %v6535, %v6531
    %v6624 = vpack.c.b16 %v6536, %v6532
    %v6625 = vpack.c.b16 %v6541, %v6537
    %v6626 = vpack.c.b16 %v6542, %v6538
    %v6627 = vpack.c.b16 %v6543, %v6539
    %v6628 = vpack.c.b16 %v6544, %v6540
    %v6629 = vpack.c.b16 %v6549, %v6545
    %v6630 = vpack.c.b16 %v6550, %v6546
    %v6631 = vpack.c.b16 %v6551, %v6547
    %v6632 = vpack.c.b16 %v6552, %v6548
    %v6633 = vpack.c.b16 %v6557, %v6553
    %v6634 = vpack.c.b16 %v6558, %v6554
    %v6635 = vpack.c.b16 %v6559, %v6555
    %v6636 = vpack.c.b16 %v6560, %v6556
    %v6637 = vpack.c.b16 %v6565, %v6561
    %v6638 = vpack.c.b16 %v6566, %v6562
    %v6639 = vpack.c.b16 %v6567, %v6563
    %v6640 = vpack.c.b16 %v6568, %v6564
    %v6641 = vpack.c.b16 %v6573, %v6569
    %v6642 = vpack.c.b16 %v6574, %v6570
    %v6643 = vpack.c.b16 %v6575, %v6571
    %v6644 = vpack.c.b16 %v6576, %v6572
    %v6645 = vpack.c.b16 %v6581, %v6577
    %v6646 = vpack.c.b16 %v6582, %v6578
    %v6647 = vpack.c.b16 %v6583, %v6579
    %v6648 = vpack.c.b16 %v6584, %v6580
    %6713 = vmatpush.bf16.msra.mxu0 %v6613
    %6714 = vmatpush.bf16.msra.mxu0 %v6609
    %6715 = vmatpush.bf16.msra.mxu0 %v6605
    %6716 = vmatpush.bf16.msra.mxu0 %v6601
    %6717 = vmatpush.bf16.msra.mxu0 %v6597
    %6718 = vmatpush.bf16.msra.mxu0 %v6593
    %6719 = vmatpush.bf16.msra.mxu0 %v6589
    %6720 = vmatpush.bf16.msra.mxu0 %v6585
    %6721 = vmatmul.bf16.gmra.mxu0 %v6317
    %v6722 = vpop.f32.mrf.mxu0
    %v6723 = vadd.f32 %v6385, %v6722
    %v6724 = vpop.f32.mrf.mxu0
    %6725 = vdwg.mxu0
    %6726 = vmatpush.bf16.msra.mxu0 %v6645
    %6727 = vmatpush.bf16.msra.mxu0 %v6641
    %6728 = vmatpush.bf16.msra.mxu0 %v6637
    %6729 = vmatpush.bf16.msra.mxu0 %v6633
    %6730 = vmatpush.bf16.msra.mxu0 %v6629
    %6731 = vmatpush.bf16.msra.mxu0 %v6625
    %6732 = vmatpush.bf16.msra.mxu0 %v6621
    %6733 = vmatpush.bf16.msra.mxu0 %v6617
    %6734 = vmatmul.bf16.gmra.mxu0 %v6318
    %v6735 = vpop.f32.mrf.mxu0
    %v6736 = vadd.f32 %v6723, %v6735
    %v6737 = vpop.f32.mrf.mxu0
    %6738 = vdwg.mxu0
    %6739 = vmatpush.bf16.msra.mxu0 %v6614
    %6740 = vmatpush.bf16.msra.mxu0 %v6610
    %6741 = vmatpush.bf16.msra.mxu0 %v6606
    %6742 = vmatpush.bf16.msra.mxu0 %v6602
    %6743 = vmatpush.bf16.msra.mxu0 %v6598
    %6744 = vmatpush.bf16.msra.mxu0 %v6594
    %6745 = vmatpush.bf16.msra.mxu0 %v6590
    %6746 = vmatpush.bf16.msra.mxu0 %v6586
    %6747 = vmatmul.bf16.gmra.mxu0 %v6317
    %v6748 = vpop.f32.mrf.mxu0
    %v6749 = vadd.f32 %v6386, %v6748
    %v6750 = vpop.f32.mrf.mxu0
    %6751 = vdwg.mxu0
    %6752 = vmatpush.bf16.msra.mxu0 %v6646
    %6753 = vmatpush.bf16.msra.mxu0 %v6642
    %6754 = vmatpush.bf16.msra.mxu0 %v6638
    %6755 = vmatpush.bf16.msra.mxu0 %v6634
    %6756 = vmatpush.bf16.msra.mxu0 %v6630
    %6757 = vmatpush.bf16.msra.mxu0 %v6626
    %6758 = vmatpush.bf16.msra.mxu0 %v6622
    %6759 = vmatpush.bf16.msra.mxu0 %v6618
    %6760 = vmatmul.bf16.gmra.mxu0 %v6318
    %v6761 = vpop.f32.mrf.mxu0
    %v6762 = vadd.f32 %v6749, %v6761
    %v6763 = vpop.f32.mrf.mxu0
    %6764 = vdwg.mxu0
    %6765 = vmatpush.bf16.msra.mxu0 %v6615
    %6766 = vmatpush.bf16.msra.mxu0 %v6611
    %6767 = vmatpush.bf16.msra.mxu0 %v6607
    %6768 = vmatpush.bf16.msra.mxu0 %v6603
    %6769 = vmatpush.bf16.msra.mxu0 %v6599
    %6770 = vmatpush.bf16.msra.mxu0 %v6595
    %6771 = vmatpush.bf16.msra.mxu0 %v6591
    %6772 = vmatpush.bf16.msra.mxu0 %v6587
    %6773 = vmatmul.bf16.gmra.mxu0 %v6317
    %v6774 = vpop.f32.mrf.mxu0
    %v6775 = vadd.f32 %v6387, %v6774
    %v6776 = vpop.f32.mrf.mxu0
    %6777 = vdwg.mxu0
    %6778 = vmatpush.bf16.msra.mxu0 %v6647
    %6779 = vmatpush.bf16.msra.mxu0 %v6643
    %6780 = vmatpush.bf16.msra.mxu0 %v6639
    %6781 = vmatpush.bf16.msra.mxu0 %v6635
    %6782 = vmatpush.bf16.msra.mxu0 %v6631
    %6783 = vmatpush.bf16.msra.mxu0 %v6627
    %6784 = vmatpush.bf16.msra.mxu0 %v6623
    %6785 = vmatpush.bf16.msra.mxu0 %v6619
    %6786 = vmatmul.bf16.gmra.mxu0 %v6318
    %v6787 = vpop.f32.mrf.mxu0
    %v6788 = vadd.f32 %v6775, %v6787
    %v6789 = vpop.f32.mrf.mxu0
    %6790 = vdwg.mxu0
    %6791 = vmatpush.bf16.msra.mxu0 %v6616
    %6792 = vmatpush.bf16.msra.mxu0 %v6612
    %6793 = vmatpush.bf16.msra.mxu0 %v6608
    %6794 = vmatpush.bf16.msra.mxu0 %v6604
    %6795 = vmatpush.bf16.msra.mxu0 %v6600
    %6796 = vmatpush.bf16.msra.mxu0 %v6596
    %6797 = vmatpush.bf16.msra.mxu0 %v6592
    %6798 = vmatpush.bf16.msra.mxu0 %v6588
    %6799 = vmatmul.bf16.gmra.mxu0 %v6317
    %v6800 = vpop.f32.mrf.mxu0
    %v6801 = vadd.f32 %v6388, %v6800
    %v6802 = vpop.f32.mrf.mxu0
    %6803 = vdwg.mxu0
    %6804 = vmatpush.bf16.msra.mxu0 %v6648
    %6805 = vmatpush.bf16.msra.mxu0 %v6644
    %6806 = vmatpush.bf16.msra.mxu0 %v6640
    %6807 = vmatpush.bf16.msra.mxu0 %v6636
    %6808 = vmatpush.bf16.msra.mxu0 %v6632
    %6809 = vmatpush.bf16.msra.mxu0 %v6628
    %6810 = vmatpush.bf16.msra.mxu0 %v6624
    %6811 = vmatpush.bf16.msra.mxu0 %v6620
    %6812 = vmatmul.bf16.gmra.mxu0 %v6318
    %v6813 = vpop.f32.mrf.mxu0
    %v6814 = vadd.f32 %v6801, %v6813
    %v6815 = vpop.f32.mrf.mxu0
    %6816 = vdwg.mxu0
    %v6817 = vld [vmem:[%s881] sm:$0xff]
    %v6818 = vxor.u32 %v6736, 2147483648
    %v6819 = vxor.u32 %v6762, 2147483648
    %v6820 = vxor.u32 %v6788, 2147483648
    %v6821 = vmul.f32 %v6818, 1.442695
    %v6822 = vpow.pop %v6821
    %v6823 = vmul.f32 %v6819, 1.442695
    %v6824 = vpow.pop %v6823
    %v6825 = vmul.f32 %v6820, 1.442695
    %v6826 = vpow.pop %v6825
    %v6827 = vadd.f32 %v6822, 1.0
    %v6828 = vadd.f32 %v6824, 1.0
    %v6829 = vadd.f32 %v6826, 1.0
    %v6830 = vrcp.pop %v6827
    %v6831 = vmul.f32 %v6827, %v6830
    %v6832 = vsub.f32 1.0, %v6831
    %v6833 = vmul.f32 %v6830, %v6832
    %v6834 = vadd.f32 %v6830, %v6833
    %vm6835 = vweird.f32 %v6827
    %vm6836 = vweird.f32 %v6830
    %vm6837 = vmor %vm6835, %vm6836
    %v6838 = vsel %vm6837, %v6830, %v6834
    %v6839 = vand.u32 2147483647, %v6827
    %vm6840 = vcmp.eq.f32.partialorder %v6839, 8.507059e+37
    %v6841 = vand.u32 %v6827, 2147483648
    %v6842 = vor.u32 1.1754944e-38, %v6841
    %v6843 = vsel %vm6840, %v6842, %v6838
    %v6844 = vmul.f32 1.0, %v6843
    %v6845 = vrcp.pop %v6828
    %v6846 = vmul.f32 %v6828, %v6845
    %v6847 = vsub.f32 1.0, %v6846
    %v6848 = vmul.f32 %v6845, %v6847
    %v6849 = vadd.f32 %v6845, %v6848
    %vm6850 = vweird.f32 %v6828
    %vm6851 = vweird.f32 %v6845
    %vm6852 = vmor %vm6850, %vm6851
    %v6853 = vsel %vm6852, %v6845, %v6849
    %v6854 = vand.u32 2147483647, %v6828
    %vm6855 = vcmp.eq.f32.partialorder %v6854, 8.507059e+37
    %v6856 = vand.u32 %v6828, 2147483648
    %v6857 = vor.u32 1.1754944e-38, %v6856
    %v6858 = vsel %vm6855, %v6857, %v6853
    %v6859 = vmul.f32 1.0, %v6858
    %v6860 = vrcp.pop %v6829
    %v6861 = vmul.f32 %v6829, %v6860
    %v6862 = vsub.f32 1.0, %v6861
    %v6863 = vmul.f32 %v6860, %v6862
    %v6864 = vadd.f32 %v6860, %v6863
    %vm6865 = vweird.f32 %v6829
    %vm6866 = vweird.f32 %v6860
    %vm6867 = vmor %vm6865, %vm6866
    %v6868 = vsel %vm6867, %v6860, %v6864
    %v6869 = vand.u32 2147483647, %v6829
    %vm6870 = vcmp.eq.f32.partialorder %v6869, 8.507059e+37
    %v6871 = vand.u32 %v6829, 2147483648
    %v6872 = vor.u32 1.1754944e-38, %v6871
    %v6873 = vsel %vm6870, %v6872, %v6868
    %v6874 = vmul.f32 1.0, %v6873
    %v6875 = vtanh.pop %v6814
    %v6876 = vmul.f32 %v6859, %v6817
    %v6877 = vmul.f32 %v6844, %v6875
    %v6878 = vadd.f32 %v6876, %v6877
    %v6879 = vtanh.pop %v6878
    %v6880 = vmul.f32 %v6874, %v6879
    %6881 = vst [vmem:[%s379] sm:$0xff] %v6880
    %6882 = vst [vmem:[%s881] sm:$0xff] %v6878
    %v6883 = vpack.c.bf16 %v6880, %v6880
    %v6885 = vrot.slane %v6883, 3
    %v6888 = vsel %vm951, %v6883, %v6885
    %v6890 = vsel %vm956, %v6883, %v6885
    %v6892 = vrot.slane %v6890, 1
    %v6893 = vsel %vm960, %v6883, %v6885
    %v6895 = vrot.slane %v6893, 2
    %v6896 = vsel %vm964, %v6883, %v6885
    %v6898 = vrot.slane %v6896, 3
    %v6899 = vunpack.i.l.s16 %v6888
    %v6900 = vunpack.i.h.s16 %v6888
    %v6901 = vunpack.i.l.s16 %v6892
    %v6902 = vunpack.i.h.s16 %v6892
    %v6903 = vunpack.i.l.s16 %v6895
    %v6904 = vunpack.i.h.s16 %v6895
    %v6905 = vunpack.i.l.s16 %v6898
    %v6906 = vunpack.i.h.s16 %v6898
    %v6907 = vpack.i.b16 %v6899, %v6899
    %v6908 = vpack.i.b16 %v6900, %v6900
    %v6909 = vpack.i.b16 %v6901, %v6901
    %v6910 = vpack.i.b16 %v6902, %v6902
    %v6911 = vpack.i.b16 %v6903, %v6903
    %v6912 = vpack.i.b16 %v6904, %v6904
    %v6913 = vpack.i.b16 %v6905, %v6905
    %v6914 = vpack.i.b16 %v6906, %v6906
    %v6916 = vunpack.c.l.s4 286326784
    %v6917 = vunpack.c.0.s8 %v6916
    %v6918 = vperm.slane %v6907, %v6917
    %v6920 = vunpack.c.l.s4 286326784
    %v6921 = vunpack.c.0.s8 %v6920
    %v6922 = vperm.slane %v6908, %v6921
    %v6924 = vunpack.c.l.s4 286326784
    %v6925 = vunpack.c.0.s8 %v6924
    %v6926 = vperm.slane %v6909, %v6925
    %v6928 = vunpack.c.l.s4 286326784
    %v6929 = vunpack.c.0.s8 %v6928
    %v6930 = vperm.slane %v6910, %v6929
    %v6932 = vunpack.c.l.s4 286326784
    %v6933 = vunpack.c.0.s8 %v6932
    %v6934 = vperm.slane %v6911, %v6933
    %v6936 = vunpack.c.l.s4 286326784
    %v6937 = vunpack.c.0.s8 %v6936
    %v6938 = vperm.slane %v6912, %v6937
    %v6940 = vunpack.c.l.s4 286326784
    %v6941 = vunpack.c.0.s8 %v6940
    %v6942 = vperm.slane %v6913, %v6941
    %v6944 = vunpack.c.l.s4 286326784
    %v6945 = vunpack.c.0.s8 %v6944
    %v6946 = vperm.slane %v6914, %v6945
    %vm6955 = vcmask 1043459
    %vm6956 = vsmask.f32 3328
    %vm6957 = vmand %vm6955, %vm6956
    %v6958 = vld [vmem:[%s4] sm:$0x8]
    %v6959 = vsel %vm6957, %v6918, %v6958
    %6960 = vst [vmem:[%s4] sm:$0x8] %v6959
    %v6961 = vld [vmem:[%s4 + $0x4] sm:$0x8]
    %v6962 = vsel %vm6957, %v6922, %v6961
    %6963 = vst [vmem:[%s4 + $0x4] sm:$0x8] %v6962
    %v6964 = vld [vmem:[%s4 + $0x8] sm:$0x8]
    %v6965 = vsel %vm6957, %v6926, %v6964
    %6966 = vst [vmem:[%s4 + $0x8] sm:$0x8] %v6965
    %v6967 = vld [vmem:[%s4 + $0xc] sm:$0x8]
    %v6968 = vsel %vm6957, %v6930, %v6967
    %6969 = vst [vmem:[%s4 + $0xc] sm:$0x8] %v6968
    %v6970 = vld [vmem:[%s4 + $0x10] sm:$0x8]
    %v6971 = vsel %vm6957, %v6934, %v6970
    %6972 = vst [vmem:[%s4 + $0x10] sm:$0x8] %v6971
    %v6973 = vld [vmem:[%s4 + $0x14] sm:$0x8]
    %v6974 = vsel %vm6957, %v6938, %v6973
    %6975 = vst [vmem:[%s4 + $0x14] sm:$0x8] %v6974
    %v6976 = vld [vmem:[%s4 + $0x18] sm:$0x8]
    %v6977 = vsel %vm6957, %v6942, %v6976
    %6978 = vst [vmem:[%s4 + $0x18] sm:$0x8] %v6977
    %v6979 = vld [vmem:[%s4 + $0x1c] sm:$0x8]
    %v6980 = vsel %vm6957, %v6946, %v6979
    %6981 = vst [vmem:[%s4 + $0x1c] sm:$0x8] %v6980
    %s6982 = scalar_lea.vmem %s0, 112
    %v6983 = vld [vmem:[%s6982] sm:$0xff]
    %v6984 = vld [vmem:[%s6982 + $0x8] sm:$0xff]
    %v6985 = vunpack.c.l.bf16 %v6983
    %v6986 = vunpack.c.h.bf16 %v6983
    %v6987 = vunpack.c.l.bf16 %v6984
    %v6988 = vunpack.c.h.bf16 %v6984
    %v6989 = vld [vmem:[#allocation2] sm:$0xff]
    %v6990 = vpack.c.bf16 %v6989, %v6989
    %v6991 = vld [vmem:[#allocation4] sm:$0xff]
    %v6992 = vld [vmem:[#allocation4 + $0x8] sm:$0xff]
    %v6993 = vld [vmem:[#allocation4 + $0x10] sm:$0xff]
    %v6994 = vld [vmem:[#allocation4 + $0x18] sm:$0xff]
    %v6995 = vld [vmem:[#allocation4 + $0x20] sm:$0xff]
    %v6996 = vld [vmem:[#allocation4 + $0x28] sm:$0xff]
    %v6997 = vld [vmem:[#allocation4 + $0x30] sm:$0xff]
    %v6998 = vld [vmem:[#allocation4 + $0x38] sm:$0xff]
    %v6999 = vld [vmem:[#allocation4 + $0x40] sm:$0xff]
    %v7000 = vld [vmem:[#allocation4 + $0x48] sm:$0xff]
    %v7001 = vld [vmem:[#allocation4 + $0x50] sm:$0xff]
    %v7002 = vld [vmem:[#allocation4 + $0x58] sm:$0xff]
    %v7003 = vld [vmem:[#allocation4 + $0x60] sm:$0xff]
    %v7004 = vld [vmem:[#allocation4 + $0x68] sm:$0xff]
    %v7005 = vld [vmem:[#allocation4 + $0x70] sm:$0xff]
    %v7006 = vld [vmem:[#allocation4 + $0x78] sm:$0xff]
    %v7007 = vld [vmem:[#allocation4 + $0x80] sm:$0xff]
    %v7008 = vld [vmem:[#allocation4 + $0x88] sm:$0xff]
    %v7009 = vld [vmem:[#allocation4 + $0x90] sm:$0xff]
    %v7010 = vld [vmem:[#allocation4 + $0x98] sm:$0xff]
    %v7011 = vld [vmem:[#allocation4 + $0xa0] sm:$0xff]
    %v7012 = vld [vmem:[#allocation4 + $0xa8] sm:$0xff]
    %v7013 = vld [vmem:[#allocation4 + $0xb0] sm:$0xff]
    %v7014 = vld [vmem:[#allocation4 + $0xb8] sm:$0xff]
    %v7015 = vld [vmem:[#allocation4 + $0xc0] sm:$0xff]
    %v7016 = vld [vmem:[#allocation4 + $0xc8] sm:$0xff]
    %v7017 = vld [vmem:[#allocation4 + $0xd0] sm:$0xff]
    %v7018 = vld [vmem:[#allocation4 + $0xd8] sm:$0xff]
    %v7019 = vld [vmem:[#allocation4 + $0xe0] sm:$0xff]
    %v7020 = vld [vmem:[#allocation4 + $0xe8] sm:$0xff]
    %v7021 = vld [vmem:[#allocation4 + $0xf0] sm:$0xff]
    %v7022 = vld [vmem:[#allocation4 + $0xf8] sm:$0xff]
    %v7055 = vunpack.c.l.b16 %v6991
    %v7056 = vunpack.c.h.b16 %v6991
    %v7057 = vunpack.c.l.b16 %v6992
    %v7058 = vunpack.c.h.b16 %v6992
    %v7059 = vunpack.c.l.b16 %v6993
    %v7060 = vunpack.c.h.b16 %v6993
    %v7061 = vunpack.c.l.b16 %v6994
    %v7062 = vunpack.c.h.b16 %v6994
    %v7063 = vunpack.c.l.b16 %v6995
    %v7064 = vunpack.c.h.b16 %v6995
    %v7065 = vunpack.c.l.b16 %v6996
    %v7066 = vunpack.c.h.b16 %v6996
    %v7067 = vunpack.c.l.b16 %v6997
    %v7068 = vunpack.c.h.b16 %v6997
    %v7069 = vunpack.c.l.b16 %v6998
    %v7070 = vunpack.c.h.b16 %v6998
    %v7071 = vunpack.c.l.b16 %v6999
    %v7072 = vunpack.c.h.b16 %v6999
    %v7073 = vunpack.c.l.b16 %v7000
    %v7074 = vunpack.c.h.b16 %v7000
    %v7075 = vunpack.c.l.b16 %v7001
    %v7076 = vunpack.c.h.b16 %v7001
    %v7077 = vunpack.c.l.b16 %v7002
    %v7078 = vunpack.c.h.b16 %v7002
    %v7079 = vunpack.c.l.b16 %v7003
    %v7080 = vunpack.c.h.b16 %v7003
    %v7081 = vunpack.c.l.b16 %v7004
    %v7082 = vunpack.c.h.b16 %v7004
    %v7083 = vunpack.c.l.b16 %v7005
    %v7084 = vunpack.c.h.b16 %v7005
    %v7085 = vunpack.c.l.b16 %v7006
    %v7086 = vunpack.c.h.b16 %v7006
    %v7087 = vunpack.c.l.b16 %v7007
    %v7088 = vunpack.c.h.b16 %v7007
    %v7089 = vunpack.c.l.b16 %v7008
    %v7090 = vunpack.c.h.b16 %v7008
    %v7091 = vunpack.c.l.b16 %v7009
    %v7092 = vunpack.c.h.b16 %v7009
    %v7093 = vunpack.c.l.b16 %v7010
    %v7094 = vunpack.c.h.b16 %v7010
    %v7095 = vunpack.c.l.b16 %v7011
    %v7096 = vunpack.c.h.b16 %v7011
    %v7097 = vunpack.c.l.b16 %v7012
    %v7098 = vunpack.c.h.b16 %v7012
    %v7099 = vunpack.c.l.b16 %v7013
    %v7100 = vunpack.c.h.b16 %v7013
    %v7101 = vunpack.c.l.b16 %v7014
    %v7102 = vunpack.c.h.b16 %v7014
    %v7103 = vunpack.c.l.b16 %v7015
    %v7104 = vunpack.c.h.b16 %v7015
    %v7105 = vunpack.c.l.b16 %v7016
    %v7106 = vunpack.c.h.b16 %v7016
    %v7107 = vunpack.c.l.b16 %v7017
    %v7108 = vunpack.c.h.b16 %v7017
    %v7109 = vunpack.c.l.b16 %v7018
    %v7110 = vunpack.c.h.b16 %v7018
    %v7111 = vunpack.c.l.b16 %v7019
    %v7112 = vunpack.c.h.b16 %v7019
    %v7113 = vunpack.c.l.b16 %v7020
    %v7114 = vunpack.c.h.b16 %v7020
    %v7115 = vunpack.c.l.b16 %v7021
    %v7116 = vunpack.c.h.b16 %v7021
    %v7117 = vunpack.c.l.b16 %v7022
    %v7118 = vunpack.c.h.b16 %v7022
    %v7119 = vpack.c.b16 %v7059, %v7055
    %v7120 = vpack.c.b16 %v7060, %v7056
    %v7121 = vpack.c.b16 %v7061, %v7057
    %v7122 = vpack.c.b16 %v7062, %v7058
    %v7123 = vpack.c.b16 %v7067, %v7063
    %v7124 = vpack.c.b16 %v7068, %v7064
    %v7125 = vpack.c.b16 %v7069, %v7065
    %v7126 = vpack.c.b16 %v7070, %v7066
    %v7127 = vpack.c.b16 %v7075, %v7071
    %v7128 = vpack.c.b16 %v7076, %v7072
    %v7129 = vpack.c.b16 %v7077, %v7073
    %v7130 = vpack.c.b16 %v7078, %v7074
    %v7131 = vpack.c.b16 %v7083, %v7079
    %v7132 = vpack.c.b16 %v7084, %v7080
    %v7133 = vpack.c.b16 %v7085, %v7081
    %v7134 = vpack.c.b16 %v7086, %v7082
    %v7135 = vpack.c.b16 %v7091, %v7087
    %v7136 = vpack.c.b16 %v7092, %v7088
    %v7137 = vpack.c.b16 %v7093, %v7089
    %v7138 = vpack.c.b16 %v7094, %v7090
    %v7139 = vpack.c.b16 %v7099, %v7095
    %v7140 = vpack.c.b16 %v7100, %v7096
    %v7141 = vpack.c.b16 %v7101, %v7097
    %v7142 = vpack.c.b16 %v7102, %v7098
    %v7143 = vpack.c.b16 %v7107, %v7103
    %v7144 = vpack.c.b16 %v7108, %v7104
    %v7145 = vpack.c.b16 %v7109, %v7105
    %v7146 = vpack.c.b16 %v7110, %v7106
    %v7147 = vpack.c.b16 %v7115, %v7111
    %v7148 = vpack.c.b16 %v7116, %v7112
    %v7149 = vpack.c.b16 %v7117, %v7113
    %v7150 = vpack.c.b16 %v7118, %v7114
    %7183 = vmatpush.bf16.msra.mxu0 %v7147
    %7184 = vmatpush.bf16.msra.mxu0 %v7143
    %7185 = vmatpush.bf16.msra.mxu0 %v7139
    %7186 = vmatpush.bf16.msra.mxu0 %v7135
    %7187 = vmatpush.bf16.msra.mxu0 %v7131
    %7188 = vmatpush.bf16.msra.mxu0 %v7127
    %7189 = vmatpush.bf16.msra.mxu0 %v7123
    %7190 = vmatpush.bf16.msra.mxu0 %v7119
    %7191 = vmatmul.bf16.gmra.mxu0 %v6990
    %v7192 = vpop.f32.mrf.mxu0
    %v7193 = vadd.f32 0.0, %v7192
    %v7194 = vpop.f32.mrf.mxu0
    %7195 = vdwg.mxu0
    %7196 = vmatpush.bf16.msra.mxu0 %v7148
    %7197 = vmatpush.bf16.msra.mxu0 %v7144
    %7198 = vmatpush.bf16.msra.mxu0 %v7140
    %7199 = vmatpush.bf16.msra.mxu0 %v7136
    %7200 = vmatpush.bf16.msra.mxu0 %v7132
    %7201 = vmatpush.bf16.msra.mxu0 %v7128
    %7202 = vmatpush.bf16.msra.mxu0 %v7124
    %7203 = vmatpush.bf16.msra.mxu0 %v7120
    %7204 = vmatmul.bf16.gmra.mxu0 %v6990
    %v7205 = vpop.f32.mrf.mxu0
    %v7206 = vadd.f32 0.0, %v7205
    %v7207 = vpop.f32.mrf.mxu0
    %7208 = vdwg.mxu0
    %7209 = vmatpush.bf16.msra.mxu0 %v7149
    %7210 = vmatpush.bf16.msra.mxu0 %v7145
    %7211 = vmatpush.bf16.msra.mxu0 %v7141
    %7212 = vmatpush.bf16.msra.mxu0 %v7137
    %7213 = vmatpush.bf16.msra.mxu0 %v7133
    %7214 = vmatpush.bf16.msra.mxu0 %v7129
    %7215 = vmatpush.bf16.msra.mxu0 %v7125
    %7216 = vmatpush.bf16.msra.mxu0 %v7121
    %7217 = vmatmul.bf16.gmra.mxu0 %v6990
    %v7218 = vpop.f32.mrf.mxu0
    %v7219 = vadd.f32 0.0, %v7218
    %v7220 = vpop.f32.mrf.mxu0
    %7221 = vdwg.mxu0
    %7222 = vmatpush.bf16.msra.mxu0 %v7150
    %7223 = vmatpush.bf16.msra.mxu0 %v7146
    %7224 = vmatpush.bf16.msra.mxu0 %v7142
    %7225 = vmatpush.bf16.msra.mxu0 %v7138
    %7226 = vmatpush.bf16.msra.mxu0 %v7134
    %7227 = vmatpush.bf16.msra.mxu0 %v7130
    %7228 = vmatpush.bf16.msra.mxu0 %v7126
    %7229 = vmatpush.bf16.msra.mxu0 %v7122
    %7230 = vmatmul.bf16.gmra.mxu0 %v6990
    %v7231 = vpop.f32.mrf.mxu0
    %v7232 = vadd.f32 0.0, %v7231
    %v7233 = vpop.f32.mrf.mxu0
    %7234 = vdwg.mxu0
    %v7235 = vadd.f32 %v6985, %v7193
    %v7236 = vadd.f32 %v6986, %v7206
    %v7237 = vadd.f32 %v6987, %v7219
    %v7238 = vadd.f32 %v6988, %v7232
    %v7239 = vld [vmem:[#allocation3] sm:$0xff]
    %v7240 = vxor.u32 %v7235, 2147483648
    %v7241 = vxor.u32 %v7236, 2147483648
    %v7242 = vxor.u32 %v7237, 2147483648
    %v7243 = vmul.f32 %v7240, 1.442695
    %v7244 = vpow.pop %v7243
    %v7245 = vmul.f32 %v7241, 1.442695
    %v7246 = vpow.pop %v7245
    %v7247 = vmul.f32 %v7242, 1.442695
    %v7248 = vpow.pop %v7247
    %v7249 = vadd.f32 %v7244, 1.0
    %v7250 = vadd.f32 %v7246, 1.0
    %v7251 = vadd.f32 %v7248, 1.0
    %v7252 = vrcp.pop %v7249
    %v7253 = vmul.f32 %v7249, %v7252
    %v7254 = vsub.f32 1.0, %v7253
    %v7255 = vmul.f32 %v7252, %v7254
    %v7256 = vadd.f32 %v7252, %v7255
    %vm7257 = vweird.f32 %v7249
    %vm7258 = vweird.f32 %v7252
    %vm7259 = vmor %vm7257, %vm7258
    %v7260 = vsel %vm7259, %v7252, %v7256
    %v7261 = vand.u32 2147483647, %v7249
    %vm7262 = vcmp.eq.f32.partialorder %v7261, 8.507059e+37
    %v7263 = vand.u32 %v7249, 2147483648
    %v7264 = vor.u32 1.1754944e-38, %v7263
    %v7265 = vsel %vm7262, %v7264, %v7260
    %v7266 = vmul.f32 1.0, %v7265
    %v7267 = vrcp.pop %v7250
    %v7268 = vmul.f32 %v7250, %v7267
    %v7269 = vsub.f32 1.0, %v7268
    %v7270 = vmul.f32 %v7267, %v7269
    %v7271 = vadd.f32 %v7267, %v7270
    %vm7272 = vweird.f32 %v7250
    %vm7273 = vweird.f32 %v7267
    %vm7274 = vmor %vm7272, %vm7273
    %v7275 = vsel %vm7274, %v7267, %v7271
    %v7276 = vand.u32 2147483647, %v7250
    %vm7277 = vcmp.eq.f32.partialorder %v7276, 8.507059e+37
    %v7278 = vand.u32 %v7250, 2147483648
    %v7279 = vor.u32 1.1754944e-38, %v7278
    %v7280 = vsel %vm7277, %v7279, %v7275
    %v7281 = vmul.f32 1.0, %v7280
    %v7282 = vrcp.pop %v7251
    %v7283 = vmul.f32 %v7251, %v7282
    %v7284 = vsub.f32 1.0, %v7283
    %v7285 = vmul.f32 %v7282, %v7284
    %v7286 = vadd.f32 %v7282, %v7285
    %vm7287 = vweird.f32 %v7251
    %vm7288 = vweird.f32 %v7282
    %vm7289 = vmor %vm7287, %vm7288
    %v7290 = vsel %vm7289, %v7282, %v7286
    %v7291 = vand.u32 2147483647, %v7251
    %vm7292 = vcmp.eq.f32.partialorder %v7291, 8.507059e+37
    %v7293 = vand.u32 %v7251, 2147483648
    %v7294 = vor.u32 1.1754944e-38, %v7293
    %v7295 = vsel %vm7292, %v7294, %v7290
    %v7296 = vmul.f32 1.0, %v7295
    %v7297 = vtanh.pop %v7238
    %v7298 = vmul.f32 %v7281, %v7239
    %v7299 = vmul.f32 %v7266, %v7297
    %v7300 = vadd.f32 %v7298, %v7299
    %v7301 = vtanh.pop %v7300
    %v7302 = vmul.f32 %v7296, %v7301
    %7303 = vst [vmem:[#allocation2] sm:$0xff] %v7302
    %7304 = vst [vmem:[#allocation3] sm:$0xff] %v7300
    %v7305 = vld [vmem:[%s379] sm:$0xff]
    %v7306 = vpack.c.bf16 %v7302, %v7302
    %v7307 = vpack.c.bf16 %v7305, %v7305
    %v7308 = vld [vmem:[#allocation6] sm:$0xff]
    %v7309 = vld [vmem:[#allocation6 + $0x8] sm:$0xff]
    %v7310 = vld [vmem:[#allocation6 + $0x10] sm:$0xff]
    %v7311 = vld [vmem:[#allocation6 + $0x18] sm:$0xff]
    %v7312 = vld [vmem:[#allocation6 + $0x20] sm:$0xff]
    %v7313 = vld [vmem:[#allocation6 + $0x28] sm:$0xff]
    %v7314 = vld [vmem:[#allocation6 + $0x30] sm:$0xff]
    %v7315 = vld [vmem:[#allocation6 + $0x38] sm:$0xff]
    %v7316 = vld [vmem:[#allocation6 + $0x40] sm:$0xff]
    %v7317 = vld [vmem:[#allocation6 + $0x48] sm:$0xff]
    %v7318 = vld [vmem:[#allocation6 + $0x50] sm:$0xff]
    %v7319 = vld [vmem:[#allocation6 + $0x58] sm:$0xff]
    %v7320 = vld [vmem:[#allocation6 + $0x60] sm:$0xff]
    %v7321 = vld [vmem:[#allocation6 + $0x68] sm:$0xff]
    %v7322 = vld [vmem:[#allocation6 + $0x70] sm:$0xff]
    %v7323 = vld [vmem:[#allocation6 + $0x78] sm:$0xff]
    %v7324 = vld [vmem:[#allocation6 + $0x80] sm:$0xff]
    %v7325 = vld [vmem:[#allocation6 + $0x88] sm:$0xff]
    %v7326 = vld [vmem:[#allocation6 + $0x90] sm:$0xff]
    %v7327 = vld [vmem:[#allocation6 + $0x98] sm:$0xff]
    %v7328 = vld [vmem:[#allocation6 + $0xa0] sm:$0xff]
    %v7329 = vld [vmem:[#allocation6 + $0xa8] sm:$0xff]
    %v7330 = vld [vmem:[#allocation6 + $0xb0] sm:$0xff]
    %v7331 = vld [vmem:[#allocation6 + $0xb8] sm:$0xff]
    %v7332 = vld [vmem:[#allocation6 + $0xc0] sm:$0xff]
    %v7333 = vld [vmem:[#allocation6 + $0xc8] sm:$0xff]
    %v7334 = vld [vmem:[#allocation6 + $0xd0] sm:$0xff]
    %v7335 = vld [vmem:[#allocation6 + $0xd8] sm:$0xff]
    %v7336 = vld [vmem:[#allocation6 + $0xe0] sm:$0xff]
    %v7337 = vld [vmem:[#allocation6 + $0xe8] sm:$0xff]
    %v7338 = vld [vmem:[#allocation6 + $0xf0] sm:$0xff]
    %v7339 = vld [vmem:[#allocation6 + $0xf8] sm:$0xff]
    %v7340 = vld [vmem:[#allocation6 + $0x100] sm:$0xff]
    %v7341 = vld [vmem:[#allocation6 + $0x108] sm:$0xff]
    %v7342 = vld [vmem:[#allocation6 + $0x110] sm:$0xff]
    %v7343 = vld [vmem:[#allocation6 + $0x118] sm:$0xff]
    %v7344 = vld [vmem:[#allocation6 + $0x120] sm:$0xff]
    %v7345 = vld [vmem:[#allocation6 + $0x128] sm:$0xff]
    %v7346 = vld [vmem:[#allocation6 + $0x130] sm:$0xff]
    %v7347 = vld [vmem:[#allocation6 + $0x138] sm:$0xff]
    %v7348 = vld [vmem:[#allocation6 + $0x140] sm:$0xff]
    %v7349 = vld [vmem:[#allocation6 + $0x148] sm:$0xff]
    %v7350 = vld [vmem:[#allocation6 + $0x150] sm:$0xff]
    %v7351 = vld [vmem:[#allocation6 + $0x158] sm:$0xff]
    %v7352 = vld [vmem:[#allocation6 + $0x160] sm:$0xff]
    %v7353 = vld [vmem:[#allocation6 + $0x168] sm:$0xff]
    %v7354 = vld [vmem:[#allocation6 + $0x170] sm:$0xff]
    %v7355 = vld [vmem:[#allocation6 + $0x178] sm:$0xff]
    %v7356 = vld [vmem:[#allocation6 + $0x180] sm:$0xff]
    %v7357 = vld [vmem:[#allocation6 + $0x188] sm:$0xff]
    %v7358 = vld [vmem:[#allocation6 + $0x190] sm:$0xff]
    %v7359 = vld [vmem:[#allocation6 + $0x198] sm:$0xff]
    %v7360 = vld [vmem:[#allocation6 + $0x1a0] sm:$0xff]
    %v7361 = vld [vmem:[#allocation6 + $0x1a8] sm:$0xff]
    %v7362 = vld [vmem:[#allocation6 + $0x1b0] sm:$0xff]
    %v7363 = vld [vmem:[#allocation6 + $0x1b8] sm:$0xff]
    %v7364 = vld [vmem:[#allocation6 + $0x1c0] sm:$0xff]
    %v7365 = vld [vmem:[#allocation6 + $0x1c8] sm:$0xff]
    %v7366 = vld [vmem:[#allocation6 + $0x1d0] sm:$0xff]
    %v7367 = vld [vmem:[#allocation6 + $0x1d8] sm:$0xff]
    %v7368 = vld [vmem:[#allocation6 + $0x1e0] sm:$0xff]
    %v7369 = vld [vmem:[#allocation6 + $0x1e8] sm:$0xff]
    %v7370 = vld [vmem:[#allocation6 + $0x1f0] sm:$0xff]
    %v7371 = vld [vmem:[#allocation6 + $0x1f8] sm:$0xff]
    %v7372 = vld [vmem:[%s3] sm:$0xf]
    %v7374 = vperm.slane %v7372, 0
    %v7375 = vperm.slane %v7372, 1
    %v7376 = vperm.slane %v7372, 2
    %v7377 = vperm.slane %v7372, 3
    %v7446 = vunpack.c.l.b16 %v7308
    %v7447 = vunpack.c.h.b16 %v7308
    %v7448 = vunpack.c.l.b16 %v7309
    %v7449 = vunpack.c.h.b16 %v7309
    %v7450 = vunpack.c.l.b16 %v7310
    %v7451 = vunpack.c.h.b16 %v7310
    %v7452 = vunpack.c.l.b16 %v7311
    %v7453 = vunpack.c.h.b16 %v7311
    %v7454 = vunpack.c.l.b16 %v7312
    %v7455 = vunpack.c.h.b16 %v7312
    %v7456 = vunpack.c.l.b16 %v7313
    %v7457 = vunpack.c.h.b16 %v7313
    %v7458 = vunpack.c.l.b16 %v7314
    %v7459 = vunpack.c.h.b16 %v7314
    %v7460 = vunpack.c.l.b16 %v7315
    %v7461 = vunpack.c.h.b16 %v7315
    %v7462 = vunpack.c.l.b16 %v7316
    %v7463 = vunpack.c.h.b16 %v7316
    %v7464 = vunpack.c.l.b16 %v7317
    %v7465 = vunpack.c.h.b16 %v7317
    %v7466 = vunpack.c.l.b16 %v7318
    %v7467 = vunpack.c.h.b16 %v7318
    %v7468 = vunpack.c.l.b16 %v7319
    %v7469 = vunpack.c.h.b16 %v7319
    %v7470 = vunpack.c.l.b16 %v7320
    %v7471 = vunpack.c.h.b16 %v7320
    %v7472 = vunpack.c.l.b16 %v7321
    %v7473 = vunpack.c.h.b16 %v7321
    %v7474 = vunpack.c.l.b16 %v7322
    %v7475 = vunpack.c.h.b16 %v7322
    %v7476 = vunpack.c.l.b16 %v7323
    %v7477 = vunpack.c.h.b16 %v7323
    %v7478 = vunpack.c.l.b16 %v7324
    %v7479 = vunpack.c.h.b16 %v7324
    %v7480 = vunpack.c.l.b16 %v7325
    %v7481 = vunpack.c.h.b16 %v7325
    %v7482 = vunpack.c.l.b16 %v7326
    %v7483 = vunpack.c.h.b16 %v7326
    %v7484 = vunpack.c.l.b16 %v7327
    %v7485 = vunpack.c.h.b16 %v7327
    %v7486 = vunpack.c.l.b16 %v7328
    %v7487 = vunpack.c.h.b16 %v7328
    %v7488 = vunpack.c.l.b16 %v7329
    %v7489 = vunpack.c.h.b16 %v7329
    %v7490 = vunpack.c.l.b16 %v7330
    %v7491 = vunpack.c.h.b16 %v7330
    %v7492 = vunpack.c.l.b16 %v7331
    %v7493 = vunpack.c.h.b16 %v7331
    %v7494 = vunpack.c.l.b16 %v7332
    %v7495 = vunpack.c.h.b16 %v7332
    %v7496 = vunpack.c.l.b16 %v7333
    %v7497 = vunpack.c.h.b16 %v7333
    %v7498 = vunpack.c.l.b16 %v7334
    %v7499 = vunpack.c.h.b16 %v7334
    %v7500 = vunpack.c.l.b16 %v7335
    %v7501 = vunpack.c.h.b16 %v7335
    %v7502 = vunpack.c.l.b16 %v7336
    %v7503 = vunpack.c.h.b16 %v7336
    %v7504 = vunpack.c.l.b16 %v7337
    %v7505 = vunpack.c.h.b16 %v7337
    %v7506 = vunpack.c.l.b16 %v7338
    %v7507 = vunpack.c.h.b16 %v7338
    %v7508 = vunpack.c.l.b16 %v7339
    %v7509 = vunpack.c.h.b16 %v7339
    %v7510 = vunpack.c.l.b16 %v7340
    %v7511 = vunpack.c.h.b16 %v7340
    %v7512 = vunpack.c.l.b16 %v7341
    %v7513 = vunpack.c.h.b16 %v7341
    %v7514 = vunpack.c.l.b16 %v7342
    %v7515 = vunpack.c.h.b16 %v7342
    %v7516 = vunpack.c.l.b16 %v7343
    %v7517 = vunpack.c.h.b16 %v7343
    %v7518 = vunpack.c.l.b16 %v7344
    %v7519 = vunpack.c.h.b16 %v7344
    %v7520 = vunpack.c.l.b16 %v7345
    %v7521 = vunpack.c.h.b16 %v7345
    %v7522 = vunpack.c.l.b16 %v7346
    %v7523 = vunpack.c.h.b16 %v7346
    %v7524 = vunpack.c.l.b16 %v7347
    %v7525 = vunpack.c.h.b16 %v7347
    %v7526 = vunpack.c.l.b16 %v7348
    %v7527 = vunpack.c.h.b16 %v7348
    %v7528 = vunpack.c.l.b16 %v7349
    %v7529 = vunpack.c.h.b16 %v7349
    %v7530 = vunpack.c.l.b16 %v7350
    %v7531 = vunpack.c.h.b16 %v7350
    %v7532 = vunpack.c.l.b16 %v7351
    %v7533 = vunpack.c.h.b16 %v7351
    %v7534 = vunpack.c.l.b16 %v7352
    %v7535 = vunpack.c.h.b16 %v7352
    %v7536 = vunpack.c.l.b16 %v7353
    %v7537 = vunpack.c.h.b16 %v7353
    %v7538 = vunpack.c.l.b16 %v7354
    %v7539 = vunpack.c.h.b16 %v7354
    %v7540 = vunpack.c.l.b16 %v7355
    %v7541 = vunpack.c.h.b16 %v7355
    %v7542 = vunpack.c.l.b16 %v7356
    %v7543 = vunpack.c.h.b16 %v7356
    %v7544 = vunpack.c.l.b16 %v7357
    %v7545 = vunpack.c.h.b16 %v7357
    %v7546 = vunpack.c.l.b16 %v7358
    %v7547 = vunpack.c.h.b16 %v7358
    %v7548 = vunpack.c.l.b16 %v7359
    %v7549 = vunpack.c.h.b16 %v7359
    %v7550 = vunpack.c.l.b16 %v7360
    %v7551 = vunpack.c.h.b16 %v7360
    %v7552 = vunpack.c.l.b16 %v7361
    %v7553 = vunpack.c.h.b16 %v7361
    %v7554 = vunpack.c.l.b16 %v7362
    %v7555 = vunpack.c.h.b16 %v7362
    %v7556 = vunpack.c.l.b16 %v7363
    %v7557 = vunpack.c.h.b16 %v7363
    %v7558 = vunpack.c.l.b16 %v7364
    %v7559 = vunpack.c.h.b16 %v7364
    %v7560 = vunpack.c.l.b16 %v7365
    %v7561 = vunpack.c.h.b16 %v7365
    %v7562 = vunpack.c.l.b16 %v7366
    %v7563 = vunpack.c.h.b16 %v7366
    %v7564 = vunpack.c.l.b16 %v7367
    %v7565 = vunpack.c.h.b16 %v7367
    %v7566 = vunpack.c.l.b16 %v7368
    %v7567 = vunpack.c.h.b16 %v7368
    %v7568 = vunpack.c.l.b16 %v7369
    %v7569 = vunpack.c.h.b16 %v7369
    %v7570 = vunpack.c.l.b16 %v7370
    %v7571 = vunpack.c.h.b16 %v7370
    %v7572 = vunpack.c.l.b16 %v7371
    %v7573 = vunpack.c.h.b16 %v7371
    %v7574 = vpack.c.b16 %v7450, %v7446
    %v7575 = vpack.c.b16 %v7451, %v7447
    %v7576 = vpack.c.b16 %v7452, %v7448
    %v7577 = vpack.c.b16 %v7453, %v7449
    %v7578 = vpack.c.b16 %v7458, %v7454
    %v7579 = vpack.c.b16 %v7459, %v7455
    %v7580 = vpack.c.b16 %v7460, %v7456
    %v7581 = vpack.c.b16 %v7461, %v7457
    %v7582 = vpack.c.b16 %v7466, %v7462
    %v7583 = vpack.c.b16 %v7467, %v7463
    %v7584 = vpack.c.b16 %v7468, %v7464
    %v7585 = vpack.c.b16 %v7469, %v7465
    %v7586 = vpack.c.b16 %v7474, %v7470
    %v7587 = vpack.c.b16 %v7475, %v7471
    %v7588 = vpack.c.b16 %v7476, %v7472
    %v7589 = vpack.c.b16 %v7477, %v7473
    %v7590 = vpack.c.b16 %v7482, %v7478
    %v7591 = vpack.c.b16 %v7483, %v7479
    %v7592 = vpack.c.b16 %v7484, %v7480
    %v7593 = vpack.c.b16 %v7485, %v7481
    %v7594 = vpack.c.b16 %v7490, %v7486
    %v7595 = vpack.c.b16 %v7491, %v7487
    %v7596 = vpack.c.b16 %v7492, %v7488
    %v7597 = vpack.c.b16 %v7493, %v7489
    %v7598 = vpack.c.b16 %v7498, %v7494
    %v7599 = vpack.c.b16 %v7499, %v7495
    %v7600 = vpack.c.b16 %v7500, %v7496
    %v7601 = vpack.c.b16 %v7501, %v7497
    %v7602 = vpack.c.b16 %v7506, %v7502
    %v7603 = vpack.c.b16 %v7507, %v7503
    %v7604 = vpack.c.b16 %v7508, %v7504
    %v7605 = vpack.c.b16 %v7509, %v7505
    %v7606 = vpack.c.b16 %v7514, %v7510
    %v7607 = vpack.c.b16 %v7515, %v7511
    %v7608 = vpack.c.b16 %v7516, %v7512
    %v7609 = vpack.c.b16 %v7517, %v7513
    %v7610 = vpack.c.b16 %v7522, %v7518
    %v7611 = vpack.c.b16 %v7523, %v7519
    %v7612 = vpack.c.b16 %v7524, %v7520
    %v7613 = vpack.c.b16 %v7525, %v7521
    %v7614 = vpack.c.b16 %v7530, %v7526
    %v7615 = vpack.c.b16 %v7531, %v7527
    %v7616 = vpack.c.b16 %v7532, %v7528
    %v7617 = vpack.c.b16 %v7533, %v7529
    %v7618 = vpack.c.b16 %v7538, %v7534
    %v7619 = vpack.c.b16 %v7539, %v7535
    %v7620 = vpack.c.b16 %v7540, %v7536
    %v7621 = vpack.c.b16 %v7541, %v7537
    %v7622 = vpack.c.b16 %v7546, %v7542
    %v7623 = vpack.c.b16 %v7547, %v7543
    %v7624 = vpack.c.b16 %v7548, %v7544
    %v7625 = vpack.c.b16 %v7549, %v7545
    %v7626 = vpack.c.b16 %v7554, %v7550
    %v7627 = vpack.c.b16 %v7555, %v7551
    %v7628 = vpack.c.b16 %v7556, %v7552
    %v7629 = vpack.c.b16 %v7557, %v7553
    %v7630 = vpack.c.b16 %v7562, %v7558
    %v7631 = vpack.c.b16 %v7563, %v7559
    %v7632 = vpack.c.b16 %v7564, %v7560
    %v7633 = vpack.c.b16 %v7565, %v7561
    %v7634 = vpack.c.b16 %v7570, %v7566
    %v7635 = vpack.c.b16 %v7571, %v7567
    %v7636 = vpack.c.b16 %v7572, %v7568
    %v7637 = vpack.c.b16 %v7573, %v7569
    %7702 = vmatpush.bf16.msra.mxu0 %v7602
    %7703 = vmatpush.bf16.msra.mxu0 %v7598
    %7704 = vmatpush.bf16.msra.mxu0 %v7594
    %7705 = vmatpush.bf16.msra.mxu0 %v7590
    %7706 = vmatpush.bf16.msra.mxu0 %v7586
    %7707 = vmatpush.bf16.msra.mxu0 %v7582
    %7708 = vmatpush.bf16.msra.mxu0 %v7578
    %7709 = vmatpush.bf16.msra.mxu0 %v7574
    %7710 = vmatmul.bf16.gmra.mxu0 %v7306
    %v7711 = vpop.f32.mrf.mxu0
    %v7712 = vadd.f32 %v7374, %v7711
    %v7713 = vpop.f32.mrf.mxu0
    %7714 = vdwg.mxu0
    %7715 = vmatpush.bf16.msra.mxu0 %v7634
    %7716 = vmatpush.bf16.msra.mxu0 %v7630
    %7717 = vmatpush.bf16.msra.mxu0 %v7626
    %7718 = vmatpush.bf16.msra.mxu0 %v7622
    %7719 = vmatpush.bf16.msra.mxu0 %v7618
    %7720 = vmatpush.bf16.msra.mxu0 %v7614
    %7721 = vmatpush.bf16.msra.mxu0 %v7610
    %7722 = vmatpush.bf16.msra.mxu0 %v7606
    %7723 = vmatmul.bf16.gmra.mxu0 %v7307
    %v7724 = vpop.f32.mrf.mxu0
    %v7725 = vadd.f32 %v7712, %v7724
    %v7726 = vpop.f32.mrf.mxu0
    %7727 = vdwg.mxu0
    %7728 = vmatpush.bf16.msra.mxu0 %v7603
    %7729 = vmatpush.bf16.msra.mxu0 %v7599
    %7730 = vmatpush.bf16.msra.mxu0 %v7595
    %7731 = vmatpush.bf16.msra.mxu0 %v7591
    %7732 = vmatpush.bf16.msra.mxu0 %v7587
    %7733 = vmatpush.bf16.msra.mxu0 %v7583
    %7734 = vmatpush.bf16.msra.mxu0 %v7579
    %7735 = vmatpush.bf16.msra.mxu0 %v7575
    %7736 = vmatmul.bf16.gmra.mxu0 %v7306
    %v7737 = vpop.f32.mrf.mxu0
    %v7738 = vadd.f32 %v7375, %v7737
    %v7739 = vpop.f32.mrf.mxu0
    %7740 = vdwg.mxu0
    %7741 = vmatpush.bf16.msra.mxu0 %v7635
    %7742 = vmatpush.bf16.msra.mxu0 %v7631
    %7743 = vmatpush.bf16.msra.mxu0 %v7627
    %7744 = vmatpush.bf16.msra.mxu0 %v7623
    %7745 = vmatpush.bf16.msra.mxu0 %v7619
    %7746 = vmatpush.bf16.msra.mxu0 %v7615
    %7747 = vmatpush.bf16.msra.mxu0 %v7611
    %7748 = vmatpush.bf16.msra.mxu0 %v7607
    %7749 = vmatmul.bf16.gmra.mxu0 %v7307
    %v7750 = vpop.f32.mrf.mxu0
    %v7751 = vadd.f32 %v7738, %v7750
    %v7752 = vpop.f32.mrf.mxu0
    %7753 = vdwg.mxu0
    %7754 = vmatpush.bf16.msra.mxu0 %v7604
    %7755 = vmatpush.bf16.msra.mxu0 %v7600
    %7756 = vmatpush.bf16.msra.mxu0 %v7596
    %7757 = vmatpush.bf16.msra.mxu0 %v7592
    %7758 = vmatpush.bf16.msra.mxu0 %v7588
    %7759 = vmatpush.bf16.msra.mxu0 %v7584
    %7760 = vmatpush.bf16.msra.mxu0 %v7580
    %7761 = vmatpush.bf16.msra.mxu0 %v7576
    %7762 = vmatmul.bf16.gmra.mxu0 %v7306
    %v7763 = vpop.f32.mrf.mxu0
    %v7764 = vadd.f32 %v7376, %v7763
    %v7765 = vpop.f32.mrf.mxu0
    %7766 = vdwg.mxu0
    %7767 = vmatpush.bf16.msra.mxu0 %v7636
    %7768 = vmatpush.bf16.msra.mxu0 %v7632
    %7769 = vmatpush.bf16.msra.mxu0 %v7628
    %7770 = vmatpush.bf16.msra.mxu0 %v7624
    %7771 = vmatpush.bf16.msra.mxu0 %v7620
    %7772 = vmatpush.bf16.msra.mxu0 %v7616
    %7773 = vmatpush.bf16.msra.mxu0 %v7612
    %7774 = vmatpush.bf16.msra.mxu0 %v7608
    %7775 = vmatmul.bf16.gmra.mxu0 %v7307
    %v7776 = vpop.f32.mrf.mxu0
    %v7777 = vadd.f32 %v7764, %v7776
    %v7778 = vpop.f32.mrf.mxu0
    %7779 = vdwg.mxu0
    %7780 = vmatpush.bf16.msra.mxu0 %v7605
    %7781 = vmatpush.bf16.msra.mxu0 %v7601
    %7782 = vmatpush.bf16.msra.mxu0 %v7597
    %7783 = vmatpush.bf16.msra.mxu0 %v7593
    %7784 = vmatpush.bf16.msra.mxu0 %v7589
    %7785 = vmatpush.bf16.msra.mxu0 %v7585
    %7786 = vmatpush.bf16.msra.mxu0 %v7581
    %7787 = vmatpush.bf16.msra.mxu0 %v7577
    %7788 = vmatmul.bf16.gmra.mxu0 %v7306
    %v7789 = vpop.f32.mrf.mxu0
    %v7790 = vadd.f32 %v7377, %v7789
    %v7791 = vpop.f32.mrf.mxu0
    %7792 = vdwg.mxu0
    %7793 = vmatpush.bf16.msra.mxu0 %v7637
    %7794 = vmatpush.bf16.msra.mxu0 %v7633
    %7795 = vmatpush.bf16.msra.mxu0 %v7629
    %7796 = vmatpush.bf16.msra.mxu0 %v7625
    %7797 = vmatpush.bf16.msra.mxu0 %v7621
    %7798 = vmatpush.bf16.msra.mxu0 %v7617
    %7799 = vmatpush.bf16.msra.mxu0 %v7613
    %7800 = vmatpush.bf16.msra.mxu0 %v7609
    %7801 = vmatmul.bf16.gmra.mxu0 %v7307
    %v7802 = vpop.f32.mrf.mxu0
    %v7803 = vadd.f32 %v7790, %v7802
    %v7804 = vpop.f32.mrf.mxu0
    %7805 = vdwg.mxu0
    %v7806 = vld [vmem:[%s881] sm:$0xff]
    %v7807 = vxor.u32 %v7725, 2147483648
    %v7808 = vxor.u32 %v7751, 2147483648
    %v7809 = vxor.u32 %v7777, 2147483648
    %v7810 = vmul.f32 %v7807, 1.442695
    %v7811 = vpow.pop %v7810
    %v7812 = vmul.f32 %v7808, 1.442695
    %v7813 = vpow.pop %v7812
    %v7814 = vmul.f32 %v7809, 1.442695
    %v7815 = vpow.pop %v7814
    %v7816 = vadd.f32 %v7811, 1.0
    %v7817 = vadd.f32 %v7813, 1.0
    %v7818 = vadd.f32 %v7815, 1.0
    %v7819 = vrcp.pop %v7816
    %v7820 = vmul.f32 %v7816, %v7819
    %v7821 = vsub.f32 1.0, %v7820
    %v7822 = vmul.f32 %v7819, %v7821
    %v7823 = vadd.f32 %v7819, %v7822
    %vm7824 = vweird.f32 %v7816
    %vm7825 = vweird.f32 %v7819
    %vm7826 = vmor %vm7824, %vm7825
    %v7827 = vsel %vm7826, %v7819, %v7823
    %v7828 = vand.u32 2147483647, %v7816
    %vm7829 = vcmp.eq.f32.partialorder %v7828, 8.507059e+37
    %v7830 = vand.u32 %v7816, 2147483648
    %v7831 = vor.u32 1.1754944e-38, %v7830
    %v7832 = vsel %vm7829, %v7831, %v7827
    %v7833 = vmul.f32 1.0, %v7832
    %v7834 = vrcp.pop %v7817
    %v7835 = vmul.f32 %v7817, %v7834
    %v7836 = vsub.f32 1.0, %v7835
    %v7837 = vmul.f32 %v7834, %v7836
    %v7838 = vadd.f32 %v7834, %v7837
    %vm7839 = vweird.f32 %v7817
    %vm7840 = vweird.f32 %v7834
    %vm7841 = vmor %vm7839, %vm7840
    %v7842 = vsel %vm7841, %v7834, %v7838
    %v7843 = vand.u32 2147483647, %v7817
    %vm7844 = vcmp.eq.f32.partialorder %v7843, 8.507059e+37
    %v7845 = vand.u32 %v7817, 2147483648
    %v7846 = vor.u32 1.1754944e-38, %v7845
    %v7847 = vsel %vm7844, %v7846, %v7842
    %v7848 = vmul.f32 1.0, %v7847
    %v7849 = vrcp.pop %v7818
    %v7850 = vmul.f32 %v7818, %v7849
    %v7851 = vsub.f32 1.0, %v7850
    %v7852 = vmul.f32 %v7849, %v7851
    %v7853 = vadd.f32 %v7849, %v7852
    %vm7854 = vweird.f32 %v7818
    %vm7855 = vweird.f32 %v7849
    %vm7856 = vmor %vm7854, %vm7855
    %v7857 = vsel %vm7856, %v7849, %v7853
    %v7858 = vand.u32 2147483647, %v7818
    %vm7859 = vcmp.eq.f32.partialorder %v7858, 8.507059e+37
    %v7860 = vand.u32 %v7818, 2147483648
    %v7861 = vor.u32 1.1754944e-38, %v7860
    %v7862 = vsel %vm7859, %v7861, %v7857
    %v7863 = vmul.f32 1.0, %v7862
    %v7864 = vtanh.pop %v7803
    %v7865 = vmul.f32 %v7848, %v7806
    %v7866 = vmul.f32 %v7833, %v7864
    %v7867 = vadd.f32 %v7865, %v7866
    %v7868 = vtanh.pop %v7867
    %v7869 = vmul.f32 %v7863, %v7868
    %7870 = vst [vmem:[%s379] sm:$0xff] %v7869
    %7871 = vst [vmem:[%s881] sm:$0xff] %v7867
    %v7872 = vpack.c.bf16 %v7869, %v7869
    %v7874 = vrot.slane %v7872, 3
    %v7877 = vsel %vm951, %v7872, %v7874
    %v7879 = vsel %vm956, %v7872, %v7874
    %v7881 = vrot.slane %v7879, 1
    %v7882 = vsel %vm960, %v7872, %v7874
    %v7884 = vrot.slane %v7882, 2
    %v7885 = vsel %vm964, %v7872, %v7874
    %v7887 = vrot.slane %v7885, 3
    %v7888 = vunpack.i.l.s16 %v7877
    %v7889 = vunpack.i.h.s16 %v7877
    %v7890 = vunpack.i.l.s16 %v7881
    %v7891 = vunpack.i.h.s16 %v7881
    %v7892 = vunpack.i.l.s16 %v7884
    %v7893 = vunpack.i.h.s16 %v7884
    %v7894 = vunpack.i.l.s16 %v7887
    %v7895 = vunpack.i.h.s16 %v7887
    %v7896 = vpack.i.b16 %v7888, %v7888
    %v7897 = vpack.i.b16 %v7889, %v7889
    %v7898 = vpack.i.b16 %v7890, %v7890
    %v7899 = vpack.i.b16 %v7891, %v7891
    %v7900 = vpack.i.b16 %v7892, %v7892
    %v7901 = vpack.i.b16 %v7893, %v7893
    %v7902 = vpack.i.b16 %v7894, %v7894
    %v7903 = vpack.i.b16 %v7895, %v7895
    %v7905 = vunpack.c.l.s4 286326784
    %v7906 = vunpack.c.0.s8 %v7905
    %v7907 = vperm.slane %v7896, %v7906
    %v7909 = vunpack.c.l.s4 286326784
    %v7910 = vunpack.c.0.s8 %v7909
    %v7911 = vperm.slane %v7897, %v7910
    %v7913 = vunpack.c.l.s4 286326784
    %v7914 = vunpack.c.0.s8 %v7913
    %v7915 = vperm.slane %v7898, %v7914
    %v7917 = vunpack.c.l.s4 286326784
    %v7918 = vunpack.c.0.s8 %v7917
    %v7919 = vperm.slane %v7899, %v7918
    %v7921 = vunpack.c.l.s4 286326784
    %v7922 = vunpack.c.0.s8 %v7921
    %v7923 = vperm.slane %v7900, %v7922
    %v7925 = vunpack.c.l.s4 286326784
    %v7926 = vunpack.c.0.s8 %v7925
    %v7927 = vperm.slane %v7901, %v7926
    %v7929 = vunpack.c.l.s4 286326784
    %v7930 = vunpack.c.0.s8 %v7929
    %v7931 = vperm.slane %v7902, %v7930
    %v7933 = vunpack.c.l.s4 286326784
    %v7934 = vunpack.c.0.s8 %v7933
    %v7935 = vperm.slane %v7903, %v7934
    %vm7944 = vsmask.f32 7950
    %vm7945 = vmand %vm6955, %vm7944
    %v7946 = vld [vmem:[%s4] sm:$0x8]
    %v7947 = vsel %vm7945, %v7907, %v7946
    %7948 = vst [vmem:[%s4] sm:$0x8] %v7947
    %v7949 = vld [vmem:[%s4 + $0x4] sm:$0x8]
    %v7950 = vsel %vm7945, %v7911, %v7949
    %7951 = vst [vmem:[%s4 + $0x4] sm:$0x8] %v7950
    %v7952 = vld [vmem:[%s4 + $0x8] sm:$0x8]
    %v7953 = vsel %vm7945, %v7915, %v7952
    %7954 = vst [vmem:[%s4 + $0x8] sm:$0x8] %v7953
    %v7955 = vld [vmem:[%s4 + $0xc] sm:$0x8]
    %v7956 = vsel %vm7945, %v7919, %v7955
    %7957 = vst [vmem:[%s4 + $0xc] sm:$0x8] %v7956
    %v7958 = vld [vmem:[%s4 + $0x10] sm:$0x8]
    %v7959 = vsel %vm7945, %v7923, %v7958
    %7960 = vst [vmem:[%s4 + $0x10] sm:$0x8] %v7959
    %v7961 = vld [vmem:[%s4 + $0x14] sm:$0x8]
    %v7962 = vsel %vm7945, %v7927, %v7961
    %7963 = vst [vmem:[%s4 + $0x14] sm:$0x8] %v7962
    %v7964 = vld [vmem:[%s4 + $0x18] sm:$0x8]
    %v7965 = vsel %vm7945, %v7931, %v7964
    %7966 = vst [vmem:[%s4 + $0x18] sm:$0x8] %v7965
    %v7967 = vld [vmem:[%s4 + $0x1c] sm:$0x8]
    %v7968 = vsel %vm7945, %v7935, %v7967
    %7969 = vst [vmem:[%s4 + $0x1c] sm:$0x8] %v7968
    // Predicated region
    $region30: #{decoder_rnn_forward.4} parent=1 // pred_check
      _
    $region31: #{decoder_rnn_forward.4} parent=1 // pred_check_branch
      %7971 = sbr.rel (0) target = $region33
    $region32: #{decoder_rnn_forward.4} parent=1 // pred_region
      _
    $region33: #{decoder_rnn_forward.4} parent=1 // pred_fallthru
      _
    // Predicated region
    $region34: #{decoder_rnn_forward.4} parent=1 // pred_check
      _
    $region35: #{decoder_rnn_forward.4} parent=1 // pred_check_branch
      %7973 = sbr.rel (0) target = $region37
    $region36: #{decoder_rnn_forward.4} parent=1 // pred_region
      _
    $region37: #{decoder_rnn_forward.4} parent=1 // pred_fallthru
      _
    %7974 = vsyncpa [#allocation5], 1
    %7975 = vsyncpa [#allocation7], 1

</llo_original>
